<compile_context>
chip_gen: v7x
topology: tpu7x:2x2x1
jax: 0.10.0
libtpu: 0.0.40
codegen_flags: <defaults>
</compile_context>

<pallas_src>
import jax
import jax.numpy as jnp
from jax.experimental import pallas as pl
from jax.experimental.pallas import tpu as pltpu

BN_EPS = 1e-5


# ---------------------------------------------------------------------------
# Fused kernel: adaptive-avg-pool(1,1) + Linear + BatchNorm1d(batch) + ReLU
# ---------------------------------------------------------------------------
def avg_fc_bn_relu_kernel(x_ref, wt_ref, bgb_ref, o_ref):
    # x_ref  : (B, HW, C)  input, C lane-dense (same block every grid step)
    # wt_ref : (C, tn)     linear weight tile, pre-transposed (in, out), bf16
    # bgb_ref: (3, tn)     row 0 = linear bias, row 1 = gamma, row 2 = beta
    # o_ref  : (B, tn)
    pooled = jnp.mean(x_ref[...], axis=1)                    # sublane reduce -> (B, C) f32
    w_tile = wt_ref[...]                                     # (C, tn) bf16
    y = jnp.dot(pooled.astype(w_tile.dtype), w_tile,
                preferred_element_type=jnp.float32)          # (B, tn) f32 acc on MXU
    y = y + bgb_ref[0:1, :]                                  # linear bias
    # BatchNorm1d, training mode: per-feature batch stats (biased variance).
    mean = jnp.mean(y, axis=0, keepdims=True)
    var = jnp.mean((y - mean) ** 2, axis=0, keepdims=True)
    y_hat = (y - mean) * jax.lax.rsqrt(var + BN_EPS)
    out = bgb_ref[1:2, :] * y_hat + bgb_ref[2:3, :]
    o_ref[...] = jnp.maximum(out, 0.0).astype(o_ref.dtype)   # ReLU


# ---------------------------------------------------------------------------
# Module wrapper
# ---------------------------------------------------------------------------
def avg_forward(x_bchw, params, *, tn=1024):
    B, C, H, W = x_bchw.shape
    wt = params["wt"]                    # (K, N) pre-transposed, bf16
    bgb = params["bgb"]                  # (3, N) f32: bias / gamma / beta
    K, N = wt.shape
    assert K == C, f"fc expects {K} input features, got C={C}"
    assert N % tn == 0, f"N={N} must be divisible by tn={tn}"
    HW = H * W

    # Small glue: (B, C, H, W) -> (B, HW, C) so C is on the lane axis (~256 KiB).
    x = jnp.transpose(x_bchw.reshape(B, C, HW), (0, 2, 1))

    flops = 2 * B * K * N
    bytes_accessed = (B * HW * C * x.dtype.itemsize          # x, read once
                      + K * N * wt.dtype.itemsize            # weight stream (dominant)
                      + 3 * N * bgb.dtype.itemsize           # bias/gamma/beta
                      + B * N * x_bchw.dtype.itemsize)       # output

    return pl.pallas_call(
        avg_fc_bn_relu_kernel,
        out_shape=jax.ShapeDtypeStruct((B, N), x_bchw.dtype),
        grid=(N // tn,),
        in_specs=[
            # Constant block index -> fetched from HBM only once.
            pl.BlockSpec((B, HW, C), lambda j: (0, 0, 0)),    # x
            pl.BlockSpec((K, tn), lambda j: (0, j)),          # W^T tile (4 MiB bf16)
            pl.BlockSpec((3, tn), lambda j: (0, j)),          # bias/gamma/beta
        ],
        out_specs=pl.BlockSpec((B, tn), lambda j: (0, j)),
        compiler_params=pltpu.CompilerParams(
            dimension_semantics=("parallel",)),
        cost_estimate=pl.CostEstimate(
            flops=flops, transcendentals=N, bytes_accessed=bytes_accessed),
    )(x, wt, bgb)


def init_params(key, in_planes=2048, out_planes=2048, weight_dtype=jnp.bfloat16):
    kw, kg = jax.random.split(key)
    # kaiming_normal_(a=0, mode='fan_out') for Linear: std = sqrt(2 / fan_out)
    std_w = (2.0 / out_planes) ** 0.5
    w = std_w * jax.random.normal(kw, (out_planes, in_planes), jnp.float32)
    b = jnp.zeros((out_planes,), jnp.float32)                 # Linear bias init 0
    # BatchNorm1d: gamma ~ N(1, 0.02), beta = 0
    gamma = 1.0 + 0.02 * jax.random.normal(kg, (out_planes,), jnp.float32)
    beta = jnp.zeros((out_planes,), jnp.float32)
    # Pre-transpose + narrow ONCE at init: removes the per-call 32 MiB w.T
    # round-trip and halves the in-kernel weight DMA.
    wt = jnp.asarray(w.T, dtype=weight_dtype)                 # (K, N)
    bgb = jnp.stack([b, gamma, beta], axis=0)                 # (3, N) f32
    return {"w": w, "b": b, "gamma": gamma, "beta": beta, "wt": wt, "bgb": bgb}


if __name__ == "__main__":
    key = jax.random.PRNGKey(0)
    kx, kp = jax.random.split(key)

    B, C, H, W = 2, 2048, 4, 4          # C fixed at 2048 by the module's fc
    x = jax.random.normal(kx, (B, C, H, W), jnp.float32)
    params = init_params(kp)

    out = jax.block_until_ready(avg_forward(x, params))
    assert out.shape == (B, 2048), out.shape
    assert bool(jnp.all(jnp.isfinite(out)))
    assert bool(jnp.all(out >= 0.0))    # ReLU output
    print("KERNEL_OK")
</pallas_src>

<mosaic_0001>
module attributes {stable_mosaic.version = 11 : i64} {
  func.func @avg_fc_bn_relu_kernel(%arg0: i32, %arg1: memref<2x16x2048xf32, #tpu.memory_space<vmem>>, %arg2: memref<2048x1024xbf16, #tpu.memory_space<vmem>>, %arg3: memref<3x1024xf32, #tpu.memory_space<vmem>>, %arg4: memref<2x1024xf32, #tpu.memory_space<vmem>>) attributes {dimension_semantics = [#tpu.dimension_semantics<parallel>], iteration_bounds = array<i64: 2>, scalar_prefetch = 0 : i64, scratch_operands = 0 : i64, tpu.core_type = #tpu.core_type<tc>, window_params = [{pipeline_mode = #tpu.pipeline_mode<synchronous>, transform_indices = @transform_0, window_bounds = array<i64: 2, 16, 2048>}, {transform_indices = @transform_1, window_bounds = array<i64: 2048, 1024>}, {transform_indices = @transform_2, window_bounds = array<i64: 3, 1024>}, {transform_indices = @transform_3, window_bounds = array<i64: 2, 1024>}]} {
    %c0 = arith.constant 0 : index
    %c0_0 = arith.constant 0 : index
    %c0_1 = arith.constant 0 : index
    %0 = vector.load %arg1[%c0, %c0_0, %c0_1] : memref<2x16x2048xf32, #tpu.memory_space<vmem>>, vector<2x16x2048xf32>
    %cst = arith.constant dense<0.000000e+00> : vector<2x2048xf32>
    %1 = vector.multi_reduction <add>, %0, %cst [1] : vector<2x16x2048xf32> to vector<2x2048xf32>
    %cst_2 = arith.constant 1.600000e+01 : f32
    %2 = vector.broadcast %cst_2 : f32 to vector<2x2048xf32>
    %3 = arith.divf %1, %2 : vector<2x2048xf32>
    %c0_3 = arith.constant 0 : index
    %c0_4 = arith.constant 0 : index
    %4 = vector.load %arg2[%c0_3, %c0_4] : memref<2048x1024xbf16, #tpu.memory_space<vmem>>, vector<2048x1024xbf16>
    %5 = arith.truncf %3 : vector<2x2048xf32> to vector<2x2048xbf16>
    %cst_5 = arith.constant dense<0.000000e+00> : vector<2x1024xf32>
    %6 = tpu.matmul %5, %4, %cst_5 {dimension_numbers = #tpu.dot_dimension_numbers<[1], [0], [0], [1], [0, 0, 1, 1], [], []>} : vector<2x2048xbf16>, vector<2048x1024xbf16>, vector<2x1024xf32> -> vector<2x1024xf32>
    %c0_6 = arith.constant 0 : index
    %c0_7 = arith.constant 0 : index
    %7 = vector.load %arg3[%c0_6, %c0_7] : memref<3x1024xf32, #tpu.memory_space<vmem>>, vector<1x1024xf32>
    %8 = vector.broadcast %7 : vector<1x1024xf32> to vector<2x1024xf32>
    %9 = arith.addf %6, %8 : vector<2x1024xf32>
    %cst_8 = arith.constant dense<0.000000e+00> : vector<1024xf32>
    %10 = vector.multi_reduction <add>, %9, %cst_8 [0] : vector<2x1024xf32> to vector<1024xf32>
    %11 = vector.shape_cast %10 : vector<1024xf32> to vector<1x1024xf32>
    %cst_9 = arith.constant 2.000000e+00 : f32
    %12 = vector.broadcast %cst_9 : f32 to vector<1x1024xf32>
    %13 = arith.divf %11, %12 : vector<1x1024xf32>
    %14 = vector.broadcast %13 : vector<1x1024xf32> to vector<2x1024xf32>
    %15 = arith.subf %9, %14 : vector<2x1024xf32>
    %16 = arith.mulf %15, %15 : vector<2x1024xf32>
    %cst_10 = arith.constant dense<0.000000e+00> : vector<1024xf32>
    %17 = vector.multi_reduction <add>, %16, %cst_10 [0] : vector<2x1024xf32> to vector<1024xf32>
    %18 = vector.shape_cast %17 : vector<1024xf32> to vector<1x1024xf32>
    %cst_11 = arith.constant 2.000000e+00 : f32
    %19 = vector.broadcast %cst_11 : f32 to vector<1x1024xf32>
    %20 = arith.divf %18, %19 : vector<1x1024xf32>
    %21 = vector.broadcast %13 : vector<1x1024xf32> to vector<2x1024xf32>
    %22 = arith.subf %9, %21 : vector<2x1024xf32>
    %cst_12 = arith.constant 9.99999974E-6 : f32
    %23 = vector.broadcast %cst_12 : f32 to vector<1x1024xf32>
    %24 = arith.addf %20, %23 : vector<1x1024xf32>
    %25 = math.rsqrt %24 : vector<1x1024xf32>
    %26 = vector.broadcast %25 : vector<1x1024xf32> to vector<2x1024xf32>
    %27 = arith.mulf %22, %26 : vector<2x1024xf32>
    %c1 = arith.constant 1 : index
    %c0_13 = arith.constant 0 : index
    %28 = vector.load %arg3[%c1, %c0_13] : memref<3x1024xf32, #tpu.memory_space<vmem>>, vector<1x1024xf32>
    %29 = vector.broadcast %28 : vector<1x1024xf32> to vector<2x1024xf32>
    %30 = arith.mulf %29, %27 : vector<2x1024xf32>
    %c2 = arith.constant 2 : index
    %c0_14 = arith.constant 0 : index
    %31 = vector.load %arg3[%c2, %c0_14] : memref<3x1024xf32, #tpu.memory_space<vmem>>, vector<1x1024xf32>
    %32 = vector.broadcast %31 : vector<1x1024xf32> to vector<2x1024xf32>
    %33 = arith.addf %30, %32 : vector<2x1024xf32>
    %cst_15 = arith.constant 0.000000e+00 : f32
    %34 = vector.broadcast %cst_15 : f32 to vector<2x1024xf32>
    %35 = arith.maximumf %33, %34 : vector<2x1024xf32>
    %c0_16 = arith.constant 0 : index
    %c0_17 = arith.constant 0 : index
    %36 = vector.load %arg4[%c0_16, %c0_17] : memref<2x1024xf32, #tpu.memory_space<vmem>>, vector<2x1024xf32>
    tpu.vector_store %arg4[%c0_16, %c0_17], %35 {strides = array<i32>} : memref<2x1024xf32, #tpu.memory_space<vmem>>, vector<2x1024xf32>,
    return
  }
  func.func @transform_0(%arg0: i32) -> (i32, i32, i32) {
    %c0_i32 = arith.constant 0 : i32
    %c0_i32_0 = arith.constant 0 : i32
    %c0_i32_1 = arith.constant 0 : i32
    %c0_i32_2 = arith.constant 0 : i32
    return %c0_i32, %c0_i32_0, %c0_i32_1 : i32, i32, i32
  }
  func.func @transform_1(%arg0: i32) -> (i32, i32) {
    %c0_i32 = arith.constant 0 : i32
    %c0_i32_0 = arith.constant 0 : i32
    return %c0_i32, %arg0 : i32, i32
  }
  func.func @transform_2(%arg0: i32) -> (i32, i32) {
    %c0_i32 = arith.constant 0 : i32
    %c0_i32_0 = arith.constant 0 : i32
    return %c0_i32, %arg0 : i32, i32
  }
  func.func @transform_3(%arg0: i32) -> (i32, i32) {
    %c0_i32 = arith.constant 0 : i32
    %c0_i32_0 = arith.constant 0 : i32
    return %c0_i32, %arg0 : i32, i32
  }
}

</mosaic_0001>

<llo_original>
// kernel: tpu_custom_call.1
$region0: #{tpu_custom_call.1}
  #allocation0 [shape = 'u32[]', space=smem, size = 0x4, offset = 0x4, fixed_abs, tag = 'smem constant byte address 0x4 - core index']
  #allocation1 [shape = 'u32[144,128]{1,0:T(1,128)}', space=vmem, size = 0x12000, scoped, tag = 'internal scratch']
  %s0 = inlined_call_operand.hbm [shape: f32[2,16,2048], index: 0, kind: input, shape index: {}]
  %s1 = inlined_call_operand.hbm [shape: bf16[2048,2048], index: 1, kind: input, shape index: {}]
  %s2 = inlined_call_operand.hbm [shape: f32[3,2048], index: 2, kind: input, shape index: {}]
  %s3 = inlined_call_operand.hbm [shape: f32[2,2048], index: 3, kind: output, shape index: {}]
  %s4 = sld [smem:[#allocation0]]
  $region57: #{tpu_custom_call.1} parent=0
    _
  %s6 = ssub.s32 1, %s4
  %s7 = scalar_select 0, %s6, %s4
  $region1: #{tpu_custom_call.1} parent=0
    #allocation2 [shape = 'u8[262144]{0}', space=vmem, size = 0x40000, scoped, tag = 'input window, operand 0, single buffered']
    #allocation3 [shape = 's32[2]{0}', space=sflag, size = 0x8, scoped, tag = 'scoped memory for tpu_custom_call.1']
    #allocation4 [shape = 's32[2]{0}', space=sflag, size = 0x8, scoped, tag = 'scoped memory for tpu_custom_call.1']
    #allocation5 [shape = 'u8[8388608]{0}', space=vmem, size = 0x800000, scoped, tag = 'input window, operand 1']
    #allocation6 [shape = 's32[2]{0}', space=sflag, size = 0x8, scoped, tag = 'scoped memory for tpu_custom_call.1']
    #allocation7 [shape = 'u8[32768]{0}', space=vmem, size = 0x8000, scoped, tag = 'input window, operand 2']
    #allocation8 [shape = 'u8[16384]{0}', space=vmem, size = 0x4000, scoped, tag = 'output window, operand 0']
    %8 = vsyncpa [#allocation3], 0
    %9 = vsyncpa [#allocation6], 0
    %s10 = scalar_lea.sflag [#allocation6], 1
    %11 = vsyncpa %s10, 0
    %12 = vsyncpa [#allocation4], 0
    %s13 = scalar_lea.sflag [#allocation4], 1
    %14 = vsyncpa %s13, 0
    loop: start=0, step=1, limit=4
    $region2: #{tpu_custom_call.1} parent=1 // loop_pre_header
      _
    $region3: #{tpu_custom_call.1} parent=1 // loop_header
      %s16 = sphi 0, %s20
      %p17 = scmp.ge.s32.totalorder %s16, 4
      %s24 = sphi 0, %s24
      %s26 = sphi 0, %s24
      %s27 = sphi 0, %s26
      %s41 = sphi 0, %s27
      %s47 = sphi 0, %s49
      %s50 = sphi 0, %s47
      %s51 = sphi 0, %s50
      %s67 = sphi 0, %s51
      %s73 = sphi 0, %s75
      %s76 = sphi 0, %s73
      %s77 = sphi 0, %s76
      %s93 = sphi 0, %s77
      %s99 = sphi 0, %s101
      %s102 = sphi 0, %s99
      %s103 = sphi 0, %s102
      %s119 = sphi 0, %s103
    $region4: #{tpu_custom_call.1} parent=1 // loop_header_branch
      %19 = sbr.rel (%p17) target = $region8
    $region5: #{tpu_custom_call.1} parent=1 // loop_body
      %s21 = ssub.s32 %s16, 1
      %s22 = ssub.s32 %s16, 2
      %s23 = sadd.s32 %s16, 1
      %s25 = sadd.s32 %s24, 1
      %p28 = scmp.eq.s32.totalorder %s16, 1
      %p29 = scmp.ne.s32.totalorder %s24, %s26
      %p30 = scmp.eq.s32.totalorder %s16, 0
      %p31 = por %p29, %p30
      %p32 = scmp.ne.s32.totalorder %s24, %s26
      %p33 = scmp.eq.s32.totalorder %s21, 1
      %p34 = por %p32, %p33
      %p35 = scmp.ne.s32.totalorder %s26, %s27
      %p36 = scmp.eq.s32.totalorder %s21, 0
      %p37 = por %p35, %p36
      %p38 = scmp.ne.s32.totalorder %s26, %s27
      %p39 = scmp.eq.s32.totalorder %s22, 1
      %p40 = por %p38, %p39
      %p42 = scmp.ne.s32.totalorder %s27, %s41
      %p43 = scmp.eq.s32.totalorder %s22, 0
      %p44 = por %p42, %p43
      %s45 = ssub.s32 %s16, %s23
      %p46 = scmp.eq.s32.totalorder %s45, 0
      %s48 = sadd.s32 %s47, 1
      %s49 = scalar_select %p46, %s47, %s48
      %p52 = pneg %p46
      %p53 = scmp.eq.s32.totalorder %s16, 1
      %p54 = por %p52, %p53
      %p55 = scmp.ne.s32.totalorder %s47, %s50
      %p56 = scmp.eq.s32.totalorder %s16, 0
      %p57 = por %p55, %p56
      %p58 = scmp.ne.s32.totalorder %s47, %s50
      %p59 = scmp.eq.s32.totalorder %s21, 1
      %p60 = por %p58, %p59
      %p61 = scmp.ne.s32.totalorder %s50, %s51
      %p62 = scmp.eq.s32.totalorder %s21, 0
      %p63 = por %p61, %p62
      %p64 = scmp.ne.s32.totalorder %s50, %s51
      %p65 = scmp.eq.s32.totalorder %s22, 1
      %p66 = por %p64, %p65
      %p68 = scmp.ne.s32.totalorder %s51, %s67
      %p69 = scmp.eq.s32.totalorder %s22, 0
      %p70 = por %p68, %p69
      %s71 = ssub.s32 %s16, %s23
      %p72 = scmp.eq.s32.totalorder %s71, 0
      %s74 = sadd.s32 %s73, 1
      %s75 = scalar_select %p72, %s73, %s74
      %p78 = pneg %p72
      %p79 = scmp.eq.s32.totalorder %s16, 1
      %p80 = por %p78, %p79
      %p81 = scmp.ne.s32.totalorder %s73, %s76
      %p82 = scmp.eq.s32.totalorder %s16, 0
      %p83 = por %p81, %p82
      %p84 = scmp.ne.s32.totalorder %s73, %s76
      %p85 = scmp.eq.s32.totalorder %s21, 1
      %p86 = por %p84, %p85
      %p87 = scmp.ne.s32.totalorder %s76, %s77
      %p88 = scmp.eq.s32.totalorder %s21, 0
      %p89 = por %p87, %p88
      %p90 = scmp.ne.s32.totalorder %s76, %s77
      %p91 = scmp.eq.s32.totalorder %s22, 1
      %p92 = por %p90, %p91
      %p94 = scmp.ne.s32.totalorder %s77, %s93
      %p95 = scmp.eq.s32.totalorder %s22, 0
      %p96 = por %p94, %p95
      %s97 = ssub.s32 %s16, %s23
      %p98 = scmp.eq.s32.totalorder %s97, 0
      %s100 = sadd.s32 %s99, 1
      %s101 = scalar_select %p98, %s99, %s100
      %p104 = pneg %p98
      %p105 = scmp.eq.s32.totalorder %s16, 1
      %p106 = por %p104, %p105
      %p107 = scmp.ne.s32.totalorder %s99, %s102
      %p108 = scmp.eq.s32.totalorder %s16, 0
      %p109 = por %p107, %p108
      %p110 = scmp.ne.s32.totalorder %s99, %s102
      %p111 = scmp.eq.s32.totalorder %s21, 1
      %p112 = por %p110, %p111
      %p113 = scmp.ne.s32.totalorder %s102, %s103
      %p114 = scmp.eq.s32.totalorder %s21, 0
      %p115 = por %p113, %p114
      %p116 = scmp.ne.s32.totalorder %s102, %s103
      %p117 = scmp.eq.s32.totalorder %s22, 1
      %p118 = por %p116, %p117
      %p120 = scmp.ne.s32.totalorder %s103, %s119
      %p121 = scmp.eq.s32.totalorder %s22, 0
      %p122 = por %p120, %p121
      %p123 = scmp.le.s32.totalorder 1, %s16
      %p124 = scmp.lt.s32.totalorder %s16, 3
      %p125 = pnand %p123, %p124
      %p126 = pneg %p125
      // Predicated region
      $region9: #{tpu_custom_call.1} parent=5 // pred_check
        _
      $region10: #{tpu_custom_call.1} parent=5 // pred_check_branch
        %128 = sbr.rel (%p125) target = $region12
      $region11: #{tpu_custom_call.1} parent=5 // pred_region
        %s129 = ssub.s32 %s16, 1
        // Predicated region
        $region13: #{tpu_custom_call.1} parent=11 // pred_check
          %p130 = pneg %p37
        $region14: #{tpu_custom_call.1} parent=11 // pred_check_branch
          %132 = sbr.rel (%p130) target = $region16
        $region15: #{tpu_custom_call.1} parent=11 // pred_region
          %s134 = ssub.s32 8192, 8192
          %135 = vsyncadd [#allocation3], %s134
          %s136 = sshll.u32 [#allocation2], 4
          %s137 = int_to_ptr.vmem [resolvable:$true] %s136
          %142 = dma.hbm_to_vmem [thread:$0]  %s0, 8192, %s137, [#allocation3], 2048, 2048, 128
        $region16: #{tpu_custom_call.1} parent=11 // pred_fallthru
          _
      $region12: #{tpu_custom_call.1} parent=5 // pred_fallthru
        _
      %p143 = scmp.lt.s32.totalorder %s16, 2
      // Predicated region
      $region17: #{tpu_custom_call.1} parent=5 // pred_check
        %p144 = pneg %p143
      $region18: #{tpu_custom_call.1} parent=5 // pred_check_branch
        %146 = sbr.rel (%p144) target = $region20
      $region19: #{tpu_custom_call.1} parent=5 // pred_region
        // Predicated region
        $region21: #{tpu_custom_call.1} parent=19 // pred_check
          %p147 = pneg %p57
        $region22: #{tpu_custom_call.1} parent=19 // pred_check_branch
          %149 = sbr.rel (%p147) target = $region24
        $region23: #{tpu_custom_call.1} parent=19 // pred_region
          %s150 = sand.u32 %s16, 1
          %s151 = scalar_lea.sflag [#allocation6], %s150
          %s152 = sand.u32 %s47, 1
          %s153 = smul.addr %s152, 8192
          %s154 = scalar_lea.vmem [#allocation5], %s153
          %s155 = smul.u32 8, %s16
          %s157 = ssub.s32 131072, 131072
          %158 = vsyncadd %s151, %s157
          %s159 = smul.addr %s155, 64
          %s160 = scalar_lea.hbm %s1, %s159
          %s161 = sshll.u32 %s154, 4
          %s162 = int_to_ptr.vmem [resolvable:$true] %s161
          %167 = dma.hbm_to_vmem [thread:$0]  %s160, 131072, %s162, %s151, 1024, 512, 32
        $region24: #{tpu_custom_call.1} parent=19 // pred_fallthru
          _
        // Predicated region
        $region25: #{tpu_custom_call.1} parent=19 // pred_check
          %p168 = pneg %p83
        $region26: #{tpu_custom_call.1} parent=19 // pred_check_branch
          %170 = sbr.rel (%p168) target = $region28
        $region27: #{tpu_custom_call.1} parent=19 // pred_region
          %s171 = sand.u32 %s16, 1
          %s172 = scalar_lea.sflag [#allocation6], %s171
          %s173 = sand.u32 %s73, 1
          %s174 = smul.addr %s173, 32
          %s175 = scalar_lea.vmem [#allocation7], %s174
          %s176 = smul.u32 8, %s16
          %s178 = ssub.s32 512, 512
          %179 = vsyncadd %s172, %s178
          %s180 = smul.addr %s176, 64
          %s181 = scalar_lea.hbm %s2, %s180
          %s183 = sshll.u32 %s175, 4
          %s184 = int_to_ptr.vmem [resolvable:$true] %s183
          %186 = dma.hbm_to_vmem [thread:$0]  %s181, 512, %s184, %s172
        $region28: #{tpu_custom_call.1} parent=19 // pred_fallthru
          _
      $region20: #{tpu_custom_call.1} parent=5 // pred_fallthru
        _
      %p187 = scmp.le.s32.totalorder 1, %s16
      %p188 = scmp.lt.s32.totalorder %s16, 3
      %p189 = pnand %p187, %p188
      %p190 = pneg %p189
      // Predicated region
      $region29: #{tpu_custom_call.1} parent=5 // pred_check
        _
      $region30: #{tpu_custom_call.1} parent=5 // pred_check_branch
        %192 = sbr.rel (%p189) target = $region32
      $region31: #{tpu_custom_call.1} parent=5 // pred_region
        %s193 = ssub.s32 %s16, 1
        // Predicated region
        $region33: #{tpu_custom_call.1} parent=31 // pred_check
          %p194 = pneg %p37
        $region34: #{tpu_custom_call.1} parent=31 // pred_check_branch
          %196 = sbr.rel (%p194) target = $region36
        $region35: #{tpu_custom_call.1} parent=31 // pred_region
          %197 = dma.done [#allocation3], 8192
        $region36: #{tpu_custom_call.1} parent=31 // pred_fallthru
          _
        %s198 = sand.u32 %s21, 1
        %s199 = scalar_lea.sflag [#allocation6], %s198
        %s200 = sand.u32 %s50, 1
        %s201 = smul.addr %s200, 8192
        %s202 = scalar_lea.vmem [#allocation5], %s201
        // Predicated region
        $region37: #{tpu_custom_call.1} parent=31 // pred_check
          %p203 = pneg %p63
        $region38: #{tpu_custom_call.1} parent=31 // pred_check_branch
          %205 = sbr.rel (%p203) target = $region40
        $region39: #{tpu_custom_call.1} parent=31 // pred_region
          %206 = dma.done %s199, 131072
        $region40: #{tpu_custom_call.1} parent=31 // pred_fallthru
          _
        %s207 = sand.u32 %s21, 1
        %s208 = scalar_lea.sflag [#allocation6], %s207
        %s209 = sand.u32 %s76, 1
        %s210 = smul.addr %s209, 32
        %s211 = scalar_lea.vmem [#allocation7], %s210
        // Predicated region
        $region41: #{tpu_custom_call.1} parent=31 // pred_check
          %p212 = pneg %p89
        $region42: #{tpu_custom_call.1} parent=31 // pred_check_branch
          %214 = sbr.rel (%p212) target = $region44
        $region43: #{tpu_custom_call.1} parent=31 // pred_region
          %215 = dma.done %s208, 512
        $region44: #{tpu_custom_call.1} parent=31 // pred_fallthru
          _
        %p216 = pneg %p37
        %p217 = pneg %p34
        %s218 = sand.u32 %s21, 1
        %s219 = scalar_lea.sflag [#allocation6], %s218
        %s220 = sand.u32 %s50, 1
        %s221 = smul.addr %s220, 8192
        %s222 = scalar_lea.vmem [#allocation5], %s221
        %p223 = pneg %p63
        %p224 = pneg %p60
        %s225 = sand.u32 %s21, 1
        %s226 = scalar_lea.sflag [#allocation6], %s225
        %s227 = sand.u32 %s76, 1
        %s228 = smul.addr %s227, 32
        %s229 = scalar_lea.vmem [#allocation7], %s228
        %p230 = pneg %p89
        %p231 = pneg %p86
        %p232 = pneg %p115
        %p233 = pneg %p112
        %s234 = sand.u32 %s102, 1
        %s235 = scalar_lea.sflag [#allocation4], %s234
        %s236 = sand.u32 %s102, 1
        %s237 = smul.addr %s236, 16
        %s238 = scalar_lea.vmem [#allocation8], %s237
        %s239 = smul.u32 8, %s21
        %s240 = smul.u32 8, %s21
        %s241 = smul.u32 8, %s21
        %v242 = vld [vmem:[#allocation2] sm:$0xff]
        %v243 = vld [vmem:[#allocation2 + $0x8] sm:$0xff]
        %v244 = vld [vmem:[#allocation2 + $0x10] sm:$0xff]
        %v245 = vld [vmem:[#allocation2 + $0x18] sm:$0xff]
        %v246 = vld [vmem:[#allocation2 + $0x20] sm:$0xff]
        %v247 = vld [vmem:[#allocation2 + $0x28] sm:$0xff]
        %v248 = vld [vmem:[#allocation2 + $0x30] sm:$0xff]
        %v249 = vld [vmem:[#allocation2 + $0x38] sm:$0xff]
        %v250 = vld [vmem:[#allocation2 + $0x40] sm:$0xff]
        %v251 = vld [vmem:[#allocation2 + $0x48] sm:$0xff]
        %v252 = vld [vmem:[#allocation2 + $0x50] sm:$0xff]
        %v253 = vld [vmem:[#allocation2 + $0x58] sm:$0xff]
        %v254 = vld [vmem:[#allocation2 + $0x60] sm:$0xff]
        %v255 = vld [vmem:[#allocation2 + $0x68] sm:$0xff]
        %v256 = vld [vmem:[#allocation2 + $0x70] sm:$0xff]
        %v257 = vld [vmem:[#allocation2 + $0x78] sm:$0xff]
        %v258 = vld [vmem:[#allocation2 + $0x80] sm:$0xff]
        %v259 = vld [vmem:[#allocation2 + $0x88] sm:$0xff]
        %v260 = vld [vmem:[#allocation2 + $0x90] sm:$0xff]
        %v261 = vld [vmem:[#allocation2 + $0x98] sm:$0xff]
        %v262 = vld [vmem:[#allocation2 + $0xa0] sm:$0xff]
        %v263 = vld [vmem:[#allocation2 + $0xa8] sm:$0xff]
        %v264 = vld [vmem:[#allocation2 + $0xb0] sm:$0xff]
        %v265 = vld [vmem:[#allocation2 + $0xb8] sm:$0xff]
        %v266 = vld [vmem:[#allocation2 + $0xc0] sm:$0xff]
        %v267 = vld [vmem:[#allocation2 + $0xc8] sm:$0xff]
        %v268 = vld [vmem:[#allocation2 + $0xd0] sm:$0xff]
        %v269 = vld [vmem:[#allocation2 + $0xd8] sm:$0xff]
        %v270 = vld [vmem:[#allocation2 + $0xe0] sm:$0xff]
        %v271 = vld [vmem:[#allocation2 + $0xe8] sm:$0xff]
        %v272 = vld [vmem:[#allocation2 + $0xf0] sm:$0xff]
        %v273 = vld [vmem:[#allocation2 + $0xf8] sm:$0xff]
        %v274 = vld [vmem:[#allocation2 + $0x100] sm:$0xff]
        %v275 = vld [vmem:[#allocation2 + $0x108] sm:$0xff]
        %v276 = vld [vmem:[#allocation2 + $0x110] sm:$0xff]
        %v277 = vld [vmem:[#allocation2 + $0x118] sm:$0xff]
        %v278 = vld [vmem:[#allocation2 + $0x120] sm:$0xff]
        %v279 = vld [vmem:[#allocation2 + $0x128] sm:$0xff]
        %v280 = vld [vmem:[#allocation2 + $0x130] sm:$0xff]
        %v281 = vld [vmem:[#allocation2 + $0x138] sm:$0xff]
        %v282 = vld [vmem:[#allocation2 + $0x140] sm:$0xff]
        %v283 = vld [vmem:[#allocation2 + $0x148] sm:$0xff]
        %v284 = vld [vmem:[#allocation2 + $0x150] sm:$0xff]
        %v285 = vld [vmem:[#allocation2 + $0x158] sm:$0xff]
        %v286 = vld [vmem:[#allocation2 + $0x160] sm:$0xff]
        %v287 = vld [vmem:[#allocation2 + $0x168] sm:$0xff]
        %v288 = vld [vmem:[#allocation2 + $0x170] sm:$0xff]
        %v289 = vld [vmem:[#allocation2 + $0x178] sm:$0xff]
        %v290 = vld [vmem:[#allocation2 + $0x180] sm:$0xff]
        %v291 = vld [vmem:[#allocation2 + $0x188] sm:$0xff]
        %v292 = vld [vmem:[#allocation2 + $0x190] sm:$0xff]
        %v293 = vld [vmem:[#allocation2 + $0x198] sm:$0xff]
        %v294 = vld [vmem:[#allocation2 + $0x1a0] sm:$0xff]
        %v295 = vld [vmem:[#allocation2 + $0x1a8] sm:$0xff]
        %v296 = vld [vmem:[#allocation2 + $0x1b0] sm:$0xff]
        %v297 = vld [vmem:[#allocation2 + $0x1b8] sm:$0xff]
        %v298 = vld [vmem:[#allocation2 + $0x1c0] sm:$0xff]
        %v299 = vld [vmem:[#allocation2 + $0x1c8] sm:$0xff]
        %v300 = vld [vmem:[#allocation2 + $0x1d0] sm:$0xff]
        %v301 = vld [vmem:[#allocation2 + $0x1d8] sm:$0xff]
        %v302 = vld [vmem:[#allocation2 + $0x1e0] sm:$0xff]
        %v303 = vld [vmem:[#allocation2 + $0x1e8] sm:$0xff]
        %v304 = vld [vmem:[#allocation2 + $0x1f0] sm:$0xff]
        %v305 = vld [vmem:[#allocation2 + $0x1f8] sm:$0xff]
        %v306 = vadd.f32 %v242, %v258
        %v307 = vrot.slane %v306, 4
        %v308 = vadd.f32 %v306, %v307
        %v309 = vrot.slane %v308, 2
        %v310 = vadd.f32 %v308, %v309
        %v311 = vrot.slane %v310, 1
        %v312 = vadd.f32 %v310, %v311
        %v313 = vadd.f32 %v243, %v259
        %v314 = vrot.slane %v313, 4
        %v315 = vadd.f32 %v313, %v314
        %v316 = vrot.slane %v315, 2
        %v317 = vadd.f32 %v315, %v316
        %v318 = vrot.slane %v317, 1
        %v319 = vadd.f32 %v317, %v318
        %v320 = vadd.f32 %v244, %v260
        %v321 = vrot.slane %v320, 4
        %v322 = vadd.f32 %v320, %v321
        %v323 = vrot.slane %v322, 2
        %v324 = vadd.f32 %v322, %v323
        %v325 = vrot.slane %v324, 1
        %v326 = vadd.f32 %v324, %v325
        %v327 = vadd.f32 %v245, %v261
        %v328 = vrot.slane %v327, 4
        %v329 = vadd.f32 %v327, %v328
        %v330 = vrot.slane %v329, 2
        %v331 = vadd.f32 %v329, %v330
        %v332 = vrot.slane %v331, 1
        %v333 = vadd.f32 %v331, %v332
        %v334 = vadd.f32 %v246, %v262
        %v335 = vrot.slane %v334, 4
        %v336 = vadd.f32 %v334, %v335
        %v337 = vrot.slane %v336, 2
        %v338 = vadd.f32 %v336, %v337
        %v339 = vrot.slane %v338, 1
        %v340 = vadd.f32 %v338, %v339
        %v341 = vadd.f32 %v247, %v263
        %v342 = vrot.slane %v341, 4
        %v343 = vadd.f32 %v341, %v342
        %v344 = vrot.slane %v343, 2
        %v345 = vadd.f32 %v343, %v344
        %v346 = vrot.slane %v345, 1
        %v347 = vadd.f32 %v345, %v346
        %v348 = vadd.f32 %v248, %v264
        %v349 = vrot.slane %v348, 4
        %v350 = vadd.f32 %v348, %v349
        %v351 = vrot.slane %v350, 2
        %v352 = vadd.f32 %v350, %v351
        %v353 = vrot.slane %v352, 1
        %v354 = vadd.f32 %v352, %v353
        %v355 = vadd.f32 %v249, %v265
        %v356 = vrot.slane %v355, 4
        %v357 = vadd.f32 %v355, %v356
        %v358 = vrot.slane %v357, 2
        %v359 = vadd.f32 %v357, %v358
        %v360 = vrot.slane %v359, 1
        %v361 = vadd.f32 %v359, %v360
        %v362 = vadd.f32 %v250, %v266
        %v363 = vrot.slane %v362, 4
        %v364 = vadd.f32 %v362, %v363
        %v365 = vrot.slane %v364, 2
        %v366 = vadd.f32 %v364, %v365
        %v367 = vrot.slane %v366, 1
        %v368 = vadd.f32 %v366, %v367
        %v369 = vadd.f32 %v251, %v267
        %v370 = vrot.slane %v369, 4
        %v371 = vadd.f32 %v369, %v370
        %v372 = vrot.slane %v371, 2
        %v373 = vadd.f32 %v371, %v372
        %v374 = vrot.slane %v373, 1
        %v375 = vadd.f32 %v373, %v374
        %v376 = vadd.f32 %v252, %v268
        %v377 = vrot.slane %v376, 4
        %v378 = vadd.f32 %v376, %v377
        %v379 = vrot.slane %v378, 2
        %v380 = vadd.f32 %v378, %v379
        %v381 = vrot.slane %v380, 1
        %v382 = vadd.f32 %v380, %v381
        %v383 = vadd.f32 %v253, %v269
        %v384 = vrot.slane %v383, 4
        %v385 = vadd.f32 %v383, %v384
        %v386 = vrot.slane %v385, 2
        %v387 = vadd.f32 %v385, %v386
        %v388 = vrot.slane %v387, 1
        %v389 = vadd.f32 %v387, %v388
        %v390 = vadd.f32 %v254, %v270
        %v391 = vrot.slane %v390, 4
        %v392 = vadd.f32 %v390, %v391
        %v393 = vrot.slane %v392, 2
        %v394 = vadd.f32 %v392, %v393
        %v395 = vrot.slane %v394, 1
        %v396 = vadd.f32 %v394, %v395
        %v397 = vadd.f32 %v255, %v271
        %v398 = vrot.slane %v397, 4
        %v399 = vadd.f32 %v397, %v398
        %v400 = vrot.slane %v399, 2
        %v401 = vadd.f32 %v399, %v400
        %v402 = vrot.slane %v401, 1
        %v403 = vadd.f32 %v401, %v402
        %v404 = vadd.f32 %v256, %v272
        %v405 = vrot.slane %v404, 4
        %v406 = vadd.f32 %v404, %v405
        %v407 = vrot.slane %v406, 2
        %v408 = vadd.f32 %v406, %v407
        %v409 = vrot.slane %v408, 1
        %v410 = vadd.f32 %v408, %v409
        %v411 = vadd.f32 %v257, %v273
        %v412 = vrot.slane %v411, 4
        %v413 = vadd.f32 %v411, %v412
        %v414 = vrot.slane %v413, 2
        %v415 = vadd.f32 %v413, %v414
        %v416 = vrot.slane %v415, 1
        %v417 = vadd.f32 %v415, %v416
        %v418 = vadd.f32 %v274, %v290
        %v419 = vrot.slane %v418, 4
        %v420 = vadd.f32 %v418, %v419
        %v421 = vrot.slane %v420, 2
        %v422 = vadd.f32 %v420, %v421
        %v423 = vrot.slane %v422, 1
        %v424 = vadd.f32 %v422, %v423
        %v425 = vadd.f32 %v275, %v291
        %v426 = vrot.slane %v425, 4
        %v427 = vadd.f32 %v425, %v426
        %v428 = vrot.slane %v427, 2
        %v429 = vadd.f32 %v427, %v428
        %v430 = vrot.slane %v429, 1
        %v431 = vadd.f32 %v429, %v430
        %v432 = vadd.f32 %v276, %v292
        %v433 = vrot.slane %v432, 4
        %v434 = vadd.f32 %v432, %v433
        %v435 = vrot.slane %v434, 2
        %v436 = vadd.f32 %v434, %v435
        %v437 = vrot.slane %v436, 1
        %v438 = vadd.f32 %v436, %v437
        %v439 = vadd.f32 %v277, %v293
        %v440 = vrot.slane %v439, 4
        %v441 = vadd.f32 %v439, %v440
        %v442 = vrot.slane %v441, 2
        %v443 = vadd.f32 %v441, %v442
        %v444 = vrot.slane %v443, 1
        %v445 = vadd.f32 %v443, %v444
        %v446 = vadd.f32 %v278, %v294
        %v447 = vrot.slane %v446, 4
        %v448 = vadd.f32 %v446, %v447
        %v449 = vrot.slane %v448, 2
        %v450 = vadd.f32 %v448, %v449
        %v451 = vrot.slane %v450, 1
        %v452 = vadd.f32 %v450, %v451
        %v453 = vadd.f32 %v279, %v295
        %v454 = vrot.slane %v453, 4
        %v455 = vadd.f32 %v453, %v454
        %v456 = vrot.slane %v455, 2
        %v457 = vadd.f32 %v455, %v456
        %v458 = vrot.slane %v457, 1
        %v459 = vadd.f32 %v457, %v458
        %v460 = vadd.f32 %v280, %v296
        %v461 = vrot.slane %v460, 4
        %v462 = vadd.f32 %v460, %v461
        %v463 = vrot.slane %v462, 2
        %v464 = vadd.f32 %v462, %v463
        %v465 = vrot.slane %v464, 1
        %v466 = vadd.f32 %v464, %v465
        %v467 = vadd.f32 %v281, %v297
        %v468 = vrot.slane %v467, 4
        %v469 = vadd.f32 %v467, %v468
        %v470 = vrot.slane %v469, 2
        %v471 = vadd.f32 %v469, %v470
        %v472 = vrot.slane %v471, 1
        %v473 = vadd.f32 %v471, %v472
        %v474 = vadd.f32 %v282, %v298
        %v475 = vrot.slane %v474, 4
        %v476 = vadd.f32 %v474, %v475
        %v477 = vrot.slane %v476, 2
        %v478 = vadd.f32 %v476, %v477
        %v479 = vrot.slane %v478, 1
        %v480 = vadd.f32 %v478, %v479
        %v481 = vadd.f32 %v283, %v299
        %v482 = vrot.slane %v481, 4
        %v483 = vadd.f32 %v481, %v482
        %v484 = vrot.slane %v483, 2
        %v485 = vadd.f32 %v483, %v484
        %v486 = vrot.slane %v485, 1
        %v487 = vadd.f32 %v485, %v486
        %v488 = vadd.f32 %v284, %v300
        %v489 = vrot.slane %v488, 4
        %v490 = vadd.f32 %v488, %v489
        %v491 = vrot.slane %v490, 2
        %v492 = vadd.f32 %v490, %v491
        %v493 = vrot.slane %v492, 1
        %v494 = vadd.f32 %v492, %v493
        %v495 = vadd.f32 %v285, %v301
        %v496 = vrot.slane %v495, 4
        %v497 = vadd.f32 %v495, %v496
        %v498 = vrot.slane %v497, 2
        %v499 = vadd.f32 %v497, %v498
        %v500 = vrot.slane %v499, 1
        %v501 = vadd.f32 %v499, %v500
        %v502 = vadd.f32 %v286, %v302
        %v503 = vrot.slane %v502, 4
        %v504 = vadd.f32 %v502, %v503
        %v505 = vrot.slane %v504, 2
        %v506 = vadd.f32 %v504, %v505
        %v507 = vrot.slane %v506, 1
        %v508 = vadd.f32 %v506, %v507
        %v509 = vadd.f32 %v287, %v303
        %v510 = vrot.slane %v509, 4
        %v511 = vadd.f32 %v509, %v510
        %v512 = vrot.slane %v511, 2
        %v513 = vadd.f32 %v511, %v512
        %v514 = vrot.slane %v513, 1
        %v515 = vadd.f32 %v513, %v514
        %v516 = vadd.f32 %v288, %v304
        %v517 = vrot.slane %v516, 4
        %v518 = vadd.f32 %v516, %v517
        %v519 = vrot.slane %v518, 2
        %v520 = vadd.f32 %v518, %v519
        %v521 = vrot.slane %v520, 1
        %v522 = vadd.f32 %v520, %v521
        %v523 = vadd.f32 %v289, %v305
        %v524 = vrot.slane %v523, 4
        %v525 = vadd.f32 %v523, %v524
        %v526 = vrot.slane %v525, 2
        %v527 = vadd.f32 %v525, %v526
        %v528 = vrot.slane %v527, 1
        %v529 = vadd.f32 %v527, %v528
        %v530 = vrcp.pop 16.0
        %v531 = vmul.f32 %v312, %v530
        %v532 = vmul.f32 %v319, %v530
        %v533 = vmul.f32 %v326, %v530
        %v534 = vmul.f32 %v333, %v530
        %v535 = vmul.f32 %v340, %v530
        %v536 = vmul.f32 %v347, %v530
        %v537 = vmul.f32 %v354, %v530
        %v538 = vmul.f32 %v361, %v530
        %v539 = vmul.f32 %v368, %v530
        %v540 = vmul.f32 %v375, %v530
        %v541 = vmul.f32 %v382, %v530
        %v542 = vmul.f32 %v389, %v530
        %v543 = vmul.f32 %v396, %v530
        %v544 = vmul.f32 %v403, %v530
        %v545 = vmul.f32 %v410, %v530
        %v546 = vmul.f32 %v417, %v530
        %v547 = vmul.f32 %v424, %v530
        %v548 = vmul.f32 %v431, %v530
        %v549 = vmul.f32 %v438, %v530
        %v550 = vmul.f32 %v445, %v530
        %v551 = vmul.f32 %v452, %v530
        %v552 = vmul.f32 %v459, %v530
        %v553 = vmul.f32 %v466, %v530
        %v554 = vmul.f32 %v473, %v530
        %v555 = vmul.f32 %v480, %v530
        %v556 = vmul.f32 %v487, %v530
        %v557 = vmul.f32 %v494, %v530
        %v558 = vmul.f32 %v501, %v530
        %v559 = vmul.f32 %v508, %v530
        %v560 = vmul.f32 %v515, %v530
        %v561 = vmul.f32 %v522, %v530
        %v562 = vmul.f32 %v529, %v530
        %v563 = vld [vmem:[%s202] sm:$0xff]
        %v564 = vld [vmem:[%s202 + $0x8] sm:$0xff]
        %v565 = vld [vmem:[%s202 + $0x10] sm:$0xff]
        %v566 = vld [vmem:[%s202 + $0x18] sm:$0xff]
        %v567 = vld [vmem:[%s202 + $0x20] sm:$0xff]
        %v568 = vld [vmem:[%s202 + $0x28] sm:$0xff]
        %v569 = vld [vmem:[%s202 + $0x30] sm:$0xff]
        %v570 = vld [vmem:[%s202 + $0x38] sm:$0xff]
        %v571 = vld [vmem:[%s202 + $0x40] sm:$0xff]
        %v572 = vld [vmem:[%s202 + $0x48] sm:$0xff]
        %v573 = vld [vmem:[%s202 + $0x50] sm:$0xff]
        %v574 = vld [vmem:[%s202 + $0x58] sm:$0xff]
        %v575 = vld [vmem:[%s202 + $0x60] sm:$0xff]
        %v576 = vld [vmem:[%s202 + $0x68] sm:$0xff]
        %v577 = vld [vmem:[%s202 + $0x70] sm:$0xff]
        %v578 = vld [vmem:[%s202 + $0x78] sm:$0xff]
        %v579 = vld [vmem:[%s202 + $0x80] sm:$0xff]
        %v580 = vld [vmem:[%s202 + $0x88] sm:$0xff]
        %v581 = vld [vmem:[%s202 + $0x90] sm:$0xff]
        %v582 = vld [vmem:[%s202 + $0x98] sm:$0xff]
        %v583 = vld [vmem:[%s202 + $0xa0] sm:$0xff]
        %v584 = vld [vmem:[%s202 + $0xa8] sm:$0xff]
        %v585 = vld [vmem:[%s202 + $0xb0] sm:$0xff]
        %v586 = vld [vmem:[%s202 + $0xb8] sm:$0xff]
        %v587 = vld [vmem:[%s202 + $0xc0] sm:$0xff]
        %v588 = vld [vmem:[%s202 + $0xc8] sm:$0xff]
        %v589 = vld [vmem:[%s202 + $0xd0] sm:$0xff]
        %v590 = vld [vmem:[%s202 + $0xd8] sm:$0xff]
        %v591 = vld [vmem:[%s202 + $0xe0] sm:$0xff]
        %v592 = vld [vmem:[%s202 + $0xe8] sm:$0xff]
        %v593 = vld [vmem:[%s202 + $0xf0] sm:$0xff]
        %v594 = vld [vmem:[%s202 + $0xf8] sm:$0xff]
        %v595 = vld [vmem:[%s202 + $0x100] sm:$0xff]
        %v596 = vld [vmem:[%s202 + $0x108] sm:$0xff]
        %v597 = vld [vmem:[%s202 + $0x110] sm:$0xff]
        %v598 = vld [vmem:[%s202 + $0x118] sm:$0xff]
        %v599 = vld [vmem:[%s202 + $0x120] sm:$0xff]
        %v600 = vld [vmem:[%s202 + $0x128] sm:$0xff]
        %v601 = vld [vmem:[%s202 + $0x130] sm:$0xff]
        %v602 = vld [vmem:[%s202 + $0x138] sm:$0xff]
        %v603 = vld [vmem:[%s202 + $0x140] sm:$0xff]
        %v604 = vld [vmem:[%s202 + $0x148] sm:$0xff]
        %v605 = vld [vmem:[%s202 + $0x150] sm:$0xff]
        %v606 = vld [vmem:[%s202 + $0x158] sm:$0xff]
        %v607 = vld [vmem:[%s202 + $0x160] sm:$0xff]
        %v608 = vld [vmem:[%s202 + $0x168] sm:$0xff]
        %v609 = vld [vmem:[%s202 + $0x170] sm:$0xff]
        %v610 = vld [vmem:[%s202 + $0x178] sm:$0xff]
        %v611 = vld [vmem:[%s202 + $0x180] sm:$0xff]
        %v612 = vld [vmem:[%s202 + $0x188] sm:$0xff]
        %v613 = vld [vmem:[%s202 + $0x190] sm:$0xff]
        %v614 = vld [vmem:[%s202 + $0x198] sm:$0xff]
        %v615 = vld [vmem:[%s202 + $0x1a0] sm:$0xff]
        %v616 = vld [vmem:[%s202 + $0x1a8] sm:$0xff]
        %v617 = vld [vmem:[%s202 + $0x1b0] sm:$0xff]
        %v618 = vld [vmem:[%s202 + $0x1b8] sm:$0xff]
        %v619 = vld [vmem:[%s202 + $0x1c0] sm:$0xff]
        %v620 = vld [vmem:[%s202 + $0x1c8] sm:$0xff]
        %v621 = vld [vmem:[%s202 + $0x1d0] sm:$0xff]
        %v622 = vld [vmem:[%s202 + $0x1d8] sm:$0xff]
        %v623 = vld [vmem:[%s202 + $0x1e0] sm:$0xff]
        %v624 = vld [vmem:[%s202 + $0x1e8] sm:$0xff]
        %v625 = vld [vmem:[%s202 + $0x1f0] sm:$0xff]
        %v626 = vld [vmem:[%s202 + $0x1f8] sm:$0xff]
        %v627 = vld [vmem:[%s202 + $0x200] sm:$0xff]
        %v628 = vld [vmem:[%s202 + $0x208] sm:$0xff]
        %v629 = vld [vmem:[%s202 + $0x210] sm:$0xff]
        %v630 = vld [vmem:[%s202 + $0x218] sm:$0xff]
        %v631 = vld [vmem:[%s202 + $0x220] sm:$0xff]
        %v632 = vld [vmem:[%s202 + $0x228] sm:$0xff]
        %v633 = vld [vmem:[%s202 + $0x230] sm:$0xff]
        %v634 = vld [vmem:[%s202 + $0x238] sm:$0xff]
        %v635 = vld [vmem:[%s202 + $0x240] sm:$0xff]
        %v636 = vld [vmem:[%s202 + $0x248] sm:$0xff]
        %v637 = vld [vmem:[%s202 + $0x250] sm:$0xff]
        %v638 = vld [vmem:[%s202 + $0x258] sm:$0xff]
        %v639 = vld [vmem:[%s202 + $0x260] sm:$0xff]
        %v640 = vld [vmem:[%s202 + $0x268] sm:$0xff]
        %v641 = vld [vmem:[%s202 + $0x270] sm:$0xff]
        %v642 = vld [vmem:[%s202 + $0x278] sm:$0xff]
        %v643 = vld [vmem:[%s202 + $0x280] sm:$0xff]
        %v644 = vld [vmem:[%s202 + $0x288] sm:$0xff]
        %v645 = vld [vmem:[%s202 + $0x290] sm:$0xff]
        %v646 = vld [vmem:[%s202 + $0x298] sm:$0xff]
        %v647 = vld [vmem:[%s202 + $0x2a0] sm:$0xff]
        %v648 = vld [vmem:[%s202 + $0x2a8] sm:$0xff]
        %v649 = vld [vmem:[%s202 + $0x2b0] sm:$0xff]
        %v650 = vld [vmem:[%s202 + $0x2b8] sm:$0xff]
        %v651 = vld [vmem:[%s202 + $0x2c0] sm:$0xff]
        %v652 = vld [vmem:[%s202 + $0x2c8] sm:$0xff]
        %v653 = vld [vmem:[%s202 + $0x2d0] sm:$0xff]
        %v654 = vld [vmem:[%s202 + $0x2d8] sm:$0xff]
        %v655 = vld [vmem:[%s202 + $0x2e0] sm:$0xff]
        %v656 = vld [vmem:[%s202 + $0x2e8] sm:$0xff]
        %v657 = vld [vmem:[%s202 + $0x2f0] sm:$0xff]
        %v658 = vld [vmem:[%s202 + $0x2f8] sm:$0xff]
        %v659 = vld [vmem:[%s202 + $0x300] sm:$0xff]
        %v660 = vld [vmem:[%s202 + $0x308] sm:$0xff]
        %v661 = vld [vmem:[%s202 + $0x310] sm:$0xff]
        %v662 = vld [vmem:[%s202 + $0x318] sm:$0xff]
        %v663 = vld [vmem:[%s202 + $0x320] sm:$0xff]
        %v664 = vld [vmem:[%s202 + $0x328] sm:$0xff]
        %v665 = vld [vmem:[%s202 + $0x330] sm:$0xff]
        %v666 = vld [vmem:[%s202 + $0x338] sm:$0xff]
        %v667 = vld [vmem:[%s202 + $0x340] sm:$0xff]
        %v668 = vld [vmem:[%s202 + $0x348] sm:$0xff]
        %v669 = vld [vmem:[%s202 + $0x350] sm:$0xff]
        %v670 = vld [vmem:[%s202 + $0x358] sm:$0xff]
        %v671 = vld [vmem:[%s202 + $0x360] sm:$0xff]
        %v672 = vld [vmem:[%s202 + $0x368] sm:$0xff]
        %v673 = vld [vmem:[%s202 + $0x370] sm:$0xff]
        %v674 = vld [vmem:[%s202 + $0x378] sm:$0xff]
        %v675 = vld [vmem:[%s202 + $0x380] sm:$0xff]
        %v676 = vld [vmem:[%s202 + $0x388] sm:$0xff]
        %v677 = vld [vmem:[%s202 + $0x390] sm:$0xff]
        %v678 = vld [vmem:[%s202 + $0x398] sm:$0xff]
        %v679 = vld [vmem:[%s202 + $0x3a0] sm:$0xff]
        %v680 = vld [vmem:[%s202 + $0x3a8] sm:$0xff]
        %v681 = vld [vmem:[%s202 + $0x3b0] sm:$0xff]
        %v682 = vld [vmem:[%s202 + $0x3b8] sm:$0xff]
        %v683 = vld [vmem:[%s202 + $0x3c0] sm:$0xff]
        %v684 = vld [vmem:[%s202 + $0x3c8] sm:$0xff]
        %v685 = vld [vmem:[%s202 + $0x3d0] sm:$0xff]
        %v686 = vld [vmem:[%s202 + $0x3d8] sm:$0xff]
        %v687 = vld [vmem:[%s202 + $0x3e0] sm:$0xff]
        %v688 = vld [vmem:[%s202 + $0x3e8] sm:$0xff]
        %v689 = vld [vmem:[%s202 + $0x3f0] sm:$0xff]
        %v690 = vld [vmem:[%s202 + $0x3f8] sm:$0xff]
        %v691 = vld [vmem:[%s202 + $0x400] sm:$0xff]
        %v692 = vld [vmem:[%s202 + $0x408] sm:$0xff]
        %v693 = vld [vmem:[%s202 + $0x410] sm:$0xff]
        %v694 = vld [vmem:[%s202 + $0x418] sm:$0xff]
        %v695 = vld [vmem:[%s202 + $0x420] sm:$0xff]
        %v696 = vld [vmem:[%s202 + $0x428] sm:$0xff]
        %v697 = vld [vmem:[%s202 + $0x430] sm:$0xff]
        %v698 = vld [vmem:[%s202 + $0x438] sm:$0xff]
        %v699 = vld [vmem:[%s202 + $0x440] sm:$0xff]
        %v700 = vld [vmem:[%s202 + $0x448] sm:$0xff]
        %v701 = vld [vmem:[%s202 + $0x450] sm:$0xff]
        %v702 = vld [vmem:[%s202 + $0x458] sm:$0xff]
        %v703 = vld [vmem:[%s202 + $0x460] sm:$0xff]
        %v704 = vld [vmem:[%s202 + $0x468] sm:$0xff]
        %v705 = vld [vmem:[%s202 + $0x470] sm:$0xff]
        %v706 = vld [vmem:[%s202 + $0x478] sm:$0xff]
        %v707 = vld [vmem:[%s202 + $0x480] sm:$0xff]
        %v708 = vld [vmem:[%s202 + $0x488] sm:$0xff]
        %v709 = vld [vmem:[%s202 + $0x490] sm:$0xff]
        %v710 = vld [vmem:[%s202 + $0x498] sm:$0xff]
        %v711 = vld [vmem:[%s202 + $0x4a0] sm:$0xff]
        %v712 = vld [vmem:[%s202 + $0x4a8] sm:$0xff]
        %v713 = vld [vmem:[%s202 + $0x4b0] sm:$0xff]
        %v714 = vld [vmem:[%s202 + $0x4b8] sm:$0xff]
        %v715 = vld [vmem:[%s202 + $0x4c0] sm:$0xff]
        %v716 = vld [vmem:[%s202 + $0x4c8] sm:$0xff]
        %v717 = vld [vmem:[%s202 + $0x4d0] sm:$0xff]
        %v718 = vld [vmem:[%s202 + $0x4d8] sm:$0xff]
        %v719 = vld [vmem:[%s202 + $0x4e0] sm:$0xff]
        %v720 = vld [vmem:[%s202 + $0x4e8] sm:$0xff]
        %v721 = vld [vmem:[%s202 + $0x4f0] sm:$0xff]
        %v722 = vld [vmem:[%s202 + $0x4f8] sm:$0xff]
        %v723 = vld [vmem:[%s202 + $0x500] sm:$0xff]
        %v724 = vld [vmem:[%s202 + $0x508] sm:$0xff]
        %v725 = vld [vmem:[%s202 + $0x510] sm:$0xff]
        %v726 = vld [vmem:[%s202 + $0x518] sm:$0xff]
        %v727 = vld [vmem:[%s202 + $0x520] sm:$0xff]
        %v728 = vld [vmem:[%s202 + $0x528] sm:$0xff]
        %v729 = vld [vmem:[%s202 + $0x530] sm:$0xff]
        %v730 = vld [vmem:[%s202 + $0x538] sm:$0xff]
        %v731 = vld [vmem:[%s202 + $0x540] sm:$0xff]
        %v732 = vld [vmem:[%s202 + $0x548] sm:$0xff]
        %v733 = vld [vmem:[%s202 + $0x550] sm:$0xff]
        %v734 = vld [vmem:[%s202 + $0x558] sm:$0xff]
        %v735 = vld [vmem:[%s202 + $0x560] sm:$0xff]
        %v736 = vld [vmem:[%s202 + $0x568] sm:$0xff]
        %v737 = vld [vmem:[%s202 + $0x570] sm:$0xff]
        %v738 = vld [vmem:[%s202 + $0x578] sm:$0xff]
        %v739 = vld [vmem:[%s202 + $0x580] sm:$0xff]
        %v740 = vld [vmem:[%s202 + $0x588] sm:$0xff]
        %v741 = vld [vmem:[%s202 + $0x590] sm:$0xff]
        %v742 = vld [vmem:[%s202 + $0x598] sm:$0xff]
        %v743 = vld [vmem:[%s202 + $0x5a0] sm:$0xff]
        %v744 = vld [vmem:[%s202 + $0x5a8] sm:$0xff]
        %v745 = vld [vmem:[%s202 + $0x5b0] sm:$0xff]
        %v746 = vld [vmem:[%s202 + $0x5b8] sm:$0xff]
        %v747 = vld [vmem:[%s202 + $0x5c0] sm:$0xff]
        %v748 = vld [vmem:[%s202 + $0x5c8] sm:$0xff]
        %v749 = vld [vmem:[%s202 + $0x5d0] sm:$0xff]
        %v750 = vld [vmem:[%s202 + $0x5d8] sm:$0xff]
        %v751 = vld [vmem:[%s202 + $0x5e0] sm:$0xff]
        %v752 = vld [vmem:[%s202 + $0x5e8] sm:$0xff]
        %v753 = vld [vmem:[%s202 + $0x5f0] sm:$0xff]
        %v754 = vld [vmem:[%s202 + $0x5f8] sm:$0xff]
        %v755 = vld [vmem:[%s202 + $0x600] sm:$0xff]
        %v756 = vld [vmem:[%s202 + $0x608] sm:$0xff]
        %v757 = vld [vmem:[%s202 + $0x610] sm:$0xff]
        %v758 = vld [vmem:[%s202 + $0x618] sm:$0xff]
        %v759 = vld [vmem:[%s202 + $0x620] sm:$0xff]
        %v760 = vld [vmem:[%s202 + $0x628] sm:$0xff]
        %v761 = vld [vmem:[%s202 + $0x630] sm:$0xff]
        %v762 = vld [vmem:[%s202 + $0x638] sm:$0xff]
        %v763 = vld [vmem:[%s202 + $0x640] sm:$0xff]
        %v764 = vld [vmem:[%s202 + $0x648] sm:$0xff]
        %v765 = vld [vmem:[%s202 + $0x650] sm:$0xff]
        %v766 = vld [vmem:[%s202 + $0x658] sm:$0xff]
        %v767 = vld [vmem:[%s202 + $0x660] sm:$0xff]
        %v768 = vld [vmem:[%s202 + $0x668] sm:$0xff]
        %v769 = vld [vmem:[%s202 + $0x670] sm:$0xff]
        %v770 = vld [vmem:[%s202 + $0x678] sm:$0xff]
        %v771 = vld [vmem:[%s202 + $0x680] sm:$0xff]
        %v772 = vld [vmem:[%s202 + $0x688] sm:$0xff]
        %v773 = vld [vmem:[%s202 + $0x690] sm:$0xff]
        %v774 = vld [vmem:[%s202 + $0x698] sm:$0xff]
        %v775 = vld [vmem:[%s202 + $0x6a0] sm:$0xff]
        %v776 = vld [vmem:[%s202 + $0x6a8] sm:$0xff]
        %v777 = vld [vmem:[%s202 + $0x6b0] sm:$0xff]
        %v778 = vld [vmem:[%s202 + $0x6b8] sm:$0xff]
        %v779 = vld [vmem:[%s202 + $0x6c0] sm:$0xff]
        %v780 = vld [vmem:[%s202 + $0x6c8] sm:$0xff]
        %v781 = vld [vmem:[%s202 + $0x6d0] sm:$0xff]
        %v782 = vld [vmem:[%s202 + $0x6d8] sm:$0xff]
        %v783 = vld [vmem:[%s202 + $0x6e0] sm:$0xff]
        %v784 = vld [vmem:[%s202 + $0x6e8] sm:$0xff]
        %v785 = vld [vmem:[%s202 + $0x6f0] sm:$0xff]
        %v786 = vld [vmem:[%s202 + $0x6f8] sm:$0xff]
        %v787 = vld [vmem:[%s202 + $0x700] sm:$0xff]
        %v788 = vld [vmem:[%s202 + $0x708] sm:$0xff]
        %v789 = vld [vmem:[%s202 + $0x710] sm:$0xff]
        %v790 = vld [vmem:[%s202 + $0x718] sm:$0xff]
        %v791 = vld [vmem:[%s202 + $0x720] sm:$0xff]
        %v792 = vld [vmem:[%s202 + $0x728] sm:$0xff]
        %v793 = vld [vmem:[%s202 + $0x730] sm:$0xff]
        %v794 = vld [vmem:[%s202 + $0x738] sm:$0xff]
        %v795 = vld [vmem:[%s202 + $0x740] sm:$0xff]
        %v796 = vld [vmem:[%s202 + $0x748] sm:$0xff]
        %v797 = vld [vmem:[%s202 + $0x750] sm:$0xff]
        %v798 = vld [vmem:[%s202 + $0x758] sm:$0xff]
        %v799 = vld [vmem:[%s202 + $0x760] sm:$0xff]
        %v800 = vld [vmem:[%s202 + $0x768] sm:$0xff]
        %v801 = vld [vmem:[%s202 + $0x770] sm:$0xff]
        %v802 = vld [vmem:[%s202 + $0x778] sm:$0xff]
        %v803 = vld [vmem:[%s202 + $0x780] sm:$0xff]
        %v804 = vld [vmem:[%s202 + $0x788] sm:$0xff]
        %v805 = vld [vmem:[%s202 + $0x790] sm:$0xff]
        %v806 = vld [vmem:[%s202 + $0x798] sm:$0xff]
        %v807 = vld [vmem:[%s202 + $0x7a0] sm:$0xff]
        %v808 = vld [vmem:[%s202 + $0x7a8] sm:$0xff]
        %v809 = vld [vmem:[%s202 + $0x7b0] sm:$0xff]
        %v810 = vld [vmem:[%s202 + $0x7b8] sm:$0xff]
        %v811 = vld [vmem:[%s202 + $0x7c0] sm:$0xff]
        %v812 = vld [vmem:[%s202 + $0x7c8] sm:$0xff]
        %v813 = vld [vmem:[%s202 + $0x7d0] sm:$0xff]
        %v814 = vld [vmem:[%s202 + $0x7d8] sm:$0xff]
        %v815 = vld [vmem:[%s202 + $0x7e0] sm:$0xff]
        %v816 = vld [vmem:[%s202 + $0x7e8] sm:$0xff]
        %v817 = vld [vmem:[%s202 + $0x7f0] sm:$0xff]
        %v818 = vld [vmem:[%s202 + $0x7f8] sm:$0xff]
        %v819 = vld [vmem:[%s202 + $0x800] sm:$0xff]
        %v820 = vld [vmem:[%s202 + $0x808] sm:$0xff]
        %v821 = vld [vmem:[%s202 + $0x810] sm:$0xff]
        %v822 = vld [vmem:[%s202 + $0x818] sm:$0xff]
        %v823 = vld [vmem:[%s202 + $0x820] sm:$0xff]
        %v824 = vld [vmem:[%s202 + $0x828] sm:$0xff]
        %v825 = vld [vmem:[%s202 + $0x830] sm:$0xff]
        %v826 = vld [vmem:[%s202 + $0x838] sm:$0xff]
        %v827 = vld [vmem:[%s202 + $0x840] sm:$0xff]
        %v828 = vld [vmem:[%s202 + $0x848] sm:$0xff]
        %v829 = vld [vmem:[%s202 + $0x850] sm:$0xff]
        %v830 = vld [vmem:[%s202 + $0x858] sm:$0xff]
        %v831 = vld [vmem:[%s202 + $0x860] sm:$0xff]
        %v832 = vld [vmem:[%s202 + $0x868] sm:$0xff]
        %v833 = vld [vmem:[%s202 + $0x870] sm:$0xff]
        %v834 = vld [vmem:[%s202 + $0x878] sm:$0xff]
        %v835 = vld [vmem:[%s202 + $0x880] sm:$0xff]
        %v836 = vld [vmem:[%s202 + $0x888] sm:$0xff]
        %v837 = vld [vmem:[%s202 + $0x890] sm:$0xff]
        %v838 = vld [vmem:[%s202 + $0x898] sm:$0xff]
        %v839 = vld [vmem:[%s202 + $0x8a0] sm:$0xff]
        %v840 = vld [vmem:[%s202 + $0x8a8] sm:$0xff]
        %v841 = vld [vmem:[%s202 + $0x8b0] sm:$0xff]
        %v842 = vld [vmem:[%s202 + $0x8b8] sm:$0xff]
        %v843 = vld [vmem:[%s202 + $0x8c0] sm:$0xff]
        %v844 = vld [vmem:[%s202 + $0x8c8] sm:$0xff]
        %v845 = vld [vmem:[%s202 + $0x8d0] sm:$0xff]
        %v846 = vld [vmem:[%s202 + $0x8d8] sm:$0xff]
        %v847 = vld [vmem:[%s202 + $0x8e0] sm:$0xff]
        %v848 = vld [vmem:[%s202 + $0x8e8] sm:$0xff]
        %v849 = vld [vmem:[%s202 + $0x8f0] sm:$0xff]
        %v850 = vld [vmem:[%s202 + $0x8f8] sm:$0xff]
        %v851 = vld [vmem:[%s202 + $0x900] sm:$0xff]
        %v852 = vld [vmem:[%s202 + $0x908] sm:$0xff]
        %v853 = vld [vmem:[%s202 + $0x910] sm:$0xff]
        %v854 = vld [vmem:[%s202 + $0x918] sm:$0xff]
        %v855 = vld [vmem:[%s202 + $0x920] sm:$0xff]
        %v856 = vld [vmem:[%s202 + $0x928] sm:$0xff]
        %v857 = vld [vmem:[%s202 + $0x930] sm:$0xff]
        %v858 = vld [vmem:[%s202 + $0x938] sm:$0xff]
        %v859 = vld [vmem:[%s202 + $0x940] sm:$0xff]
        %v860 = vld [vmem:[%s202 + $0x948] sm:$0xff]
        %v861 = vld [vmem:[%s202 + $0x950] sm:$0xff]
        %v862 = vld [vmem:[%s202 + $0x958] sm:$0xff]
        %v863 = vld [vmem:[%s202 + $0x960] sm:$0xff]
        %v864 = vld [vmem:[%s202 + $0x968] sm:$0xff]
        %v865 = vld [vmem:[%s202 + $0x970] sm:$0xff]
        %v866 = vld [vmem:[%s202 + $0x978] sm:$0xff]
        %v867 = vld [vmem:[%s202 + $0x980] sm:$0xff]
        %v868 = vld [vmem:[%s202 + $0x988] sm:$0xff]
        %v869 = vld [vmem:[%s202 + $0x990] sm:$0xff]
        %v870 = vld [vmem:[%s202 + $0x998] sm:$0xff]
        %v871 = vld [vmem:[%s202 + $0x9a0] sm:$0xff]
        %v872 = vld [vmem:[%s202 + $0x9a8] sm:$0xff]
        %v873 = vld [vmem:[%s202 + $0x9b0] sm:$0xff]
        %v874 = vld [vmem:[%s202 + $0x9b8] sm:$0xff]
        %v875 = vld [vmem:[%s202 + $0x9c0] sm:$0xff]
        %v876 = vld [vmem:[%s202 + $0x9c8] sm:$0xff]
        %v877 = vld [vmem:[%s202 + $0x9d0] sm:$0xff]
        %v878 = vld [vmem:[%s202 + $0x9d8] sm:$0xff]
        %v879 = vld [vmem:[%s202 + $0x9e0] sm:$0xff]
        %v880 = vld [vmem:[%s202 + $0x9e8] sm:$0xff]
        %v881 = vld [vmem:[%s202 + $0x9f0] sm:$0xff]
        %v882 = vld [vmem:[%s202 + $0x9f8] sm:$0xff]
        %v883 = vld [vmem:[%s202 + $0xa00] sm:$0xff]
        %v884 = vld [vmem:[%s202 + $0xa08] sm:$0xff]
        %v885 = vld [vmem:[%s202 + $0xa10] sm:$0xff]
        %v886 = vld [vmem:[%s202 + $0xa18] sm:$0xff]
        %v887 = vld [vmem:[%s202 + $0xa20] sm:$0xff]
        %v888 = vld [vmem:[%s202 + $0xa28] sm:$0xff]
        %v889 = vld [vmem:[%s202 + $0xa30] sm:$0xff]
        %v890 = vld [vmem:[%s202 + $0xa38] sm:$0xff]
        %v891 = vld [vmem:[%s202 + $0xa40] sm:$0xff]
        %v892 = vld [vmem:[%s202 + $0xa48] sm:$0xff]
        %v893 = vld [vmem:[%s202 + $0xa50] sm:$0xff]
        %v894 = vld [vmem:[%s202 + $0xa58] sm:$0xff]
        %v895 = vld [vmem:[%s202 + $0xa60] sm:$0xff]
        %v896 = vld [vmem:[%s202 + $0xa68] sm:$0xff]
        %v897 = vld [vmem:[%s202 + $0xa70] sm:$0xff]
        %v898 = vld [vmem:[%s202 + $0xa78] sm:$0xff]
        %v899 = vld [vmem:[%s202 + $0xa80] sm:$0xff]
        %v900 = vld [vmem:[%s202 + $0xa88] sm:$0xff]
        %v901 = vld [vmem:[%s202 + $0xa90] sm:$0xff]
        %v902 = vld [vmem:[%s202 + $0xa98] sm:$0xff]
        %v903 = vld [vmem:[%s202 + $0xaa0] sm:$0xff]
        %v904 = vld [vmem:[%s202 + $0xaa8] sm:$0xff]
        %v905 = vld [vmem:[%s202 + $0xab0] sm:$0xff]
        %v906 = vld [vmem:[%s202 + $0xab8] sm:$0xff]
        %v907 = vld [vmem:[%s202 + $0xac0] sm:$0xff]
        %v908 = vld [vmem:[%s202 + $0xac8] sm:$0xff]
        %v909 = vld [vmem:[%s202 + $0xad0] sm:$0xff]
        %v910 = vld [vmem:[%s202 + $0xad8] sm:$0xff]
        %v911 = vld [vmem:[%s202 + $0xae0] sm:$0xff]
        %v912 = vld [vmem:[%s202 + $0xae8] sm:$0xff]
        %v913 = vld [vmem:[%s202 + $0xaf0] sm:$0xff]
        %v914 = vld [vmem:[%s202 + $0xaf8] sm:$0xff]
        %v915 = vld [vmem:[%s202 + $0xb00] sm:$0xff]
        %v916 = vld [vmem:[%s202 + $0xb08] sm:$0xff]
        %v917 = vld [vmem:[%s202 + $0xb10] sm:$0xff]
        %v918 = vld [vmem:[%s202 + $0xb18] sm:$0xff]
        %v919 = vld [vmem:[%s202 + $0xb20] sm:$0xff]
        %v920 = vld [vmem:[%s202 + $0xb28] sm:$0xff]
        %v921 = vld [vmem:[%s202 + $0xb30] sm:$0xff]
        %v922 = vld [vmem:[%s202 + $0xb38] sm:$0xff]
        %v923 = vld [vmem:[%s202 + $0xb40] sm:$0xff]
        %v924 = vld [vmem:[%s202 + $0xb48] sm:$0xff]
        %v925 = vld [vmem:[%s202 + $0xb50] sm:$0xff]
        %v926 = vld [vmem:[%s202 + $0xb58] sm:$0xff]
        %v927 = vld [vmem:[%s202 + $0xb60] sm:$0xff]
        %v928 = vld [vmem:[%s202 + $0xb68] sm:$0xff]
        %v929 = vld [vmem:[%s202 + $0xb70] sm:$0xff]
        %v930 = vld [vmem:[%s202 + $0xb78] sm:$0xff]
        %v931 = vld [vmem:[%s202 + $0xb80] sm:$0xff]
        %v932 = vld [vmem:[%s202 + $0xb88] sm:$0xff]
        %v933 = vld [vmem:[%s202 + $0xb90] sm:$0xff]
        %v934 = vld [vmem:[%s202 + $0xb98] sm:$0xff]
        %v935 = vld [vmem:[%s202 + $0xba0] sm:$0xff]
        %v936 = vld [vmem:[%s202 + $0xba8] sm:$0xff]
        %v937 = vld [vmem:[%s202 + $0xbb0] sm:$0xff]
        %v938 = vld [vmem:[%s202 + $0xbb8] sm:$0xff]
        %v939 = vld [vmem:[%s202 + $0xbc0] sm:$0xff]
        %v940 = vld [vmem:[%s202 + $0xbc8] sm:$0xff]
        %v941 = vld [vmem:[%s202 + $0xbd0] sm:$0xff]
        %v942 = vld [vmem:[%s202 + $0xbd8] sm:$0xff]
        %v943 = vld [vmem:[%s202 + $0xbe0] sm:$0xff]
        %v944 = vld [vmem:[%s202 + $0xbe8] sm:$0xff]
        %v945 = vld [vmem:[%s202 + $0xbf0] sm:$0xff]
        %v946 = vld [vmem:[%s202 + $0xbf8] sm:$0xff]
        %v947 = vld [vmem:[%s202 + $0xc00] sm:$0xff]
        %v948 = vld [vmem:[%s202 + $0xc08] sm:$0xff]
        %v949 = vld [vmem:[%s202 + $0xc10] sm:$0xff]
        %v950 = vld [vmem:[%s202 + $0xc18] sm:$0xff]
        %v951 = vld [vmem:[%s202 + $0xc20] sm:$0xff]
        %v952 = vld [vmem:[%s202 + $0xc28] sm:$0xff]
        %v953 = vld [vmem:[%s202 + $0xc30] sm:$0xff]
        %v954 = vld [vmem:[%s202 + $0xc38] sm:$0xff]
        %v955 = vld [vmem:[%s202 + $0xc40] sm:$0xff]
        %v956 = vld [vmem:[%s202 + $0xc48] sm:$0xff]
        %v957 = vld [vmem:[%s202 + $0xc50] sm:$0xff]
        %v958 = vld [vmem:[%s202 + $0xc58] sm:$0xff]
        %v959 = vld [vmem:[%s202 + $0xc60] sm:$0xff]
        %v960 = vld [vmem:[%s202 + $0xc68] sm:$0xff]
        %v961 = vld [vmem:[%s202 + $0xc70] sm:$0xff]
        %v962 = vld [vmem:[%s202 + $0xc78] sm:$0xff]
        %v963 = vld [vmem:[%s202 + $0xc80] sm:$0xff]
        %v964 = vld [vmem:[%s202 + $0xc88] sm:$0xff]
        %v965 = vld [vmem:[%s202 + $0xc90] sm:$0xff]
        %v966 = vld [vmem:[%s202 + $0xc98] sm:$0xff]
        %v967 = vld [vmem:[%s202 + $0xca0] sm:$0xff]
        %v968 = vld [vmem:[%s202 + $0xca8] sm:$0xff]
        %v969 = vld [vmem:[%s202 + $0xcb0] sm:$0xff]
        %v970 = vld [vmem:[%s202 + $0xcb8] sm:$0xff]
        %v971 = vld [vmem:[%s202 + $0xcc0] sm:$0xff]
        %v972 = vld [vmem:[%s202 + $0xcc8] sm:$0xff]
        %v973 = vld [vmem:[%s202 + $0xcd0] sm:$0xff]
        %v974 = vld [vmem:[%s202 + $0xcd8] sm:$0xff]
        %v975 = vld [vmem:[%s202 + $0xce0] sm:$0xff]
        %v976 = vld [vmem:[%s202 + $0xce8] sm:$0xff]
        %v977 = vld [vmem:[%s202 + $0xcf0] sm:$0xff]
        %v978 = vld [vmem:[%s202 + $0xcf8] sm:$0xff]
        %v979 = vld [vmem:[%s202 + $0xd00] sm:$0xff]
        %v980 = vld [vmem:[%s202 + $0xd08] sm:$0xff]
        %v981 = vld [vmem:[%s202 + $0xd10] sm:$0xff]
        %v982 = vld [vmem:[%s202 + $0xd18] sm:$0xff]
        %v983 = vld [vmem:[%s202 + $0xd20] sm:$0xff]
        %v984 = vld [vmem:[%s202 + $0xd28] sm:$0xff]
        %v985 = vld [vmem:[%s202 + $0xd30] sm:$0xff]
        %v986 = vld [vmem:[%s202 + $0xd38] sm:$0xff]
        %v987 = vld [vmem:[%s202 + $0xd40] sm:$0xff]
        %v988 = vld [vmem:[%s202 + $0xd48] sm:$0xff]
        %v989 = vld [vmem:[%s202 + $0xd50] sm:$0xff]
        %v990 = vld [vmem:[%s202 + $0xd58] sm:$0xff]
        %v991 = vld [vmem:[%s202 + $0xd60] sm:$0xff]
        %v992 = vld [vmem:[%s202 + $0xd68] sm:$0xff]
        %v993 = vld [vmem:[%s202 + $0xd70] sm:$0xff]
        %v994 = vld [vmem:[%s202 + $0xd78] sm:$0xff]
        %v995 = vld [vmem:[%s202 + $0xd80] sm:$0xff]
        %v996 = vld [vmem:[%s202 + $0xd88] sm:$0xff]
        %v997 = vld [vmem:[%s202 + $0xd90] sm:$0xff]
        %v998 = vld [vmem:[%s202 + $0xd98] sm:$0xff]
        %v999 = vld [vmem:[%s202 + $0xda0] sm:$0xff]
        %v1000 = vld [vmem:[%s202 + $0xda8] sm:$0xff]
        %v1001 = vld [vmem:[%s202 + $0xdb0] sm:$0xff]
        %v1002 = vld [vmem:[%s202 + $0xdb8] sm:$0xff]
        %v1003 = vld [vmem:[%s202 + $0xdc0] sm:$0xff]
        %v1004 = vld [vmem:[%s202 + $0xdc8] sm:$0xff]
        %v1005 = vld [vmem:[%s202 + $0xdd0] sm:$0xff]
        %v1006 = vld [vmem:[%s202 + $0xdd8] sm:$0xff]
        %v1007 = vld [vmem:[%s202 + $0xde0] sm:$0xff]
        %v1008 = vld [vmem:[%s202 + $0xde8] sm:$0xff]
        %v1009 = vld [vmem:[%s202 + $0xdf0] sm:$0xff]
        %v1010 = vld [vmem:[%s202 + $0xdf8] sm:$0xff]
        %v1011 = vld [vmem:[%s202 + $0xe00] sm:$0xff]
        %v1012 = vld [vmem:[%s202 + $0xe08] sm:$0xff]
        %v1013 = vld [vmem:[%s202 + $0xe10] sm:$0xff]
        %v1014 = vld [vmem:[%s202 + $0xe18] sm:$0xff]
        %v1015 = vld [vmem:[%s202 + $0xe20] sm:$0xff]
        %v1016 = vld [vmem:[%s202 + $0xe28] sm:$0xff]
        %v1017 = vld [vmem:[%s202 + $0xe30] sm:$0xff]
        %v1018 = vld [vmem:[%s202 + $0xe38] sm:$0xff]
        %v1019 = vld [vmem:[%s202 + $0xe40] sm:$0xff]
        %v1020 = vld [vmem:[%s202 + $0xe48] sm:$0xff]
        %v1021 = vld [vmem:[%s202 + $0xe50] sm:$0xff]
        %v1022 = vld [vmem:[%s202 + $0xe58] sm:$0xff]
        %v1023 = vld [vmem:[%s202 + $0xe60] sm:$0xff]
        %v1024 = vld [vmem:[%s202 + $0xe68] sm:$0xff]
        %v1025 = vld [vmem:[%s202 + $0xe70] sm:$0xff]
        %v1026 = vld [vmem:[%s202 + $0xe78] sm:$0xff]
        %v1027 = vld [vmem:[%s202 + $0xe80] sm:$0xff]
        %v1028 = vld [vmem:[%s202 + $0xe88] sm:$0xff]
        %v1029 = vld [vmem:[%s202 + $0xe90] sm:$0xff]
        %v1030 = vld [vmem:[%s202 + $0xe98] sm:$0xff]
        %v1031 = vld [vmem:[%s202 + $0xea0] sm:$0xff]
        %v1032 = vld [vmem:[%s202 + $0xea8] sm:$0xff]
        %v1033 = vld [vmem:[%s202 + $0xeb0] sm:$0xff]
        %v1034 = vld [vmem:[%s202 + $0xeb8] sm:$0xff]
        %v1035 = vld [vmem:[%s202 + $0xec0] sm:$0xff]
        %v1036 = vld [vmem:[%s202 + $0xec8] sm:$0xff]
        %v1037 = vld [vmem:[%s202 + $0xed0] sm:$0xff]
        %v1038 = vld [vmem:[%s202 + $0xed8] sm:$0xff]
        %v1039 = vld [vmem:[%s202 + $0xee0] sm:$0xff]
        %v1040 = vld [vmem:[%s202 + $0xee8] sm:$0xff]
        %v1041 = vld [vmem:[%s202 + $0xef0] sm:$0xff]
        %v1042 = vld [vmem:[%s202 + $0xef8] sm:$0xff]
        %v1043 = vld [vmem:[%s202 + $0xf00] sm:$0xff]
        %v1044 = vld [vmem:[%s202 + $0xf08] sm:$0xff]
        %v1045 = vld [vmem:[%s202 + $0xf10] sm:$0xff]
        %v1046 = vld [vmem:[%s202 + $0xf18] sm:$0xff]
        %v1047 = vld [vmem:[%s202 + $0xf20] sm:$0xff]
        %v1048 = vld [vmem:[%s202 + $0xf28] sm:$0xff]
        %v1049 = vld [vmem:[%s202 + $0xf30] sm:$0xff]
        %v1050 = vld [vmem:[%s202 + $0xf38] sm:$0xff]
        %v1051 = vld [vmem:[%s202 + $0xf40] sm:$0xff]
        %v1052 = vld [vmem:[%s202 + $0xf48] sm:$0xff]
        %v1053 = vld [vmem:[%s202 + $0xf50] sm:$0xff]
        %v1054 = vld [vmem:[%s202 + $0xf58] sm:$0xff]
        %v1055 = vld [vmem:[%s202 + $0xf60] sm:$0xff]
        %v1056 = vld [vmem:[%s202 + $0xf68] sm:$0xff]
        %v1057 = vld [vmem:[%s202 + $0xf70] sm:$0xff]
        %v1058 = vld [vmem:[%s202 + $0xf78] sm:$0xff]
        %v1059 = vld [vmem:[%s202 + $0xf80] sm:$0xff]
        %v1060 = vld [vmem:[%s202 + $0xf88] sm:$0xff]
        %v1061 = vld [vmem:[%s202 + $0xf90] sm:$0xff]
        %v1062 = vld [vmem:[%s202 + $0xf98] sm:$0xff]
        %v1063 = vld [vmem:[%s202 + $0xfa0] sm:$0xff]
        %v1064 = vld [vmem:[%s202 + $0xfa8] sm:$0xff]
        %v1065 = vld [vmem:[%s202 + $0xfb0] sm:$0xff]
        %v1066 = vld [vmem:[%s202 + $0xfb8] sm:$0xff]
        %v1067 = vld [vmem:[%s202 + $0xfc0] sm:$0xff]
        %v1068 = vld [vmem:[%s202 + $0xfc8] sm:$0xff]
        %v1069 = vld [vmem:[%s202 + $0xfd0] sm:$0xff]
        %v1070 = vld [vmem:[%s202 + $0xfd8] sm:$0xff]
        %v1071 = vld [vmem:[%s202 + $0xfe0] sm:$0xff]
        %v1072 = vld [vmem:[%s202 + $0xfe8] sm:$0xff]
        %v1073 = vld [vmem:[%s202 + $0xff0] sm:$0xff]
        %v1074 = vld [vmem:[%s202 + $0xff8] sm:$0xff]
        %v1075 = vld [vmem:[%s202 + $0x1000] sm:$0xff]
        %v1076 = vld [vmem:[%s202 + $0x1008] sm:$0xff]
        %v1077 = vld [vmem:[%s202 + $0x1010] sm:$0xff]
        %v1078 = vld [vmem:[%s202 + $0x1018] sm:$0xff]
        %v1079 = vld [vmem:[%s202 + $0x1020] sm:$0xff]
        %v1080 = vld [vmem:[%s202 + $0x1028] sm:$0xff]
        %v1081 = vld [vmem:[%s202 + $0x1030] sm:$0xff]
        %v1082 = vld [vmem:[%s202 + $0x1038] sm:$0xff]
        %v1083 = vld [vmem:[%s202 + $0x1040] sm:$0xff]
        %v1084 = vld [vmem:[%s202 + $0x1048] sm:$0xff]
        %v1085 = vld [vmem:[%s202 + $0x1050] sm:$0xff]
        %v1086 = vld [vmem:[%s202 + $0x1058] sm:$0xff]
        %v1087 = vld [vmem:[%s202 + $0x1060] sm:$0xff]
        %v1088 = vld [vmem:[%s202 + $0x1068] sm:$0xff]
        %v1089 = vld [vmem:[%s202 + $0x1070] sm:$0xff]
        %v1090 = vld [vmem:[%s202 + $0x1078] sm:$0xff]
        %v1091 = vld [vmem:[%s202 + $0x1080] sm:$0xff]
        %v1092 = vld [vmem:[%s202 + $0x1088] sm:$0xff]
        %v1093 = vld [vmem:[%s202 + $0x1090] sm:$0xff]
        %v1094 = vld [vmem:[%s202 + $0x1098] sm:$0xff]
        %v1095 = vld [vmem:[%s202 + $0x10a0] sm:$0xff]
        %v1096 = vld [vmem:[%s202 + $0x10a8] sm:$0xff]
        %v1097 = vld [vmem:[%s202 + $0x10b0] sm:$0xff]
        %v1098 = vld [vmem:[%s202 + $0x10b8] sm:$0xff]
        %v1099 = vld [vmem:[%s202 + $0x10c0] sm:$0xff]
        %v1100 = vld [vmem:[%s202 + $0x10c8] sm:$0xff]
        %v1101 = vld [vmem:[%s202 + $0x10d0] sm:$0xff]
        %v1102 = vld [vmem:[%s202 + $0x10d8] sm:$0xff]
        %v1103 = vld [vmem:[%s202 + $0x10e0] sm:$0xff]
        %v1104 = vld [vmem:[%s202 + $0x10e8] sm:$0xff]
        %v1105 = vld [vmem:[%s202 + $0x10f0] sm:$0xff]
        %v1106 = vld [vmem:[%s202 + $0x10f8] sm:$0xff]
        %v1107 = vld [vmem:[%s202 + $0x1100] sm:$0xff]
        %v1108 = vld [vmem:[%s202 + $0x1108] sm:$0xff]
        %v1109 = vld [vmem:[%s202 + $0x1110] sm:$0xff]
        %v1110 = vld [vmem:[%s202 + $0x1118] sm:$0xff]
        %v1111 = vld [vmem:[%s202 + $0x1120] sm:$0xff]
        %v1112 = vld [vmem:[%s202 + $0x1128] sm:$0xff]
        %v1113 = vld [vmem:[%s202 + $0x1130] sm:$0xff]
        %v1114 = vld [vmem:[%s202 + $0x1138] sm:$0xff]
        %v1115 = vld [vmem:[%s202 + $0x1140] sm:$0xff]
        %v1116 = vld [vmem:[%s202 + $0x1148] sm:$0xff]
        %v1117 = vld [vmem:[%s202 + $0x1150] sm:$0xff]
        %v1118 = vld [vmem:[%s202 + $0x1158] sm:$0xff]
        %v1119 = vld [vmem:[%s202 + $0x1160] sm:$0xff]
        %v1120 = vld [vmem:[%s202 + $0x1168] sm:$0xff]
        %v1121 = vld [vmem:[%s202 + $0x1170] sm:$0xff]
        %v1122 = vld [vmem:[%s202 + $0x1178] sm:$0xff]
        %v1123 = vld [vmem:[%s202 + $0x1180] sm:$0xff]
        %v1124 = vld [vmem:[%s202 + $0x1188] sm:$0xff]
        %v1125 = vld [vmem:[%s202 + $0x1190] sm:$0xff]
        %v1126 = vld [vmem:[%s202 + $0x1198] sm:$0xff]
        %v1127 = vld [vmem:[%s202 + $0x11a0] sm:$0xff]
        %v1128 = vld [vmem:[%s202 + $0x11a8] sm:$0xff]
        %v1129 = vld [vmem:[%s202 + $0x11b0] sm:$0xff]
        %v1130 = vld [vmem:[%s202 + $0x11b8] sm:$0xff]
        %v1131 = vld [vmem:[%s202 + $0x11c0] sm:$0xff]
        %v1132 = vld [vmem:[%s202 + $0x11c8] sm:$0xff]
        %v1133 = vld [vmem:[%s202 + $0x11d0] sm:$0xff]
        %v1134 = vld [vmem:[%s202 + $0x11d8] sm:$0xff]
        %v1135 = vld [vmem:[%s202 + $0x11e0] sm:$0xff]
        %v1136 = vld [vmem:[%s202 + $0x11e8] sm:$0xff]
        %v1137 = vld [vmem:[%s202 + $0x11f0] sm:$0xff]
        %v1138 = vld [vmem:[%s202 + $0x11f8] sm:$0xff]
        %v1139 = vld [vmem:[%s202 + $0x1200] sm:$0xff]
        %v1140 = vld [vmem:[%s202 + $0x1208] sm:$0xff]
        %v1141 = vld [vmem:[%s202 + $0x1210] sm:$0xff]
        %v1142 = vld [vmem:[%s202 + $0x1218] sm:$0xff]
        %v1143 = vld [vmem:[%s202 + $0x1220] sm:$0xff]
        %v1144 = vld [vmem:[%s202 + $0x1228] sm:$0xff]
        %v1145 = vld [vmem:[%s202 + $0x1230] sm:$0xff]
        %v1146 = vld [vmem:[%s202 + $0x1238] sm:$0xff]
        %v1147 = vld [vmem:[%s202 + $0x1240] sm:$0xff]
        %v1148 = vld [vmem:[%s202 + $0x1248] sm:$0xff]
        %v1149 = vld [vmem:[%s202 + $0x1250] sm:$0xff]
        %v1150 = vld [vmem:[%s202 + $0x1258] sm:$0xff]
        %v1151 = vld [vmem:[%s202 + $0x1260] sm:$0xff]
        %v1152 = vld [vmem:[%s202 + $0x1268] sm:$0xff]
        %v1153 = vld [vmem:[%s202 + $0x1270] sm:$0xff]
        %v1154 = vld [vmem:[%s202 + $0x1278] sm:$0xff]
        %v1155 = vld [vmem:[%s202 + $0x1280] sm:$0xff]
        %v1156 = vld [vmem:[%s202 + $0x1288] sm:$0xff]
        %v1157 = vld [vmem:[%s202 + $0x1290] sm:$0xff]
        %v1158 = vld [vmem:[%s202 + $0x1298] sm:$0xff]
        %v1159 = vld [vmem:[%s202 + $0x12a0] sm:$0xff]
        %v1160 = vld [vmem:[%s202 + $0x12a8] sm:$0xff]
        %v1161 = vld [vmem:[%s202 + $0x12b0] sm:$0xff]
        %v1162 = vld [vmem:[%s202 + $0x12b8] sm:$0xff]
        %v1163 = vld [vmem:[%s202 + $0x12c0] sm:$0xff]
        %v1164 = vld [vmem:[%s202 + $0x12c8] sm:$0xff]
        %v1165 = vld [vmem:[%s202 + $0x12d0] sm:$0xff]
        %v1166 = vld [vmem:[%s202 + $0x12d8] sm:$0xff]
        %v1167 = vld [vmem:[%s202 + $0x12e0] sm:$0xff]
        %v1168 = vld [vmem:[%s202 + $0x12e8] sm:$0xff]
        %v1169 = vld [vmem:[%s202 + $0x12f0] sm:$0xff]
        %v1170 = vld [vmem:[%s202 + $0x12f8] sm:$0xff]
        %v1171 = vld [vmem:[%s202 + $0x1300] sm:$0xff]
        %v1172 = vld [vmem:[%s202 + $0x1308] sm:$0xff]
        %v1173 = vld [vmem:[%s202 + $0x1310] sm:$0xff]
        %v1174 = vld [vmem:[%s202 + $0x1318] sm:$0xff]
        %v1175 = vld [vmem:[%s202 + $0x1320] sm:$0xff]
        %v1176 = vld [vmem:[%s202 + $0x1328] sm:$0xff]
        %v1177 = vld [vmem:[%s202 + $0x1330] sm:$0xff]
        %v1178 = vld [vmem:[%s202 + $0x1338] sm:$0xff]
        %v1179 = vld [vmem:[%s202 + $0x1340] sm:$0xff]
        %v1180 = vld [vmem:[%s202 + $0x1348] sm:$0xff]
        %v1181 = vld [vmem:[%s202 + $0x1350] sm:$0xff]
        %v1182 = vld [vmem:[%s202 + $0x1358] sm:$0xff]
        %v1183 = vld [vmem:[%s202 + $0x1360] sm:$0xff]
        %v1184 = vld [vmem:[%s202 + $0x1368] sm:$0xff]
        %v1185 = vld [vmem:[%s202 + $0x1370] sm:$0xff]
        %v1186 = vld [vmem:[%s202 + $0x1378] sm:$0xff]
        %v1187 = vld [vmem:[%s202 + $0x1380] sm:$0xff]
        %v1188 = vld [vmem:[%s202 + $0x1388] sm:$0xff]
        %v1189 = vld [vmem:[%s202 + $0x1390] sm:$0xff]
        %v1190 = vld [vmem:[%s202 + $0x1398] sm:$0xff]
        %v1191 = vld [vmem:[%s202 + $0x13a0] sm:$0xff]
        %v1192 = vld [vmem:[%s202 + $0x13a8] sm:$0xff]
        %v1193 = vld [vmem:[%s202 + $0x13b0] sm:$0xff]
        %v1194 = vld [vmem:[%s202 + $0x13b8] sm:$0xff]
        %v1195 = vld [vmem:[%s202 + $0x13c0] sm:$0xff]
        %v1196 = vld [vmem:[%s202 + $0x13c8] sm:$0xff]
        %v1197 = vld [vmem:[%s202 + $0x13d0] sm:$0xff]
        %v1198 = vld [vmem:[%s202 + $0x13d8] sm:$0xff]
        %v1199 = vld [vmem:[%s202 + $0x13e0] sm:$0xff]
        %v1200 = vld [vmem:[%s202 + $0x13e8] sm:$0xff]
        %v1201 = vld [vmem:[%s202 + $0x13f0] sm:$0xff]
        %v1202 = vld [vmem:[%s202 + $0x13f8] sm:$0xff]
        %v1203 = vld [vmem:[%s202 + $0x1400] sm:$0xff]
        %v1204 = vld [vmem:[%s202 + $0x1408] sm:$0xff]
        %v1205 = vld [vmem:[%s202 + $0x1410] sm:$0xff]
        %v1206 = vld [vmem:[%s202 + $0x1418] sm:$0xff]
        %v1207 = vld [vmem:[%s202 + $0x1420] sm:$0xff]
        %v1208 = vld [vmem:[%s202 + $0x1428] sm:$0xff]
        %v1209 = vld [vmem:[%s202 + $0x1430] sm:$0xff]
        %v1210 = vld [vmem:[%s202 + $0x1438] sm:$0xff]
        %v1211 = vld [vmem:[%s202 + $0x1440] sm:$0xff]
        %v1212 = vld [vmem:[%s202 + $0x1448] sm:$0xff]
        %v1213 = vld [vmem:[%s202 + $0x1450] sm:$0xff]
        %v1214 = vld [vmem:[%s202 + $0x1458] sm:$0xff]
        %v1215 = vld [vmem:[%s202 + $0x1460] sm:$0xff]
        %v1216 = vld [vmem:[%s202 + $0x1468] sm:$0xff]
        %v1217 = vld [vmem:[%s202 + $0x1470] sm:$0xff]
        %v1218 = vld [vmem:[%s202 + $0x1478] sm:$0xff]
        %v1219 = vld [vmem:[%s202 + $0x1480] sm:$0xff]
        %v1220 = vld [vmem:[%s202 + $0x1488] sm:$0xff]
        %v1221 = vld [vmem:[%s202 + $0x1490] sm:$0xff]
        %v1222 = vld [vmem:[%s202 + $0x1498] sm:$0xff]
        %v1223 = vld [vmem:[%s202 + $0x14a0] sm:$0xff]
        %v1224 = vld [vmem:[%s202 + $0x14a8] sm:$0xff]
        %v1225 = vld [vmem:[%s202 + $0x14b0] sm:$0xff]
        %v1226 = vld [vmem:[%s202 + $0x14b8] sm:$0xff]
        %v1227 = vld [vmem:[%s202 + $0x14c0] sm:$0xff]
        %v1228 = vld [vmem:[%s202 + $0x14c8] sm:$0xff]
        %v1229 = vld [vmem:[%s202 + $0x14d0] sm:$0xff]
        %v1230 = vld [vmem:[%s202 + $0x14d8] sm:$0xff]
        %v1231 = vld [vmem:[%s202 + $0x14e0] sm:$0xff]
        %v1232 = vld [vmem:[%s202 + $0x14e8] sm:$0xff]
        %v1233 = vld [vmem:[%s202 + $0x14f0] sm:$0xff]
        %v1234 = vld [vmem:[%s202 + $0x14f8] sm:$0xff]
        %v1235 = vld [vmem:[%s202 + $0x1500] sm:$0xff]
        %v1236 = vld [vmem:[%s202 + $0x1508] sm:$0xff]
        %v1237 = vld [vmem:[%s202 + $0x1510] sm:$0xff]
        %v1238 = vld [vmem:[%s202 + $0x1518] sm:$0xff]
        %v1239 = vld [vmem:[%s202 + $0x1520] sm:$0xff]
        %v1240 = vld [vmem:[%s202 + $0x1528] sm:$0xff]
        %v1241 = vld [vmem:[%s202 + $0x1530] sm:$0xff]
        %v1242 = vld [vmem:[%s202 + $0x1538] sm:$0xff]
        %v1243 = vld [vmem:[%s202 + $0x1540] sm:$0xff]
        %v1244 = vld [vmem:[%s202 + $0x1548] sm:$0xff]
        %v1245 = vld [vmem:[%s202 + $0x1550] sm:$0xff]
        %v1246 = vld [vmem:[%s202 + $0x1558] sm:$0xff]
        %v1247 = vld [vmem:[%s202 + $0x1560] sm:$0xff]
        %v1248 = vld [vmem:[%s202 + $0x1568] sm:$0xff]
        %v1249 = vld [vmem:[%s202 + $0x1570] sm:$0xff]
        %v1250 = vld [vmem:[%s202 + $0x1578] sm:$0xff]
        %v1251 = vld [vmem:[%s202 + $0x1580] sm:$0xff]
        %v1252 = vld [vmem:[%s202 + $0x1588] sm:$0xff]
        %v1253 = vld [vmem:[%s202 + $0x1590] sm:$0xff]
        %v1254 = vld [vmem:[%s202 + $0x1598] sm:$0xff]
        %v1255 = vld [vmem:[%s202 + $0x15a0] sm:$0xff]
        %v1256 = vld [vmem:[%s202 + $0x15a8] sm:$0xff]
        %v1257 = vld [vmem:[%s202 + $0x15b0] sm:$0xff]
        %v1258 = vld [vmem:[%s202 + $0x15b8] sm:$0xff]
        %v1259 = vld [vmem:[%s202 + $0x15c0] sm:$0xff]
        %v1260 = vld [vmem:[%s202 + $0x15c8] sm:$0xff]
        %v1261 = vld [vmem:[%s202 + $0x15d0] sm:$0xff]
        %v1262 = vld [vmem:[%s202 + $0x15d8] sm:$0xff]
        %v1263 = vld [vmem:[%s202 + $0x15e0] sm:$0xff]
        %v1264 = vld [vmem:[%s202 + $0x15e8] sm:$0xff]
        %v1265 = vld [vmem:[%s202 + $0x15f0] sm:$0xff]
        %v1266 = vld [vmem:[%s202 + $0x15f8] sm:$0xff]
        %v1267 = vld [vmem:[%s202 + $0x1600] sm:$0xff]
        %v1268 = vld [vmem:[%s202 + $0x1608] sm:$0xff]
        %v1269 = vld [vmem:[%s202 + $0x1610] sm:$0xff]
        %v1270 = vld [vmem:[%s202 + $0x1618] sm:$0xff]
        %v1271 = vld [vmem:[%s202 + $0x1620] sm:$0xff]
        %v1272 = vld [vmem:[%s202 + $0x1628] sm:$0xff]
        %v1273 = vld [vmem:[%s202 + $0x1630] sm:$0xff]
        %v1274 = vld [vmem:[%s202 + $0x1638] sm:$0xff]
        %v1275 = vld [vmem:[%s202 + $0x1640] sm:$0xff]
        %v1276 = vld [vmem:[%s202 + $0x1648] sm:$0xff]
        %v1277 = vld [vmem:[%s202 + $0x1650] sm:$0xff]
        %v1278 = vld [vmem:[%s202 + $0x1658] sm:$0xff]
        %v1279 = vld [vmem:[%s202 + $0x1660] sm:$0xff]
        %v1280 = vld [vmem:[%s202 + $0x1668] sm:$0xff]
        %v1281 = vld [vmem:[%s202 + $0x1670] sm:$0xff]
        %v1282 = vld [vmem:[%s202 + $0x1678] sm:$0xff]
        %v1283 = vld [vmem:[%s202 + $0x1680] sm:$0xff]
        %v1284 = vld [vmem:[%s202 + $0x1688] sm:$0xff]
        %v1285 = vld [vmem:[%s202 + $0x1690] sm:$0xff]
        %v1286 = vld [vmem:[%s202 + $0x1698] sm:$0xff]
        %v1287 = vld [vmem:[%s202 + $0x16a0] sm:$0xff]
        %v1288 = vld [vmem:[%s202 + $0x16a8] sm:$0xff]
        %v1289 = vld [vmem:[%s202 + $0x16b0] sm:$0xff]
        %v1290 = vld [vmem:[%s202 + $0x16b8] sm:$0xff]
        %v1291 = vld [vmem:[%s202 + $0x16c0] sm:$0xff]
        %v1292 = vld [vmem:[%s202 + $0x16c8] sm:$0xff]
        %v1293 = vld [vmem:[%s202 + $0x16d0] sm:$0xff]
        %v1294 = vld [vmem:[%s202 + $0x16d8] sm:$0xff]
        %v1295 = vld [vmem:[%s202 + $0x16e0] sm:$0xff]
        %v1296 = vld [vmem:[%s202 + $0x16e8] sm:$0xff]
        %v1297 = vld [vmem:[%s202 + $0x16f0] sm:$0xff]
        %v1298 = vld [vmem:[%s202 + $0x16f8] sm:$0xff]
        %v1299 = vld [vmem:[%s202 + $0x1700] sm:$0xff]
        %v1300 = vld [vmem:[%s202 + $0x1708] sm:$0xff]
        %v1301 = vld [vmem:[%s202 + $0x1710] sm:$0xff]
        %v1302 = vld [vmem:[%s202 + $0x1718] sm:$0xff]
        %v1303 = vld [vmem:[%s202 + $0x1720] sm:$0xff]
        %v1304 = vld [vmem:[%s202 + $0x1728] sm:$0xff]
        %v1305 = vld [vmem:[%s202 + $0x1730] sm:$0xff]
        %v1306 = vld [vmem:[%s202 + $0x1738] sm:$0xff]
        %v1307 = vld [vmem:[%s202 + $0x1740] sm:$0xff]
        %v1308 = vld [vmem:[%s202 + $0x1748] sm:$0xff]
        %v1309 = vld [vmem:[%s202 + $0x1750] sm:$0xff]
        %v1310 = vld [vmem:[%s202 + $0x1758] sm:$0xff]
        %v1311 = vld [vmem:[%s202 + $0x1760] sm:$0xff]
        %v1312 = vld [vmem:[%s202 + $0x1768] sm:$0xff]
        %v1313 = vld [vmem:[%s202 + $0x1770] sm:$0xff]
        %v1314 = vld [vmem:[%s202 + $0x1778] sm:$0xff]
        %v1315 = vld [vmem:[%s202 + $0x1780] sm:$0xff]
        %v1316 = vld [vmem:[%s202 + $0x1788] sm:$0xff]
        %v1317 = vld [vmem:[%s202 + $0x1790] sm:$0xff]
        %v1318 = vld [vmem:[%s202 + $0x1798] sm:$0xff]
        %v1319 = vld [vmem:[%s202 + $0x17a0] sm:$0xff]
        %v1320 = vld [vmem:[%s202 + $0x17a8] sm:$0xff]
        %v1321 = vld [vmem:[%s202 + $0x17b0] sm:$0xff]
        %v1322 = vld [vmem:[%s202 + $0x17b8] sm:$0xff]
        %v1323 = vld [vmem:[%s202 + $0x17c0] sm:$0xff]
        %v1324 = vld [vmem:[%s202 + $0x17c8] sm:$0xff]
        %v1325 = vld [vmem:[%s202 + $0x17d0] sm:$0xff]
        %v1326 = vld [vmem:[%s202 + $0x17d8] sm:$0xff]
        %v1327 = vld [vmem:[%s202 + $0x17e0] sm:$0xff]
        %v1328 = vld [vmem:[%s202 + $0x17e8] sm:$0xff]
        %v1329 = vld [vmem:[%s202 + $0x17f0] sm:$0xff]
        %v1330 = vld [vmem:[%s202 + $0x17f8] sm:$0xff]
        %v1331 = vld [vmem:[%s202 + $0x1800] sm:$0xff]
        %v1332 = vld [vmem:[%s202 + $0x1808] sm:$0xff]
        %v1333 = vld [vmem:[%s202 + $0x1810] sm:$0xff]
        %v1334 = vld [vmem:[%s202 + $0x1818] sm:$0xff]
        %v1335 = vld [vmem:[%s202 + $0x1820] sm:$0xff]
        %v1336 = vld [vmem:[%s202 + $0x1828] sm:$0xff]
        %v1337 = vld [vmem:[%s202 + $0x1830] sm:$0xff]
        %v1338 = vld [vmem:[%s202 + $0x1838] sm:$0xff]
        %v1339 = vld [vmem:[%s202 + $0x1840] sm:$0xff]
        %v1340 = vld [vmem:[%s202 + $0x1848] sm:$0xff]
        %v1341 = vld [vmem:[%s202 + $0x1850] sm:$0xff]
        %v1342 = vld [vmem:[%s202 + $0x1858] sm:$0xff]
        %v1343 = vld [vmem:[%s202 + $0x1860] sm:$0xff]
        %v1344 = vld [vmem:[%s202 + $0x1868] sm:$0xff]
        %v1345 = vld [vmem:[%s202 + $0x1870] sm:$0xff]
        %v1346 = vld [vmem:[%s202 + $0x1878] sm:$0xff]
        %v1347 = vld [vmem:[%s202 + $0x1880] sm:$0xff]
        %v1348 = vld [vmem:[%s202 + $0x1888] sm:$0xff]
        %v1349 = vld [vmem:[%s202 + $0x1890] sm:$0xff]
        %v1350 = vld [vmem:[%s202 + $0x1898] sm:$0xff]
        %v1351 = vld [vmem:[%s202 + $0x18a0] sm:$0xff]
        %v1352 = vld [vmem:[%s202 + $0x18a8] sm:$0xff]
        %v1353 = vld [vmem:[%s202 + $0x18b0] sm:$0xff]
        %v1354 = vld [vmem:[%s202 + $0x18b8] sm:$0xff]
        %v1355 = vld [vmem:[%s202 + $0x18c0] sm:$0xff]
        %v1356 = vld [vmem:[%s202 + $0x18c8] sm:$0xff]
        %v1357 = vld [vmem:[%s202 + $0x18d0] sm:$0xff]
        %v1358 = vld [vmem:[%s202 + $0x18d8] sm:$0xff]
        %v1359 = vld [vmem:[%s202 + $0x18e0] sm:$0xff]
        %v1360 = vld [vmem:[%s202 + $0x18e8] sm:$0xff]
        %v1361 = vld [vmem:[%s202 + $0x18f0] sm:$0xff]
        %v1362 = vld [vmem:[%s202 + $0x18f8] sm:$0xff]
        %v1363 = vld [vmem:[%s202 + $0x1900] sm:$0xff]
        %v1364 = vld [vmem:[%s202 + $0x1908] sm:$0xff]
        %v1365 = vld [vmem:[%s202 + $0x1910] sm:$0xff]
        %v1366 = vld [vmem:[%s202 + $0x1918] sm:$0xff]
        %v1367 = vld [vmem:[%s202 + $0x1920] sm:$0xff]
        %v1368 = vld [vmem:[%s202 + $0x1928] sm:$0xff]
        %v1369 = vld [vmem:[%s202 + $0x1930] sm:$0xff]
        %v1370 = vld [vmem:[%s202 + $0x1938] sm:$0xff]
        %v1371 = vld [vmem:[%s202 + $0x1940] sm:$0xff]
        %v1372 = vld [vmem:[%s202 + $0x1948] sm:$0xff]
        %v1373 = vld [vmem:[%s202 + $0x1950] sm:$0xff]
        %v1374 = vld [vmem:[%s202 + $0x1958] sm:$0xff]
        %v1375 = vld [vmem:[%s202 + $0x1960] sm:$0xff]
        %v1376 = vld [vmem:[%s202 + $0x1968] sm:$0xff]
        %v1377 = vld [vmem:[%s202 + $0x1970] sm:$0xff]
        %v1378 = vld [vmem:[%s202 + $0x1978] sm:$0xff]
        %v1379 = vld [vmem:[%s202 + $0x1980] sm:$0xff]
        %v1380 = vld [vmem:[%s202 + $0x1988] sm:$0xff]
        %v1381 = vld [vmem:[%s202 + $0x1990] sm:$0xff]
        %v1382 = vld [vmem:[%s202 + $0x1998] sm:$0xff]
        %v1383 = vld [vmem:[%s202 + $0x19a0] sm:$0xff]
        %v1384 = vld [vmem:[%s202 + $0x19a8] sm:$0xff]
        %v1385 = vld [vmem:[%s202 + $0x19b0] sm:$0xff]
        %v1386 = vld [vmem:[%s202 + $0x19b8] sm:$0xff]
        %v1387 = vld [vmem:[%s202 + $0x19c0] sm:$0xff]
        %v1388 = vld [vmem:[%s202 + $0x19c8] sm:$0xff]
        %v1389 = vld [vmem:[%s202 + $0x19d0] sm:$0xff]
        %v1390 = vld [vmem:[%s202 + $0x19d8] sm:$0xff]
        %v1391 = vld [vmem:[%s202 + $0x19e0] sm:$0xff]
        %v1392 = vld [vmem:[%s202 + $0x19e8] sm:$0xff]
        %v1393 = vld [vmem:[%s202 + $0x19f0] sm:$0xff]
        %v1394 = vld [vmem:[%s202 + $0x19f8] sm:$0xff]
        %v1395 = vld [vmem:[%s202 + $0x1a00] sm:$0xff]
        %v1396 = vld [vmem:[%s202 + $0x1a08] sm:$0xff]
        %v1397 = vld [vmem:[%s202 + $0x1a10] sm:$0xff]
        %v1398 = vld [vmem:[%s202 + $0x1a18] sm:$0xff]
        %v1399 = vld [vmem:[%s202 + $0x1a20] sm:$0xff]
        %v1400 = vld [vmem:[%s202 + $0x1a28] sm:$0xff]
        %v1401 = vld [vmem:[%s202 + $0x1a30] sm:$0xff]
        %v1402 = vld [vmem:[%s202 + $0x1a38] sm:$0xff]
        %v1403 = vld [vmem:[%s202 + $0x1a40] sm:$0xff]
        %v1404 = vld [vmem:[%s202 + $0x1a48] sm:$0xff]
        %v1405 = vld [vmem:[%s202 + $0x1a50] sm:$0xff]
        %v1406 = vld [vmem:[%s202 + $0x1a58] sm:$0xff]
        %v1407 = vld [vmem:[%s202 + $0x1a60] sm:$0xff]
        %v1408 = vld [vmem:[%s202 + $0x1a68] sm:$0xff]
        %v1409 = vld [vmem:[%s202 + $0x1a70] sm:$0xff]
        %v1410 = vld [vmem:[%s202 + $0x1a78] sm:$0xff]
        %v1411 = vld [vmem:[%s202 + $0x1a80] sm:$0xff]
        %v1412 = vld [vmem:[%s202 + $0x1a88] sm:$0xff]
        %v1413 = vld [vmem:[%s202 + $0x1a90] sm:$0xff]
        %v1414 = vld [vmem:[%s202 + $0x1a98] sm:$0xff]
        %v1415 = vld [vmem:[%s202 + $0x1aa0] sm:$0xff]
        %v1416 = vld [vmem:[%s202 + $0x1aa8] sm:$0xff]
        %v1417 = vld [vmem:[%s202 + $0x1ab0] sm:$0xff]
        %v1418 = vld [vmem:[%s202 + $0x1ab8] sm:$0xff]
        %v1419 = vld [vmem:[%s202 + $0x1ac0] sm:$0xff]
        %v1420 = vld [vmem:[%s202 + $0x1ac8] sm:$0xff]
        %v1421 = vld [vmem:[%s202 + $0x1ad0] sm:$0xff]
        %v1422 = vld [vmem:[%s202 + $0x1ad8] sm:$0xff]
        %v1423 = vld [vmem:[%s202 + $0x1ae0] sm:$0xff]
        %v1424 = vld [vmem:[%s202 + $0x1ae8] sm:$0xff]
        %v1425 = vld [vmem:[%s202 + $0x1af0] sm:$0xff]
        %v1426 = vld [vmem:[%s202 + $0x1af8] sm:$0xff]
        %v1427 = vld [vmem:[%s202 + $0x1b00] sm:$0xff]
        %v1428 = vld [vmem:[%s202 + $0x1b08] sm:$0xff]
        %v1429 = vld [vmem:[%s202 + $0x1b10] sm:$0xff]
        %v1430 = vld [vmem:[%s202 + $0x1b18] sm:$0xff]
        %v1431 = vld [vmem:[%s202 + $0x1b20] sm:$0xff]
        %v1432 = vld [vmem:[%s202 + $0x1b28] sm:$0xff]
        %v1433 = vld [vmem:[%s202 + $0x1b30] sm:$0xff]
        %v1434 = vld [vmem:[%s202 + $0x1b38] sm:$0xff]
        %v1435 = vld [vmem:[%s202 + $0x1b40] sm:$0xff]
        %v1436 = vld [vmem:[%s202 + $0x1b48] sm:$0xff]
        %v1437 = vld [vmem:[%s202 + $0x1b50] sm:$0xff]
        %v1438 = vld [vmem:[%s202 + $0x1b58] sm:$0xff]
        %v1439 = vld [vmem:[%s202 + $0x1b60] sm:$0xff]
        %v1440 = vld [vmem:[%s202 + $0x1b68] sm:$0xff]
        %v1441 = vld [vmem:[%s202 + $0x1b70] sm:$0xff]
        %v1442 = vld [vmem:[%s202 + $0x1b78] sm:$0xff]
        %v1443 = vld [vmem:[%s202 + $0x1b80] sm:$0xff]
        %v1444 = vld [vmem:[%s202 + $0x1b88] sm:$0xff]
        %v1445 = vld [vmem:[%s202 + $0x1b90] sm:$0xff]
        %v1446 = vld [vmem:[%s202 + $0x1b98] sm:$0xff]
        %v1447 = vld [vmem:[%s202 + $0x1ba0] sm:$0xff]
        %v1448 = vld [vmem:[%s202 + $0x1ba8] sm:$0xff]
        %v1449 = vld [vmem:[%s202 + $0x1bb0] sm:$0xff]
        %v1450 = vld [vmem:[%s202 + $0x1bb8] sm:$0xff]
        %v1451 = vld [vmem:[%s202 + $0x1bc0] sm:$0xff]
        %v1452 = vld [vmem:[%s202 + $0x1bc8] sm:$0xff]
        %v1453 = vld [vmem:[%s202 + $0x1bd0] sm:$0xff]
        %v1454 = vld [vmem:[%s202 + $0x1bd8] sm:$0xff]
        %v1455 = vld [vmem:[%s202 + $0x1be0] sm:$0xff]
        %v1456 = vld [vmem:[%s202 + $0x1be8] sm:$0xff]
        %v1457 = vld [vmem:[%s202 + $0x1bf0] sm:$0xff]
        %v1458 = vld [vmem:[%s202 + $0x1bf8] sm:$0xff]
        %v1459 = vld [vmem:[%s202 + $0x1c00] sm:$0xff]
        %v1460 = vld [vmem:[%s202 + $0x1c08] sm:$0xff]
        %v1461 = vld [vmem:[%s202 + $0x1c10] sm:$0xff]
        %v1462 = vld [vmem:[%s202 + $0x1c18] sm:$0xff]
        %v1463 = vld [vmem:[%s202 + $0x1c20] sm:$0xff]
        %v1464 = vld [vmem:[%s202 + $0x1c28] sm:$0xff]
        %v1465 = vld [vmem:[%s202 + $0x1c30] sm:$0xff]
        %v1466 = vld [vmem:[%s202 + $0x1c38] sm:$0xff]
        %v1467 = vld [vmem:[%s202 + $0x1c40] sm:$0xff]
        %v1468 = vld [vmem:[%s202 + $0x1c48] sm:$0xff]
        %v1469 = vld [vmem:[%s202 + $0x1c50] sm:$0xff]
        %v1470 = vld [vmem:[%s202 + $0x1c58] sm:$0xff]
        %v1471 = vld [vmem:[%s202 + $0x1c60] sm:$0xff]
        %v1472 = vld [vmem:[%s202 + $0x1c68] sm:$0xff]
        %v1473 = vld [vmem:[%s202 + $0x1c70] sm:$0xff]
        %v1474 = vld [vmem:[%s202 + $0x1c78] sm:$0xff]
        %v1475 = vld [vmem:[%s202 + $0x1c80] sm:$0xff]
        %v1476 = vld [vmem:[%s202 + $0x1c88] sm:$0xff]
        %v1477 = vld [vmem:[%s202 + $0x1c90] sm:$0xff]
        %v1478 = vld [vmem:[%s202 + $0x1c98] sm:$0xff]
        %v1479 = vld [vmem:[%s202 + $0x1ca0] sm:$0xff]
        %v1480 = vld [vmem:[%s202 + $0x1ca8] sm:$0xff]
        %v1481 = vld [vmem:[%s202 + $0x1cb0] sm:$0xff]
        %v1482 = vld [vmem:[%s202 + $0x1cb8] sm:$0xff]
        %v1483 = vld [vmem:[%s202 + $0x1cc0] sm:$0xff]
        %v1484 = vld [vmem:[%s202 + $0x1cc8] sm:$0xff]
        %v1485 = vld [vmem:[%s202 + $0x1cd0] sm:$0xff]
        %v1486 = vld [vmem:[%s202 + $0x1cd8] sm:$0xff]
        %v1487 = vld [vmem:[%s202 + $0x1ce0] sm:$0xff]
        %v1488 = vld [vmem:[%s202 + $0x1ce8] sm:$0xff]
        %v1489 = vld [vmem:[%s202 + $0x1cf0] sm:$0xff]
        %v1490 = vld [vmem:[%s202 + $0x1cf8] sm:$0xff]
        %v1491 = vld [vmem:[%s202 + $0x1d00] sm:$0xff]
        %v1492 = vld [vmem:[%s202 + $0x1d08] sm:$0xff]
        %v1493 = vld [vmem:[%s202 + $0x1d10] sm:$0xff]
        %v1494 = vld [vmem:[%s202 + $0x1d18] sm:$0xff]
        %v1495 = vld [vmem:[%s202 + $0x1d20] sm:$0xff]
        %v1496 = vld [vmem:[%s202 + $0x1d28] sm:$0xff]
        %v1497 = vld [vmem:[%s202 + $0x1d30] sm:$0xff]
        %v1498 = vld [vmem:[%s202 + $0x1d38] sm:$0xff]
        %v1499 = vld [vmem:[%s202 + $0x1d40] sm:$0xff]
        %v1500 = vld [vmem:[%s202 + $0x1d48] sm:$0xff]
        %v1501 = vld [vmem:[%s202 + $0x1d50] sm:$0xff]
        %v1502 = vld [vmem:[%s202 + $0x1d58] sm:$0xff]
        %v1503 = vld [vmem:[%s202 + $0x1d60] sm:$0xff]
        %v1504 = vld [vmem:[%s202 + $0x1d68] sm:$0xff]
        %v1505 = vld [vmem:[%s202 + $0x1d70] sm:$0xff]
        %v1506 = vld [vmem:[%s202 + $0x1d78] sm:$0xff]
        %v1507 = vld [vmem:[%s202 + $0x1d80] sm:$0xff]
        %v1508 = vld [vmem:[%s202 + $0x1d88] sm:$0xff]
        %v1509 = vld [vmem:[%s202 + $0x1d90] sm:$0xff]
        %v1510 = vld [vmem:[%s202 + $0x1d98] sm:$0xff]
        %v1511 = vld [vmem:[%s202 + $0x1da0] sm:$0xff]
        %v1512 = vld [vmem:[%s202 + $0x1da8] sm:$0xff]
        %v1513 = vld [vmem:[%s202 + $0x1db0] sm:$0xff]
        %v1514 = vld [vmem:[%s202 + $0x1db8] sm:$0xff]
        %v1515 = vld [vmem:[%s202 + $0x1dc0] sm:$0xff]
        %v1516 = vld [vmem:[%s202 + $0x1dc8] sm:$0xff]
        %v1517 = vld [vmem:[%s202 + $0x1dd0] sm:$0xff]
        %v1518 = vld [vmem:[%s202 + $0x1dd8] sm:$0xff]
        %v1519 = vld [vmem:[%s202 + $0x1de0] sm:$0xff]
        %v1520 = vld [vmem:[%s202 + $0x1de8] sm:$0xff]
        %v1521 = vld [vmem:[%s202 + $0x1df0] sm:$0xff]
        %v1522 = vld [vmem:[%s202 + $0x1df8] sm:$0xff]
        %v1523 = vld [vmem:[%s202 + $0x1e00] sm:$0xff]
        %v1524 = vld [vmem:[%s202 + $0x1e08] sm:$0xff]
        %v1525 = vld [vmem:[%s202 + $0x1e10] sm:$0xff]
        %v1526 = vld [vmem:[%s202 + $0x1e18] sm:$0xff]
        %v1527 = vld [vmem:[%s202 + $0x1e20] sm:$0xff]
        %v1528 = vld [vmem:[%s202 + $0x1e28] sm:$0xff]
        %v1529 = vld [vmem:[%s202 + $0x1e30] sm:$0xff]
        %v1530 = vld [vmem:[%s202 + $0x1e38] sm:$0xff]
        %v1531 = vld [vmem:[%s202 + $0x1e40] sm:$0xff]
        %v1532 = vld [vmem:[%s202 + $0x1e48] sm:$0xff]
        %v1533 = vld [vmem:[%s202 + $0x1e50] sm:$0xff]
        %v1534 = vld [vmem:[%s202 + $0x1e58] sm:$0xff]
        %v1535 = vld [vmem:[%s202 + $0x1e60] sm:$0xff]
        %v1536 = vld [vmem:[%s202 + $0x1e68] sm:$0xff]
        %v1537 = vld [vmem:[%s202 + $0x1e70] sm:$0xff]
        %v1538 = vld [vmem:[%s202 + $0x1e78] sm:$0xff]
        %v1539 = vld [vmem:[%s202 + $0x1e80] sm:$0xff]
        %v1540 = vld [vmem:[%s202 + $0x1e88] sm:$0xff]
        %v1541 = vld [vmem:[%s202 + $0x1e90] sm:$0xff]
        %v1542 = vld [vmem:[%s202 + $0x1e98] sm:$0xff]
        %v1543 = vld [vmem:[%s202 + $0x1ea0] sm:$0xff]
        %v1544 = vld [vmem:[%s202 + $0x1ea8] sm:$0xff]
        %v1545 = vld [vmem:[%s202 + $0x1eb0] sm:$0xff]
        %v1546 = vld [vmem:[%s202 + $0x1eb8] sm:$0xff]
        %v1547 = vld [vmem:[%s202 + $0x1ec0] sm:$0xff]
        %v1548 = vld [vmem:[%s202 + $0x1ec8] sm:$0xff]
        %v1549 = vld [vmem:[%s202 + $0x1ed0] sm:$0xff]
        %v1550 = vld [vmem:[%s202 + $0x1ed8] sm:$0xff]
        %v1551 = vld [vmem:[%s202 + $0x1ee0] sm:$0xff]
        %v1552 = vld [vmem:[%s202 + $0x1ee8] sm:$0xff]
        %v1553 = vld [vmem:[%s202 + $0x1ef0] sm:$0xff]
        %v1554 = vld [vmem:[%s202 + $0x1ef8] sm:$0xff]
        %v1555 = vld [vmem:[%s202 + $0x1f00] sm:$0xff]
        %v1556 = vld [vmem:[%s202 + $0x1f08] sm:$0xff]
        %v1557 = vld [vmem:[%s202 + $0x1f10] sm:$0xff]
        %v1558 = vld [vmem:[%s202 + $0x1f18] sm:$0xff]
        %v1559 = vld [vmem:[%s202 + $0x1f20] sm:$0xff]
        %v1560 = vld [vmem:[%s202 + $0x1f28] sm:$0xff]
        %v1561 = vld [vmem:[%s202 + $0x1f30] sm:$0xff]
        %v1562 = vld [vmem:[%s202 + $0x1f38] sm:$0xff]
        %v1563 = vld [vmem:[%s202 + $0x1f40] sm:$0xff]
        %v1564 = vld [vmem:[%s202 + $0x1f48] sm:$0xff]
        %v1565 = vld [vmem:[%s202 + $0x1f50] sm:$0xff]
        %v1566 = vld [vmem:[%s202 + $0x1f58] sm:$0xff]
        %v1567 = vld [vmem:[%s202 + $0x1f60] sm:$0xff]
        %v1568 = vld [vmem:[%s202 + $0x1f68] sm:$0xff]
        %v1569 = vld [vmem:[%s202 + $0x1f70] sm:$0xff]
        %v1570 = vld [vmem:[%s202 + $0x1f78] sm:$0xff]
        %v1571 = vld [vmem:[%s202 + $0x1f80] sm:$0xff]
        %v1572 = vld [vmem:[%s202 + $0x1f88] sm:$0xff]
        %v1573 = vld [vmem:[%s202 + $0x1f90] sm:$0xff]
        %v1574 = vld [vmem:[%s202 + $0x1f98] sm:$0xff]
        %v1575 = vld [vmem:[%s202 + $0x1fa0] sm:$0xff]
        %v1576 = vld [vmem:[%s202 + $0x1fa8] sm:$0xff]
        %v1577 = vld [vmem:[%s202 + $0x1fb0] sm:$0xff]
        %v1578 = vld [vmem:[%s202 + $0x1fb8] sm:$0xff]
        %v1579 = vld [vmem:[%s202 + $0x1fc0] sm:$0xff]
        %v1580 = vld [vmem:[%s202 + $0x1fc8] sm:$0xff]
        %v1581 = vld [vmem:[%s202 + $0x1fd0] sm:$0xff]
        %v1582 = vld [vmem:[%s202 + $0x1fd8] sm:$0xff]
        %v1583 = vld [vmem:[%s202 + $0x1fe0] sm:$0xff]
        %v1584 = vld [vmem:[%s202 + $0x1fe8] sm:$0xff]
        %v1585 = vld [vmem:[%s202 + $0x1ff0] sm:$0xff]
        %v1586 = vld [vmem:[%s202 + $0x1ff8] sm:$0xff]
        %v1587 = vpack.c.bf16 %v531, %v531
        %v1588 = vpack.c.bf16 %v532, %v532
        %v1589 = vpack.c.bf16 %v533, %v533
        %v1590 = vpack.c.bf16 %v534, %v534
        %v1591 = vpack.c.bf16 %v535, %v535
        %v1592 = vpack.c.bf16 %v536, %v536
        %v1593 = vpack.c.bf16 %v537, %v537
        %v1594 = vpack.c.bf16 %v538, %v538
        %v1595 = vpack.c.bf16 %v539, %v539
        %v1596 = vpack.c.bf16 %v540, %v540
        %v1597 = vpack.c.bf16 %v541, %v541
        %v1598 = vpack.c.bf16 %v542, %v542
        %v1599 = vpack.c.bf16 %v543, %v543
        %v1600 = vpack.c.bf16 %v544, %v544
        %v1601 = vpack.c.bf16 %v545, %v545
        %v1602 = vpack.c.bf16 %v546, %v546
        %v1603 = vpack.c.bf16 %v547, %v547
        %v1604 = vpack.c.bf16 %v548, %v548
        %v1605 = vpack.c.bf16 %v549, %v549
        %v1606 = vpack.c.bf16 %v550, %v550
        %v1607 = vpack.c.bf16 %v551, %v551
        %v1608 = vpack.c.bf16 %v552, %v552
        %v1609 = vpack.c.bf16 %v553, %v553
        %v1610 = vpack.c.bf16 %v554, %v554
        %v1611 = vpack.c.bf16 %v555, %v555
        %v1612 = vpack.c.bf16 %v556, %v556
        %v1613 = vpack.c.bf16 %v557, %v557
        %v1614 = vpack.c.bf16 %v558, %v558
        %v1615 = vpack.c.bf16 %v559, %v559
        %v1616 = vpack.c.bf16 %v560, %v560
        %v1617 = vpack.c.bf16 %v561, %v561
        %v1618 = vpack.c.bf16 %v562, %v562
        %v1619 = vld [vmem:[%s211] ss:$4 sm:$0xff]
        %v1621 = vlaneseq
        %v1622 = vshrl.u32 %v1621, 7
        %v1623 = vsub.s32 0, %v1622
        %v1624 = vrot.slane %v1619, %v1623
        %v1625 = vlaneseq
        %v1626 = vshrl.u32 %v1625, 7
        %v1627 = vsub.s32 1, %v1626
        %v1628 = vrot.slane %v1619, %v1627
        %v1629 = vlaneseq
        %v1630 = vshrl.u32 %v1629, 7
        %v1631 = vsub.s32 2, %v1630
        %v1632 = vrot.slane %v1619, %v1631
        %v1633 = vlaneseq
        %v1634 = vshrl.u32 %v1633, 7
        %v1635 = vsub.s32 3, %v1634
        %v1636 = vrot.slane %v1619, %v1635
        %v1637 = vlaneseq
        %v1638 = vshrl.u32 %v1637, 7
        %v1639 = vsub.s32 4, %v1638
        %v1640 = vrot.slane %v1619, %v1639
        %v1641 = vlaneseq
        %v1642 = vshrl.u32 %v1641, 7
        %v1643 = vsub.s32 5, %v1642
        %v1644 = vrot.slane %v1619, %v1643
        %v1645 = vlaneseq
        %v1646 = vshrl.u32 %v1645, 7
        %v1647 = vsub.s32 6, %v1646
        %v1648 = vrot.slane %v1619, %v1647
        %v1649 = vlaneseq
        %v1650 = vshrl.u32 %v1649, 7
        %v1651 = vsub.s32 7, %v1650
        %v1652 = vrot.slane %v1619, %v1651
        %v1693 = vunpack.c.l.b16 %v1587
        %v1694 = vunpack.c.l.b16 %v1588
        %v1695 = vunpack.c.l.b16 %v1589
        %v1696 = vunpack.c.l.b16 %v1590
        %v1697 = vunpack.c.l.b16 %v1591
        %v1698 = vunpack.c.l.b16 %v1592
        %v1699 = vunpack.c.l.b16 %v1593
        %v1700 = vunpack.c.l.b16 %v1594
        %v1701 = vunpack.c.l.b16 %v1595
        %v1702 = vunpack.c.l.b16 %v1596
        %v1703 = vunpack.c.l.b16 %v1597
        %v1704 = vunpack.c.l.b16 %v1598
        %v1705 = vunpack.c.l.b16 %v1599
        %v1706 = vunpack.c.l.b16 %v1600
        %v1707 = vunpack.c.l.b16 %v1601
        %v1708 = vunpack.c.l.b16 %v1602
        %v1709 = vunpack.c.l.b16 %v1603
        %v1710 = vunpack.c.l.b16 %v1604
        %v1711 = vunpack.c.l.b16 %v1605
        %v1712 = vunpack.c.l.b16 %v1606
        %v1713 = vunpack.c.l.b16 %v1607
        %v1714 = vunpack.c.l.b16 %v1608
        %v1715 = vunpack.c.l.b16 %v1609
        %v1716 = vunpack.c.l.b16 %v1610
        %v1717 = vunpack.c.l.b16 %v1611
        %v1718 = vunpack.c.l.b16 %v1612
        %v1719 = vunpack.c.l.b16 %v1613
        %v1720 = vunpack.c.l.b16 %v1614
        %v1721 = vunpack.c.l.b16 %v1615
        %v1722 = vunpack.c.l.b16 %v1616
        %v1723 = vunpack.c.l.b16 %v1617
        %v1724 = vunpack.c.l.b16 %v1618
        %vm1725 = vcmask 1041409
        %v1726 = vsel %vm1725, %v1709, %v1693
        %v1727 = vsel %vm1725, %v1710, %v1694
        %v1728 = vsel %vm1725, %v1711, %v1695
        %v1729 = vsel %vm1725, %v1712, %v1696
        %v1730 = vsel %vm1725, %v1713, %v1697
        %v1731 = vsel %vm1725, %v1714, %v1698
        %v1732 = vsel %vm1725, %v1715, %v1699
        %v1733 = vsel %vm1725, %v1716, %v1700
        %v1734 = vsel %vm1725, %v1717, %v1701
        %v1735 = vsel %vm1725, %v1718, %v1702
        %v1736 = vsel %vm1725, %v1719, %v1703
        %v1737 = vsel %vm1725, %v1720, %v1704
        %v1738 = vsel %vm1725, %v1721, %v1705
        %v1739 = vsel %vm1725, %v1722, %v1706
        %v1740 = vsel %vm1725, %v1723, %v1707
        %v1741 = vsel %vm1725, %v1724, %v1708
        %v1742 = vpack.c.b16 %v1726, %v1726
        %v1743 = vpack.c.b16 %v1727, %v1727
        %v1744 = vpack.c.b16 %v1728, %v1728
        %v1745 = vpack.c.b16 %v1729, %v1729
        %v1746 = vpack.c.b16 %v1730, %v1730
        %v1747 = vpack.c.b16 %v1731, %v1731
        %v1748 = vpack.c.b16 %v1732, %v1732
        %v1749 = vpack.c.b16 %v1733, %v1733
        %v1750 = vpack.c.b16 %v1734, %v1734
        %v1751 = vpack.c.b16 %v1735, %v1735
        %v1752 = vpack.c.b16 %v1736, %v1736
        %v1753 = vpack.c.b16 %v1737, %v1737
        %v1754 = vpack.c.b16 %v1738, %v1738
        %v1755 = vpack.c.b16 %v1739, %v1739
        %v1756 = vpack.c.b16 %v1740, %v1740
        %v1757 = vpack.c.b16 %v1741, %v1741
        %v2798 = vunpack.c.l.b16 %v563
        %v2799 = vunpack.c.h.b16 %v563
        %v2800 = vunpack.c.l.b16 %v564
        %v2801 = vunpack.c.h.b16 %v564
        %v2802 = vunpack.c.l.b16 %v565
        %v2803 = vunpack.c.h.b16 %v565
        %v2804 = vunpack.c.l.b16 %v566
        %v2805 = vunpack.c.h.b16 %v566
        %v2806 = vunpack.c.l.b16 %v567
        %v2807 = vunpack.c.h.b16 %v567
        %v2808 = vunpack.c.l.b16 %v568
        %v2809 = vunpack.c.h.b16 %v568
        %v2810 = vunpack.c.l.b16 %v569
        %v2811 = vunpack.c.h.b16 %v569
        %v2812 = vunpack.c.l.b16 %v570
        %v2813 = vunpack.c.h.b16 %v570
        %v2814 = vunpack.c.l.b16 %v571
        %v2815 = vunpack.c.h.b16 %v571
        %v2816 = vunpack.c.l.b16 %v572
        %v2817 = vunpack.c.h.b16 %v572
        %v2818 = vunpack.c.l.b16 %v573
        %v2819 = vunpack.c.h.b16 %v573
        %v2820 = vunpack.c.l.b16 %v574
        %v2821 = vunpack.c.h.b16 %v574
        %v2822 = vunpack.c.l.b16 %v575
        %v2823 = vunpack.c.h.b16 %v575
        %v2824 = vunpack.c.l.b16 %v576
        %v2825 = vunpack.c.h.b16 %v576
        %v2826 = vunpack.c.l.b16 %v577
        %v2827 = vunpack.c.h.b16 %v577
        %v2828 = vunpack.c.l.b16 %v578
        %v2829 = vunpack.c.h.b16 %v578
        %v2830 = vunpack.c.l.b16 %v579
        %v2831 = vunpack.c.h.b16 %v579
        %v2832 = vunpack.c.l.b16 %v580
        %v2833 = vunpack.c.h.b16 %v580
        %v2834 = vunpack.c.l.b16 %v581
        %v2835 = vunpack.c.h.b16 %v581
        %v2836 = vunpack.c.l.b16 %v582
        %v2837 = vunpack.c.h.b16 %v582
        %v2838 = vunpack.c.l.b16 %v583
        %v2839 = vunpack.c.h.b16 %v583
        %v2840 = vunpack.c.l.b16 %v584
        %v2841 = vunpack.c.h.b16 %v584
        %v2842 = vunpack.c.l.b16 %v585
        %v2843 = vunpack.c.h.b16 %v585
        %v2844 = vunpack.c.l.b16 %v586
        %v2845 = vunpack.c.h.b16 %v586
        %v2846 = vunpack.c.l.b16 %v587
        %v2847 = vunpack.c.h.b16 %v587
        %v2848 = vunpack.c.l.b16 %v588
        %v2849 = vunpack.c.h.b16 %v588
        %v2850 = vunpack.c.l.b16 %v589
        %v2851 = vunpack.c.h.b16 %v589
        %v2852 = vunpack.c.l.b16 %v590
        %v2853 = vunpack.c.h.b16 %v590
        %v2854 = vunpack.c.l.b16 %v591
        %v2855 = vunpack.c.h.b16 %v591
        %v2856 = vunpack.c.l.b16 %v592
        %v2857 = vunpack.c.h.b16 %v592
        %v2858 = vunpack.c.l.b16 %v593
        %v2859 = vunpack.c.h.b16 %v593
        %v2860 = vunpack.c.l.b16 %v594
        %v2861 = vunpack.c.h.b16 %v594
        %v2862 = vunpack.c.l.b16 %v595
        %v2863 = vunpack.c.h.b16 %v595
        %v2864 = vunpack.c.l.b16 %v596
        %v2865 = vunpack.c.h.b16 %v596
        %v2866 = vunpack.c.l.b16 %v597
        %v2867 = vunpack.c.h.b16 %v597
        %v2868 = vunpack.c.l.b16 %v598
        %v2869 = vunpack.c.h.b16 %v598
        %v2870 = vunpack.c.l.b16 %v599
        %v2871 = vunpack.c.h.b16 %v599
        %v2872 = vunpack.c.l.b16 %v600
        %v2873 = vunpack.c.h.b16 %v600
        %v2874 = vunpack.c.l.b16 %v601
        %v2875 = vunpack.c.h.b16 %v601
        %v2876 = vunpack.c.l.b16 %v602
        %v2877 = vunpack.c.h.b16 %v602
        %v2878 = vunpack.c.l.b16 %v603
        %v2879 = vunpack.c.h.b16 %v603
        %v2880 = vunpack.c.l.b16 %v604
        %v2881 = vunpack.c.h.b16 %v604
        %v2882 = vunpack.c.l.b16 %v605
        %v2883 = vunpack.c.h.b16 %v605
        %v2884 = vunpack.c.l.b16 %v606
        %v2885 = vunpack.c.h.b16 %v606
        %v2886 = vunpack.c.l.b16 %v607
        %v2887 = vunpack.c.h.b16 %v607
        %v2888 = vunpack.c.l.b16 %v608
        %v2889 = vunpack.c.h.b16 %v608
        %v2890 = vunpack.c.l.b16 %v609
        %v2891 = vunpack.c.h.b16 %v609
        %v2892 = vunpack.c.l.b16 %v610
        %v2893 = vunpack.c.h.b16 %v610
        %v2894 = vunpack.c.l.b16 %v611
        %v2895 = vunpack.c.h.b16 %v611
        %v2896 = vunpack.c.l.b16 %v612
        %v2897 = vunpack.c.h.b16 %v612
        %v2898 = vunpack.c.l.b16 %v613
        %v2899 = vunpack.c.h.b16 %v613
        %v2900 = vunpack.c.l.b16 %v614
        %v2901 = vunpack.c.h.b16 %v614
        %v2902 = vunpack.c.l.b16 %v615
        %v2903 = vunpack.c.h.b16 %v615
        %v2904 = vunpack.c.l.b16 %v616
        %v2905 = vunpack.c.h.b16 %v616
        %v2906 = vunpack.c.l.b16 %v617
        %v2907 = vunpack.c.h.b16 %v617
        %v2908 = vunpack.c.l.b16 %v618
        %v2909 = vunpack.c.h.b16 %v618
        %v2910 = vunpack.c.l.b16 %v619
        %v2911 = vunpack.c.h.b16 %v619
        %v2912 = vunpack.c.l.b16 %v620
        %v2913 = vunpack.c.h.b16 %v620
        %v2914 = vunpack.c.l.b16 %v621
        %v2915 = vunpack.c.h.b16 %v621
        %v2916 = vunpack.c.l.b16 %v622
        %v2917 = vunpack.c.h.b16 %v622
        %v2918 = vunpack.c.l.b16 %v623
        %v2919 = vunpack.c.h.b16 %v623
        %v2920 = vunpack.c.l.b16 %v624
        %v2921 = vunpack.c.h.b16 %v624
        %v2922 = vunpack.c.l.b16 %v625
        %v2923 = vunpack.c.h.b16 %v625
        %v2924 = vunpack.c.l.b16 %v626
        %v2925 = vunpack.c.h.b16 %v626
        %v2926 = vunpack.c.l.b16 %v627
        %v2927 = vunpack.c.h.b16 %v627
        %v2928 = vunpack.c.l.b16 %v628
        %v2929 = vunpack.c.h.b16 %v628
        %v2930 = vunpack.c.l.b16 %v629
        %v2931 = vunpack.c.h.b16 %v629
        %v2932 = vunpack.c.l.b16 %v630
        %v2933 = vunpack.c.h.b16 %v630
        %v2934 = vunpack.c.l.b16 %v631
        %v2935 = vunpack.c.h.b16 %v631
        %v2936 = vunpack.c.l.b16 %v632
        %v2937 = vunpack.c.h.b16 %v632
        %v2938 = vunpack.c.l.b16 %v633
        %v2939 = vunpack.c.h.b16 %v633
        %v2940 = vunpack.c.l.b16 %v634
        %v2941 = vunpack.c.h.b16 %v634
        %v2942 = vunpack.c.l.b16 %v635
        %v2943 = vunpack.c.h.b16 %v635
        %v2944 = vunpack.c.l.b16 %v636
        %v2945 = vunpack.c.h.b16 %v636
        %v2946 = vunpack.c.l.b16 %v637
        %v2947 = vunpack.c.h.b16 %v637
        %v2948 = vunpack.c.l.b16 %v638
        %v2949 = vunpack.c.h.b16 %v638
        %v2950 = vunpack.c.l.b16 %v639
        %v2951 = vunpack.c.h.b16 %v639
        %v2952 = vunpack.c.l.b16 %v640
        %v2953 = vunpack.c.h.b16 %v640
        %v2954 = vunpack.c.l.b16 %v641
        %v2955 = vunpack.c.h.b16 %v641
        %v2956 = vunpack.c.l.b16 %v642
        %v2957 = vunpack.c.h.b16 %v642
        %v2958 = vunpack.c.l.b16 %v643
        %v2959 = vunpack.c.h.b16 %v643
        %v2960 = vunpack.c.l.b16 %v644
        %v2961 = vunpack.c.h.b16 %v644
        %v2962 = vunpack.c.l.b16 %v645
        %v2963 = vunpack.c.h.b16 %v645
        %v2964 = vunpack.c.l.b16 %v646
        %v2965 = vunpack.c.h.b16 %v646
        %v2966 = vunpack.c.l.b16 %v647
        %v2967 = vunpack.c.h.b16 %v647
        %v2968 = vunpack.c.l.b16 %v648
        %v2969 = vunpack.c.h.b16 %v648
        %v2970 = vunpack.c.l.b16 %v649
        %v2971 = vunpack.c.h.b16 %v649
        %v2972 = vunpack.c.l.b16 %v650
        %v2973 = vunpack.c.h.b16 %v650
        %v2974 = vunpack.c.l.b16 %v651
        %v2975 = vunpack.c.h.b16 %v651
        %v2976 = vunpack.c.l.b16 %v652
        %v2977 = vunpack.c.h.b16 %v652
        %v2978 = vunpack.c.l.b16 %v653
        %v2979 = vunpack.c.h.b16 %v653
        %v2980 = vunpack.c.l.b16 %v654
        %v2981 = vunpack.c.h.b16 %v654
        %v2982 = vunpack.c.l.b16 %v655
        %v2983 = vunpack.c.h.b16 %v655
        %v2984 = vunpack.c.l.b16 %v656
        %v2985 = vunpack.c.h.b16 %v656
        %v2986 = vunpack.c.l.b16 %v657
        %v2987 = vunpack.c.h.b16 %v657
        %v2988 = vunpack.c.l.b16 %v658
        %v2989 = vunpack.c.h.b16 %v658
        %v2990 = vunpack.c.l.b16 %v659
        %v2991 = vunpack.c.h.b16 %v659
        %v2992 = vunpack.c.l.b16 %v660
        %v2993 = vunpack.c.h.b16 %v660
        %v2994 = vunpack.c.l.b16 %v661
        %v2995 = vunpack.c.h.b16 %v661
        %v2996 = vunpack.c.l.b16 %v662
        %v2997 = vunpack.c.h.b16 %v662
        %v2998 = vunpack.c.l.b16 %v663
        %v2999 = vunpack.c.h.b16 %v663
        %v3000 = vunpack.c.l.b16 %v664
        %v3001 = vunpack.c.h.b16 %v664
        %v3002 = vunpack.c.l.b16 %v665
        %v3003 = vunpack.c.h.b16 %v665
        %v3004 = vunpack.c.l.b16 %v666
        %v3005 = vunpack.c.h.b16 %v666
        %v3006 = vunpack.c.l.b16 %v667
        %v3007 = vunpack.c.h.b16 %v667
        %v3008 = vunpack.c.l.b16 %v668
        %v3009 = vunpack.c.h.b16 %v668
        %v3010 = vunpack.c.l.b16 %v669
        %v3011 = vunpack.c.h.b16 %v669
        %v3012 = vunpack.c.l.b16 %v670
        %v3013 = vunpack.c.h.b16 %v670
        %v3014 = vunpack.c.l.b16 %v671
        %v3015 = vunpack.c.h.b16 %v671
        %v3016 = vunpack.c.l.b16 %v672
        %v3017 = vunpack.c.h.b16 %v672
        %v3018 = vunpack.c.l.b16 %v673
        %v3019 = vunpack.c.h.b16 %v673
        %v3020 = vunpack.c.l.b16 %v674
        %v3021 = vunpack.c.h.b16 %v674
        %v3022 = vunpack.c.l.b16 %v675
        %v3023 = vunpack.c.h.b16 %v675
        %v3024 = vunpack.c.l.b16 %v676
        %v3025 = vunpack.c.h.b16 %v676
        %v3026 = vunpack.c.l.b16 %v677
        %v3027 = vunpack.c.h.b16 %v677
        %v3028 = vunpack.c.l.b16 %v678
        %v3029 = vunpack.c.h.b16 %v678
        %v3030 = vunpack.c.l.b16 %v679
        %v3031 = vunpack.c.h.b16 %v679
        %v3032 = vunpack.c.l.b16 %v680
        %v3033 = vunpack.c.h.b16 %v680
        %v3034 = vunpack.c.l.b16 %v681
        %v3035 = vunpack.c.h.b16 %v681
        %v3036 = vunpack.c.l.b16 %v682
        %v3037 = vunpack.c.h.b16 %v682
        %v3038 = vunpack.c.l.b16 %v683
        %v3039 = vunpack.c.h.b16 %v683
        %v3040 = vunpack.c.l.b16 %v684
        %v3041 = vunpack.c.h.b16 %v684
        %v3042 = vunpack.c.l.b16 %v685
        %v3043 = vunpack.c.h.b16 %v685
        %v3044 = vunpack.c.l.b16 %v686
        %v3045 = vunpack.c.h.b16 %v686
        %v3046 = vunpack.c.l.b16 %v687
        %v3047 = vunpack.c.h.b16 %v687
        %v3048 = vunpack.c.l.b16 %v688
        %v3049 = vunpack.c.h.b16 %v688
        %v3050 = vunpack.c.l.b16 %v689
        %v3051 = vunpack.c.h.b16 %v689
        %v3052 = vunpack.c.l.b16 %v690
        %v3053 = vunpack.c.h.b16 %v690
        %v3054 = vunpack.c.l.b16 %v691
        %v3055 = vunpack.c.h.b16 %v691
        %v3056 = vunpack.c.l.b16 %v692
        %v3057 = vunpack.c.h.b16 %v692
        %v3058 = vunpack.c.l.b16 %v693
        %v3059 = vunpack.c.h.b16 %v693
        %v3060 = vunpack.c.l.b16 %v694
        %v3061 = vunpack.c.h.b16 %v694
        %v3062 = vunpack.c.l.b16 %v695
        %v3063 = vunpack.c.h.b16 %v695
        %v3064 = vunpack.c.l.b16 %v696
        %v3065 = vunpack.c.h.b16 %v696
        %v3066 = vunpack.c.l.b16 %v697
        %v3067 = vunpack.c.h.b16 %v697
        %v3068 = vunpack.c.l.b16 %v698
        %v3069 = vunpack.c.h.b16 %v698
        %v3070 = vunpack.c.l.b16 %v699
        %v3071 = vunpack.c.h.b16 %v699
        %v3072 = vunpack.c.l.b16 %v700
        %v3073 = vunpack.c.h.b16 %v700
        %v3074 = vunpack.c.l.b16 %v701
        %v3075 = vunpack.c.h.b16 %v701
        %v3076 = vunpack.c.l.b16 %v702
        %v3077 = vunpack.c.h.b16 %v702
        %v3078 = vunpack.c.l.b16 %v703
        %v3079 = vunpack.c.h.b16 %v703
        %v3080 = vunpack.c.l.b16 %v704
        %v3081 = vunpack.c.h.b16 %v704
        %v3082 = vunpack.c.l.b16 %v705
        %v3083 = vunpack.c.h.b16 %v705
        %v3084 = vunpack.c.l.b16 %v706
        %v3085 = vunpack.c.h.b16 %v706
        %v3086 = vunpack.c.l.b16 %v707
        %v3087 = vunpack.c.h.b16 %v707
        %v3088 = vunpack.c.l.b16 %v708
        %v3089 = vunpack.c.h.b16 %v708
        %v3090 = vunpack.c.l.b16 %v709
        %v3091 = vunpack.c.h.b16 %v709
        %v3092 = vunpack.c.l.b16 %v710
        %v3093 = vunpack.c.h.b16 %v710
        %v3094 = vunpack.c.l.b16 %v711
        %v3095 = vunpack.c.h.b16 %v711
        %v3096 = vunpack.c.l.b16 %v712
        %v3097 = vunpack.c.h.b16 %v712
        %v3098 = vunpack.c.l.b16 %v713
        %v3099 = vunpack.c.h.b16 %v713
        %v3100 = vunpack.c.l.b16 %v714
        %v3101 = vunpack.c.h.b16 %v714
        %v3102 = vunpack.c.l.b16 %v715
        %v3103 = vunpack.c.h.b16 %v715
        %v3104 = vunpack.c.l.b16 %v716
        %v3105 = vunpack.c.h.b16 %v716
        %v3106 = vunpack.c.l.b16 %v717
        %v3107 = vunpack.c.h.b16 %v717
        %v3108 = vunpack.c.l.b16 %v718
        %v3109 = vunpack.c.h.b16 %v718
        %v3110 = vunpack.c.l.b16 %v719
        %v3111 = vunpack.c.h.b16 %v719
        %v3112 = vunpack.c.l.b16 %v720
        %v3113 = vunpack.c.h.b16 %v720
        %v3114 = vunpack.c.l.b16 %v721
        %v3115 = vunpack.c.h.b16 %v721
        %v3116 = vunpack.c.l.b16 %v722
        %v3117 = vunpack.c.h.b16 %v722
        %v3118 = vunpack.c.l.b16 %v723
        %v3119 = vunpack.c.h.b16 %v723
        %v3120 = vunpack.c.l.b16 %v724
        %v3121 = vunpack.c.h.b16 %v724
        %v3122 = vunpack.c.l.b16 %v725
        %v3123 = vunpack.c.h.b16 %v725
        %v3124 = vunpack.c.l.b16 %v726
        %v3125 = vunpack.c.h.b16 %v726
        %v3126 = vunpack.c.l.b16 %v727
        %v3127 = vunpack.c.h.b16 %v727
        %v3128 = vunpack.c.l.b16 %v728
        %v3129 = vunpack.c.h.b16 %v728
        %v3130 = vunpack.c.l.b16 %v729
        %v3131 = vunpack.c.h.b16 %v729
        %v3132 = vunpack.c.l.b16 %v730
        %v3133 = vunpack.c.h.b16 %v730
        %v3134 = vunpack.c.l.b16 %v731
        %v3135 = vunpack.c.h.b16 %v731
        %v3136 = vunpack.c.l.b16 %v732
        %v3137 = vunpack.c.h.b16 %v732
        %v3138 = vunpack.c.l.b16 %v733
        %v3139 = vunpack.c.h.b16 %v733
        %v3140 = vunpack.c.l.b16 %v734
        %v3141 = vunpack.c.h.b16 %v734
        %v3142 = vunpack.c.l.b16 %v735
        %v3143 = vunpack.c.h.b16 %v735
        %v3144 = vunpack.c.l.b16 %v736
        %v3145 = vunpack.c.h.b16 %v736
        %v3146 = vunpack.c.l.b16 %v737
        %v3147 = vunpack.c.h.b16 %v737
        %v3148 = vunpack.c.l.b16 %v738
        %v3149 = vunpack.c.h.b16 %v738
        %v3150 = vunpack.c.l.b16 %v739
        %v3151 = vunpack.c.h.b16 %v739
        %v3152 = vunpack.c.l.b16 %v740
        %v3153 = vunpack.c.h.b16 %v740
        %v3154 = vunpack.c.l.b16 %v741
        %v3155 = vunpack.c.h.b16 %v741
        %v3156 = vunpack.c.l.b16 %v742
        %v3157 = vunpack.c.h.b16 %v742
        %v3158 = vunpack.c.l.b16 %v743
        %v3159 = vunpack.c.h.b16 %v743
        %v3160 = vunpack.c.l.b16 %v744
        %v3161 = vunpack.c.h.b16 %v744
        %v3162 = vunpack.c.l.b16 %v745
        %v3163 = vunpack.c.h.b16 %v745
        %v3164 = vunpack.c.l.b16 %v746
        %v3165 = vunpack.c.h.b16 %v746
        %v3166 = vunpack.c.l.b16 %v747
        %v3167 = vunpack.c.h.b16 %v747
        %v3168 = vunpack.c.l.b16 %v748
        %v3169 = vunpack.c.h.b16 %v748
        %v3170 = vunpack.c.l.b16 %v749
        %v3171 = vunpack.c.h.b16 %v749
        %v3172 = vunpack.c.l.b16 %v750
        %v3173 = vunpack.c.h.b16 %v750
        %v3174 = vunpack.c.l.b16 %v751
        %v3175 = vunpack.c.h.b16 %v751
        %v3176 = vunpack.c.l.b16 %v752
        %v3177 = vunpack.c.h.b16 %v752
        %v3178 = vunpack.c.l.b16 %v753
        %v3179 = vunpack.c.h.b16 %v753
        %v3180 = vunpack.c.l.b16 %v754
        %v3181 = vunpack.c.h.b16 %v754
        %v3182 = vunpack.c.l.b16 %v755
        %v3183 = vunpack.c.h.b16 %v755
        %v3184 = vunpack.c.l.b16 %v756
        %v3185 = vunpack.c.h.b16 %v756
        %v3186 = vunpack.c.l.b16 %v757
        %v3187 = vunpack.c.h.b16 %v757
        %v3188 = vunpack.c.l.b16 %v758
        %v3189 = vunpack.c.h.b16 %v758
        %v3190 = vunpack.c.l.b16 %v759
        %v3191 = vunpack.c.h.b16 %v759
        %v3192 = vunpack.c.l.b16 %v760
        %v3193 = vunpack.c.h.b16 %v760
        %v3194 = vunpack.c.l.b16 %v761
        %v3195 = vunpack.c.h.b16 %v761
        %v3196 = vunpack.c.l.b16 %v762
        %v3197 = vunpack.c.h.b16 %v762
        %v3198 = vunpack.c.l.b16 %v763
        %v3199 = vunpack.c.h.b16 %v763
        %v3200 = vunpack.c.l.b16 %v764
        %v3201 = vunpack.c.h.b16 %v764
        %v3202 = vunpack.c.l.b16 %v765
        %v3203 = vunpack.c.h.b16 %v765
        %v3204 = vunpack.c.l.b16 %v766
        %v3205 = vunpack.c.h.b16 %v766
        %v3206 = vunpack.c.l.b16 %v767
        %v3207 = vunpack.c.h.b16 %v767
        %v3208 = vunpack.c.l.b16 %v768
        %v3209 = vunpack.c.h.b16 %v768
        %v3210 = vunpack.c.l.b16 %v769
        %v3211 = vunpack.c.h.b16 %v769
        %v3212 = vunpack.c.l.b16 %v770
        %v3213 = vunpack.c.h.b16 %v770
        %v3214 = vunpack.c.l.b16 %v771
        %v3215 = vunpack.c.h.b16 %v771
        %v3216 = vunpack.c.l.b16 %v772
        %v3217 = vunpack.c.h.b16 %v772
        %v3218 = vunpack.c.l.b16 %v773
        %v3219 = vunpack.c.h.b16 %v773
        %v3220 = vunpack.c.l.b16 %v774
        %v3221 = vunpack.c.h.b16 %v774
        %v3222 = vunpack.c.l.b16 %v775
        %v3223 = vunpack.c.h.b16 %v775
        %v3224 = vunpack.c.l.b16 %v776
        %v3225 = vunpack.c.h.b16 %v776
        %v3226 = vunpack.c.l.b16 %v777
        %v3227 = vunpack.c.h.b16 %v777
        %v3228 = vunpack.c.l.b16 %v778
        %v3229 = vunpack.c.h.b16 %v778
        %v3230 = vunpack.c.l.b16 %v779
        %v3231 = vunpack.c.h.b16 %v779
        %v3232 = vunpack.c.l.b16 %v780
        %v3233 = vunpack.c.h.b16 %v780
        %v3234 = vunpack.c.l.b16 %v781
        %v3235 = vunpack.c.h.b16 %v781
        %v3236 = vunpack.c.l.b16 %v782
        %v3237 = vunpack.c.h.b16 %v782
        %v3238 = vunpack.c.l.b16 %v783
        %v3239 = vunpack.c.h.b16 %v783
        %v3240 = vunpack.c.l.b16 %v784
        %v3241 = vunpack.c.h.b16 %v784
        %v3242 = vunpack.c.l.b16 %v785
        %v3243 = vunpack.c.h.b16 %v785
        %v3244 = vunpack.c.l.b16 %v786
        %v3245 = vunpack.c.h.b16 %v786
        %v3246 = vunpack.c.l.b16 %v787
        %v3247 = vunpack.c.h.b16 %v787
        %v3248 = vunpack.c.l.b16 %v788
        %v3249 = vunpack.c.h.b16 %v788
        %v3250 = vunpack.c.l.b16 %v789
        %v3251 = vunpack.c.h.b16 %v789
        %v3252 = vunpack.c.l.b16 %v790
        %v3253 = vunpack.c.h.b16 %v790
        %v3254 = vunpack.c.l.b16 %v791
        %v3255 = vunpack.c.h.b16 %v791
        %v3256 = vunpack.c.l.b16 %v792
        %v3257 = vunpack.c.h.b16 %v792
        %v3258 = vunpack.c.l.b16 %v793
        %v3259 = vunpack.c.h.b16 %v793
        %v3260 = vunpack.c.l.b16 %v794
        %v3261 = vunpack.c.h.b16 %v794
        %v3262 = vunpack.c.l.b16 %v795
        %v3263 = vunpack.c.h.b16 %v795
        %v3264 = vunpack.c.l.b16 %v796
        %v3265 = vunpack.c.h.b16 %v796
        %v3266 = vunpack.c.l.b16 %v797
        %v3267 = vunpack.c.h.b16 %v797
        %v3268 = vunpack.c.l.b16 %v798
        %v3269 = vunpack.c.h.b16 %v798
        %v3270 = vunpack.c.l.b16 %v799
        %v3271 = vunpack.c.h.b16 %v799
        %v3272 = vunpack.c.l.b16 %v800
        %v3273 = vunpack.c.h.b16 %v800
        %v3274 = vunpack.c.l.b16 %v801
        %v3275 = vunpack.c.h.b16 %v801
        %v3276 = vunpack.c.l.b16 %v802
        %v3277 = vunpack.c.h.b16 %v802
        %v3278 = vunpack.c.l.b16 %v803
        %v3279 = vunpack.c.h.b16 %v803
        %v3280 = vunpack.c.l.b16 %v804
        %v3281 = vunpack.c.h.b16 %v804
        %v3282 = vunpack.c.l.b16 %v805
        %v3283 = vunpack.c.h.b16 %v805
        %v3284 = vunpack.c.l.b16 %v806
        %v3285 = vunpack.c.h.b16 %v806
        %v3286 = vunpack.c.l.b16 %v807
        %v3287 = vunpack.c.h.b16 %v807
        %v3288 = vunpack.c.l.b16 %v808
        %v3289 = vunpack.c.h.b16 %v808
        %v3290 = vunpack.c.l.b16 %v809
        %v3291 = vunpack.c.h.b16 %v809
        %v3292 = vunpack.c.l.b16 %v810
        %v3293 = vunpack.c.h.b16 %v810
        %v3294 = vunpack.c.l.b16 %v811
        %v3295 = vunpack.c.h.b16 %v811
        %v3296 = vunpack.c.l.b16 %v812
        %v3297 = vunpack.c.h.b16 %v812
        %v3298 = vunpack.c.l.b16 %v813
        %v3299 = vunpack.c.h.b16 %v813
        %v3300 = vunpack.c.l.b16 %v814
        %v3301 = vunpack.c.h.b16 %v814
        %v3302 = vunpack.c.l.b16 %v815
        %v3303 = vunpack.c.h.b16 %v815
        %v3304 = vunpack.c.l.b16 %v816
        %v3305 = vunpack.c.h.b16 %v816
        %v3306 = vunpack.c.l.b16 %v817
        %v3307 = vunpack.c.h.b16 %v817
        %v3308 = vunpack.c.l.b16 %v818
        %v3309 = vunpack.c.h.b16 %v818
        %v3310 = vunpack.c.l.b16 %v819
        %v3311 = vunpack.c.h.b16 %v819
        %v3312 = vunpack.c.l.b16 %v820
        %v3313 = vunpack.c.h.b16 %v820
        %v3314 = vunpack.c.l.b16 %v821
        %v3315 = vunpack.c.h.b16 %v821
        %v3316 = vunpack.c.l.b16 %v822
        %v3317 = vunpack.c.h.b16 %v822
        %v3318 = vunpack.c.l.b16 %v823
        %v3319 = vunpack.c.h.b16 %v823
        %v3320 = vunpack.c.l.b16 %v824
        %v3321 = vunpack.c.h.b16 %v824
        %v3322 = vunpack.c.l.b16 %v825
        %v3323 = vunpack.c.h.b16 %v825
        %v3324 = vunpack.c.l.b16 %v826
        %v3325 = vunpack.c.h.b16 %v826
        %v3326 = vunpack.c.l.b16 %v827
        %v3327 = vunpack.c.h.b16 %v827
        %v3328 = vunpack.c.l.b16 %v828
        %v3329 = vunpack.c.h.b16 %v828
        %v3330 = vunpack.c.l.b16 %v829
        %v3331 = vunpack.c.h.b16 %v829
        %v3332 = vunpack.c.l.b16 %v830
        %v3333 = vunpack.c.h.b16 %v830
        %v3334 = vunpack.c.l.b16 %v831
        %v3335 = vunpack.c.h.b16 %v831
        %v3336 = vunpack.c.l.b16 %v832
        %v3337 = vunpack.c.h.b16 %v832
        %v3338 = vunpack.c.l.b16 %v833
        %v3339 = vunpack.c.h.b16 %v833
        %v3340 = vunpack.c.l.b16 %v834
        %v3341 = vunpack.c.h.b16 %v834
        %v3342 = vunpack.c.l.b16 %v835
        %v3343 = vunpack.c.h.b16 %v835
        %v3344 = vunpack.c.l.b16 %v836
        %v3345 = vunpack.c.h.b16 %v836
        %v3346 = vunpack.c.l.b16 %v837
        %v3347 = vunpack.c.h.b16 %v837
        %v3348 = vunpack.c.l.b16 %v838
        %v3349 = vunpack.c.h.b16 %v838
        %v3350 = vunpack.c.l.b16 %v839
        %v3351 = vunpack.c.h.b16 %v839
        %v3352 = vunpack.c.l.b16 %v840
        %v3353 = vunpack.c.h.b16 %v840
        %v3354 = vunpack.c.l.b16 %v841
        %v3355 = vunpack.c.h.b16 %v841
        %v3356 = vunpack.c.l.b16 %v842
        %v3357 = vunpack.c.h.b16 %v842
        %v3358 = vunpack.c.l.b16 %v843
        %v3359 = vunpack.c.h.b16 %v843
        %v3360 = vunpack.c.l.b16 %v844
        %v3361 = vunpack.c.h.b16 %v844
        %v3362 = vunpack.c.l.b16 %v845
        %v3363 = vunpack.c.h.b16 %v845
        %v3364 = vunpack.c.l.b16 %v846
        %v3365 = vunpack.c.h.b16 %v846
        %v3366 = vunpack.c.l.b16 %v847
        %v3367 = vunpack.c.h.b16 %v847
        %v3368 = vunpack.c.l.b16 %v848
        %v3369 = vunpack.c.h.b16 %v848
        %v3370 = vunpack.c.l.b16 %v849
        %v3371 = vunpack.c.h.b16 %v849
        %v3372 = vunpack.c.l.b16 %v850
        %v3373 = vunpack.c.h.b16 %v850
        %v3374 = vunpack.c.l.b16 %v851
        %v3375 = vunpack.c.h.b16 %v851
        %v3376 = vunpack.c.l.b16 %v852
        %v3377 = vunpack.c.h.b16 %v852
        %v3378 = vunpack.c.l.b16 %v853
        %v3379 = vunpack.c.h.b16 %v853
        %v3380 = vunpack.c.l.b16 %v854
        %v3381 = vunpack.c.h.b16 %v854
        %v3382 = vunpack.c.l.b16 %v855
        %v3383 = vunpack.c.h.b16 %v855
        %v3384 = vunpack.c.l.b16 %v856
        %v3385 = vunpack.c.h.b16 %v856
        %v3386 = vunpack.c.l.b16 %v857
        %v3387 = vunpack.c.h.b16 %v857
        %v3388 = vunpack.c.l.b16 %v858
        %v3389 = vunpack.c.h.b16 %v858
        %v3390 = vunpack.c.l.b16 %v859
        %v3391 = vunpack.c.h.b16 %v859
        %v3392 = vunpack.c.l.b16 %v860
        %v3393 = vunpack.c.h.b16 %v860
        %v3394 = vunpack.c.l.b16 %v861
        %v3395 = vunpack.c.h.b16 %v861
        %v3396 = vunpack.c.l.b16 %v862
        %v3397 = vunpack.c.h.b16 %v862
        %v3398 = vunpack.c.l.b16 %v863
        %v3399 = vunpack.c.h.b16 %v863
        %v3400 = vunpack.c.l.b16 %v864
        %v3401 = vunpack.c.h.b16 %v864
        %v3402 = vunpack.c.l.b16 %v865
        %v3403 = vunpack.c.h.b16 %v865
        %v3404 = vunpack.c.l.b16 %v866
        %v3405 = vunpack.c.h.b16 %v866
        %v3406 = vunpack.c.l.b16 %v867
        %v3407 = vunpack.c.h.b16 %v867
        %v3408 = vunpack.c.l.b16 %v868
        %v3409 = vunpack.c.h.b16 %v868
        %v3410 = vunpack.c.l.b16 %v869
        %v3411 = vunpack.c.h.b16 %v869
        %v3412 = vunpack.c.l.b16 %v870
        %v3413 = vunpack.c.h.b16 %v870
        %v3414 = vunpack.c.l.b16 %v871
        %v3415 = vunpack.c.h.b16 %v871
        %v3416 = vunpack.c.l.b16 %v872
        %v3417 = vunpack.c.h.b16 %v872
        %v3418 = vunpack.c.l.b16 %v873
        %v3419 = vunpack.c.h.b16 %v873
        %v3420 = vunpack.c.l.b16 %v874
        %v3421 = vunpack.c.h.b16 %v874
        %v3422 = vunpack.c.l.b16 %v875
        %v3423 = vunpack.c.h.b16 %v875
        %v3424 = vunpack.c.l.b16 %v876
        %v3425 = vunpack.c.h.b16 %v876
        %v3426 = vunpack.c.l.b16 %v877
        %v3427 = vunpack.c.h.b16 %v877
        %v3428 = vunpack.c.l.b16 %v878
        %v3429 = vunpack.c.h.b16 %v878
        %v3430 = vunpack.c.l.b16 %v879
        %v3431 = vunpack.c.h.b16 %v879
        %v3432 = vunpack.c.l.b16 %v880
        %v3433 = vunpack.c.h.b16 %v880
        %v3434 = vunpack.c.l.b16 %v881
        %v3435 = vunpack.c.h.b16 %v881
        %v3436 = vunpack.c.l.b16 %v882
        %v3437 = vunpack.c.h.b16 %v882
        %v3438 = vunpack.c.l.b16 %v883
        %v3439 = vunpack.c.h.b16 %v883
        %v3440 = vunpack.c.l.b16 %v884
        %v3441 = vunpack.c.h.b16 %v884
        %v3442 = vunpack.c.l.b16 %v885
        %v3443 = vunpack.c.h.b16 %v885
        %v3444 = vunpack.c.l.b16 %v886
        %v3445 = vunpack.c.h.b16 %v886
        %v3446 = vunpack.c.l.b16 %v887
        %v3447 = vunpack.c.h.b16 %v887
        %v3448 = vunpack.c.l.b16 %v888
        %v3449 = vunpack.c.h.b16 %v888
        %v3450 = vunpack.c.l.b16 %v889
        %v3451 = vunpack.c.h.b16 %v889
        %v3452 = vunpack.c.l.b16 %v890
        %v3453 = vunpack.c.h.b16 %v890
        %v3454 = vunpack.c.l.b16 %v891
        %v3455 = vunpack.c.h.b16 %v891
        %v3456 = vunpack.c.l.b16 %v892
        %v3457 = vunpack.c.h.b16 %v892
        %v3458 = vunpack.c.l.b16 %v893
        %v3459 = vunpack.c.h.b16 %v893
        %v3460 = vunpack.c.l.b16 %v894
        %v3461 = vunpack.c.h.b16 %v894
        %v3462 = vunpack.c.l.b16 %v895
        %v3463 = vunpack.c.h.b16 %v895
        %v3464 = vunpack.c.l.b16 %v896
        %v3465 = vunpack.c.h.b16 %v896
        %v3466 = vunpack.c.l.b16 %v897
        %v3467 = vunpack.c.h.b16 %v897
        %v3468 = vunpack.c.l.b16 %v898
        %v3469 = vunpack.c.h.b16 %v898
        %v3470 = vunpack.c.l.b16 %v899
        %v3471 = vunpack.c.h.b16 %v899
        %v3472 = vunpack.c.l.b16 %v900
        %v3473 = vunpack.c.h.b16 %v900
        %v3474 = vunpack.c.l.b16 %v901
        %v3475 = vunpack.c.h.b16 %v901
        %v3476 = vunpack.c.l.b16 %v902
        %v3477 = vunpack.c.h.b16 %v902
        %v3478 = vunpack.c.l.b16 %v903
        %v3479 = vunpack.c.h.b16 %v903
        %v3480 = vunpack.c.l.b16 %v904
        %v3481 = vunpack.c.h.b16 %v904
        %v3482 = vunpack.c.l.b16 %v905
        %v3483 = vunpack.c.h.b16 %v905
        %v3484 = vunpack.c.l.b16 %v906
        %v3485 = vunpack.c.h.b16 %v906
        %v3486 = vunpack.c.l.b16 %v907
        %v3487 = vunpack.c.h.b16 %v907
        %v3488 = vunpack.c.l.b16 %v908
        %v3489 = vunpack.c.h.b16 %v908
        %v3490 = vunpack.c.l.b16 %v909
        %v3491 = vunpack.c.h.b16 %v909
        %v3492 = vunpack.c.l.b16 %v910
        %v3493 = vunpack.c.h.b16 %v910
        %v3494 = vunpack.c.l.b16 %v911
        %v3495 = vunpack.c.h.b16 %v911
        %v3496 = vunpack.c.l.b16 %v912
        %v3497 = vunpack.c.h.b16 %v912
        %v3498 = vunpack.c.l.b16 %v913
        %v3499 = vunpack.c.h.b16 %v913
        %v3500 = vunpack.c.l.b16 %v914
        %v3501 = vunpack.c.h.b16 %v914
        %v3502 = vunpack.c.l.b16 %v915
        %v3503 = vunpack.c.h.b16 %v915
        %v3504 = vunpack.c.l.b16 %v916
        %v3505 = vunpack.c.h.b16 %v916
        %v3506 = vunpack.c.l.b16 %v917
        %v3507 = vunpack.c.h.b16 %v917
        %v3508 = vunpack.c.l.b16 %v918
        %v3509 = vunpack.c.h.b16 %v918
        %v3510 = vunpack.c.l.b16 %v919
        %v3511 = vunpack.c.h.b16 %v919
        %v3512 = vunpack.c.l.b16 %v920
        %v3513 = vunpack.c.h.b16 %v920
        %v3514 = vunpack.c.l.b16 %v921
        %v3515 = vunpack.c.h.b16 %v921
        %v3516 = vunpack.c.l.b16 %v922
        %v3517 = vunpack.c.h.b16 %v922
        %v3518 = vunpack.c.l.b16 %v923
        %v3519 = vunpack.c.h.b16 %v923
        %v3520 = vunpack.c.l.b16 %v924
        %v3521 = vunpack.c.h.b16 %v924
        %v3522 = vunpack.c.l.b16 %v925
        %v3523 = vunpack.c.h.b16 %v925
        %v3524 = vunpack.c.l.b16 %v926
        %v3525 = vunpack.c.h.b16 %v926
        %v3526 = vunpack.c.l.b16 %v927
        %v3527 = vunpack.c.h.b16 %v927
        %v3528 = vunpack.c.l.b16 %v928
        %v3529 = vunpack.c.h.b16 %v928
        %v3530 = vunpack.c.l.b16 %v929
        %v3531 = vunpack.c.h.b16 %v929
        %v3532 = vunpack.c.l.b16 %v930
        %v3533 = vunpack.c.h.b16 %v930
        %v3534 = vunpack.c.l.b16 %v931
        %v3535 = vunpack.c.h.b16 %v931
        %v3536 = vunpack.c.l.b16 %v932
        %v3537 = vunpack.c.h.b16 %v932
        %v3538 = vunpack.c.l.b16 %v933
        %v3539 = vunpack.c.h.b16 %v933
        %v3540 = vunpack.c.l.b16 %v934
        %v3541 = vunpack.c.h.b16 %v934
        %v3542 = vunpack.c.l.b16 %v935
        %v3543 = vunpack.c.h.b16 %v935
        %v3544 = vunpack.c.l.b16 %v936
        %v3545 = vunpack.c.h.b16 %v936
        %v3546 = vunpack.c.l.b16 %v937
        %v3547 = vunpack.c.h.b16 %v937
        %v3548 = vunpack.c.l.b16 %v938
        %v3549 = vunpack.c.h.b16 %v938
        %v3550 = vunpack.c.l.b16 %v939
        %v3551 = vunpack.c.h.b16 %v939
        %v3552 = vunpack.c.l.b16 %v940
        %v3553 = vunpack.c.h.b16 %v940
        %v3554 = vunpack.c.l.b16 %v941
        %v3555 = vunpack.c.h.b16 %v941
        %v3556 = vunpack.c.l.b16 %v942
        %v3557 = vunpack.c.h.b16 %v942
        %v3558 = vunpack.c.l.b16 %v943
        %v3559 = vunpack.c.h.b16 %v943
        %v3560 = vunpack.c.l.b16 %v944
        %v3561 = vunpack.c.h.b16 %v944
        %v3562 = vunpack.c.l.b16 %v945
        %v3563 = vunpack.c.h.b16 %v945
        %v3564 = vunpack.c.l.b16 %v946
        %v3565 = vunpack.c.h.b16 %v946
        %v3566 = vunpack.c.l.b16 %v947
        %v3567 = vunpack.c.h.b16 %v947
        %v3568 = vunpack.c.l.b16 %v948
        %v3569 = vunpack.c.h.b16 %v948
        %v3570 = vunpack.c.l.b16 %v949
        %v3571 = vunpack.c.h.b16 %v949
        %v3572 = vunpack.c.l.b16 %v950
        %v3573 = vunpack.c.h.b16 %v950
        %v3574 = vunpack.c.l.b16 %v951
        %v3575 = vunpack.c.h.b16 %v951
        %v3576 = vunpack.c.l.b16 %v952
        %v3577 = vunpack.c.h.b16 %v952
        %v3578 = vunpack.c.l.b16 %v953
        %v3579 = vunpack.c.h.b16 %v953
        %v3580 = vunpack.c.l.b16 %v954
        %v3581 = vunpack.c.h.b16 %v954
        %v3582 = vunpack.c.l.b16 %v955
        %v3583 = vunpack.c.h.b16 %v955
        %v3584 = vunpack.c.l.b16 %v956
        %v3585 = vunpack.c.h.b16 %v956
        %v3586 = vunpack.c.l.b16 %v957
        %v3587 = vunpack.c.h.b16 %v957
        %v3588 = vunpack.c.l.b16 %v958
        %v3589 = vunpack.c.h.b16 %v958
        %v3590 = vunpack.c.l.b16 %v959
        %v3591 = vunpack.c.h.b16 %v959
        %v3592 = vunpack.c.l.b16 %v960
        %v3593 = vunpack.c.h.b16 %v960
        %v3594 = vunpack.c.l.b16 %v961
        %v3595 = vunpack.c.h.b16 %v961
        %v3596 = vunpack.c.l.b16 %v962
        %v3597 = vunpack.c.h.b16 %v962
        %v3598 = vunpack.c.l.b16 %v963
        %v3599 = vunpack.c.h.b16 %v963
        %v3600 = vunpack.c.l.b16 %v964
        %v3601 = vunpack.c.h.b16 %v964
        %v3602 = vunpack.c.l.b16 %v965
        %v3603 = vunpack.c.h.b16 %v965
        %v3604 = vunpack.c.l.b16 %v966
        %v3605 = vunpack.c.h.b16 %v966
        %v3606 = vunpack.c.l.b16 %v967
        %v3607 = vunpack.c.h.b16 %v967
        %v3608 = vunpack.c.l.b16 %v968
        %v3609 = vunpack.c.h.b16 %v968
        %v3610 = vunpack.c.l.b16 %v969
        %v3611 = vunpack.c.h.b16 %v969
        %v3612 = vunpack.c.l.b16 %v970
        %v3613 = vunpack.c.h.b16 %v970
        %v3614 = vunpack.c.l.b16 %v971
        %v3615 = vunpack.c.h.b16 %v971
        %v3616 = vunpack.c.l.b16 %v972
        %v3617 = vunpack.c.h.b16 %v972
        %v3618 = vunpack.c.l.b16 %v973
        %v3619 = vunpack.c.h.b16 %v973
        %v3620 = vunpack.c.l.b16 %v974
        %v3621 = vunpack.c.h.b16 %v974
        %v3622 = vunpack.c.l.b16 %v975
        %v3623 = vunpack.c.h.b16 %v975
        %v3624 = vunpack.c.l.b16 %v976
        %v3625 = vunpack.c.h.b16 %v976
        %v3626 = vunpack.c.l.b16 %v977
        %v3627 = vunpack.c.h.b16 %v977
        %v3628 = vunpack.c.l.b16 %v978
        %v3629 = vunpack.c.h.b16 %v978
        %v3630 = vunpack.c.l.b16 %v979
        %v3631 = vunpack.c.h.b16 %v979
        %v3632 = vunpack.c.l.b16 %v980
        %v3633 = vunpack.c.h.b16 %v980
        %v3634 = vunpack.c.l.b16 %v981
        %v3635 = vunpack.c.h.b16 %v981
        %v3636 = vunpack.c.l.b16 %v982
        %v3637 = vunpack.c.h.b16 %v982
        %v3638 = vunpack.c.l.b16 %v983
        %v3639 = vunpack.c.h.b16 %v983
        %v3640 = vunpack.c.l.b16 %v984
        %v3641 = vunpack.c.h.b16 %v984
        %v3642 = vunpack.c.l.b16 %v985
        %v3643 = vunpack.c.h.b16 %v985
        %v3644 = vunpack.c.l.b16 %v986
        %v3645 = vunpack.c.h.b16 %v986
        %v3646 = vunpack.c.l.b16 %v987
        %v3647 = vunpack.c.h.b16 %v987
        %v3648 = vunpack.c.l.b16 %v988
        %v3649 = vunpack.c.h.b16 %v988
        %v3650 = vunpack.c.l.b16 %v989
        %v3651 = vunpack.c.h.b16 %v989
        %v3652 = vunpack.c.l.b16 %v990
        %v3653 = vunpack.c.h.b16 %v990
        %v3654 = vunpack.c.l.b16 %v991
        %v3655 = vunpack.c.h.b16 %v991
        %v3656 = vunpack.c.l.b16 %v992
        %v3657 = vunpack.c.h.b16 %v992
        %v3658 = vunpack.c.l.b16 %v993
        %v3659 = vunpack.c.h.b16 %v993
        %v3660 = vunpack.c.l.b16 %v994
        %v3661 = vunpack.c.h.b16 %v994
        %v3662 = vunpack.c.l.b16 %v995
        %v3663 = vunpack.c.h.b16 %v995
        %v3664 = vunpack.c.l.b16 %v996
        %v3665 = vunpack.c.h.b16 %v996
        %v3666 = vunpack.c.l.b16 %v997
        %v3667 = vunpack.c.h.b16 %v997
        %v3668 = vunpack.c.l.b16 %v998
        %v3669 = vunpack.c.h.b16 %v998
        %v3670 = vunpack.c.l.b16 %v999
        %v3671 = vunpack.c.h.b16 %v999
        %v3672 = vunpack.c.l.b16 %v1000
        %v3673 = vunpack.c.h.b16 %v1000
        %v3674 = vunpack.c.l.b16 %v1001
        %v3675 = vunpack.c.h.b16 %v1001
        %v3676 = vunpack.c.l.b16 %v1002
        %v3677 = vunpack.c.h.b16 %v1002
        %v3678 = vunpack.c.l.b16 %v1003
        %v3679 = vunpack.c.h.b16 %v1003
        %v3680 = vunpack.c.l.b16 %v1004
        %v3681 = vunpack.c.h.b16 %v1004
        %v3682 = vunpack.c.l.b16 %v1005
        %v3683 = vunpack.c.h.b16 %v1005
        %v3684 = vunpack.c.l.b16 %v1006
        %v3685 = vunpack.c.h.b16 %v1006
        %v3686 = vunpack.c.l.b16 %v1007
        %v3687 = vunpack.c.h.b16 %v1007
        %v3688 = vunpack.c.l.b16 %v1008
        %v3689 = vunpack.c.h.b16 %v1008
        %v3690 = vunpack.c.l.b16 %v1009
        %v3691 = vunpack.c.h.b16 %v1009
        %v3692 = vunpack.c.l.b16 %v1010
        %v3693 = vunpack.c.h.b16 %v1010
        %v3694 = vunpack.c.l.b16 %v1011
        %v3695 = vunpack.c.h.b16 %v1011
        %v3696 = vunpack.c.l.b16 %v1012
        %v3697 = vunpack.c.h.b16 %v1012
        %v3698 = vunpack.c.l.b16 %v1013
        %v3699 = vunpack.c.h.b16 %v1013
        %v3700 = vunpack.c.l.b16 %v1014
        %v3701 = vunpack.c.h.b16 %v1014
        %v3702 = vunpack.c.l.b16 %v1015
        %v3703 = vunpack.c.h.b16 %v1015
        %v3704 = vunpack.c.l.b16 %v1016
        %v3705 = vunpack.c.h.b16 %v1016
        %v3706 = vunpack.c.l.b16 %v1017
        %v3707 = vunpack.c.h.b16 %v1017
        %v3708 = vunpack.c.l.b16 %v1018
        %v3709 = vunpack.c.h.b16 %v1018
        %v3710 = vunpack.c.l.b16 %v1019
        %v3711 = vunpack.c.h.b16 %v1019
        %v3712 = vunpack.c.l.b16 %v1020
        %v3713 = vunpack.c.h.b16 %v1020
        %v3714 = vunpack.c.l.b16 %v1021
        %v3715 = vunpack.c.h.b16 %v1021
        %v3716 = vunpack.c.l.b16 %v1022
        %v3717 = vunpack.c.h.b16 %v1022
        %v3718 = vunpack.c.l.b16 %v1023
        %v3719 = vunpack.c.h.b16 %v1023
        %v3720 = vunpack.c.l.b16 %v1024
        %v3721 = vunpack.c.h.b16 %v1024
        %v3722 = vunpack.c.l.b16 %v1025
        %v3723 = vunpack.c.h.b16 %v1025
        %v3724 = vunpack.c.l.b16 %v1026
        %v3725 = vunpack.c.h.b16 %v1026
        %v3726 = vunpack.c.l.b16 %v1027
        %v3727 = vunpack.c.h.b16 %v1027
        %v3728 = vunpack.c.l.b16 %v1028
        %v3729 = vunpack.c.h.b16 %v1028
        %v3730 = vunpack.c.l.b16 %v1029
        %v3731 = vunpack.c.h.b16 %v1029
        %v3732 = vunpack.c.l.b16 %v1030
        %v3733 = vunpack.c.h.b16 %v1030
        %v3734 = vunpack.c.l.b16 %v1031
        %v3735 = vunpack.c.h.b16 %v1031
        %v3736 = vunpack.c.l.b16 %v1032
        %v3737 = vunpack.c.h.b16 %v1032
        %v3738 = vunpack.c.l.b16 %v1033
        %v3739 = vunpack.c.h.b16 %v1033
        %v3740 = vunpack.c.l.b16 %v1034
        %v3741 = vunpack.c.h.b16 %v1034
        %v3742 = vunpack.c.l.b16 %v1035
        %v3743 = vunpack.c.h.b16 %v1035
        %v3744 = vunpack.c.l.b16 %v1036
        %v3745 = vunpack.c.h.b16 %v1036
        %v3746 = vunpack.c.l.b16 %v1037
        %v3747 = vunpack.c.h.b16 %v1037
        %v3748 = vunpack.c.l.b16 %v1038
        %v3749 = vunpack.c.h.b16 %v1038
        %v3750 = vunpack.c.l.b16 %v1039
        %v3751 = vunpack.c.h.b16 %v1039
        %v3752 = vunpack.c.l.b16 %v1040
        %v3753 = vunpack.c.h.b16 %v1040
        %v3754 = vunpack.c.l.b16 %v1041
        %v3755 = vunpack.c.h.b16 %v1041
        %v3756 = vunpack.c.l.b16 %v1042
        %v3757 = vunpack.c.h.b16 %v1042
        %v3758 = vunpack.c.l.b16 %v1043
        %v3759 = vunpack.c.h.b16 %v1043
        %v3760 = vunpack.c.l.b16 %v1044
        %v3761 = vunpack.c.h.b16 %v1044
        %v3762 = vunpack.c.l.b16 %v1045
        %v3763 = vunpack.c.h.b16 %v1045
        %v3764 = vunpack.c.l.b16 %v1046
        %v3765 = vunpack.c.h.b16 %v1046
        %v3766 = vunpack.c.l.b16 %v1047
        %v3767 = vunpack.c.h.b16 %v1047
        %v3768 = vunpack.c.l.b16 %v1048
        %v3769 = vunpack.c.h.b16 %v1048
        %v3770 = vunpack.c.l.b16 %v1049
        %v3771 = vunpack.c.h.b16 %v1049
        %v3772 = vunpack.c.l.b16 %v1050
        %v3773 = vunpack.c.h.b16 %v1050
        %v3774 = vunpack.c.l.b16 %v1051
        %v3775 = vunpack.c.h.b16 %v1051
        %v3776 = vunpack.c.l.b16 %v1052
        %v3777 = vunpack.c.h.b16 %v1052
        %v3778 = vunpack.c.l.b16 %v1053
        %v3779 = vunpack.c.h.b16 %v1053
        %v3780 = vunpack.c.l.b16 %v1054
        %v3781 = vunpack.c.h.b16 %v1054
        %v3782 = vunpack.c.l.b16 %v1055
        %v3783 = vunpack.c.h.b16 %v1055
        %v3784 = vunpack.c.l.b16 %v1056
        %v3785 = vunpack.c.h.b16 %v1056
        %v3786 = vunpack.c.l.b16 %v1057
        %v3787 = vunpack.c.h.b16 %v1057
        %v3788 = vunpack.c.l.b16 %v1058
        %v3789 = vunpack.c.h.b16 %v1058
        %v3790 = vunpack.c.l.b16 %v1059
        %v3791 = vunpack.c.h.b16 %v1059
        %v3792 = vunpack.c.l.b16 %v1060
        %v3793 = vunpack.c.h.b16 %v1060
        %v3794 = vunpack.c.l.b16 %v1061
        %v3795 = vunpack.c.h.b16 %v1061
        %v3796 = vunpack.c.l.b16 %v1062
        %v3797 = vunpack.c.h.b16 %v1062
        %v3798 = vunpack.c.l.b16 %v1063
        %v3799 = vunpack.c.h.b16 %v1063
        %v3800 = vunpack.c.l.b16 %v1064
        %v3801 = vunpack.c.h.b16 %v1064
        %v3802 = vunpack.c.l.b16 %v1065
        %v3803 = vunpack.c.h.b16 %v1065
        %v3804 = vunpack.c.l.b16 %v1066
        %v3805 = vunpack.c.h.b16 %v1066
        %v3806 = vunpack.c.l.b16 %v1067
        %v3807 = vunpack.c.h.b16 %v1067
        %v3808 = vunpack.c.l.b16 %v1068
        %v3809 = vunpack.c.h.b16 %v1068
        %v3810 = vunpack.c.l.b16 %v1069
        %v3811 = vunpack.c.h.b16 %v1069
        %v3812 = vunpack.c.l.b16 %v1070
        %v3813 = vunpack.c.h.b16 %v1070
        %v3814 = vunpack.c.l.b16 %v1071
        %v3815 = vunpack.c.h.b16 %v1071
        %v3816 = vunpack.c.l.b16 %v1072
        %v3817 = vunpack.c.h.b16 %v1072
        %v3818 = vunpack.c.l.b16 %v1073
        %v3819 = vunpack.c.h.b16 %v1073
        %v3820 = vunpack.c.l.b16 %v1074
        %v3821 = vunpack.c.h.b16 %v1074
        %v3822 = vunpack.c.l.b16 %v1075
        %v3823 = vunpack.c.h.b16 %v1075
        %v3824 = vunpack.c.l.b16 %v1076
        %v3825 = vunpack.c.h.b16 %v1076
        %v3826 = vunpack.c.l.b16 %v1077
        %v3827 = vunpack.c.h.b16 %v1077
        %v3828 = vunpack.c.l.b16 %v1078
        %v3829 = vunpack.c.h.b16 %v1078
        %v3830 = vunpack.c.l.b16 %v1079
        %v3831 = vunpack.c.h.b16 %v1079
        %v3832 = vunpack.c.l.b16 %v1080
        %v3833 = vunpack.c.h.b16 %v1080
        %v3834 = vunpack.c.l.b16 %v1081
        %v3835 = vunpack.c.h.b16 %v1081
        %v3836 = vunpack.c.l.b16 %v1082
        %v3837 = vunpack.c.h.b16 %v1082
        %v3838 = vunpack.c.l.b16 %v1083
        %v3839 = vunpack.c.h.b16 %v1083
        %v3840 = vunpack.c.l.b16 %v1084
        %v3841 = vunpack.c.h.b16 %v1084
        %v3842 = vunpack.c.l.b16 %v1085
        %v3843 = vunpack.c.h.b16 %v1085
        %v3844 = vunpack.c.l.b16 %v1086
        %v3845 = vunpack.c.h.b16 %v1086
        %v3846 = vunpack.c.l.b16 %v1087
        %v3847 = vunpack.c.h.b16 %v1087
        %v3848 = vunpack.c.l.b16 %v1088
        %v3849 = vunpack.c.h.b16 %v1088
        %v3850 = vunpack.c.l.b16 %v1089
        %v3851 = vunpack.c.h.b16 %v1089
        %v3852 = vunpack.c.l.b16 %v1090
        %v3853 = vunpack.c.h.b16 %v1090
        %v3854 = vunpack.c.l.b16 %v1091
        %v3855 = vunpack.c.h.b16 %v1091
        %v3856 = vunpack.c.l.b16 %v1092
        %v3857 = vunpack.c.h.b16 %v1092
        %v3858 = vunpack.c.l.b16 %v1093
        %v3859 = vunpack.c.h.b16 %v1093
        %v3860 = vunpack.c.l.b16 %v1094
        %v3861 = vunpack.c.h.b16 %v1094
        %v3862 = vunpack.c.l.b16 %v1095
        %v3863 = vunpack.c.h.b16 %v1095
        %v3864 = vunpack.c.l.b16 %v1096
        %v3865 = vunpack.c.h.b16 %v1096
        %v3866 = vunpack.c.l.b16 %v1097
        %v3867 = vunpack.c.h.b16 %v1097
        %v3868 = vunpack.c.l.b16 %v1098
        %v3869 = vunpack.c.h.b16 %v1098
        %v3870 = vunpack.c.l.b16 %v1099
        %v3871 = vunpack.c.h.b16 %v1099
        %v3872 = vunpack.c.l.b16 %v1100
        %v3873 = vunpack.c.h.b16 %v1100
        %v3874 = vunpack.c.l.b16 %v1101
        %v3875 = vunpack.c.h.b16 %v1101
        %v3876 = vunpack.c.l.b16 %v1102
        %v3877 = vunpack.c.h.b16 %v1102
        %v3878 = vunpack.c.l.b16 %v1103
        %v3879 = vunpack.c.h.b16 %v1103
        %v3880 = vunpack.c.l.b16 %v1104
        %v3881 = vunpack.c.h.b16 %v1104
        %v3882 = vunpack.c.l.b16 %v1105
        %v3883 = vunpack.c.h.b16 %v1105
        %v3884 = vunpack.c.l.b16 %v1106
        %v3885 = vunpack.c.h.b16 %v1106
        %v3886 = vunpack.c.l.b16 %v1107
        %v3887 = vunpack.c.h.b16 %v1107
        %v3888 = vunpack.c.l.b16 %v1108
        %v3889 = vunpack.c.h.b16 %v1108
        %v3890 = vunpack.c.l.b16 %v1109
        %v3891 = vunpack.c.h.b16 %v1109
        %v3892 = vunpack.c.l.b16 %v1110
        %v3893 = vunpack.c.h.b16 %v1110
        %v3894 = vunpack.c.l.b16 %v1111
        %v3895 = vunpack.c.h.b16 %v1111
        %v3896 = vunpack.c.l.b16 %v1112
        %v3897 = vunpack.c.h.b16 %v1112
        %v3898 = vunpack.c.l.b16 %v1113
        %v3899 = vunpack.c.h.b16 %v1113
        %v3900 = vunpack.c.l.b16 %v1114
        %v3901 = vunpack.c.h.b16 %v1114
        %v3902 = vunpack.c.l.b16 %v1115
        %v3903 = vunpack.c.h.b16 %v1115
        %v3904 = vunpack.c.l.b16 %v1116
        %v3905 = vunpack.c.h.b16 %v1116
        %v3906 = vunpack.c.l.b16 %v1117
        %v3907 = vunpack.c.h.b16 %v1117
        %v3908 = vunpack.c.l.b16 %v1118
        %v3909 = vunpack.c.h.b16 %v1118
        %v3910 = vunpack.c.l.b16 %v1119
        %v3911 = vunpack.c.h.b16 %v1119
        %v3912 = vunpack.c.l.b16 %v1120
        %v3913 = vunpack.c.h.b16 %v1120
        %v3914 = vunpack.c.l.b16 %v1121
        %v3915 = vunpack.c.h.b16 %v1121
        %v3916 = vunpack.c.l.b16 %v1122
        %v3917 = vunpack.c.h.b16 %v1122
        %v3918 = vunpack.c.l.b16 %v1123
        %v3919 = vunpack.c.h.b16 %v1123
        %v3920 = vunpack.c.l.b16 %v1124
        %v3921 = vunpack.c.h.b16 %v1124
        %v3922 = vunpack.c.l.b16 %v1125
        %v3923 = vunpack.c.h.b16 %v1125
        %v3924 = vunpack.c.l.b16 %v1126
        %v3925 = vunpack.c.h.b16 %v1126
        %v3926 = vunpack.c.l.b16 %v1127
        %v3927 = vunpack.c.h.b16 %v1127
        %v3928 = vunpack.c.l.b16 %v1128
        %v3929 = vunpack.c.h.b16 %v1128
        %v3930 = vunpack.c.l.b16 %v1129
        %v3931 = vunpack.c.h.b16 %v1129
        %v3932 = vunpack.c.l.b16 %v1130
        %v3933 = vunpack.c.h.b16 %v1130
        %v3934 = vunpack.c.l.b16 %v1131
        %v3935 = vunpack.c.h.b16 %v1131
        %v3936 = vunpack.c.l.b16 %v1132
        %v3937 = vunpack.c.h.b16 %v1132
        %v3938 = vunpack.c.l.b16 %v1133
        %v3939 = vunpack.c.h.b16 %v1133
        %v3940 = vunpack.c.l.b16 %v1134
        %v3941 = vunpack.c.h.b16 %v1134
        %v3942 = vunpack.c.l.b16 %v1135
        %v3943 = vunpack.c.h.b16 %v1135
        %v3944 = vunpack.c.l.b16 %v1136
        %v3945 = vunpack.c.h.b16 %v1136
        %v3946 = vunpack.c.l.b16 %v1137
        %v3947 = vunpack.c.h.b16 %v1137
        %v3948 = vunpack.c.l.b16 %v1138
        %v3949 = vunpack.c.h.b16 %v1138
        %v3950 = vunpack.c.l.b16 %v1139
        %v3951 = vunpack.c.h.b16 %v1139
        %v3952 = vunpack.c.l.b16 %v1140
        %v3953 = vunpack.c.h.b16 %v1140
        %v3954 = vunpack.c.l.b16 %v1141
        %v3955 = vunpack.c.h.b16 %v1141
        %v3956 = vunpack.c.l.b16 %v1142
        %v3957 = vunpack.c.h.b16 %v1142
        %v3958 = vunpack.c.l.b16 %v1143
        %v3959 = vunpack.c.h.b16 %v1143
        %v3960 = vunpack.c.l.b16 %v1144
        %v3961 = vunpack.c.h.b16 %v1144
        %v3962 = vunpack.c.l.b16 %v1145
        %v3963 = vunpack.c.h.b16 %v1145
        %v3964 = vunpack.c.l.b16 %v1146
        %v3965 = vunpack.c.h.b16 %v1146
        %v3966 = vunpack.c.l.b16 %v1147
        %v3967 = vunpack.c.h.b16 %v1147
        %v3968 = vunpack.c.l.b16 %v1148
        %v3969 = vunpack.c.h.b16 %v1148
        %v3970 = vunpack.c.l.b16 %v1149
        %v3971 = vunpack.c.h.b16 %v1149
        %v3972 = vunpack.c.l.b16 %v1150
        %v3973 = vunpack.c.h.b16 %v1150
        %v3974 = vunpack.c.l.b16 %v1151
        %v3975 = vunpack.c.h.b16 %v1151
        %v3976 = vunpack.c.l.b16 %v1152
        %v3977 = vunpack.c.h.b16 %v1152
        %v3978 = vunpack.c.l.b16 %v1153
        %v3979 = vunpack.c.h.b16 %v1153
        %v3980 = vunpack.c.l.b16 %v1154
        %v3981 = vunpack.c.h.b16 %v1154
        %v3982 = vunpack.c.l.b16 %v1155
        %v3983 = vunpack.c.h.b16 %v1155
        %v3984 = vunpack.c.l.b16 %v1156
        %v3985 = vunpack.c.h.b16 %v1156
        %v3986 = vunpack.c.l.b16 %v1157
        %v3987 = vunpack.c.h.b16 %v1157
        %v3988 = vunpack.c.l.b16 %v1158
        %v3989 = vunpack.c.h.b16 %v1158
        %v3990 = vunpack.c.l.b16 %v1159
        %v3991 = vunpack.c.h.b16 %v1159
        %v3992 = vunpack.c.l.b16 %v1160
        %v3993 = vunpack.c.h.b16 %v1160
        %v3994 = vunpack.c.l.b16 %v1161
        %v3995 = vunpack.c.h.b16 %v1161
        %v3996 = vunpack.c.l.b16 %v1162
        %v3997 = vunpack.c.h.b16 %v1162
        %v3998 = vunpack.c.l.b16 %v1163
        %v3999 = vunpack.c.h.b16 %v1163
        %v4000 = vunpack.c.l.b16 %v1164
        %v4001 = vunpack.c.h.b16 %v1164
        %v4002 = vunpack.c.l.b16 %v1165
        %v4003 = vunpack.c.h.b16 %v1165
        %v4004 = vunpack.c.l.b16 %v1166
        %v4005 = vunpack.c.h.b16 %v1166
        %v4006 = vunpack.c.l.b16 %v1167
        %v4007 = vunpack.c.h.b16 %v1167
        %v4008 = vunpack.c.l.b16 %v1168
        %v4009 = vunpack.c.h.b16 %v1168
        %v4010 = vunpack.c.l.b16 %v1169
        %v4011 = vunpack.c.h.b16 %v1169
        %v4012 = vunpack.c.l.b16 %v1170
        %v4013 = vunpack.c.h.b16 %v1170
        %v4014 = vunpack.c.l.b16 %v1171
        %v4015 = vunpack.c.h.b16 %v1171
        %v4016 = vunpack.c.l.b16 %v1172
        %v4017 = vunpack.c.h.b16 %v1172
        %v4018 = vunpack.c.l.b16 %v1173
        %v4019 = vunpack.c.h.b16 %v1173
        %v4020 = vunpack.c.l.b16 %v1174
        %v4021 = vunpack.c.h.b16 %v1174
        %v4022 = vunpack.c.l.b16 %v1175
        %v4023 = vunpack.c.h.b16 %v1175
        %v4024 = vunpack.c.l.b16 %v1176
        %v4025 = vunpack.c.h.b16 %v1176
        %v4026 = vunpack.c.l.b16 %v1177
        %v4027 = vunpack.c.h.b16 %v1177
        %v4028 = vunpack.c.l.b16 %v1178
        %v4029 = vunpack.c.h.b16 %v1178
        %v4030 = vunpack.c.l.b16 %v1179
        %v4031 = vunpack.c.h.b16 %v1179
        %v4032 = vunpack.c.l.b16 %v1180
        %v4033 = vunpack.c.h.b16 %v1180
        %v4034 = vunpack.c.l.b16 %v1181
        %v4035 = vunpack.c.h.b16 %v1181
        %v4036 = vunpack.c.l.b16 %v1182
        %v4037 = vunpack.c.h.b16 %v1182
        %v4038 = vunpack.c.l.b16 %v1183
        %v4039 = vunpack.c.h.b16 %v1183
        %v4040 = vunpack.c.l.b16 %v1184
        %v4041 = vunpack.c.h.b16 %v1184
        %v4042 = vunpack.c.l.b16 %v1185
        %v4043 = vunpack.c.h.b16 %v1185
        %v4044 = vunpack.c.l.b16 %v1186
        %v4045 = vunpack.c.h.b16 %v1186
        %v4046 = vunpack.c.l.b16 %v1187
        %v4047 = vunpack.c.h.b16 %v1187
        %v4048 = vunpack.c.l.b16 %v1188
        %v4049 = vunpack.c.h.b16 %v1188
        %v4050 = vunpack.c.l.b16 %v1189
        %v4051 = vunpack.c.h.b16 %v1189
        %v4052 = vunpack.c.l.b16 %v1190
        %v4053 = vunpack.c.h.b16 %v1190
        %v4054 = vunpack.c.l.b16 %v1191
        %v4055 = vunpack.c.h.b16 %v1191
        %v4056 = vunpack.c.l.b16 %v1192
        %v4057 = vunpack.c.h.b16 %v1192
        %v4058 = vunpack.c.l.b16 %v1193
        %v4059 = vunpack.c.h.b16 %v1193
        %v4060 = vunpack.c.l.b16 %v1194
        %v4061 = vunpack.c.h.b16 %v1194
        %v4062 = vunpack.c.l.b16 %v1195
        %v4063 = vunpack.c.h.b16 %v1195
        %v4064 = vunpack.c.l.b16 %v1196
        %v4065 = vunpack.c.h.b16 %v1196
        %v4066 = vunpack.c.l.b16 %v1197
        %v4067 = vunpack.c.h.b16 %v1197
        %v4068 = vunpack.c.l.b16 %v1198
        %v4069 = vunpack.c.h.b16 %v1198
        %v4070 = vunpack.c.l.b16 %v1199
        %v4071 = vunpack.c.h.b16 %v1199
        %v4072 = vunpack.c.l.b16 %v1200
        %v4073 = vunpack.c.h.b16 %v1200
        %v4074 = vunpack.c.l.b16 %v1201
        %v4075 = vunpack.c.h.b16 %v1201
        %v4076 = vunpack.c.l.b16 %v1202
        %v4077 = vunpack.c.h.b16 %v1202
        %v4078 = vunpack.c.l.b16 %v1203
        %v4079 = vunpack.c.h.b16 %v1203
        %v4080 = vunpack.c.l.b16 %v1204
        %v4081 = vunpack.c.h.b16 %v1204
        %v4082 = vunpack.c.l.b16 %v1205
        %v4083 = vunpack.c.h.b16 %v1205
        %v4084 = vunpack.c.l.b16 %v1206
        %v4085 = vunpack.c.h.b16 %v1206
        %v4086 = vunpack.c.l.b16 %v1207
        %v4087 = vunpack.c.h.b16 %v1207
        %v4088 = vunpack.c.l.b16 %v1208
        %v4089 = vunpack.c.h.b16 %v1208
        %v4090 = vunpack.c.l.b16 %v1209
        %v4091 = vunpack.c.h.b16 %v1209
        %v4092 = vunpack.c.l.b16 %v1210
        %v4093 = vunpack.c.h.b16 %v1210
        %v4094 = vunpack.c.l.b16 %v1211
        %v4095 = vunpack.c.h.b16 %v1211
        %v4096 = vunpack.c.l.b16 %v1212
        %v4097 = vunpack.c.h.b16 %v1212
        %v4098 = vunpack.c.l.b16 %v1213
        %v4099 = vunpack.c.h.b16 %v1213
        %v4100 = vunpack.c.l.b16 %v1214
        %v4101 = vunpack.c.h.b16 %v1214
        %v4102 = vunpack.c.l.b16 %v1215
        %v4103 = vunpack.c.h.b16 %v1215
        %v4104 = vunpack.c.l.b16 %v1216
        %v4105 = vunpack.c.h.b16 %v1216
        %v4106 = vunpack.c.l.b16 %v1217
        %v4107 = vunpack.c.h.b16 %v1217
        %v4108 = vunpack.c.l.b16 %v1218
        %v4109 = vunpack.c.h.b16 %v1218
        %v4110 = vunpack.c.l.b16 %v1219
        %v4111 = vunpack.c.h.b16 %v1219
        %v4112 = vunpack.c.l.b16 %v1220
        %v4113 = vunpack.c.h.b16 %v1220
        %v4114 = vunpack.c.l.b16 %v1221
        %v4115 = vunpack.c.h.b16 %v1221
        %v4116 = vunpack.c.l.b16 %v1222
        %v4117 = vunpack.c.h.b16 %v1222
        %v4118 = vunpack.c.l.b16 %v1223
        %v4119 = vunpack.c.h.b16 %v1223
        %v4120 = vunpack.c.l.b16 %v1224
        %v4121 = vunpack.c.h.b16 %v1224
        %v4122 = vunpack.c.l.b16 %v1225
        %v4123 = vunpack.c.h.b16 %v1225
        %v4124 = vunpack.c.l.b16 %v1226
        %v4125 = vunpack.c.h.b16 %v1226
        %v4126 = vunpack.c.l.b16 %v1227
        %v4127 = vunpack.c.h.b16 %v1227
        %v4128 = vunpack.c.l.b16 %v1228
        %v4129 = vunpack.c.h.b16 %v1228
        %v4130 = vunpack.c.l.b16 %v1229
        %v4131 = vunpack.c.h.b16 %v1229
        %v4132 = vunpack.c.l.b16 %v1230
        %v4133 = vunpack.c.h.b16 %v1230
        %v4134 = vunpack.c.l.b16 %v1231
        %v4135 = vunpack.c.h.b16 %v1231
        %v4136 = vunpack.c.l.b16 %v1232
        %v4137 = vunpack.c.h.b16 %v1232
        %v4138 = vunpack.c.l.b16 %v1233
        %v4139 = vunpack.c.h.b16 %v1233
        %v4140 = vunpack.c.l.b16 %v1234
        %v4141 = vunpack.c.h.b16 %v1234
        %v4142 = vunpack.c.l.b16 %v1235
        %v4143 = vunpack.c.h.b16 %v1235
        %v4144 = vunpack.c.l.b16 %v1236
        %v4145 = vunpack.c.h.b16 %v1236
        %v4146 = vunpack.c.l.b16 %v1237
        %v4147 = vunpack.c.h.b16 %v1237
        %v4148 = vunpack.c.l.b16 %v1238
        %v4149 = vunpack.c.h.b16 %v1238
        %v4150 = vunpack.c.l.b16 %v1239
        %v4151 = vunpack.c.h.b16 %v1239
        %v4152 = vunpack.c.l.b16 %v1240
        %v4153 = vunpack.c.h.b16 %v1240
        %v4154 = vunpack.c.l.b16 %v1241
        %v4155 = vunpack.c.h.b16 %v1241
        %v4156 = vunpack.c.l.b16 %v1242
        %v4157 = vunpack.c.h.b16 %v1242
        %v4158 = vunpack.c.l.b16 %v1243
        %v4159 = vunpack.c.h.b16 %v1243
        %v4160 = vunpack.c.l.b16 %v1244
        %v4161 = vunpack.c.h.b16 %v1244
        %v4162 = vunpack.c.l.b16 %v1245
        %v4163 = vunpack.c.h.b16 %v1245
        %v4164 = vunpack.c.l.b16 %v1246
        %v4165 = vunpack.c.h.b16 %v1246
        %v4166 = vunpack.c.l.b16 %v1247
        %v4167 = vunpack.c.h.b16 %v1247
        %v4168 = vunpack.c.l.b16 %v1248
        %v4169 = vunpack.c.h.b16 %v1248
        %v4170 = vunpack.c.l.b16 %v1249
        %v4171 = vunpack.c.h.b16 %v1249
        %v4172 = vunpack.c.l.b16 %v1250
        %v4173 = vunpack.c.h.b16 %v1250
        %v4174 = vunpack.c.l.b16 %v1251
        %v4175 = vunpack.c.h.b16 %v1251
        %v4176 = vunpack.c.l.b16 %v1252
        %v4177 = vunpack.c.h.b16 %v1252
        %v4178 = vunpack.c.l.b16 %v1253
        %v4179 = vunpack.c.h.b16 %v1253
        %v4180 = vunpack.c.l.b16 %v1254
        %v4181 = vunpack.c.h.b16 %v1254
        %v4182 = vunpack.c.l.b16 %v1255
        %v4183 = vunpack.c.h.b16 %v1255
        %v4184 = vunpack.c.l.b16 %v1256
        %v4185 = vunpack.c.h.b16 %v1256
        %v4186 = vunpack.c.l.b16 %v1257
        %v4187 = vunpack.c.h.b16 %v1257
        %v4188 = vunpack.c.l.b16 %v1258
        %v4189 = vunpack.c.h.b16 %v1258
        %v4190 = vunpack.c.l.b16 %v1259
        %v4191 = vunpack.c.h.b16 %v1259
        %v4192 = vunpack.c.l.b16 %v1260
        %v4193 = vunpack.c.h.b16 %v1260
        %v4194 = vunpack.c.l.b16 %v1261
        %v4195 = vunpack.c.h.b16 %v1261
        %v4196 = vunpack.c.l.b16 %v1262
        %v4197 = vunpack.c.h.b16 %v1262
        %v4198 = vunpack.c.l.b16 %v1263
        %v4199 = vunpack.c.h.b16 %v1263
        %v4200 = vunpack.c.l.b16 %v1264
        %v4201 = vunpack.c.h.b16 %v1264
        %v4202 = vunpack.c.l.b16 %v1265
        %v4203 = vunpack.c.h.b16 %v1265
        %v4204 = vunpack.c.l.b16 %v1266
        %v4205 = vunpack.c.h.b16 %v1266
        %v4206 = vunpack.c.l.b16 %v1267
        %v4207 = vunpack.c.h.b16 %v1267
        %v4208 = vunpack.c.l.b16 %v1268
        %v4209 = vunpack.c.h.b16 %v1268
        %v4210 = vunpack.c.l.b16 %v1269
        %v4211 = vunpack.c.h.b16 %v1269
        %v4212 = vunpack.c.l.b16 %v1270
        %v4213 = vunpack.c.h.b16 %v1270
        %v4214 = vunpack.c.l.b16 %v1271
        %v4215 = vunpack.c.h.b16 %v1271
        %v4216 = vunpack.c.l.b16 %v1272
        %v4217 = vunpack.c.h.b16 %v1272
        %v4218 = vunpack.c.l.b16 %v1273
        %v4219 = vunpack.c.h.b16 %v1273
        %v4220 = vunpack.c.l.b16 %v1274
        %v4221 = vunpack.c.h.b16 %v1274
        %v4222 = vunpack.c.l.b16 %v1275
        %v4223 = vunpack.c.h.b16 %v1275
        %v4224 = vunpack.c.l.b16 %v1276
        %v4225 = vunpack.c.h.b16 %v1276
        %v4226 = vunpack.c.l.b16 %v1277
        %v4227 = vunpack.c.h.b16 %v1277
        %v4228 = vunpack.c.l.b16 %v1278
        %v4229 = vunpack.c.h.b16 %v1278
        %v4230 = vunpack.c.l.b16 %v1279
        %v4231 = vunpack.c.h.b16 %v1279
        %v4232 = vunpack.c.l.b16 %v1280
        %v4233 = vunpack.c.h.b16 %v1280
        %v4234 = vunpack.c.l.b16 %v1281
        %v4235 = vunpack.c.h.b16 %v1281
        %v4236 = vunpack.c.l.b16 %v1282
        %v4237 = vunpack.c.h.b16 %v1282
        %v4238 = vunpack.c.l.b16 %v1283
        %v4239 = vunpack.c.h.b16 %v1283
        %v4240 = vunpack.c.l.b16 %v1284
        %v4241 = vunpack.c.h.b16 %v1284
        %v4242 = vunpack.c.l.b16 %v1285
        %v4243 = vunpack.c.h.b16 %v1285
        %v4244 = vunpack.c.l.b16 %v1286
        %v4245 = vunpack.c.h.b16 %v1286
        %v4246 = vunpack.c.l.b16 %v1287
        %v4247 = vunpack.c.h.b16 %v1287
        %v4248 = vunpack.c.l.b16 %v1288
        %v4249 = vunpack.c.h.b16 %v1288
        %v4250 = vunpack.c.l.b16 %v1289
        %v4251 = vunpack.c.h.b16 %v1289
        %v4252 = vunpack.c.l.b16 %v1290
        %v4253 = vunpack.c.h.b16 %v1290
        %v4254 = vunpack.c.l.b16 %v1291
        %v4255 = vunpack.c.h.b16 %v1291
        %v4256 = vunpack.c.l.b16 %v1292
        %v4257 = vunpack.c.h.b16 %v1292
        %v4258 = vunpack.c.l.b16 %v1293
        %v4259 = vunpack.c.h.b16 %v1293
        %v4260 = vunpack.c.l.b16 %v1294
        %v4261 = vunpack.c.h.b16 %v1294
        %v4262 = vunpack.c.l.b16 %v1295
        %v4263 = vunpack.c.h.b16 %v1295
        %v4264 = vunpack.c.l.b16 %v1296
        %v4265 = vunpack.c.h.b16 %v1296
        %v4266 = vunpack.c.l.b16 %v1297
        %v4267 = vunpack.c.h.b16 %v1297
        %v4268 = vunpack.c.l.b16 %v1298
        %v4269 = vunpack.c.h.b16 %v1298
        %v4270 = vunpack.c.l.b16 %v1299
        %v4271 = vunpack.c.h.b16 %v1299
        %v4272 = vunpack.c.l.b16 %v1300
        %v4273 = vunpack.c.h.b16 %v1300
        %v4274 = vunpack.c.l.b16 %v1301
        %v4275 = vunpack.c.h.b16 %v1301
        %v4276 = vunpack.c.l.b16 %v1302
        %v4277 = vunpack.c.h.b16 %v1302
        %v4278 = vunpack.c.l.b16 %v1303
        %v4279 = vunpack.c.h.b16 %v1303
        %v4280 = vunpack.c.l.b16 %v1304
        %v4281 = vunpack.c.h.b16 %v1304
        %v4282 = vunpack.c.l.b16 %v1305
        %v4283 = vunpack.c.h.b16 %v1305
        %v4284 = vunpack.c.l.b16 %v1306
        %v4285 = vunpack.c.h.b16 %v1306
        %v4286 = vunpack.c.l.b16 %v1307
        %v4287 = vunpack.c.h.b16 %v1307
        %v4288 = vunpack.c.l.b16 %v1308
        %v4289 = vunpack.c.h.b16 %v1308
        %v4290 = vunpack.c.l.b16 %v1309
        %v4291 = vunpack.c.h.b16 %v1309
        %v4292 = vunpack.c.l.b16 %v1310
        %v4293 = vunpack.c.h.b16 %v1310
        %v4294 = vunpack.c.l.b16 %v1311
        %v4295 = vunpack.c.h.b16 %v1311
        %v4296 = vunpack.c.l.b16 %v1312
        %v4297 = vunpack.c.h.b16 %v1312
        %v4298 = vunpack.c.l.b16 %v1313
        %v4299 = vunpack.c.h.b16 %v1313
        %v4300 = vunpack.c.l.b16 %v1314
        %v4301 = vunpack.c.h.b16 %v1314
        %v4302 = vunpack.c.l.b16 %v1315
        %v4303 = vunpack.c.h.b16 %v1315
        %v4304 = vunpack.c.l.b16 %v1316
        %v4305 = vunpack.c.h.b16 %v1316
        %v4306 = vunpack.c.l.b16 %v1317
        %v4307 = vunpack.c.h.b16 %v1317
        %v4308 = vunpack.c.l.b16 %v1318
        %v4309 = vunpack.c.h.b16 %v1318
        %v4310 = vunpack.c.l.b16 %v1319
        %v4311 = vunpack.c.h.b16 %v1319
        %v4312 = vunpack.c.l.b16 %v1320
        %v4313 = vunpack.c.h.b16 %v1320
        %v4314 = vunpack.c.l.b16 %v1321
        %v4315 = vunpack.c.h.b16 %v1321
        %v4316 = vunpack.c.l.b16 %v1322
        %v4317 = vunpack.c.h.b16 %v1322
        %v4318 = vunpack.c.l.b16 %v1323
        %v4319 = vunpack.c.h.b16 %v1323
        %v4320 = vunpack.c.l.b16 %v1324
        %v4321 = vunpack.c.h.b16 %v1324
        %v4322 = vunpack.c.l.b16 %v1325
        %v4323 = vunpack.c.h.b16 %v1325
        %v4324 = vunpack.c.l.b16 %v1326
        %v4325 = vunpack.c.h.b16 %v1326
        %v4326 = vunpack.c.l.b16 %v1327
        %v4327 = vunpack.c.h.b16 %v1327
        %v4328 = vunpack.c.l.b16 %v1328
        %v4329 = vunpack.c.h.b16 %v1328
        %v4330 = vunpack.c.l.b16 %v1329
        %v4331 = vunpack.c.h.b16 %v1329
        %v4332 = vunpack.c.l.b16 %v1330
        %v4333 = vunpack.c.h.b16 %v1330
        %v4334 = vunpack.c.l.b16 %v1331
        %v4335 = vunpack.c.h.b16 %v1331
        %v4336 = vunpack.c.l.b16 %v1332
        %v4337 = vunpack.c.h.b16 %v1332
        %v4338 = vunpack.c.l.b16 %v1333
        %v4339 = vunpack.c.h.b16 %v1333
        %v4340 = vunpack.c.l.b16 %v1334
        %v4341 = vunpack.c.h.b16 %v1334
        %v4342 = vunpack.c.l.b16 %v1335
        %v4343 = vunpack.c.h.b16 %v1335
        %v4344 = vunpack.c.l.b16 %v1336
        %v4345 = vunpack.c.h.b16 %v1336
        %v4346 = vunpack.c.l.b16 %v1337
        %v4347 = vunpack.c.h.b16 %v1337
        %v4348 = vunpack.c.l.b16 %v1338
        %v4349 = vunpack.c.h.b16 %v1338
        %v4350 = vunpack.c.l.b16 %v1339
        %v4351 = vunpack.c.h.b16 %v1339
        %v4352 = vunpack.c.l.b16 %v1340
        %v4353 = vunpack.c.h.b16 %v1340
        %v4354 = vunpack.c.l.b16 %v1341
        %v4355 = vunpack.c.h.b16 %v1341
        %v4356 = vunpack.c.l.b16 %v1342
        %v4357 = vunpack.c.h.b16 %v1342
        %v4358 = vunpack.c.l.b16 %v1343
        %v4359 = vunpack.c.h.b16 %v1343
        %v4360 = vunpack.c.l.b16 %v1344
        %v4361 = vunpack.c.h.b16 %v1344
        %v4362 = vunpack.c.l.b16 %v1345
        %v4363 = vunpack.c.h.b16 %v1345
        %v4364 = vunpack.c.l.b16 %v1346
        %v4365 = vunpack.c.h.b16 %v1346
        %v4366 = vunpack.c.l.b16 %v1347
        %v4367 = vunpack.c.h.b16 %v1347
        %v4368 = vunpack.c.l.b16 %v1348
        %v4369 = vunpack.c.h.b16 %v1348
        %v4370 = vunpack.c.l.b16 %v1349
        %v4371 = vunpack.c.h.b16 %v1349
        %v4372 = vunpack.c.l.b16 %v1350
        %v4373 = vunpack.c.h.b16 %v1350
        %v4374 = vunpack.c.l.b16 %v1351
        %v4375 = vunpack.c.h.b16 %v1351
        %v4376 = vunpack.c.l.b16 %v1352
        %v4377 = vunpack.c.h.b16 %v1352
        %v4378 = vunpack.c.l.b16 %v1353
        %v4379 = vunpack.c.h.b16 %v1353
        %v4380 = vunpack.c.l.b16 %v1354
        %v4381 = vunpack.c.h.b16 %v1354
        %v4382 = vunpack.c.l.b16 %v1355
        %v4383 = vunpack.c.h.b16 %v1355
        %v4384 = vunpack.c.l.b16 %v1356
        %v4385 = vunpack.c.h.b16 %v1356
        %v4386 = vunpack.c.l.b16 %v1357
        %v4387 = vunpack.c.h.b16 %v1357
        %v4388 = vunpack.c.l.b16 %v1358
        %v4389 = vunpack.c.h.b16 %v1358
        %v4390 = vunpack.c.l.b16 %v1359
        %v4391 = vunpack.c.h.b16 %v1359
        %v4392 = vunpack.c.l.b16 %v1360
        %v4393 = vunpack.c.h.b16 %v1360
        %v4394 = vunpack.c.l.b16 %v1361
        %v4395 = vunpack.c.h.b16 %v1361
        %v4396 = vunpack.c.l.b16 %v1362
        %v4397 = vunpack.c.h.b16 %v1362
        %v4398 = vunpack.c.l.b16 %v1363
        %v4399 = vunpack.c.h.b16 %v1363
        %v4400 = vunpack.c.l.b16 %v1364
        %v4401 = vunpack.c.h.b16 %v1364
        %v4402 = vunpack.c.l.b16 %v1365
        %v4403 = vunpack.c.h.b16 %v1365
        %v4404 = vunpack.c.l.b16 %v1366
        %v4405 = vunpack.c.h.b16 %v1366
        %v4406 = vunpack.c.l.b16 %v1367
        %v4407 = vunpack.c.h.b16 %v1367
        %v4408 = vunpack.c.l.b16 %v1368
        %v4409 = vunpack.c.h.b16 %v1368
        %v4410 = vunpack.c.l.b16 %v1369
        %v4411 = vunpack.c.h.b16 %v1369
        %v4412 = vunpack.c.l.b16 %v1370
        %v4413 = vunpack.c.h.b16 %v1370
        %v4414 = vunpack.c.l.b16 %v1371
        %v4415 = vunpack.c.h.b16 %v1371
        %v4416 = vunpack.c.l.b16 %v1372
        %v4417 = vunpack.c.h.b16 %v1372
        %v4418 = vunpack.c.l.b16 %v1373
        %v4419 = vunpack.c.h.b16 %v1373
        %v4420 = vunpack.c.l.b16 %v1374
        %v4421 = vunpack.c.h.b16 %v1374
        %v4422 = vunpack.c.l.b16 %v1375
        %v4423 = vunpack.c.h.b16 %v1375
        %v4424 = vunpack.c.l.b16 %v1376
        %v4425 = vunpack.c.h.b16 %v1376
        %v4426 = vunpack.c.l.b16 %v1377
        %v4427 = vunpack.c.h.b16 %v1377
        %v4428 = vunpack.c.l.b16 %v1378
        %v4429 = vunpack.c.h.b16 %v1378
        %v4430 = vunpack.c.l.b16 %v1379
        %v4431 = vunpack.c.h.b16 %v1379
        %v4432 = vunpack.c.l.b16 %v1380
        %v4433 = vunpack.c.h.b16 %v1380
        %v4434 = vunpack.c.l.b16 %v1381
        %v4435 = vunpack.c.h.b16 %v1381
        %v4436 = vunpack.c.l.b16 %v1382
        %v4437 = vunpack.c.h.b16 %v1382
        %v4438 = vunpack.c.l.b16 %v1383
        %v4439 = vunpack.c.h.b16 %v1383
        %v4440 = vunpack.c.l.b16 %v1384
        %v4441 = vunpack.c.h.b16 %v1384
        %v4442 = vunpack.c.l.b16 %v1385
        %v4443 = vunpack.c.h.b16 %v1385
        %v4444 = vunpack.c.l.b16 %v1386
        %v4445 = vunpack.c.h.b16 %v1386
        %v4446 = vunpack.c.l.b16 %v1387
        %v4447 = vunpack.c.h.b16 %v1387
        %v4448 = vunpack.c.l.b16 %v1388
        %v4449 = vunpack.c.h.b16 %v1388
        %v4450 = vunpack.c.l.b16 %v1389
        %v4451 = vunpack.c.h.b16 %v1389
        %v4452 = vunpack.c.l.b16 %v1390
        %v4453 = vunpack.c.h.b16 %v1390
        %v4454 = vunpack.c.l.b16 %v1391
        %v4455 = vunpack.c.h.b16 %v1391
        %v4456 = vunpack.c.l.b16 %v1392
        %v4457 = vunpack.c.h.b16 %v1392
        %v4458 = vunpack.c.l.b16 %v1393
        %v4459 = vunpack.c.h.b16 %v1393
        %v4460 = vunpack.c.l.b16 %v1394
        %v4461 = vunpack.c.h.b16 %v1394
        %v4462 = vunpack.c.l.b16 %v1395
        %v4463 = vunpack.c.h.b16 %v1395
        %v4464 = vunpack.c.l.b16 %v1396
        %v4465 = vunpack.c.h.b16 %v1396
        %v4466 = vunpack.c.l.b16 %v1397
        %v4467 = vunpack.c.h.b16 %v1397
        %v4468 = vunpack.c.l.b16 %v1398
        %v4469 = vunpack.c.h.b16 %v1398
        %v4470 = vunpack.c.l.b16 %v1399
        %v4471 = vunpack.c.h.b16 %v1399
        %v4472 = vunpack.c.l.b16 %v1400
        %v4473 = vunpack.c.h.b16 %v1400
        %v4474 = vunpack.c.l.b16 %v1401
        %v4475 = vunpack.c.h.b16 %v1401
        %v4476 = vunpack.c.l.b16 %v1402
        %v4477 = vunpack.c.h.b16 %v1402
        %v4478 = vunpack.c.l.b16 %v1403
        %v4479 = vunpack.c.h.b16 %v1403
        %v4480 = vunpack.c.l.b16 %v1404
        %v4481 = vunpack.c.h.b16 %v1404
        %v4482 = vunpack.c.l.b16 %v1405
        %v4483 = vunpack.c.h.b16 %v1405
        %v4484 = vunpack.c.l.b16 %v1406
        %v4485 = vunpack.c.h.b16 %v1406
        %v4486 = vunpack.c.l.b16 %v1407
        %v4487 = vunpack.c.h.b16 %v1407
        %v4488 = vunpack.c.l.b16 %v1408
        %v4489 = vunpack.c.h.b16 %v1408
        %v4490 = vunpack.c.l.b16 %v1409
        %v4491 = vunpack.c.h.b16 %v1409
        %v4492 = vunpack.c.l.b16 %v1410
        %v4493 = vunpack.c.h.b16 %v1410
        %v4494 = vunpack.c.l.b16 %v1411
        %v4495 = vunpack.c.h.b16 %v1411
        %v4496 = vunpack.c.l.b16 %v1412
        %v4497 = vunpack.c.h.b16 %v1412
        %v4498 = vunpack.c.l.b16 %v1413
        %v4499 = vunpack.c.h.b16 %v1413
        %v4500 = vunpack.c.l.b16 %v1414
        %v4501 = vunpack.c.h.b16 %v1414
        %v4502 = vunpack.c.l.b16 %v1415
        %v4503 = vunpack.c.h.b16 %v1415
        %v4504 = vunpack.c.l.b16 %v1416
        %v4505 = vunpack.c.h.b16 %v1416
        %v4506 = vunpack.c.l.b16 %v1417
        %v4507 = vunpack.c.h.b16 %v1417
        %v4508 = vunpack.c.l.b16 %v1418
        %v4509 = vunpack.c.h.b16 %v1418
        %v4510 = vunpack.c.l.b16 %v1419
        %v4511 = vunpack.c.h.b16 %v1419
        %v4512 = vunpack.c.l.b16 %v1420
        %v4513 = vunpack.c.h.b16 %v1420
        %v4514 = vunpack.c.l.b16 %v1421
        %v4515 = vunpack.c.h.b16 %v1421
        %v4516 = vunpack.c.l.b16 %v1422
        %v4517 = vunpack.c.h.b16 %v1422
        %v4518 = vunpack.c.l.b16 %v1423
        %v4519 = vunpack.c.h.b16 %v1423
        %v4520 = vunpack.c.l.b16 %v1424
        %v4521 = vunpack.c.h.b16 %v1424
        %v4522 = vunpack.c.l.b16 %v1425
        %v4523 = vunpack.c.h.b16 %v1425
        %v4524 = vunpack.c.l.b16 %v1426
        %v4525 = vunpack.c.h.b16 %v1426
        %v4526 = vunpack.c.l.b16 %v1427
        %v4527 = vunpack.c.h.b16 %v1427
        %v4528 = vunpack.c.l.b16 %v1428
        %v4529 = vunpack.c.h.b16 %v1428
        %v4530 = vunpack.c.l.b16 %v1429
        %v4531 = vunpack.c.h.b16 %v1429
        %v4532 = vunpack.c.l.b16 %v1430
        %v4533 = vunpack.c.h.b16 %v1430
        %v4534 = vunpack.c.l.b16 %v1431
        %v4535 = vunpack.c.h.b16 %v1431
        %v4536 = vunpack.c.l.b16 %v1432
        %v4537 = vunpack.c.h.b16 %v1432
        %v4538 = vunpack.c.l.b16 %v1433
        %v4539 = vunpack.c.h.b16 %v1433
        %v4540 = vunpack.c.l.b16 %v1434
        %v4541 = vunpack.c.h.b16 %v1434
        %v4542 = vunpack.c.l.b16 %v1435
        %v4543 = vunpack.c.h.b16 %v1435
        %v4544 = vunpack.c.l.b16 %v1436
        %v4545 = vunpack.c.h.b16 %v1436
        %v4546 = vunpack.c.l.b16 %v1437
        %v4547 = vunpack.c.h.b16 %v1437
        %v4548 = vunpack.c.l.b16 %v1438
        %v4549 = vunpack.c.h.b16 %v1438
        %v4550 = vunpack.c.l.b16 %v1439
        %v4551 = vunpack.c.h.b16 %v1439
        %v4552 = vunpack.c.l.b16 %v1440
        %v4553 = vunpack.c.h.b16 %v1440
        %v4554 = vunpack.c.l.b16 %v1441
        %v4555 = vunpack.c.h.b16 %v1441
        %v4556 = vunpack.c.l.b16 %v1442
        %v4557 = vunpack.c.h.b16 %v1442
        %v4558 = vunpack.c.l.b16 %v1443
        %v4559 = vunpack.c.h.b16 %v1443
        %v4560 = vunpack.c.l.b16 %v1444
        %v4561 = vunpack.c.h.b16 %v1444
        %v4562 = vunpack.c.l.b16 %v1445
        %v4563 = vunpack.c.h.b16 %v1445
        %v4564 = vunpack.c.l.b16 %v1446
        %v4565 = vunpack.c.h.b16 %v1446
        %v4566 = vunpack.c.l.b16 %v1447
        %v4567 = vunpack.c.h.b16 %v1447
        %v4568 = vunpack.c.l.b16 %v1448
        %v4569 = vunpack.c.h.b16 %v1448
        %v4570 = vunpack.c.l.b16 %v1449
        %v4571 = vunpack.c.h.b16 %v1449
        %v4572 = vunpack.c.l.b16 %v1450
        %v4573 = vunpack.c.h.b16 %v1450
        %v4574 = vunpack.c.l.b16 %v1451
        %v4575 = vunpack.c.h.b16 %v1451
        %v4576 = vunpack.c.l.b16 %v1452
        %v4577 = vunpack.c.h.b16 %v1452
        %v4578 = vunpack.c.l.b16 %v1453
        %v4579 = vunpack.c.h.b16 %v1453
        %v4580 = vunpack.c.l.b16 %v1454
        %v4581 = vunpack.c.h.b16 %v1454
        %v4582 = vunpack.c.l.b16 %v1455
        %v4583 = vunpack.c.h.b16 %v1455
        %v4584 = vunpack.c.l.b16 %v1456
        %v4585 = vunpack.c.h.b16 %v1456
        %v4586 = vunpack.c.l.b16 %v1457
        %v4587 = vunpack.c.h.b16 %v1457
        %v4588 = vunpack.c.l.b16 %v1458
        %v4589 = vunpack.c.h.b16 %v1458
        %v4590 = vunpack.c.l.b16 %v1459
        %v4591 = vunpack.c.h.b16 %v1459
        %v4592 = vunpack.c.l.b16 %v1460
        %v4593 = vunpack.c.h.b16 %v1460
        %v4594 = vunpack.c.l.b16 %v1461
        %v4595 = vunpack.c.h.b16 %v1461
        %v4596 = vunpack.c.l.b16 %v1462
        %v4597 = vunpack.c.h.b16 %v1462
        %v4598 = vunpack.c.l.b16 %v1463
        %v4599 = vunpack.c.h.b16 %v1463
        %v4600 = vunpack.c.l.b16 %v1464
        %v4601 = vunpack.c.h.b16 %v1464
        %v4602 = vunpack.c.l.b16 %v1465
        %v4603 = vunpack.c.h.b16 %v1465
        %v4604 = vunpack.c.l.b16 %v1466
        %v4605 = vunpack.c.h.b16 %v1466
        %v4606 = vunpack.c.l.b16 %v1467
        %v4607 = vunpack.c.h.b16 %v1467
        %v4608 = vunpack.c.l.b16 %v1468
        %v4609 = vunpack.c.h.b16 %v1468
        %v4610 = vunpack.c.l.b16 %v1469
        %v4611 = vunpack.c.h.b16 %v1469
        %v4612 = vunpack.c.l.b16 %v1470
        %v4613 = vunpack.c.h.b16 %v1470
        %v4614 = vunpack.c.l.b16 %v1471
        %v4615 = vunpack.c.h.b16 %v1471
        %v4616 = vunpack.c.l.b16 %v1472
        %v4617 = vunpack.c.h.b16 %v1472
        %v4618 = vunpack.c.l.b16 %v1473
        %v4619 = vunpack.c.h.b16 %v1473
        %v4620 = vunpack.c.l.b16 %v1474
        %v4621 = vunpack.c.h.b16 %v1474
        %v4622 = vunpack.c.l.b16 %v1475
        %v4623 = vunpack.c.h.b16 %v1475
        %v4624 = vunpack.c.l.b16 %v1476
        %v4625 = vunpack.c.h.b16 %v1476
        %v4626 = vunpack.c.l.b16 %v1477
        %v4627 = vunpack.c.h.b16 %v1477
        %v4628 = vunpack.c.l.b16 %v1478
        %v4629 = vunpack.c.h.b16 %v1478
        %v4630 = vunpack.c.l.b16 %v1479
        %v4631 = vunpack.c.h.b16 %v1479
        %v4632 = vunpack.c.l.b16 %v1480
        %v4633 = vunpack.c.h.b16 %v1480
        %v4634 = vunpack.c.l.b16 %v1481
        %v4635 = vunpack.c.h.b16 %v1481
        %v4636 = vunpack.c.l.b16 %v1482
        %v4637 = vunpack.c.h.b16 %v1482
        %v4638 = vunpack.c.l.b16 %v1483
        %v4639 = vunpack.c.h.b16 %v1483
        %v4640 = vunpack.c.l.b16 %v1484
        %v4641 = vunpack.c.h.b16 %v1484
        %v4642 = vunpack.c.l.b16 %v1485
        %v4643 = vunpack.c.h.b16 %v1485
        %v4644 = vunpack.c.l.b16 %v1486
        %v4645 = vunpack.c.h.b16 %v1486
        %v4646 = vunpack.c.l.b16 %v1487
        %v4647 = vunpack.c.h.b16 %v1487
        %v4648 = vunpack.c.l.b16 %v1488
        %v4649 = vunpack.c.h.b16 %v1488
        %v4650 = vunpack.c.l.b16 %v1489
        %v4651 = vunpack.c.h.b16 %v1489
        %v4652 = vunpack.c.l.b16 %v1490
        %v4653 = vunpack.c.h.b16 %v1490
        %v4654 = vunpack.c.l.b16 %v1491
        %v4655 = vunpack.c.h.b16 %v1491
        %v4656 = vunpack.c.l.b16 %v1492
        %v4657 = vunpack.c.h.b16 %v1492
        %v4658 = vunpack.c.l.b16 %v1493
        %v4659 = vunpack.c.h.b16 %v1493
        %v4660 = vunpack.c.l.b16 %v1494
        %v4661 = vunpack.c.h.b16 %v1494
        %v4662 = vunpack.c.l.b16 %v1495
        %v4663 = vunpack.c.h.b16 %v1495
        %v4664 = vunpack.c.l.b16 %v1496
        %v4665 = vunpack.c.h.b16 %v1496
        %v4666 = vunpack.c.l.b16 %v1497
        %v4667 = vunpack.c.h.b16 %v1497
        %v4668 = vunpack.c.l.b16 %v1498
        %v4669 = vunpack.c.h.b16 %v1498
        %v4670 = vunpack.c.l.b16 %v1499
        %v4671 = vunpack.c.h.b16 %v1499
        %v4672 = vunpack.c.l.b16 %v1500
        %v4673 = vunpack.c.h.b16 %v1500
        %v4674 = vunpack.c.l.b16 %v1501
        %v4675 = vunpack.c.h.b16 %v1501
        %v4676 = vunpack.c.l.b16 %v1502
        %v4677 = vunpack.c.h.b16 %v1502
        %v4678 = vunpack.c.l.b16 %v1503
        %v4679 = vunpack.c.h.b16 %v1503
        %v4680 = vunpack.c.l.b16 %v1504
        %v4681 = vunpack.c.h.b16 %v1504
        %v4682 = vunpack.c.l.b16 %v1505
        %v4683 = vunpack.c.h.b16 %v1505
        %v4684 = vunpack.c.l.b16 %v1506
        %v4685 = vunpack.c.h.b16 %v1506
        %v4686 = vunpack.c.l.b16 %v1507
        %v4687 = vunpack.c.h.b16 %v1507
        %v4688 = vunpack.c.l.b16 %v1508
        %v4689 = vunpack.c.h.b16 %v1508
        %v4690 = vunpack.c.l.b16 %v1509
        %v4691 = vunpack.c.h.b16 %v1509
        %v4692 = vunpack.c.l.b16 %v1510
        %v4693 = vunpack.c.h.b16 %v1510
        %v4694 = vunpack.c.l.b16 %v1511
        %v4695 = vunpack.c.h.b16 %v1511
        %v4696 = vunpack.c.l.b16 %v1512
        %v4697 = vunpack.c.h.b16 %v1512
        %v4698 = vunpack.c.l.b16 %v1513
        %v4699 = vunpack.c.h.b16 %v1513
        %v4700 = vunpack.c.l.b16 %v1514
        %v4701 = vunpack.c.h.b16 %v1514
        %v4702 = vunpack.c.l.b16 %v1515
        %v4703 = vunpack.c.h.b16 %v1515
        %v4704 = vunpack.c.l.b16 %v1516
        %v4705 = vunpack.c.h.b16 %v1516
        %v4706 = vunpack.c.l.b16 %v1517
        %v4707 = vunpack.c.h.b16 %v1517
        %v4708 = vunpack.c.l.b16 %v1518
        %v4709 = vunpack.c.h.b16 %v1518
        %v4710 = vunpack.c.l.b16 %v1519
        %v4711 = vunpack.c.h.b16 %v1519
        %v4712 = vunpack.c.l.b16 %v1520
        %v4713 = vunpack.c.h.b16 %v1520
        %v4714 = vunpack.c.l.b16 %v1521
        %v4715 = vunpack.c.h.b16 %v1521
        %v4716 = vunpack.c.l.b16 %v1522
        %v4717 = vunpack.c.h.b16 %v1522
        %v4718 = vunpack.c.l.b16 %v1523
        %v4719 = vunpack.c.h.b16 %v1523
        %v4720 = vunpack.c.l.b16 %v1524
        %v4721 = vunpack.c.h.b16 %v1524
        %v4722 = vunpack.c.l.b16 %v1525
        %v4723 = vunpack.c.h.b16 %v1525
        %v4724 = vunpack.c.l.b16 %v1526
        %v4725 = vunpack.c.h.b16 %v1526
        %v4726 = vunpack.c.l.b16 %v1527
        %v4727 = vunpack.c.h.b16 %v1527
        %v4728 = vunpack.c.l.b16 %v1528
        %v4729 = vunpack.c.h.b16 %v1528
        %v4730 = vunpack.c.l.b16 %v1529
        %v4731 = vunpack.c.h.b16 %v1529
        %v4732 = vunpack.c.l.b16 %v1530
        %v4733 = vunpack.c.h.b16 %v1530
        %v4734 = vunpack.c.l.b16 %v1531
        %v4735 = vunpack.c.h.b16 %v1531
        %v4736 = vunpack.c.l.b16 %v1532
        %v4737 = vunpack.c.h.b16 %v1532
        %v4738 = vunpack.c.l.b16 %v1533
        %v4739 = vunpack.c.h.b16 %v1533
        %v4740 = vunpack.c.l.b16 %v1534
        %v4741 = vunpack.c.h.b16 %v1534
        %v4742 = vunpack.c.l.b16 %v1535
        %v4743 = vunpack.c.h.b16 %v1535
        %v4744 = vunpack.c.l.b16 %v1536
        %v4745 = vunpack.c.h.b16 %v1536
        %v4746 = vunpack.c.l.b16 %v1537
        %v4747 = vunpack.c.h.b16 %v1537
        %v4748 = vunpack.c.l.b16 %v1538
        %v4749 = vunpack.c.h.b16 %v1538
        %v4750 = vunpack.c.l.b16 %v1539
        %v4751 = vunpack.c.h.b16 %v1539
        %v4752 = vunpack.c.l.b16 %v1540
        %v4753 = vunpack.c.h.b16 %v1540
        %v4754 = vunpack.c.l.b16 %v1541
        %v4755 = vunpack.c.h.b16 %v1541
        %v4756 = vunpack.c.l.b16 %v1542
        %v4757 = vunpack.c.h.b16 %v1542
        %v4758 = vunpack.c.l.b16 %v1543
        %v4759 = vunpack.c.h.b16 %v1543
        %v4760 = vunpack.c.l.b16 %v1544
        %v4761 = vunpack.c.h.b16 %v1544
        %v4762 = vunpack.c.l.b16 %v1545
        %v4763 = vunpack.c.h.b16 %v1545
        %v4764 = vunpack.c.l.b16 %v1546
        %v4765 = vunpack.c.h.b16 %v1546
        %v4766 = vunpack.c.l.b16 %v1547
        %v4767 = vunpack.c.h.b16 %v1547
        %v4768 = vunpack.c.l.b16 %v1548
        %v4769 = vunpack.c.h.b16 %v1548
        %v4770 = vunpack.c.l.b16 %v1549
        %v4771 = vunpack.c.h.b16 %v1549
        %v4772 = vunpack.c.l.b16 %v1550
        %v4773 = vunpack.c.h.b16 %v1550
        %v4774 = vunpack.c.l.b16 %v1551
        %v4775 = vunpack.c.h.b16 %v1551
        %v4776 = vunpack.c.l.b16 %v1552
        %v4777 = vunpack.c.h.b16 %v1552
        %v4778 = vunpack.c.l.b16 %v1553
        %v4779 = vunpack.c.h.b16 %v1553
        %v4780 = vunpack.c.l.b16 %v1554
        %v4781 = vunpack.c.h.b16 %v1554
        %v4782 = vunpack.c.l.b16 %v1555
        %v4783 = vunpack.c.h.b16 %v1555
        %v4784 = vunpack.c.l.b16 %v1556
        %v4785 = vunpack.c.h.b16 %v1556
        %v4786 = vunpack.c.l.b16 %v1557
        %v4787 = vunpack.c.h.b16 %v1557
        %v4788 = vunpack.c.l.b16 %v1558
        %v4789 = vunpack.c.h.b16 %v1558
        %v4790 = vunpack.c.l.b16 %v1559
        %v4791 = vunpack.c.h.b16 %v1559
        %v4792 = vunpack.c.l.b16 %v1560
        %v4793 = vunpack.c.h.b16 %v1560
        %v4794 = vunpack.c.l.b16 %v1561
        %v4795 = vunpack.c.h.b16 %v1561
        %v4796 = vunpack.c.l.b16 %v1562
        %v4797 = vunpack.c.h.b16 %v1562
        %v4798 = vunpack.c.l.b16 %v1563
        %v4799 = vunpack.c.h.b16 %v1563
        %v4800 = vunpack.c.l.b16 %v1564
        %v4801 = vunpack.c.h.b16 %v1564
        %v4802 = vunpack.c.l.b16 %v1565
        %v4803 = vunpack.c.h.b16 %v1565
        %v4804 = vunpack.c.l.b16 %v1566
        %v4805 = vunpack.c.h.b16 %v1566
        %v4806 = vunpack.c.l.b16 %v1567
        %v4807 = vunpack.c.h.b16 %v1567
        %v4808 = vunpack.c.l.b16 %v1568
        %v4809 = vunpack.c.h.b16 %v1568
        %v4810 = vunpack.c.l.b16 %v1569
        %v4811 = vunpack.c.h.b16 %v1569
        %v4812 = vunpack.c.l.b16 %v1570
        %v4813 = vunpack.c.h.b16 %v1570
        %v4814 = vunpack.c.l.b16 %v1571
        %v4815 = vunpack.c.h.b16 %v1571
        %v4816 = vunpack.c.l.b16 %v1572
        %v4817 = vunpack.c.h.b16 %v1572
        %v4818 = vunpack.c.l.b16 %v1573
        %v4819 = vunpack.c.h.b16 %v1573
        %v4820 = vunpack.c.l.b16 %v1574
        %v4821 = vunpack.c.h.b16 %v1574
        %v4822 = vunpack.c.l.b16 %v1575
        %v4823 = vunpack.c.h.b16 %v1575
        %v4824 = vunpack.c.l.b16 %v1576
        %v4825 = vunpack.c.h.b16 %v1576
        %v4826 = vunpack.c.l.b16 %v1577
        %v4827 = vunpack.c.h.b16 %v1577
        %v4828 = vunpack.c.l.b16 %v1578
        %v4829 = vunpack.c.h.b16 %v1578
        %v4830 = vunpack.c.l.b16 %v1579
        %v4831 = vunpack.c.h.b16 %v1579
        %v4832 = vunpack.c.l.b16 %v1580
        %v4833 = vunpack.c.h.b16 %v1580
        %v4834 = vunpack.c.l.b16 %v1581
        %v4835 = vunpack.c.h.b16 %v1581
        %v4836 = vunpack.c.l.b16 %v1582
        %v4837 = vunpack.c.h.b16 %v1582
        %v4838 = vunpack.c.l.b16 %v1583
        %v4839 = vunpack.c.h.b16 %v1583
        %v4840 = vunpack.c.l.b16 %v1584
        %v4841 = vunpack.c.h.b16 %v1584
        %v4842 = vunpack.c.l.b16 %v1585
        %v4843 = vunpack.c.h.b16 %v1585
        %v4844 = vunpack.c.l.b16 %v1586
        %v4845 = vunpack.c.h.b16 %v1586
        %v4846 = vpack.c.b16 %v2806, %v2798
        %v4847 = vpack.c.b16 %v2807, %v2799
        %v4848 = vpack.c.b16 %v2808, %v2800
        %v4849 = vpack.c.b16 %v2809, %v2801
        %v4850 = vpack.c.b16 %v2810, %v2802
        %v4851 = vpack.c.b16 %v2811, %v2803
        %v4852 = vpack.c.b16 %v2812, %v2804
        %v4853 = vpack.c.b16 %v2813, %v2805
        %v4854 = vpack.c.b16 %v2822, %v2814
        %v4855 = vpack.c.b16 %v2823, %v2815
        %v4856 = vpack.c.b16 %v2824, %v2816
        %v4857 = vpack.c.b16 %v2825, %v2817
        %v4858 = vpack.c.b16 %v2826, %v2818
        %v4859 = vpack.c.b16 %v2827, %v2819
        %v4860 = vpack.c.b16 %v2828, %v2820
        %v4861 = vpack.c.b16 %v2829, %v2821
        %v4862 = vpack.c.b16 %v2838, %v2830
        %v4863 = vpack.c.b16 %v2839, %v2831
        %v4864 = vpack.c.b16 %v2840, %v2832
        %v4865 = vpack.c.b16 %v2841, %v2833
        %v4866 = vpack.c.b16 %v2842, %v2834
        %v4867 = vpack.c.b16 %v2843, %v2835
        %v4868 = vpack.c.b16 %v2844, %v2836
        %v4869 = vpack.c.b16 %v2845, %v2837
        %v4870 = vpack.c.b16 %v2854, %v2846
        %v4871 = vpack.c.b16 %v2855, %v2847
        %v4872 = vpack.c.b16 %v2856, %v2848
        %v4873 = vpack.c.b16 %v2857, %v2849
        %v4874 = vpack.c.b16 %v2858, %v2850
        %v4875 = vpack.c.b16 %v2859, %v2851
        %v4876 = vpack.c.b16 %v2860, %v2852
        %v4877 = vpack.c.b16 %v2861, %v2853
        %v4878 = vpack.c.b16 %v2870, %v2862
        %v4879 = vpack.c.b16 %v2871, %v2863
        %v4880 = vpack.c.b16 %v2872, %v2864
        %v4881 = vpack.c.b16 %v2873, %v2865
        %v4882 = vpack.c.b16 %v2874, %v2866
        %v4883 = vpack.c.b16 %v2875, %v2867
        %v4884 = vpack.c.b16 %v2876, %v2868
        %v4885 = vpack.c.b16 %v2877, %v2869
        %v4886 = vpack.c.b16 %v2886, %v2878
        %v4887 = vpack.c.b16 %v2887, %v2879
        %v4888 = vpack.c.b16 %v2888, %v2880
        %v4889 = vpack.c.b16 %v2889, %v2881
        %v4890 = vpack.c.b16 %v2890, %v2882
        %v4891 = vpack.c.b16 %v2891, %v2883
        %v4892 = vpack.c.b16 %v2892, %v2884
        %v4893 = vpack.c.b16 %v2893, %v2885
        %v4894 = vpack.c.b16 %v2902, %v2894
        %v4895 = vpack.c.b16 %v2903, %v2895
        %v4896 = vpack.c.b16 %v2904, %v2896
        %v4897 = vpack.c.b16 %v2905, %v2897
        %v4898 = vpack.c.b16 %v2906, %v2898
        %v4899 = vpack.c.b16 %v2907, %v2899
        %v4900 = vpack.c.b16 %v2908, %v2900
        %v4901 = vpack.c.b16 %v2909, %v2901
        %v4902 = vpack.c.b16 %v2918, %v2910
        %v4903 = vpack.c.b16 %v2919, %v2911
        %v4904 = vpack.c.b16 %v2920, %v2912
        %v4905 = vpack.c.b16 %v2921, %v2913
        %v4906 = vpack.c.b16 %v2922, %v2914
        %v4907 = vpack.c.b16 %v2923, %v2915
        %v4908 = vpack.c.b16 %v2924, %v2916
        %v4909 = vpack.c.b16 %v2925, %v2917
        %v4910 = vpack.c.b16 %v2934, %v2926
        %v4911 = vpack.c.b16 %v2935, %v2927
        %v4912 = vpack.c.b16 %v2936, %v2928
        %v4913 = vpack.c.b16 %v2937, %v2929
        %v4914 = vpack.c.b16 %v2938, %v2930
        %v4915 = vpack.c.b16 %v2939, %v2931
        %v4916 = vpack.c.b16 %v2940, %v2932
        %v4917 = vpack.c.b16 %v2941, %v2933
        %v4918 = vpack.c.b16 %v2950, %v2942
        %v4919 = vpack.c.b16 %v2951, %v2943
        %v4920 = vpack.c.b16 %v2952, %v2944
        %v4921 = vpack.c.b16 %v2953, %v2945
        %v4922 = vpack.c.b16 %v2954, %v2946
        %v4923 = vpack.c.b16 %v2955, %v2947
        %v4924 = vpack.c.b16 %v2956, %v2948
        %v4925 = vpack.c.b16 %v2957, %v2949
        %v4926 = vpack.c.b16 %v2966, %v2958
        %v4927 = vpack.c.b16 %v2967, %v2959
        %v4928 = vpack.c.b16 %v2968, %v2960
        %v4929 = vpack.c.b16 %v2969, %v2961
        %v4930 = vpack.c.b16 %v2970, %v2962
        %v4931 = vpack.c.b16 %v2971, %v2963
        %v4932 = vpack.c.b16 %v2972, %v2964
        %v4933 = vpack.c.b16 %v2973, %v2965
        %v4934 = vpack.c.b16 %v2982, %v2974
        %v4935 = vpack.c.b16 %v2983, %v2975
        %v4936 = vpack.c.b16 %v2984, %v2976
        %v4937 = vpack.c.b16 %v2985, %v2977
        %v4938 = vpack.c.b16 %v2986, %v2978
        %v4939 = vpack.c.b16 %v2987, %v2979
        %v4940 = vpack.c.b16 %v2988, %v2980
        %v4941 = vpack.c.b16 %v2989, %v2981
        %v4942 = vpack.c.b16 %v2998, %v2990
        %v4943 = vpack.c.b16 %v2999, %v2991
        %v4944 = vpack.c.b16 %v3000, %v2992
        %v4945 = vpack.c.b16 %v3001, %v2993
        %v4946 = vpack.c.b16 %v3002, %v2994
        %v4947 = vpack.c.b16 %v3003, %v2995
        %v4948 = vpack.c.b16 %v3004, %v2996
        %v4949 = vpack.c.b16 %v3005, %v2997
        %v4950 = vpack.c.b16 %v3014, %v3006
        %v4951 = vpack.c.b16 %v3015, %v3007
        %v4952 = vpack.c.b16 %v3016, %v3008
        %v4953 = vpack.c.b16 %v3017, %v3009
        %v4954 = vpack.c.b16 %v3018, %v3010
        %v4955 = vpack.c.b16 %v3019, %v3011
        %v4956 = vpack.c.b16 %v3020, %v3012
        %v4957 = vpack.c.b16 %v3021, %v3013
        %v4958 = vpack.c.b16 %v3030, %v3022
        %v4959 = vpack.c.b16 %v3031, %v3023
        %v4960 = vpack.c.b16 %v3032, %v3024
        %v4961 = vpack.c.b16 %v3033, %v3025
        %v4962 = vpack.c.b16 %v3034, %v3026
        %v4963 = vpack.c.b16 %v3035, %v3027
        %v4964 = vpack.c.b16 %v3036, %v3028
        %v4965 = vpack.c.b16 %v3037, %v3029
        %v4966 = vpack.c.b16 %v3046, %v3038
        %v4967 = vpack.c.b16 %v3047, %v3039
        %v4968 = vpack.c.b16 %v3048, %v3040
        %v4969 = vpack.c.b16 %v3049, %v3041
        %v4970 = vpack.c.b16 %v3050, %v3042
        %v4971 = vpack.c.b16 %v3051, %v3043
        %v4972 = vpack.c.b16 %v3052, %v3044
        %v4973 = vpack.c.b16 %v3053, %v3045
        %v4974 = vpack.c.b16 %v3062, %v3054
        %v4975 = vpack.c.b16 %v3063, %v3055
        %v4976 = vpack.c.b16 %v3064, %v3056
        %v4977 = vpack.c.b16 %v3065, %v3057
        %v4978 = vpack.c.b16 %v3066, %v3058
        %v4979 = vpack.c.b16 %v3067, %v3059
        %v4980 = vpack.c.b16 %v3068, %v3060
        %v4981 = vpack.c.b16 %v3069, %v3061
        %v4982 = vpack.c.b16 %v3078, %v3070
        %v4983 = vpack.c.b16 %v3079, %v3071
        %v4984 = vpack.c.b16 %v3080, %v3072
        %v4985 = vpack.c.b16 %v3081, %v3073
        %v4986 = vpack.c.b16 %v3082, %v3074
        %v4987 = vpack.c.b16 %v3083, %v3075
        %v4988 = vpack.c.b16 %v3084, %v3076
        %v4989 = vpack.c.b16 %v3085, %v3077
        %v4990 = vpack.c.b16 %v3094, %v3086
        %v4991 = vpack.c.b16 %v3095, %v3087
        %v4992 = vpack.c.b16 %v3096, %v3088
        %v4993 = vpack.c.b16 %v3097, %v3089
        %v4994 = vpack.c.b16 %v3098, %v3090
        %v4995 = vpack.c.b16 %v3099, %v3091
        %v4996 = vpack.c.b16 %v3100, %v3092
        %v4997 = vpack.c.b16 %v3101, %v3093
        %v4998 = vpack.c.b16 %v3110, %v3102
        %v4999 = vpack.c.b16 %v3111, %v3103
        %v5000 = vpack.c.b16 %v3112, %v3104
        %v5001 = vpack.c.b16 %v3113, %v3105
        %v5002 = vpack.c.b16 %v3114, %v3106
        %v5003 = vpack.c.b16 %v3115, %v3107
        %v5004 = vpack.c.b16 %v3116, %v3108
        %v5005 = vpack.c.b16 %v3117, %v3109
        %v5006 = vpack.c.b16 %v3126, %v3118
        %v5007 = vpack.c.b16 %v3127, %v3119
        %v5008 = vpack.c.b16 %v3128, %v3120
        %v5009 = vpack.c.b16 %v3129, %v3121
        %v5010 = vpack.c.b16 %v3130, %v3122
        %v5011 = vpack.c.b16 %v3131, %v3123
        %v5012 = vpack.c.b16 %v3132, %v3124
        %v5013 = vpack.c.b16 %v3133, %v3125
        %v5014 = vpack.c.b16 %v3142, %v3134
        %v5015 = vpack.c.b16 %v3143, %v3135
        %v5016 = vpack.c.b16 %v3144, %v3136
        %v5017 = vpack.c.b16 %v3145, %v3137
        %v5018 = vpack.c.b16 %v3146, %v3138
        %v5019 = vpack.c.b16 %v3147, %v3139
        %v5020 = vpack.c.b16 %v3148, %v3140
        %v5021 = vpack.c.b16 %v3149, %v3141
        %v5022 = vpack.c.b16 %v3158, %v3150
        %v5023 = vpack.c.b16 %v3159, %v3151
        %v5024 = vpack.c.b16 %v3160, %v3152
        %v5025 = vpack.c.b16 %v3161, %v3153
        %v5026 = vpack.c.b16 %v3162, %v3154
        %v5027 = vpack.c.b16 %v3163, %v3155
        %v5028 = vpack.c.b16 %v3164, %v3156
        %v5029 = vpack.c.b16 %v3165, %v3157
        %v5030 = vpack.c.b16 %v3174, %v3166
        %v5031 = vpack.c.b16 %v3175, %v3167
        %v5032 = vpack.c.b16 %v3176, %v3168
        %v5033 = vpack.c.b16 %v3177, %v3169
        %v5034 = vpack.c.b16 %v3178, %v3170
        %v5035 = vpack.c.b16 %v3179, %v3171
        %v5036 = vpack.c.b16 %v3180, %v3172
        %v5037 = vpack.c.b16 %v3181, %v3173
        %v5038 = vpack.c.b16 %v3190, %v3182
        %v5039 = vpack.c.b16 %v3191, %v3183
        %v5040 = vpack.c.b16 %v3192, %v3184
        %v5041 = vpack.c.b16 %v3193, %v3185
        %v5042 = vpack.c.b16 %v3194, %v3186
        %v5043 = vpack.c.b16 %v3195, %v3187
        %v5044 = vpack.c.b16 %v3196, %v3188
        %v5045 = vpack.c.b16 %v3197, %v3189
        %v5046 = vpack.c.b16 %v3206, %v3198
        %v5047 = vpack.c.b16 %v3207, %v3199
        %v5048 = vpack.c.b16 %v3208, %v3200
        %v5049 = vpack.c.b16 %v3209, %v3201
        %v5050 = vpack.c.b16 %v3210, %v3202
        %v5051 = vpack.c.b16 %v3211, %v3203
        %v5052 = vpack.c.b16 %v3212, %v3204
        %v5053 = vpack.c.b16 %v3213, %v3205
        %v5054 = vpack.c.b16 %v3222, %v3214
        %v5055 = vpack.c.b16 %v3223, %v3215
        %v5056 = vpack.c.b16 %v3224, %v3216
        %v5057 = vpack.c.b16 %v3225, %v3217
        %v5058 = vpack.c.b16 %v3226, %v3218
        %v5059 = vpack.c.b16 %v3227, %v3219
        %v5060 = vpack.c.b16 %v3228, %v3220
        %v5061 = vpack.c.b16 %v3229, %v3221
        %v5062 = vpack.c.b16 %v3238, %v3230
        %v5063 = vpack.c.b16 %v3239, %v3231
        %v5064 = vpack.c.b16 %v3240, %v3232
        %v5065 = vpack.c.b16 %v3241, %v3233
        %v5066 = vpack.c.b16 %v3242, %v3234
        %v5067 = vpack.c.b16 %v3243, %v3235
        %v5068 = vpack.c.b16 %v3244, %v3236
        %v5069 = vpack.c.b16 %v3245, %v3237
        %v5070 = vpack.c.b16 %v3254, %v3246
        %v5071 = vpack.c.b16 %v3255, %v3247
        %v5072 = vpack.c.b16 %v3256, %v3248
        %v5073 = vpack.c.b16 %v3257, %v3249
        %v5074 = vpack.c.b16 %v3258, %v3250
        %v5075 = vpack.c.b16 %v3259, %v3251
        %v5076 = vpack.c.b16 %v3260, %v3252
        %v5077 = vpack.c.b16 %v3261, %v3253
        %v5078 = vpack.c.b16 %v3270, %v3262
        %v5079 = vpack.c.b16 %v3271, %v3263
        %v5080 = vpack.c.b16 %v3272, %v3264
        %v5081 = vpack.c.b16 %v3273, %v3265
        %v5082 = vpack.c.b16 %v3274, %v3266
        %v5083 = vpack.c.b16 %v3275, %v3267
        %v5084 = vpack.c.b16 %v3276, %v3268
        %v5085 = vpack.c.b16 %v3277, %v3269
        %v5086 = vpack.c.b16 %v3286, %v3278
        %v5087 = vpack.c.b16 %v3287, %v3279
        %v5088 = vpack.c.b16 %v3288, %v3280
        %v5089 = vpack.c.b16 %v3289, %v3281
        %v5090 = vpack.c.b16 %v3290, %v3282
        %v5091 = vpack.c.b16 %v3291, %v3283
        %v5092 = vpack.c.b16 %v3292, %v3284
        %v5093 = vpack.c.b16 %v3293, %v3285
        %v5094 = vpack.c.b16 %v3302, %v3294
        %v5095 = vpack.c.b16 %v3303, %v3295
        %v5096 = vpack.c.b16 %v3304, %v3296
        %v5097 = vpack.c.b16 %v3305, %v3297
        %v5098 = vpack.c.b16 %v3306, %v3298
        %v5099 = vpack.c.b16 %v3307, %v3299
        %v5100 = vpack.c.b16 %v3308, %v3300
        %v5101 = vpack.c.b16 %v3309, %v3301
        %v5102 = vpack.c.b16 %v3318, %v3310
        %v5103 = vpack.c.b16 %v3319, %v3311
        %v5104 = vpack.c.b16 %v3320, %v3312
        %v5105 = vpack.c.b16 %v3321, %v3313
        %v5106 = vpack.c.b16 %v3322, %v3314
        %v5107 = vpack.c.b16 %v3323, %v3315
        %v5108 = vpack.c.b16 %v3324, %v3316
        %v5109 = vpack.c.b16 %v3325, %v3317
        %v5110 = vpack.c.b16 %v3334, %v3326
        %v5111 = vpack.c.b16 %v3335, %v3327
        %v5112 = vpack.c.b16 %v3336, %v3328
        %v5113 = vpack.c.b16 %v3337, %v3329
        %v5114 = vpack.c.b16 %v3338, %v3330
        %v5115 = vpack.c.b16 %v3339, %v3331
        %v5116 = vpack.c.b16 %v3340, %v3332
        %v5117 = vpack.c.b16 %v3341, %v3333
        %v5118 = vpack.c.b16 %v3350, %v3342
        %v5119 = vpack.c.b16 %v3351, %v3343
        %v5120 = vpack.c.b16 %v3352, %v3344
        %v5121 = vpack.c.b16 %v3353, %v3345
        %v5122 = vpack.c.b16 %v3354, %v3346
        %v5123 = vpack.c.b16 %v3355, %v3347
        %v5124 = vpack.c.b16 %v3356, %v3348
        %v5125 = vpack.c.b16 %v3357, %v3349
        %v5126 = vpack.c.b16 %v3366, %v3358
        %v5127 = vpack.c.b16 %v3367, %v3359
        %v5128 = vpack.c.b16 %v3368, %v3360
        %v5129 = vpack.c.b16 %v3369, %v3361
        %v5130 = vpack.c.b16 %v3370, %v3362
        %v5131 = vpack.c.b16 %v3371, %v3363
        %v5132 = vpack.c.b16 %v3372, %v3364
        %v5133 = vpack.c.b16 %v3373, %v3365
        %v5134 = vpack.c.b16 %v3382, %v3374
        %v5135 = vpack.c.b16 %v3383, %v3375
        %v5136 = vpack.c.b16 %v3384, %v3376
        %v5137 = vpack.c.b16 %v3385, %v3377
        %v5138 = vpack.c.b16 %v3386, %v3378
        %v5139 = vpack.c.b16 %v3387, %v3379
        %v5140 = vpack.c.b16 %v3388, %v3380
        %v5141 = vpack.c.b16 %v3389, %v3381
        %v5142 = vpack.c.b16 %v3398, %v3390
        %v5143 = vpack.c.b16 %v3399, %v3391
        %v5144 = vpack.c.b16 %v3400, %v3392
        %v5145 = vpack.c.b16 %v3401, %v3393
        %v5146 = vpack.c.b16 %v3402, %v3394
        %v5147 = vpack.c.b16 %v3403, %v3395
        %v5148 = vpack.c.b16 %v3404, %v3396
        %v5149 = vpack.c.b16 %v3405, %v3397
        %v5150 = vpack.c.b16 %v3414, %v3406
        %v5151 = vpack.c.b16 %v3415, %v3407
        %v5152 = vpack.c.b16 %v3416, %v3408
        %v5153 = vpack.c.b16 %v3417, %v3409
        %v5154 = vpack.c.b16 %v3418, %v3410
        %v5155 = vpack.c.b16 %v3419, %v3411
        %v5156 = vpack.c.b16 %v3420, %v3412
        %v5157 = vpack.c.b16 %v3421, %v3413
        %v5158 = vpack.c.b16 %v3430, %v3422
        %v5159 = vpack.c.b16 %v3431, %v3423
        %v5160 = vpack.c.b16 %v3432, %v3424
        %v5161 = vpack.c.b16 %v3433, %v3425
        %v5162 = vpack.c.b16 %v3434, %v3426
        %v5163 = vpack.c.b16 %v3435, %v3427
        %v5164 = vpack.c.b16 %v3436, %v3428
        %v5165 = vpack.c.b16 %v3437, %v3429
        %v5166 = vpack.c.b16 %v3446, %v3438
        %v5167 = vpack.c.b16 %v3447, %v3439
        %v5168 = vpack.c.b16 %v3448, %v3440
        %v5169 = vpack.c.b16 %v3449, %v3441
        %v5170 = vpack.c.b16 %v3450, %v3442
        %v5171 = vpack.c.b16 %v3451, %v3443
        %v5172 = vpack.c.b16 %v3452, %v3444
        %v5173 = vpack.c.b16 %v3453, %v3445
        %v5174 = vpack.c.b16 %v3462, %v3454
        %v5175 = vpack.c.b16 %v3463, %v3455
        %v5176 = vpack.c.b16 %v3464, %v3456
        %v5177 = vpack.c.b16 %v3465, %v3457
        %v5178 = vpack.c.b16 %v3466, %v3458
        %v5179 = vpack.c.b16 %v3467, %v3459
        %v5180 = vpack.c.b16 %v3468, %v3460
        %v5181 = vpack.c.b16 %v3469, %v3461
        %v5182 = vpack.c.b16 %v3478, %v3470
        %v5183 = vpack.c.b16 %v3479, %v3471
        %v5184 = vpack.c.b16 %v3480, %v3472
        %v5185 = vpack.c.b16 %v3481, %v3473
        %v5186 = vpack.c.b16 %v3482, %v3474
        %v5187 = vpack.c.b16 %v3483, %v3475
        %v5188 = vpack.c.b16 %v3484, %v3476
        %v5189 = vpack.c.b16 %v3485, %v3477
        %v5190 = vpack.c.b16 %v3494, %v3486
        %v5191 = vpack.c.b16 %v3495, %v3487
        %v5192 = vpack.c.b16 %v3496, %v3488
        %v5193 = vpack.c.b16 %v3497, %v3489
        %v5194 = vpack.c.b16 %v3498, %v3490
        %v5195 = vpack.c.b16 %v3499, %v3491
        %v5196 = vpack.c.b16 %v3500, %v3492
        %v5197 = vpack.c.b16 %v3501, %v3493
        %v5198 = vpack.c.b16 %v3510, %v3502
        %v5199 = vpack.c.b16 %v3511, %v3503
        %v5200 = vpack.c.b16 %v3512, %v3504
        %v5201 = vpack.c.b16 %v3513, %v3505
        %v5202 = vpack.c.b16 %v3514, %v3506
        %v5203 = vpack.c.b16 %v3515, %v3507
        %v5204 = vpack.c.b16 %v3516, %v3508
        %v5205 = vpack.c.b16 %v3517, %v3509
        %v5206 = vpack.c.b16 %v3526, %v3518
        %v5207 = vpack.c.b16 %v3527, %v3519
        %v5208 = vpack.c.b16 %v3528, %v3520
        %v5209 = vpack.c.b16 %v3529, %v3521
        %v5210 = vpack.c.b16 %v3530, %v3522
        %v5211 = vpack.c.b16 %v3531, %v3523
        %v5212 = vpack.c.b16 %v3532, %v3524
        %v5213 = vpack.c.b16 %v3533, %v3525
        %v5214 = vpack.c.b16 %v3542, %v3534
        %v5215 = vpack.c.b16 %v3543, %v3535
        %v5216 = vpack.c.b16 %v3544, %v3536
        %v5217 = vpack.c.b16 %v3545, %v3537
        %v5218 = vpack.c.b16 %v3546, %v3538
        %v5219 = vpack.c.b16 %v3547, %v3539
        %v5220 = vpack.c.b16 %v3548, %v3540
        %v5221 = vpack.c.b16 %v3549, %v3541
        %v5222 = vpack.c.b16 %v3558, %v3550
        %v5223 = vpack.c.b16 %v3559, %v3551
        %v5224 = vpack.c.b16 %v3560, %v3552
        %v5225 = vpack.c.b16 %v3561, %v3553
        %v5226 = vpack.c.b16 %v3562, %v3554
        %v5227 = vpack.c.b16 %v3563, %v3555
        %v5228 = vpack.c.b16 %v3564, %v3556
        %v5229 = vpack.c.b16 %v3565, %v3557
        %v5230 = vpack.c.b16 %v3574, %v3566
        %v5231 = vpack.c.b16 %v3575, %v3567
        %v5232 = vpack.c.b16 %v3576, %v3568
        %v5233 = vpack.c.b16 %v3577, %v3569
        %v5234 = vpack.c.b16 %v3578, %v3570
        %v5235 = vpack.c.b16 %v3579, %v3571
        %v5236 = vpack.c.b16 %v3580, %v3572
        %v5237 = vpack.c.b16 %v3581, %v3573
        %v5238 = vpack.c.b16 %v3590, %v3582
        %v5239 = vpack.c.b16 %v3591, %v3583
        %v5240 = vpack.c.b16 %v3592, %v3584
        %v5241 = vpack.c.b16 %v3593, %v3585
        %v5242 = vpack.c.b16 %v3594, %v3586
        %v5243 = vpack.c.b16 %v3595, %v3587
        %v5244 = vpack.c.b16 %v3596, %v3588
        %v5245 = vpack.c.b16 %v3597, %v3589
        %v5246 = vpack.c.b16 %v3606, %v3598
        %v5247 = vpack.c.b16 %v3607, %v3599
        %v5248 = vpack.c.b16 %v3608, %v3600
        %v5249 = vpack.c.b16 %v3609, %v3601
        %v5250 = vpack.c.b16 %v3610, %v3602
        %v5251 = vpack.c.b16 %v3611, %v3603
        %v5252 = vpack.c.b16 %v3612, %v3604
        %v5253 = vpack.c.b16 %v3613, %v3605
        %v5254 = vpack.c.b16 %v3622, %v3614
        %v5255 = vpack.c.b16 %v3623, %v3615
        %v5256 = vpack.c.b16 %v3624, %v3616
        %v5257 = vpack.c.b16 %v3625, %v3617
        %v5258 = vpack.c.b16 %v3626, %v3618
        %v5259 = vpack.c.b16 %v3627, %v3619
        %v5260 = vpack.c.b16 %v3628, %v3620
        %v5261 = vpack.c.b16 %v3629, %v3621
        %v5262 = vpack.c.b16 %v3638, %v3630
        %v5263 = vpack.c.b16 %v3639, %v3631
        %v5264 = vpack.c.b16 %v3640, %v3632
        %v5265 = vpack.c.b16 %v3641, %v3633
        %v5266 = vpack.c.b16 %v3642, %v3634
        %v5267 = vpack.c.b16 %v3643, %v3635
        %v5268 = vpack.c.b16 %v3644, %v3636
        %v5269 = vpack.c.b16 %v3645, %v3637
        %v5270 = vpack.c.b16 %v3654, %v3646
        %v5271 = vpack.c.b16 %v3655, %v3647
        %v5272 = vpack.c.b16 %v3656, %v3648
        %v5273 = vpack.c.b16 %v3657, %v3649
        %v5274 = vpack.c.b16 %v3658, %v3650
        %v5275 = vpack.c.b16 %v3659, %v3651
        %v5276 = vpack.c.b16 %v3660, %v3652
        %v5277 = vpack.c.b16 %v3661, %v3653
        %v5278 = vpack.c.b16 %v3670, %v3662
        %v5279 = vpack.c.b16 %v3671, %v3663
        %v5280 = vpack.c.b16 %v3672, %v3664
        %v5281 = vpack.c.b16 %v3673, %v3665
        %v5282 = vpack.c.b16 %v3674, %v3666
        %v5283 = vpack.c.b16 %v3675, %v3667
        %v5284 = vpack.c.b16 %v3676, %v3668
        %v5285 = vpack.c.b16 %v3677, %v3669
        %v5286 = vpack.c.b16 %v3686, %v3678
        %v5287 = vpack.c.b16 %v3687, %v3679
        %v5288 = vpack.c.b16 %v3688, %v3680
        %v5289 = vpack.c.b16 %v3689, %v3681
        %v5290 = vpack.c.b16 %v3690, %v3682
        %v5291 = vpack.c.b16 %v3691, %v3683
        %v5292 = vpack.c.b16 %v3692, %v3684
        %v5293 = vpack.c.b16 %v3693, %v3685
        %v5294 = vpack.c.b16 %v3702, %v3694
        %v5295 = vpack.c.b16 %v3703, %v3695
        %v5296 = vpack.c.b16 %v3704, %v3696
        %v5297 = vpack.c.b16 %v3705, %v3697
        %v5298 = vpack.c.b16 %v3706, %v3698
        %v5299 = vpack.c.b16 %v3707, %v3699
        %v5300 = vpack.c.b16 %v3708, %v3700
        %v5301 = vpack.c.b16 %v3709, %v3701
        %v5302 = vpack.c.b16 %v3718, %v3710
        %v5303 = vpack.c.b16 %v3719, %v3711
        %v5304 = vpack.c.b16 %v3720, %v3712
        %v5305 = vpack.c.b16 %v3721, %v3713
        %v5306 = vpack.c.b16 %v3722, %v3714
        %v5307 = vpack.c.b16 %v3723, %v3715
        %v5308 = vpack.c.b16 %v3724, %v3716
        %v5309 = vpack.c.b16 %v3725, %v3717
        %v5310 = vpack.c.b16 %v3734, %v3726
        %v5311 = vpack.c.b16 %v3735, %v3727
        %v5312 = vpack.c.b16 %v3736, %v3728
        %v5313 = vpack.c.b16 %v3737, %v3729
        %v5314 = vpack.c.b16 %v3738, %v3730
        %v5315 = vpack.c.b16 %v3739, %v3731
        %v5316 = vpack.c.b16 %v3740, %v3732
        %v5317 = vpack.c.b16 %v3741, %v3733
        %v5318 = vpack.c.b16 %v3750, %v3742
        %v5319 = vpack.c.b16 %v3751, %v3743
        %v5320 = vpack.c.b16 %v3752, %v3744
        %v5321 = vpack.c.b16 %v3753, %v3745
        %v5322 = vpack.c.b16 %v3754, %v3746
        %v5323 = vpack.c.b16 %v3755, %v3747
        %v5324 = vpack.c.b16 %v3756, %v3748
        %v5325 = vpack.c.b16 %v3757, %v3749
        %v5326 = vpack.c.b16 %v3766, %v3758
        %v5327 = vpack.c.b16 %v3767, %v3759
        %v5328 = vpack.c.b16 %v3768, %v3760
        %v5329 = vpack.c.b16 %v3769, %v3761
        %v5330 = vpack.c.b16 %v3770, %v3762
        %v5331 = vpack.c.b16 %v3771, %v3763
        %v5332 = vpack.c.b16 %v3772, %v3764
        %v5333 = vpack.c.b16 %v3773, %v3765
        %v5334 = vpack.c.b16 %v3782, %v3774
        %v5335 = vpack.c.b16 %v3783, %v3775
        %v5336 = vpack.c.b16 %v3784, %v3776
        %v5337 = vpack.c.b16 %v3785, %v3777
        %v5338 = vpack.c.b16 %v3786, %v3778
        %v5339 = vpack.c.b16 %v3787, %v3779
        %v5340 = vpack.c.b16 %v3788, %v3780
        %v5341 = vpack.c.b16 %v3789, %v3781
        %v5342 = vpack.c.b16 %v3798, %v3790
        %v5343 = vpack.c.b16 %v3799, %v3791
        %v5344 = vpack.c.b16 %v3800, %v3792
        %v5345 = vpack.c.b16 %v3801, %v3793
        %v5346 = vpack.c.b16 %v3802, %v3794
        %v5347 = vpack.c.b16 %v3803, %v3795
        %v5348 = vpack.c.b16 %v3804, %v3796
        %v5349 = vpack.c.b16 %v3805, %v3797
        %v5350 = vpack.c.b16 %v3814, %v3806
        %v5351 = vpack.c.b16 %v3815, %v3807
        %v5352 = vpack.c.b16 %v3816, %v3808
        %v5353 = vpack.c.b16 %v3817, %v3809
        %v5354 = vpack.c.b16 %v3818, %v3810
        %v5355 = vpack.c.b16 %v3819, %v3811
        %v5356 = vpack.c.b16 %v3820, %v3812
        %v5357 = vpack.c.b16 %v3821, %v3813
        %v5358 = vpack.c.b16 %v3830, %v3822
        %v5359 = vpack.c.b16 %v3831, %v3823
        %v5360 = vpack.c.b16 %v3832, %v3824
        %v5361 = vpack.c.b16 %v3833, %v3825
        %v5362 = vpack.c.b16 %v3834, %v3826
        %v5363 = vpack.c.b16 %v3835, %v3827
        %v5364 = vpack.c.b16 %v3836, %v3828
        %v5365 = vpack.c.b16 %v3837, %v3829
        %v5366 = vpack.c.b16 %v3846, %v3838
        %v5367 = vpack.c.b16 %v3847, %v3839
        %v5368 = vpack.c.b16 %v3848, %v3840
        %v5369 = vpack.c.b16 %v3849, %v3841
        %v5370 = vpack.c.b16 %v3850, %v3842
        %v5371 = vpack.c.b16 %v3851, %v3843
        %v5372 = vpack.c.b16 %v3852, %v3844
        %v5373 = vpack.c.b16 %v3853, %v3845
        %v5374 = vpack.c.b16 %v3862, %v3854
        %v5375 = vpack.c.b16 %v3863, %v3855
        %v5376 = vpack.c.b16 %v3864, %v3856
        %v5377 = vpack.c.b16 %v3865, %v3857
        %v5378 = vpack.c.b16 %v3866, %v3858
        %v5379 = vpack.c.b16 %v3867, %v3859
        %v5380 = vpack.c.b16 %v3868, %v3860
        %v5381 = vpack.c.b16 %v3869, %v3861
        %v5382 = vpack.c.b16 %v3878, %v3870
        %v5383 = vpack.c.b16 %v3879, %v3871
        %v5384 = vpack.c.b16 %v3880, %v3872
        %v5385 = vpack.c.b16 %v3881, %v3873
        %v5386 = vpack.c.b16 %v3882, %v3874
        %v5387 = vpack.c.b16 %v3883, %v3875
        %v5388 = vpack.c.b16 %v3884, %v3876
        %v5389 = vpack.c.b16 %v3885, %v3877
        %v5390 = vpack.c.b16 %v3894, %v3886
        %v5391 = vpack.c.b16 %v3895, %v3887
        %v5392 = vpack.c.b16 %v3896, %v3888
        %v5393 = vpack.c.b16 %v3897, %v3889
        %v5394 = vpack.c.b16 %v3898, %v3890
        %v5395 = vpack.c.b16 %v3899, %v3891
        %v5396 = vpack.c.b16 %v3900, %v3892
        %v5397 = vpack.c.b16 %v3901, %v3893
        %v5398 = vpack.c.b16 %v3910, %v3902
        %v5399 = vpack.c.b16 %v3911, %v3903
        %v5400 = vpack.c.b16 %v3912, %v3904
        %v5401 = vpack.c.b16 %v3913, %v3905
        %v5402 = vpack.c.b16 %v3914, %v3906
        %v5403 = vpack.c.b16 %v3915, %v3907
        %v5404 = vpack.c.b16 %v3916, %v3908
        %v5405 = vpack.c.b16 %v3917, %v3909
        %v5406 = vpack.c.b16 %v3926, %v3918
        %v5407 = vpack.c.b16 %v3927, %v3919
        %v5408 = vpack.c.b16 %v3928, %v3920
        %v5409 = vpack.c.b16 %v3929, %v3921
        %v5410 = vpack.c.b16 %v3930, %v3922
        %v5411 = vpack.c.b16 %v3931, %v3923
        %v5412 = vpack.c.b16 %v3932, %v3924
        %v5413 = vpack.c.b16 %v3933, %v3925
        %v5414 = vpack.c.b16 %v3942, %v3934
        %v5415 = vpack.c.b16 %v3943, %v3935
        %v5416 = vpack.c.b16 %v3944, %v3936
        %v5417 = vpack.c.b16 %v3945, %v3937
        %v5418 = vpack.c.b16 %v3946, %v3938
        %v5419 = vpack.c.b16 %v3947, %v3939
        %v5420 = vpack.c.b16 %v3948, %v3940
        %v5421 = vpack.c.b16 %v3949, %v3941
        %v5422 = vpack.c.b16 %v3958, %v3950
        %v5423 = vpack.c.b16 %v3959, %v3951
        %v5424 = vpack.c.b16 %v3960, %v3952
        %v5425 = vpack.c.b16 %v3961, %v3953
        %v5426 = vpack.c.b16 %v3962, %v3954
        %v5427 = vpack.c.b16 %v3963, %v3955
        %v5428 = vpack.c.b16 %v3964, %v3956
        %v5429 = vpack.c.b16 %v3965, %v3957
        %v5430 = vpack.c.b16 %v3974, %v3966
        %v5431 = vpack.c.b16 %v3975, %v3967
        %v5432 = vpack.c.b16 %v3976, %v3968
        %v5433 = vpack.c.b16 %v3977, %v3969
        %v5434 = vpack.c.b16 %v3978, %v3970
        %v5435 = vpack.c.b16 %v3979, %v3971
        %v5436 = vpack.c.b16 %v3980, %v3972
        %v5437 = vpack.c.b16 %v3981, %v3973
        %v5438 = vpack.c.b16 %v3990, %v3982
        %v5439 = vpack.c.b16 %v3991, %v3983
        %v5440 = vpack.c.b16 %v3992, %v3984
        %v5441 = vpack.c.b16 %v3993, %v3985
        %v5442 = vpack.c.b16 %v3994, %v3986
        %v5443 = vpack.c.b16 %v3995, %v3987
        %v5444 = vpack.c.b16 %v3996, %v3988
        %v5445 = vpack.c.b16 %v3997, %v3989
        %v5446 = vpack.c.b16 %v4006, %v3998
        %v5447 = vpack.c.b16 %v4007, %v3999
        %v5448 = vpack.c.b16 %v4008, %v4000
        %v5449 = vpack.c.b16 %v4009, %v4001
        %v5450 = vpack.c.b16 %v4010, %v4002
        %v5451 = vpack.c.b16 %v4011, %v4003
        %v5452 = vpack.c.b16 %v4012, %v4004
        %v5453 = vpack.c.b16 %v4013, %v4005
        %v5454 = vpack.c.b16 %v4022, %v4014
        %v5455 = vpack.c.b16 %v4023, %v4015
        %v5456 = vpack.c.b16 %v4024, %v4016
        %v5457 = vpack.c.b16 %v4025, %v4017
        %v5458 = vpack.c.b16 %v4026, %v4018
        %v5459 = vpack.c.b16 %v4027, %v4019
        %v5460 = vpack.c.b16 %v4028, %v4020
        %v5461 = vpack.c.b16 %v4029, %v4021
        %v5462 = vpack.c.b16 %v4038, %v4030
        %v5463 = vpack.c.b16 %v4039, %v4031
        %v5464 = vpack.c.b16 %v4040, %v4032
        %v5465 = vpack.c.b16 %v4041, %v4033
        %v5466 = vpack.c.b16 %v4042, %v4034
        %v5467 = vpack.c.b16 %v4043, %v4035
        %v5468 = vpack.c.b16 %v4044, %v4036
        %v5469 = vpack.c.b16 %v4045, %v4037
        %v5470 = vpack.c.b16 %v4054, %v4046
        %v5471 = vpack.c.b16 %v4055, %v4047
        %v5472 = vpack.c.b16 %v4056, %v4048
        %v5473 = vpack.c.b16 %v4057, %v4049
        %v5474 = vpack.c.b16 %v4058, %v4050
        %v5475 = vpack.c.b16 %v4059, %v4051
        %v5476 = vpack.c.b16 %v4060, %v4052
        %v5477 = vpack.c.b16 %v4061, %v4053
        %v5478 = vpack.c.b16 %v4070, %v4062
        %v5479 = vpack.c.b16 %v4071, %v4063
        %v5480 = vpack.c.b16 %v4072, %v4064
        %v5481 = vpack.c.b16 %v4073, %v4065
        %v5482 = vpack.c.b16 %v4074, %v4066
        %v5483 = vpack.c.b16 %v4075, %v4067
        %v5484 = vpack.c.b16 %v4076, %v4068
        %v5485 = vpack.c.b16 %v4077, %v4069
        %v5486 = vpack.c.b16 %v4086, %v4078
        %v5487 = vpack.c.b16 %v4087, %v4079
        %v5488 = vpack.c.b16 %v4088, %v4080
        %v5489 = vpack.c.b16 %v4089, %v4081
        %v5490 = vpack.c.b16 %v4090, %v4082
        %v5491 = vpack.c.b16 %v4091, %v4083
        %v5492 = vpack.c.b16 %v4092, %v4084
        %v5493 = vpack.c.b16 %v4093, %v4085
        %v5494 = vpack.c.b16 %v4102, %v4094
        %v5495 = vpack.c.b16 %v4103, %v4095
        %v5496 = vpack.c.b16 %v4104, %v4096
        %v5497 = vpack.c.b16 %v4105, %v4097
        %v5498 = vpack.c.b16 %v4106, %v4098
        %v5499 = vpack.c.b16 %v4107, %v4099
        %v5500 = vpack.c.b16 %v4108, %v4100
        %v5501 = vpack.c.b16 %v4109, %v4101
        %v5502 = vpack.c.b16 %v4118, %v4110
        %v5503 = vpack.c.b16 %v4119, %v4111
        %v5504 = vpack.c.b16 %v4120, %v4112
        %v5505 = vpack.c.b16 %v4121, %v4113
        %v5506 = vpack.c.b16 %v4122, %v4114
        %v5507 = vpack.c.b16 %v4123, %v4115
        %v5508 = vpack.c.b16 %v4124, %v4116
        %v5509 = vpack.c.b16 %v4125, %v4117
        %v5510 = vpack.c.b16 %v4134, %v4126
        %v5511 = vpack.c.b16 %v4135, %v4127
        %v5512 = vpack.c.b16 %v4136, %v4128
        %v5513 = vpack.c.b16 %v4137, %v4129
        %v5514 = vpack.c.b16 %v4138, %v4130
        %v5515 = vpack.c.b16 %v4139, %v4131
        %v5516 = vpack.c.b16 %v4140, %v4132
        %v5517 = vpack.c.b16 %v4141, %v4133
        %v5518 = vpack.c.b16 %v4150, %v4142
        %v5519 = vpack.c.b16 %v4151, %v4143
        %v5520 = vpack.c.b16 %v4152, %v4144
        %v5521 = vpack.c.b16 %v4153, %v4145
        %v5522 = vpack.c.b16 %v4154, %v4146
        %v5523 = vpack.c.b16 %v4155, %v4147
        %v5524 = vpack.c.b16 %v4156, %v4148
        %v5525 = vpack.c.b16 %v4157, %v4149
        %v5526 = vpack.c.b16 %v4166, %v4158
        %v5527 = vpack.c.b16 %v4167, %v4159
        %v5528 = vpack.c.b16 %v4168, %v4160
        %v5529 = vpack.c.b16 %v4169, %v4161
        %v5530 = vpack.c.b16 %v4170, %v4162
        %v5531 = vpack.c.b16 %v4171, %v4163
        %v5532 = vpack.c.b16 %v4172, %v4164
        %v5533 = vpack.c.b16 %v4173, %v4165
        %v5534 = vpack.c.b16 %v4182, %v4174
        %v5535 = vpack.c.b16 %v4183, %v4175
        %v5536 = vpack.c.b16 %v4184, %v4176
        %v5537 = vpack.c.b16 %v4185, %v4177
        %v5538 = vpack.c.b16 %v4186, %v4178
        %v5539 = vpack.c.b16 %v4187, %v4179
        %v5540 = vpack.c.b16 %v4188, %v4180
        %v5541 = vpack.c.b16 %v4189, %v4181
        %v5542 = vpack.c.b16 %v4198, %v4190
        %v5543 = vpack.c.b16 %v4199, %v4191
        %v5544 = vpack.c.b16 %v4200, %v4192
        %v5545 = vpack.c.b16 %v4201, %v4193
        %v5546 = vpack.c.b16 %v4202, %v4194
        %v5547 = vpack.c.b16 %v4203, %v4195
        %v5548 = vpack.c.b16 %v4204, %v4196
        %v5549 = vpack.c.b16 %v4205, %v4197
        %v5550 = vpack.c.b16 %v4214, %v4206
        %v5551 = vpack.c.b16 %v4215, %v4207
        %v5552 = vpack.c.b16 %v4216, %v4208
        %v5553 = vpack.c.b16 %v4217, %v4209
        %v5554 = vpack.c.b16 %v4218, %v4210
        %v5555 = vpack.c.b16 %v4219, %v4211
        %v5556 = vpack.c.b16 %v4220, %v4212
        %v5557 = vpack.c.b16 %v4221, %v4213
        %v5558 = vpack.c.b16 %v4230, %v4222
        %v5559 = vpack.c.b16 %v4231, %v4223
        %v5560 = vpack.c.b16 %v4232, %v4224
        %v5561 = vpack.c.b16 %v4233, %v4225
        %v5562 = vpack.c.b16 %v4234, %v4226
        %v5563 = vpack.c.b16 %v4235, %v4227
        %v5564 = vpack.c.b16 %v4236, %v4228
        %v5565 = vpack.c.b16 %v4237, %v4229
        %v5566 = vpack.c.b16 %v4246, %v4238
        %v5567 = vpack.c.b16 %v4247, %v4239
        %v5568 = vpack.c.b16 %v4248, %v4240
        %v5569 = vpack.c.b16 %v4249, %v4241
        %v5570 = vpack.c.b16 %v4250, %v4242
        %v5571 = vpack.c.b16 %v4251, %v4243
        %v5572 = vpack.c.b16 %v4252, %v4244
        %v5573 = vpack.c.b16 %v4253, %v4245
        %v5574 = vpack.c.b16 %v4262, %v4254
        %v5575 = vpack.c.b16 %v4263, %v4255
        %v5576 = vpack.c.b16 %v4264, %v4256
        %v5577 = vpack.c.b16 %v4265, %v4257
        %v5578 = vpack.c.b16 %v4266, %v4258
        %v5579 = vpack.c.b16 %v4267, %v4259
        %v5580 = vpack.c.b16 %v4268, %v4260
        %v5581 = vpack.c.b16 %v4269, %v4261
        %v5582 = vpack.c.b16 %v4278, %v4270
        %v5583 = vpack.c.b16 %v4279, %v4271
        %v5584 = vpack.c.b16 %v4280, %v4272
        %v5585 = vpack.c.b16 %v4281, %v4273
        %v5586 = vpack.c.b16 %v4282, %v4274
        %v5587 = vpack.c.b16 %v4283, %v4275
        %v5588 = vpack.c.b16 %v4284, %v4276
        %v5589 = vpack.c.b16 %v4285, %v4277
        %v5590 = vpack.c.b16 %v4294, %v4286
        %v5591 = vpack.c.b16 %v4295, %v4287
        %v5592 = vpack.c.b16 %v4296, %v4288
        %v5593 = vpack.c.b16 %v4297, %v4289
        %v5594 = vpack.c.b16 %v4298, %v4290
        %v5595 = vpack.c.b16 %v4299, %v4291
        %v5596 = vpack.c.b16 %v4300, %v4292
        %v5597 = vpack.c.b16 %v4301, %v4293
        %v5598 = vpack.c.b16 %v4310, %v4302
        %v5599 = vpack.c.b16 %v4311, %v4303
        %v5600 = vpack.c.b16 %v4312, %v4304
        %v5601 = vpack.c.b16 %v4313, %v4305
        %v5602 = vpack.c.b16 %v4314, %v4306
        %v5603 = vpack.c.b16 %v4315, %v4307
        %v5604 = vpack.c.b16 %v4316, %v4308
        %v5605 = vpack.c.b16 %v4317, %v4309
        %v5606 = vpack.c.b16 %v4326, %v4318
        %v5607 = vpack.c.b16 %v4327, %v4319
        %v5608 = vpack.c.b16 %v4328, %v4320
        %v5609 = vpack.c.b16 %v4329, %v4321
        %v5610 = vpack.c.b16 %v4330, %v4322
        %v5611 = vpack.c.b16 %v4331, %v4323
        %v5612 = vpack.c.b16 %v4332, %v4324
        %v5613 = vpack.c.b16 %v4333, %v4325
        %v5614 = vpack.c.b16 %v4342, %v4334
        %v5615 = vpack.c.b16 %v4343, %v4335
        %v5616 = vpack.c.b16 %v4344, %v4336
        %v5617 = vpack.c.b16 %v4345, %v4337
        %v5618 = vpack.c.b16 %v4346, %v4338
        %v5619 = vpack.c.b16 %v4347, %v4339
        %v5620 = vpack.c.b16 %v4348, %v4340
        %v5621 = vpack.c.b16 %v4349, %v4341
        %v5622 = vpack.c.b16 %v4358, %v4350
        %v5623 = vpack.c.b16 %v4359, %v4351
        %v5624 = vpack.c.b16 %v4360, %v4352
        %v5625 = vpack.c.b16 %v4361, %v4353
        %v5626 = vpack.c.b16 %v4362, %v4354
        %v5627 = vpack.c.b16 %v4363, %v4355
        %v5628 = vpack.c.b16 %v4364, %v4356
        %v5629 = vpack.c.b16 %v4365, %v4357
        %v5630 = vpack.c.b16 %v4374, %v4366
        %v5631 = vpack.c.b16 %v4375, %v4367
        %v5632 = vpack.c.b16 %v4376, %v4368
        %v5633 = vpack.c.b16 %v4377, %v4369
        %v5634 = vpack.c.b16 %v4378, %v4370
        %v5635 = vpack.c.b16 %v4379, %v4371
        %v5636 = vpack.c.b16 %v4380, %v4372
        %v5637 = vpack.c.b16 %v4381, %v4373
        %v5638 = vpack.c.b16 %v4390, %v4382
        %v5639 = vpack.c.b16 %v4391, %v4383
        %v5640 = vpack.c.b16 %v4392, %v4384
        %v5641 = vpack.c.b16 %v4393, %v4385
        %v5642 = vpack.c.b16 %v4394, %v4386
        %v5643 = vpack.c.b16 %v4395, %v4387
        %v5644 = vpack.c.b16 %v4396, %v4388
        %v5645 = vpack.c.b16 %v4397, %v4389
        %v5646 = vpack.c.b16 %v4406, %v4398
        %v5647 = vpack.c.b16 %v4407, %v4399
        %v5648 = vpack.c.b16 %v4408, %v4400
        %v5649 = vpack.c.b16 %v4409, %v4401
        %v5650 = vpack.c.b16 %v4410, %v4402
        %v5651 = vpack.c.b16 %v4411, %v4403
        %v5652 = vpack.c.b16 %v4412, %v4404
        %v5653 = vpack.c.b16 %v4413, %v4405
        %v5654 = vpack.c.b16 %v4422, %v4414
        %v5655 = vpack.c.b16 %v4423, %v4415
        %v5656 = vpack.c.b16 %v4424, %v4416
        %v5657 = vpack.c.b16 %v4425, %v4417
        %v5658 = vpack.c.b16 %v4426, %v4418
        %v5659 = vpack.c.b16 %v4427, %v4419
        %v5660 = vpack.c.b16 %v4428, %v4420
        %v5661 = vpack.c.b16 %v4429, %v4421
        %v5662 = vpack.c.b16 %v4438, %v4430
        %v5663 = vpack.c.b16 %v4439, %v4431
        %v5664 = vpack.c.b16 %v4440, %v4432
        %v5665 = vpack.c.b16 %v4441, %v4433
        %v5666 = vpack.c.b16 %v4442, %v4434
        %v5667 = vpack.c.b16 %v4443, %v4435
        %v5668 = vpack.c.b16 %v4444, %v4436
        %v5669 = vpack.c.b16 %v4445, %v4437
        %v5670 = vpack.c.b16 %v4454, %v4446
        %v5671 = vpack.c.b16 %v4455, %v4447
        %v5672 = vpack.c.b16 %v4456, %v4448
        %v5673 = vpack.c.b16 %v4457, %v4449
        %v5674 = vpack.c.b16 %v4458, %v4450
        %v5675 = vpack.c.b16 %v4459, %v4451
        %v5676 = vpack.c.b16 %v4460, %v4452
        %v5677 = vpack.c.b16 %v4461, %v4453
        %v5678 = vpack.c.b16 %v4470, %v4462
        %v5679 = vpack.c.b16 %v4471, %v4463
        %v5680 = vpack.c.b16 %v4472, %v4464
        %v5681 = vpack.c.b16 %v4473, %v4465
        %v5682 = vpack.c.b16 %v4474, %v4466
        %v5683 = vpack.c.b16 %v4475, %v4467
        %v5684 = vpack.c.b16 %v4476, %v4468
        %v5685 = vpack.c.b16 %v4477, %v4469
        %v5686 = vpack.c.b16 %v4486, %v4478
        %v5687 = vpack.c.b16 %v4487, %v4479
        %v5688 = vpack.c.b16 %v4488, %v4480
        %v5689 = vpack.c.b16 %v4489, %v4481
        %v5690 = vpack.c.b16 %v4490, %v4482
        %v5691 = vpack.c.b16 %v4491, %v4483
        %v5692 = vpack.c.b16 %v4492, %v4484
        %v5693 = vpack.c.b16 %v4493, %v4485
        %v5694 = vpack.c.b16 %v4502, %v4494
        %v5695 = vpack.c.b16 %v4503, %v4495
        %v5696 = vpack.c.b16 %v4504, %v4496
        %v5697 = vpack.c.b16 %v4505, %v4497
        %v5698 = vpack.c.b16 %v4506, %v4498
        %v5699 = vpack.c.b16 %v4507, %v4499
        %v5700 = vpack.c.b16 %v4508, %v4500
        %v5701 = vpack.c.b16 %v4509, %v4501
        %v5702 = vpack.c.b16 %v4518, %v4510
        %v5703 = vpack.c.b16 %v4519, %v4511
        %v5704 = vpack.c.b16 %v4520, %v4512
        %v5705 = vpack.c.b16 %v4521, %v4513
        %v5706 = vpack.c.b16 %v4522, %v4514
        %v5707 = vpack.c.b16 %v4523, %v4515
        %v5708 = vpack.c.b16 %v4524, %v4516
        %v5709 = vpack.c.b16 %v4525, %v4517
        %v5710 = vpack.c.b16 %v4534, %v4526
        %v5711 = vpack.c.b16 %v4535, %v4527
        %v5712 = vpack.c.b16 %v4536, %v4528
        %v5713 = vpack.c.b16 %v4537, %v4529
        %v5714 = vpack.c.b16 %v4538, %v4530
        %v5715 = vpack.c.b16 %v4539, %v4531
        %v5716 = vpack.c.b16 %v4540, %v4532
        %v5717 = vpack.c.b16 %v4541, %v4533
        %v5718 = vpack.c.b16 %v4550, %v4542
        %v5719 = vpack.c.b16 %v4551, %v4543
        %v5720 = vpack.c.b16 %v4552, %v4544
        %v5721 = vpack.c.b16 %v4553, %v4545
        %v5722 = vpack.c.b16 %v4554, %v4546
        %v5723 = vpack.c.b16 %v4555, %v4547
        %v5724 = vpack.c.b16 %v4556, %v4548
        %v5725 = vpack.c.b16 %v4557, %v4549
        %v5726 = vpack.c.b16 %v4566, %v4558
        %v5727 = vpack.c.b16 %v4567, %v4559
        %v5728 = vpack.c.b16 %v4568, %v4560
        %v5729 = vpack.c.b16 %v4569, %v4561
        %v5730 = vpack.c.b16 %v4570, %v4562
        %v5731 = vpack.c.b16 %v4571, %v4563
        %v5732 = vpack.c.b16 %v4572, %v4564
        %v5733 = vpack.c.b16 %v4573, %v4565
        %v5734 = vpack.c.b16 %v4582, %v4574
        %v5735 = vpack.c.b16 %v4583, %v4575
        %v5736 = vpack.c.b16 %v4584, %v4576
        %v5737 = vpack.c.b16 %v4585, %v4577
        %v5738 = vpack.c.b16 %v4586, %v4578
        %v5739 = vpack.c.b16 %v4587, %v4579
        %v5740 = vpack.c.b16 %v4588, %v4580
        %v5741 = vpack.c.b16 %v4589, %v4581
        %v5742 = vpack.c.b16 %v4598, %v4590
        %v5743 = vpack.c.b16 %v4599, %v4591
        %v5744 = vpack.c.b16 %v4600, %v4592
        %v5745 = vpack.c.b16 %v4601, %v4593
        %v5746 = vpack.c.b16 %v4602, %v4594
        %v5747 = vpack.c.b16 %v4603, %v4595
        %v5748 = vpack.c.b16 %v4604, %v4596
        %v5749 = vpack.c.b16 %v4605, %v4597
        %v5750 = vpack.c.b16 %v4614, %v4606
        %v5751 = vpack.c.b16 %v4615, %v4607
        %v5752 = vpack.c.b16 %v4616, %v4608
        %v5753 = vpack.c.b16 %v4617, %v4609
        %v5754 = vpack.c.b16 %v4618, %v4610
        %v5755 = vpack.c.b16 %v4619, %v4611
        %v5756 = vpack.c.b16 %v4620, %v4612
        %v5757 = vpack.c.b16 %v4621, %v4613
        %v5758 = vpack.c.b16 %v4630, %v4622
        %v5759 = vpack.c.b16 %v4631, %v4623
        %v5760 = vpack.c.b16 %v4632, %v4624
        %v5761 = vpack.c.b16 %v4633, %v4625
        %v5762 = vpack.c.b16 %v4634, %v4626
        %v5763 = vpack.c.b16 %v4635, %v4627
        %v5764 = vpack.c.b16 %v4636, %v4628
        %v5765 = vpack.c.b16 %v4637, %v4629
        %v5766 = vpack.c.b16 %v4646, %v4638
        %v5767 = vpack.c.b16 %v4647, %v4639
        %v5768 = vpack.c.b16 %v4648, %v4640
        %v5769 = vpack.c.b16 %v4649, %v4641
        %v5770 = vpack.c.b16 %v4650, %v4642
        %v5771 = vpack.c.b16 %v4651, %v4643
        %v5772 = vpack.c.b16 %v4652, %v4644
        %v5773 = vpack.c.b16 %v4653, %v4645
        %v5774 = vpack.c.b16 %v4662, %v4654
        %v5775 = vpack.c.b16 %v4663, %v4655
        %v5776 = vpack.c.b16 %v4664, %v4656
        %v5777 = vpack.c.b16 %v4665, %v4657
        %v5778 = vpack.c.b16 %v4666, %v4658
        %v5779 = vpack.c.b16 %v4667, %v4659
        %v5780 = vpack.c.b16 %v4668, %v4660
        %v5781 = vpack.c.b16 %v4669, %v4661
        %v5782 = vpack.c.b16 %v4678, %v4670
        %v5783 = vpack.c.b16 %v4679, %v4671
        %v5784 = vpack.c.b16 %v4680, %v4672
        %v5785 = vpack.c.b16 %v4681, %v4673
        %v5786 = vpack.c.b16 %v4682, %v4674
        %v5787 = vpack.c.b16 %v4683, %v4675
        %v5788 = vpack.c.b16 %v4684, %v4676
        %v5789 = vpack.c.b16 %v4685, %v4677
        %v5790 = vpack.c.b16 %v4694, %v4686
        %v5791 = vpack.c.b16 %v4695, %v4687
        %v5792 = vpack.c.b16 %v4696, %v4688
        %v5793 = vpack.c.b16 %v4697, %v4689
        %v5794 = vpack.c.b16 %v4698, %v4690
        %v5795 = vpack.c.b16 %v4699, %v4691
        %v5796 = vpack.c.b16 %v4700, %v4692
        %v5797 = vpack.c.b16 %v4701, %v4693
        %v5798 = vpack.c.b16 %v4710, %v4702
        %v5799 = vpack.c.b16 %v4711, %v4703
        %v5800 = vpack.c.b16 %v4712, %v4704
        %v5801 = vpack.c.b16 %v4713, %v4705
        %v5802 = vpack.c.b16 %v4714, %v4706
        %v5803 = vpack.c.b16 %v4715, %v4707
        %v5804 = vpack.c.b16 %v4716, %v4708
        %v5805 = vpack.c.b16 %v4717, %v4709
        %v5806 = vpack.c.b16 %v4726, %v4718
        %v5807 = vpack.c.b16 %v4727, %v4719
        %v5808 = vpack.c.b16 %v4728, %v4720
        %v5809 = vpack.c.b16 %v4729, %v4721
        %v5810 = vpack.c.b16 %v4730, %v4722
        %v5811 = vpack.c.b16 %v4731, %v4723
        %v5812 = vpack.c.b16 %v4732, %v4724
        %v5813 = vpack.c.b16 %v4733, %v4725
        %v5814 = vpack.c.b16 %v4742, %v4734
        %v5815 = vpack.c.b16 %v4743, %v4735
        %v5816 = vpack.c.b16 %v4744, %v4736
        %v5817 = vpack.c.b16 %v4745, %v4737
        %v5818 = vpack.c.b16 %v4746, %v4738
        %v5819 = vpack.c.b16 %v4747, %v4739
        %v5820 = vpack.c.b16 %v4748, %v4740
        %v5821 = vpack.c.b16 %v4749, %v4741
        %v5822 = vpack.c.b16 %v4758, %v4750
        %v5823 = vpack.c.b16 %v4759, %v4751
        %v5824 = vpack.c.b16 %v4760, %v4752
        %v5825 = vpack.c.b16 %v4761, %v4753
        %v5826 = vpack.c.b16 %v4762, %v4754
        %v5827 = vpack.c.b16 %v4763, %v4755
        %v5828 = vpack.c.b16 %v4764, %v4756
        %v5829 = vpack.c.b16 %v4765, %v4757
        %v5830 = vpack.c.b16 %v4774, %v4766
        %v5831 = vpack.c.b16 %v4775, %v4767
        %v5832 = vpack.c.b16 %v4776, %v4768
        %v5833 = vpack.c.b16 %v4777, %v4769
        %v5834 = vpack.c.b16 %v4778, %v4770
        %v5835 = vpack.c.b16 %v4779, %v4771
        %v5836 = vpack.c.b16 %v4780, %v4772
        %v5837 = vpack.c.b16 %v4781, %v4773
        %v5838 = vpack.c.b16 %v4790, %v4782
        %v5839 = vpack.c.b16 %v4791, %v4783
        %v5840 = vpack.c.b16 %v4792, %v4784
        %v5841 = vpack.c.b16 %v4793, %v4785
        %v5842 = vpack.c.b16 %v4794, %v4786
        %v5843 = vpack.c.b16 %v4795, %v4787
        %v5844 = vpack.c.b16 %v4796, %v4788
        %v5845 = vpack.c.b16 %v4797, %v4789
        %v5846 = vpack.c.b16 %v4806, %v4798
        %v5847 = vpack.c.b16 %v4807, %v4799
        %v5848 = vpack.c.b16 %v4808, %v4800
        %v5849 = vpack.c.b16 %v4809, %v4801
        %v5850 = vpack.c.b16 %v4810, %v4802
        %v5851 = vpack.c.b16 %v4811, %v4803
        %v5852 = vpack.c.b16 %v4812, %v4804
        %v5853 = vpack.c.b16 %v4813, %v4805
        %v5854 = vpack.c.b16 %v4822, %v4814
        %v5855 = vpack.c.b16 %v4823, %v4815
        %v5856 = vpack.c.b16 %v4824, %v4816
        %v5857 = vpack.c.b16 %v4825, %v4817
        %v5858 = vpack.c.b16 %v4826, %v4818
        %v5859 = vpack.c.b16 %v4827, %v4819
        %v5860 = vpack.c.b16 %v4828, %v4820
        %v5861 = vpack.c.b16 %v4829, %v4821
        %v5862 = vpack.c.b16 %v4838, %v4830
        %v5863 = vpack.c.b16 %v4839, %v4831
        %v5864 = vpack.c.b16 %v4840, %v4832
        %v5865 = vpack.c.b16 %v4841, %v4833
        %v5866 = vpack.c.b16 %v4842, %v4834
        %v5867 = vpack.c.b16 %v4843, %v4835
        %v5868 = vpack.c.b16 %v4844, %v4836
        %v5869 = vpack.c.b16 %v4845, %v4837
        %6894 = vmatprep.subr.bf16.mxu0 %v4847
        %6895 = vmatpush1.bf16.msra.mxu0 %v4846
        %6896 = vmatprep.subr.bf16.mxu0 %v4855
        %6897 = vmatpush1.bf16.msra.mxu0 %v4854
        %6898 = vmatprep.subr.bf16.mxu0 %v4863
        %6899 = vmatpush1.bf16.msra.mxu0 %v4862
        %6900 = vmatprep.subr.bf16.mxu0 %v4871
        %6901 = vmatpush1.bf16.msra.mxu0 %v4870
        %6902 = vmatprep.subr.bf16.mxu0 %v4879
        %6903 = vmatpush1.bf16.msra.mxu0 %v4878
        %6904 = vmatprep.subr.bf16.mxu0 %v4887
        %6905 = vmatpush1.bf16.msra.mxu0 %v4886
        %6906 = vmatprep.subr.bf16.mxu0 %v4895
        %6907 = vmatpush1.bf16.msra.mxu0 %v4894
        %6908 = vmatprep.subr.bf16.mxu0 %v4903
        %6909 = vmatpush1.bf16.msra.mxu0 %v4902
        %6910 = vmatprep.subr.bf16.mxu0 %v4911
        %6911 = vmatpush1.bf16.msra.mxu0 %v4910
        %6912 = vmatprep.subr.bf16.mxu0 %v4919
        %6913 = vmatpush1.bf16.msra.mxu0 %v4918
        %6914 = vmatprep.subr.bf16.mxu0 %v4927
        %6915 = vmatpush1.bf16.msra.mxu0 %v4926
        %6916 = vmatprep.subr.bf16.mxu0 %v4935
        %6917 = vmatpush1.bf16.msra.mxu0 %v4934
        %6918 = vmatprep.subr.bf16.mxu0 %v4943
        %6919 = vmatpush1.bf16.msra.mxu0 %v4942
        %6920 = vmatprep.subr.bf16.mxu0 %v4951
        %6921 = vmatpush1.bf16.msra.mxu0 %v4950
        %6922 = vmatprep.subr.bf16.mxu0 %v4959
        %6923 = vmatpush1.bf16.msra.mxu0 %v4958
        %6924 = vmatprep.subr.bf16.mxu0 %v4967
        %6925 = vmatpush1.bf16.msra.mxu0 %v4966
        %6926 = vmatprep.mubr.bf16.mxu0 %v1743
        %6927 = vmatmul.mubr.bf16.gmra.mrb[0].mxu0 %v1742
        %v6928 = vpop.f32.mrb[0].mxu0
        %v6929 = vadd.f32 %v1624, %v6928
        %v6930 = vpop.f32.mrb[0].mxu0
        %v6931 = vadd.f32 %v1628, %v6930
        %v6932 = vpop.f32.mrb[0].mxu0
        %v6933 = vpop.f32.mrb[0].mxu0
        %6934 = vdwg.mxu0
        %6935 = vmatprep.subr.bf16.mxu0 %v4975
        %6936 = vmatpush1.bf16.msra.mxu0 %v4974
        %6937 = vmatprep.subr.bf16.mxu0 %v4983
        %6938 = vmatpush1.bf16.msra.mxu0 %v4982
        %6939 = vmatprep.subr.bf16.mxu0 %v4991
        %6940 = vmatpush1.bf16.msra.mxu0 %v4990
        %6941 = vmatprep.subr.bf16.mxu0 %v4999
        %6942 = vmatpush1.bf16.msra.mxu0 %v4998
        %6943 = vmatprep.subr.bf16.mxu0 %v5007
        %6944 = vmatpush1.bf16.msra.mxu0 %v5006
        %6945 = vmatprep.subr.bf16.mxu0 %v5015
        %6946 = vmatpush1.bf16.msra.mxu0 %v5014
        %6947 = vmatprep.subr.bf16.mxu0 %v5023
        %6948 = vmatpush1.bf16.msra.mxu0 %v5022
        %6949 = vmatprep.subr.bf16.mxu0 %v5031
        %6950 = vmatpush1.bf16.msra.mxu0 %v5030
        %6951 = vmatprep.subr.bf16.mxu0 %v5039
        %6952 = vmatpush1.bf16.msra.mxu0 %v5038
        %6953 = vmatprep.subr.bf16.mxu0 %v5047
        %6954 = vmatpush1.bf16.msra.mxu0 %v5046
        %6955 = vmatprep.subr.bf16.mxu0 %v5055
        %6956 = vmatpush1.bf16.msra.mxu0 %v5054
        %6957 = vmatprep.subr.bf16.mxu0 %v5063
        %6958 = vmatpush1.bf16.msra.mxu0 %v5062
        %6959 = vmatprep.subr.bf16.mxu0 %v5071
        %6960 = vmatpush1.bf16.msra.mxu0 %v5070
        %6961 = vmatprep.subr.bf16.mxu0 %v5079
        %6962 = vmatpush1.bf16.msra.mxu0 %v5078
        %6963 = vmatprep.subr.bf16.mxu0 %v5087
        %6964 = vmatpush1.bf16.msra.mxu0 %v5086
        %6965 = vmatprep.subr.bf16.mxu0 %v5095
        %6966 = vmatpush1.bf16.msra.mxu0 %v5094
        %6967 = vmatprep.mubr.bf16.mxu0 %v1745
        %6968 = vmatmul.mubr.bf16.gmra.mrb[0].mxu0 %v1744
        %v6969 = vpop.f32.mrb[0].mxu0
        %v6970 = vadd.f32 %v6929, %v6969
        %v6971 = vpop.f32.mrb[0].mxu0
        %v6972 = vadd.f32 %v6931, %v6971
        %v6973 = vpop.f32.mrb[0].mxu0
        %v6974 = vpop.f32.mrb[0].mxu0
        %6975 = vdwg.mxu0
        %6976 = vmatprep.subr.bf16.mxu0 %v5103
        %6977 = vmatpush1.bf16.msra.mxu0 %v5102
        %6978 = vmatprep.subr.bf16.mxu0 %v5111
        %6979 = vmatpush1.bf16.msra.mxu0 %v5110
        %6980 = vmatprep.subr.bf16.mxu0 %v5119
        %6981 = vmatpush1.bf16.msra.mxu0 %v5118
        %6982 = vmatprep.subr.bf16.mxu0 %v5127
        %6983 = vmatpush1.bf16.msra.mxu0 %v5126
        %6984 = vmatprep.subr.bf16.mxu0 %v5135
        %6985 = vmatpush1.bf16.msra.mxu0 %v5134
        %6986 = vmatprep.subr.bf16.mxu0 %v5143
        %6987 = vmatpush1.bf16.msra.mxu0 %v5142
        %6988 = vmatprep.subr.bf16.mxu0 %v5151
        %6989 = vmatpush1.bf16.msra.mxu0 %v5150
        %6990 = vmatprep.subr.bf16.mxu0 %v5159
        %6991 = vmatpush1.bf16.msra.mxu0 %v5158
        %6992 = vmatprep.subr.bf16.mxu0 %v5167
        %6993 = vmatpush1.bf16.msra.mxu0 %v5166
        %6994 = vmatprep.subr.bf16.mxu0 %v5175
        %6995 = vmatpush1.bf16.msra.mxu0 %v5174
        %6996 = vmatprep.subr.bf16.mxu0 %v5183
        %6997 = vmatpush1.bf16.msra.mxu0 %v5182
        %6998 = vmatprep.subr.bf16.mxu0 %v5191
        %6999 = vmatpush1.bf16.msra.mxu0 %v5190
        %7000 = vmatprep.subr.bf16.mxu0 %v5199
        %7001 = vmatpush1.bf16.msra.mxu0 %v5198
        %7002 = vmatprep.subr.bf16.mxu0 %v5207
        %7003 = vmatpush1.bf16.msra.mxu0 %v5206
        %7004 = vmatprep.subr.bf16.mxu0 %v5215
        %7005 = vmatpush1.bf16.msra.mxu0 %v5214
        %7006 = vmatprep.subr.bf16.mxu0 %v5223
        %7007 = vmatpush1.bf16.msra.mxu0 %v5222
        %7008 = vmatprep.mubr.bf16.mxu0 %v1747
        %7009 = vmatmul.mubr.bf16.gmra.mrb[0].mxu0 %v1746
        %v7010 = vpop.f32.mrb[0].mxu0
        %v7011 = vadd.f32 %v6970, %v7010
        %v7012 = vpop.f32.mrb[0].mxu0
        %v7013 = vadd.f32 %v6972, %v7012
        %v7014 = vpop.f32.mrb[0].mxu0
        %v7015 = vpop.f32.mrb[0].mxu0
        %7016 = vdwg.mxu0
        %7017 = vmatprep.subr.bf16.mxu0 %v5231
        %7018 = vmatpush1.bf16.msra.mxu0 %v5230
        %7019 = vmatprep.subr.bf16.mxu0 %v5239
        %7020 = vmatpush1.bf16.msra.mxu0 %v5238
        %7021 = vmatprep.subr.bf16.mxu0 %v5247
        %7022 = vmatpush1.bf16.msra.mxu0 %v5246
        %7023 = vmatprep.subr.bf16.mxu0 %v5255
        %7024 = vmatpush1.bf16.msra.mxu0 %v5254
        %7025 = vmatprep.subr.bf16.mxu0 %v5263
        %7026 = vmatpush1.bf16.msra.mxu0 %v5262
        %7027 = vmatprep.subr.bf16.mxu0 %v5271
        %7028 = vmatpush1.bf16.msra.mxu0 %v5270
        %7029 = vmatprep.subr.bf16.mxu0 %v5279
        %7030 = vmatpush1.bf16.msra.mxu0 %v5278
        %7031 = vmatprep.subr.bf16.mxu0 %v5287
        %7032 = vmatpush1.bf16.msra.mxu0 %v5286
        %7033 = vmatprep.subr.bf16.mxu0 %v5295
        %7034 = vmatpush1.bf16.msra.mxu0 %v5294
        %7035 = vmatprep.subr.bf16.mxu0 %v5303
        %7036 = vmatpush1.bf16.msra.mxu0 %v5302
        %7037 = vmatprep.subr.bf16.mxu0 %v5311
        %7038 = vmatpush1.bf16.msra.mxu0 %v5310
        %7039 = vmatprep.subr.bf16.mxu0 %v5319
        %7040 = vmatpush1.bf16.msra.mxu0 %v5318
        %7041 = vmatprep.subr.bf16.mxu0 %v5327
        %7042 = vmatpush1.bf16.msra.mxu0 %v5326
        %7043 = vmatprep.subr.bf16.mxu0 %v5335
        %7044 = vmatpush1.bf16.msra.mxu0 %v5334
        %7045 = vmatprep.subr.bf16.mxu0 %v5343
        %7046 = vmatpush1.bf16.msra.mxu0 %v5342
        %7047 = vmatprep.subr.bf16.mxu0 %v5351
        %7048 = vmatpush1.bf16.msra.mxu0 %v5350
        %7049 = vmatprep.mubr.bf16.mxu0 %v1749
        %7050 = vmatmul.mubr.bf16.gmra.mrb[0].mxu0 %v1748
        %v7051 = vpop.f32.mrb[0].mxu0
        %v7052 = vadd.f32 %v7011, %v7051
        %v7053 = vpop.f32.mrb[0].mxu0
        %v7054 = vadd.f32 %v7013, %v7053
        %v7055 = vpop.f32.mrb[0].mxu0
        %v7056 = vpop.f32.mrb[0].mxu0
        %7057 = vdwg.mxu0
        %7058 = vmatprep.subr.bf16.mxu0 %v5359
        %7059 = vmatpush1.bf16.msra.mxu0 %v5358
        %7060 = vmatprep.subr.bf16.mxu0 %v5367
        %7061 = vmatpush1.bf16.msra.mxu0 %v5366
        %7062 = vmatprep.subr.bf16.mxu0 %v5375
        %7063 = vmatpush1.bf16.msra.mxu0 %v5374
        %7064 = vmatprep.subr.bf16.mxu0 %v5383
        %7065 = vmatpush1.bf16.msra.mxu0 %v5382
        %7066 = vmatprep.subr.bf16.mxu0 %v5391
        %7067 = vmatpush1.bf16.msra.mxu0 %v5390
        %7068 = vmatprep.subr.bf16.mxu0 %v5399
        %7069 = vmatpush1.bf16.msra.mxu0 %v5398
        %7070 = vmatprep.subr.bf16.mxu0 %v5407
        %7071 = vmatpush1.bf16.msra.mxu0 %v5406
        %7072 = vmatprep.subr.bf16.mxu0 %v5415
        %7073 = vmatpush1.bf16.msra.mxu0 %v5414
        %7074 = vmatprep.subr.bf16.mxu0 %v5423
        %7075 = vmatpush1.bf16.msra.mxu0 %v5422
        %7076 = vmatprep.subr.bf16.mxu0 %v5431
        %7077 = vmatpush1.bf16.msra.mxu0 %v5430
        %7078 = vmatprep.subr.bf16.mxu0 %v5439
        %7079 = vmatpush1.bf16.msra.mxu0 %v5438
        %7080 = vmatprep.subr.bf16.mxu0 %v5447
        %7081 = vmatpush1.bf16.msra.mxu0 %v5446
        %7082 = vmatprep.subr.bf16.mxu0 %v5455
        %7083 = vmatpush1.bf16.msra.mxu0 %v5454
        %7084 = vmatprep.subr.bf16.mxu0 %v5463
        %7085 = vmatpush1.bf16.msra.mxu0 %v5462
        %7086 = vmatprep.subr.bf16.mxu0 %v5471
        %7087 = vmatpush1.bf16.msra.mxu0 %v5470
        %7088 = vmatprep.subr.bf16.mxu0 %v5479
        %7089 = vmatpush1.bf16.msra.mxu0 %v5478
        %7090 = vmatprep.mubr.bf16.mxu0 %v1751
        %7091 = vmatmul.mubr.bf16.gmra.mrb[0].mxu0 %v1750
        %v7092 = vpop.f32.mrb[0].mxu0
        %v7093 = vadd.f32 %v7052, %v7092
        %v7094 = vpop.f32.mrb[0].mxu0
        %v7095 = vadd.f32 %v7054, %v7094
        %v7096 = vpop.f32.mrb[0].mxu0
        %v7097 = vpop.f32.mrb[0].mxu0
        %7098 = vdwg.mxu0
        %7099 = vmatprep.subr.bf16.mxu0 %v5487
        %7100 = vmatpush1.bf16.msra.mxu0 %v5486
        %7101 = vmatprep.subr.bf16.mxu0 %v5495
        %7102 = vmatpush1.bf16.msra.mxu0 %v5494
        %7103 = vmatprep.subr.bf16.mxu0 %v5503
        %7104 = vmatpush1.bf16.msra.mxu0 %v5502
        %7105 = vmatprep.subr.bf16.mxu0 %v5511
        %7106 = vmatpush1.bf16.msra.mxu0 %v5510
        %7107 = vmatprep.subr.bf16.mxu0 %v5519
        %7108 = vmatpush1.bf16.msra.mxu0 %v5518
        %7109 = vmatprep.subr.bf16.mxu0 %v5527
        %7110 = vmatpush1.bf16.msra.mxu0 %v5526
        %7111 = vmatprep.subr.bf16.mxu0 %v5535
        %7112 = vmatpush1.bf16.msra.mxu0 %v5534
        %7113 = vmatprep.subr.bf16.mxu0 %v5543
        %7114 = vmatpush1.bf16.msra.mxu0 %v5542
        %7115 = vmatprep.subr.bf16.mxu0 %v5551
        %7116 = vmatpush1.bf16.msra.mxu0 %v5550
        %7117 = vmatprep.subr.bf16.mxu0 %v5559
        %7118 = vmatpush1.bf16.msra.mxu0 %v5558
        %7119 = vmatprep.subr.bf16.mxu0 %v5567
        %7120 = vmatpush1.bf16.msra.mxu0 %v5566
        %7121 = vmatprep.subr.bf16.mxu0 %v5575
        %7122 = vmatpush1.bf16.msra.mxu0 %v5574
        %7123 = vmatprep.subr.bf16.mxu0 %v5583
        %7124 = vmatpush1.bf16.msra.mxu0 %v5582
        %7125 = vmatprep.subr.bf16.mxu0 %v5591
        %7126 = vmatpush1.bf16.msra.mxu0 %v5590
        %7127 = vmatprep.subr.bf16.mxu0 %v5599
        %7128 = vmatpush1.bf16.msra.mxu0 %v5598
        %7129 = vmatprep.subr.bf16.mxu0 %v5607
        %7130 = vmatpush1.bf16.msra.mxu0 %v5606
        %7131 = vmatprep.mubr.bf16.mxu0 %v1753
        %7132 = vmatmul.mubr.bf16.gmra.mrb[0].mxu0 %v1752
        %v7133 = vpop.f32.mrb[0].mxu0
        %v7134 = vadd.f32 %v7093, %v7133
        %v7135 = vpop.f32.mrb[0].mxu0
        %v7136 = vadd.f32 %v7095, %v7135
        %v7137 = vpop.f32.mrb[0].mxu0
        %v7138 = vpop.f32.mrb[0].mxu0
        %7139 = vdwg.mxu0
        %7140 = vmatprep.subr.bf16.mxu0 %v5615
        %7141 = vmatpush1.bf16.msra.mxu0 %v5614
        %7142 = vmatprep.subr.bf16.mxu0 %v5623
        %7143 = vmatpush1.bf16.msra.mxu0 %v5622
        %7144 = vmatprep.subr.bf16.mxu0 %v5631
        %7145 = vmatpush1.bf16.msra.mxu0 %v5630
        %7146 = vmatprep.subr.bf16.mxu0 %v5639
        %7147 = vmatpush1.bf16.msra.mxu0 %v5638
        %7148 = vmatprep.subr.bf16.mxu0 %v5647
        %7149 = vmatpush1.bf16.msra.mxu0 %v5646
        %7150 = vmatprep.subr.bf16.mxu0 %v5655
        %7151 = vmatpush1.bf16.msra.mxu0 %v5654
        %7152 = vmatprep.subr.bf16.mxu0 %v5663
        %7153 = vmatpush1.bf16.msra.mxu0 %v5662
        %7154 = vmatprep.subr.bf16.mxu0 %v5671
        %7155 = vmatpush1.bf16.msra.mxu0 %v5670
        %7156 = vmatprep.subr.bf16.mxu0 %v5679
        %7157 = vmatpush1.bf16.msra.mxu0 %v5678
        %7158 = vmatprep.subr.bf16.mxu0 %v5687
        %7159 = vmatpush1.bf16.msra.mxu0 %v5686
        %7160 = vmatprep.subr.bf16.mxu0 %v5695
        %7161 = vmatpush1.bf16.msra.mxu0 %v5694
        %7162 = vmatprep.subr.bf16.mxu0 %v5703
        %7163 = vmatpush1.bf16.msra.mxu0 %v5702
        %7164 = vmatprep.subr.bf16.mxu0 %v5711
        %7165 = vmatpush1.bf16.msra.mxu0 %v5710
        %7166 = vmatprep.subr.bf16.mxu0 %v5719
        %7167 = vmatpush1.bf16.msra.mxu0 %v5718
        %7168 = vmatprep.subr.bf16.mxu0 %v5727
        %7169 = vmatpush1.bf16.msra.mxu0 %v5726
        %7170 = vmatprep.subr.bf16.mxu0 %v5735
        %7171 = vmatpush1.bf16.msra.mxu0 %v5734
        %7172 = vmatprep.mubr.bf16.mxu0 %v1755
        %7173 = vmatmul.mubr.bf16.gmra.mrb[0].mxu0 %v1754
        %v7174 = vpop.f32.mrb[0].mxu0
        %v7175 = vadd.f32 %v7134, %v7174
        %v7176 = vpop.f32.mrb[0].mxu0
        %v7177 = vadd.f32 %v7136, %v7176
        %v7178 = vpop.f32.mrb[0].mxu0
        %v7179 = vpop.f32.mrb[0].mxu0
        %7180 = vdwg.mxu0
        %7181 = vmatprep.subr.bf16.mxu0 %v5743
        %7182 = vmatpush1.bf16.msra.mxu0 %v5742
        %7183 = vmatprep.subr.bf16.mxu0 %v5751
        %7184 = vmatpush1.bf16.msra.mxu0 %v5750
        %7185 = vmatprep.subr.bf16.mxu0 %v5759
        %7186 = vmatpush1.bf16.msra.mxu0 %v5758
        %7187 = vmatprep.subr.bf16.mxu0 %v5767
        %7188 = vmatpush1.bf16.msra.mxu0 %v5766
        %7189 = vmatprep.subr.bf16.mxu0 %v5775
        %7190 = vmatpush1.bf16.msra.mxu0 %v5774
        %7191 = vmatprep.subr.bf16.mxu0 %v5783
        %7192 = vmatpush1.bf16.msra.mxu0 %v5782
        %7193 = vmatprep.subr.bf16.mxu0 %v5791
        %7194 = vmatpush1.bf16.msra.mxu0 %v5790
        %7195 = vmatprep.subr.bf16.mxu0 %v5799
        %7196 = vmatpush1.bf16.msra.mxu0 %v5798
        %7197 = vmatprep.subr.bf16.mxu0 %v5807
        %7198 = vmatpush1.bf16.msra.mxu0 %v5806
        %7199 = vmatprep.subr.bf16.mxu0 %v5815
        %7200 = vmatpush1.bf16.msra.mxu0 %v5814
        %7201 = vmatprep.subr.bf16.mxu0 %v5823
        %7202 = vmatpush1.bf16.msra.mxu0 %v5822
        %7203 = vmatprep.subr.bf16.mxu0 %v5831
        %7204 = vmatpush1.bf16.msra.mxu0 %v5830
        %7205 = vmatprep.subr.bf16.mxu0 %v5839
        %7206 = vmatpush1.bf16.msra.mxu0 %v5838
        %7207 = vmatprep.subr.bf16.mxu0 %v5847
        %7208 = vmatpush1.bf16.msra.mxu0 %v5846
        %7209 = vmatprep.subr.bf16.mxu0 %v5855
        %7210 = vmatpush1.bf16.msra.mxu0 %v5854
        %7211 = vmatprep.subr.bf16.mxu0 %v5863
        %7212 = vmatpush1.bf16.msra.mxu0 %v5862
        %7213 = vmatprep.mubr.bf16.mxu0 %v1757
        %7214 = vmatmul.mubr.bf16.gmra.mrb[0].mxu0 %v1756
        %v7215 = vpop.f32.mrb[0].mxu0
        %v7216 = vadd.f32 %v7175, %v7215
        %v7217 = vpop.f32.mrb[0].mxu0
        %v7218 = vadd.f32 %v7177, %v7217
        %v7219 = vpop.f32.mrb[0].mxu0
        %v7220 = vpop.f32.mrb[0].mxu0
        %7221 = vdwg.mxu0
        %7222 = vmatprep.subr.bf16.mxu0 %v4849
        %7223 = vmatpush1.bf16.msra.mxu0 %v4848
        %7224 = vmatprep.subr.bf16.mxu0 %v4857
        %7225 = vmatpush1.bf16.msra.mxu0 %v4856
        %7226 = vmatprep.subr.bf16.mxu0 %v4865
        %7227 = vmatpush1.bf16.msra.mxu0 %v4864
        %7228 = vmatprep.subr.bf16.mxu0 %v4873
        %7229 = vmatpush1.bf16.msra.mxu0 %v4872
        %7230 = vmatprep.subr.bf16.mxu0 %v4881
        %7231 = vmatpush1.bf16.msra.mxu0 %v4880
        %7232 = vmatprep.subr.bf16.mxu0 %v4889
        %7233 = vmatpush1.bf16.msra.mxu0 %v4888
        %7234 = vmatprep.subr.bf16.mxu0 %v4897
        %7235 = vmatpush1.bf16.msra.mxu0 %v4896
        %7236 = vmatprep.subr.bf16.mxu0 %v4905
        %7237 = vmatpush1.bf16.msra.mxu0 %v4904
        %7238 = vmatprep.subr.bf16.mxu0 %v4913
        %7239 = vmatpush1.bf16.msra.mxu0 %v4912
        %7240 = vmatprep.subr.bf16.mxu0 %v4921
        %7241 = vmatpush1.bf16.msra.mxu0 %v4920
        %7242 = vmatprep.subr.bf16.mxu0 %v4929
        %7243 = vmatpush1.bf16.msra.mxu0 %v4928
        %7244 = vmatprep.subr.bf16.mxu0 %v4937
        %7245 = vmatpush1.bf16.msra.mxu0 %v4936
        %7246 = vmatprep.subr.bf16.mxu0 %v4945
        %7247 = vmatpush1.bf16.msra.mxu0 %v4944
        %7248 = vmatprep.subr.bf16.mxu0 %v4953
        %7249 = vmatpush1.bf16.msra.mxu0 %v4952
        %7250 = vmatprep.subr.bf16.mxu0 %v4961
        %7251 = vmatpush1.bf16.msra.mxu0 %v4960
        %7252 = vmatprep.subr.bf16.mxu0 %v4969
        %7253 = vmatpush1.bf16.msra.mxu0 %v4968
        %7254 = vmatprep.mubr.bf16.mxu0 %v1743
        %7255 = vmatmul.mubr.bf16.gmra.mrb[0].mxu0 %v1742
        %v7256 = vpop.f32.mrb[0].mxu0
        %v7257 = vadd.f32 %v1632, %v7256
        %v7258 = vpop.f32.mrb[0].mxu0
        %v7259 = vadd.f32 %v1636, %v7258
        %v7260 = vpop.f32.mrb[0].mxu0
        %v7261 = vpop.f32.mrb[0].mxu0
        %7262 = vdwg.mxu0
        %7263 = vmatprep.subr.bf16.mxu0 %v4977
        %7264 = vmatpush1.bf16.msra.mxu0 %v4976
        %7265 = vmatprep.subr.bf16.mxu0 %v4985
        %7266 = vmatpush1.bf16.msra.mxu0 %v4984
        %7267 = vmatprep.subr.bf16.mxu0 %v4993
        %7268 = vmatpush1.bf16.msra.mxu0 %v4992
        %7269 = vmatprep.subr.bf16.mxu0 %v5001
        %7270 = vmatpush1.bf16.msra.mxu0 %v5000
        %7271 = vmatprep.subr.bf16.mxu0 %v5009
        %7272 = vmatpush1.bf16.msra.mxu0 %v5008
        %7273 = vmatprep.subr.bf16.mxu0 %v5017
        %7274 = vmatpush1.bf16.msra.mxu0 %v5016
        %7275 = vmatprep.subr.bf16.mxu0 %v5025
        %7276 = vmatpush1.bf16.msra.mxu0 %v5024
        %7277 = vmatprep.subr.bf16.mxu0 %v5033
        %7278 = vmatpush1.bf16.msra.mxu0 %v5032
        %7279 = vmatprep.subr.bf16.mxu0 %v5041
        %7280 = vmatpush1.bf16.msra.mxu0 %v5040
        %7281 = vmatprep.subr.bf16.mxu0 %v5049
        %7282 = vmatpush1.bf16.msra.mxu0 %v5048
        %7283 = vmatprep.subr.bf16.mxu0 %v5057
        %7284 = vmatpush1.bf16.msra.mxu0 %v5056
        %7285 = vmatprep.subr.bf16.mxu0 %v5065
        %7286 = vmatpush1.bf16.msra.mxu0 %v5064
        %7287 = vmatprep.subr.bf16.mxu0 %v5073
        %7288 = vmatpush1.bf16.msra.mxu0 %v5072
        %7289 = vmatprep.subr.bf16.mxu0 %v5081
        %7290 = vmatpush1.bf16.msra.mxu0 %v5080
        %7291 = vmatprep.subr.bf16.mxu0 %v5089
        %7292 = vmatpush1.bf16.msra.mxu0 %v5088
        %7293 = vmatprep.subr.bf16.mxu0 %v5097
        %7294 = vmatpush1.bf16.msra.mxu0 %v5096
        %7295 = vmatprep.mubr.bf16.mxu0 %v1745
        %7296 = vmatmul.mubr.bf16.gmra.mrb[0].mxu0 %v1744
        %v7297 = vpop.f32.mrb[0].mxu0
        %v7298 = vadd.f32 %v7257, %v7297
        %v7299 = vpop.f32.mrb[0].mxu0
        %v7300 = vadd.f32 %v7259, %v7299
        %v7301 = vpop.f32.mrb[0].mxu0
        %v7302 = vpop.f32.mrb[0].mxu0
        %7303 = vdwg.mxu0
        %7304 = vmatprep.subr.bf16.mxu0 %v5105
        %7305 = vmatpush1.bf16.msra.mxu0 %v5104
        %7306 = vmatprep.subr.bf16.mxu0 %v5113
        %7307 = vmatpush1.bf16.msra.mxu0 %v5112
        %7308 = vmatprep.subr.bf16.mxu0 %v5121
        %7309 = vmatpush1.bf16.msra.mxu0 %v5120
        %7310 = vmatprep.subr.bf16.mxu0 %v5129
        %7311 = vmatpush1.bf16.msra.mxu0 %v5128
        %7312 = vmatprep.subr.bf16.mxu0 %v5137
        %7313 = vmatpush1.bf16.msra.mxu0 %v5136
        %7314 = vmatprep.subr.bf16.mxu0 %v5145
        %7315 = vmatpush1.bf16.msra.mxu0 %v5144
        %7316 = vmatprep.subr.bf16.mxu0 %v5153
        %7317 = vmatpush1.bf16.msra.mxu0 %v5152
        %7318 = vmatprep.subr.bf16.mxu0 %v5161
        %7319 = vmatpush1.bf16.msra.mxu0 %v5160
        %7320 = vmatprep.subr.bf16.mxu0 %v5169
        %7321 = vmatpush1.bf16.msra.mxu0 %v5168
        %7322 = vmatprep.subr.bf16.mxu0 %v5177
        %7323 = vmatpush1.bf16.msra.mxu0 %v5176
        %7324 = vmatprep.subr.bf16.mxu0 %v5185
        %7325 = vmatpush1.bf16.msra.mxu0 %v5184
        %7326 = vmatprep.subr.bf16.mxu0 %v5193
        %7327 = vmatpush1.bf16.msra.mxu0 %v5192
        %7328 = vmatprep.subr.bf16.mxu0 %v5201
        %7329 = vmatpush1.bf16.msra.mxu0 %v5200
        %7330 = vmatprep.subr.bf16.mxu0 %v5209
        %7331 = vmatpush1.bf16.msra.mxu0 %v5208
        %7332 = vmatprep.subr.bf16.mxu0 %v5217
        %7333 = vmatpush1.bf16.msra.mxu0 %v5216
        %7334 = vmatprep.subr.bf16.mxu0 %v5225
        %7335 = vmatpush1.bf16.msra.mxu0 %v5224
        %7336 = vmatprep.mubr.bf16.mxu0 %v1747
        %7337 = vmatmul.mubr.bf16.gmra.mrb[0].mxu0 %v1746
        %v7338 = vpop.f32.mrb[0].mxu0
        %v7339 = vadd.f32 %v7298, %v7338
        %v7340 = vpop.f32.mrb[0].mxu0
        %v7341 = vadd.f32 %v7300, %v7340
        %v7342 = vpop.f32.mrb[0].mxu0
        %v7343 = vpop.f32.mrb[0].mxu0
        %7344 = vdwg.mxu0
        %7345 = vmatprep.subr.bf16.mxu0 %v5233
        %7346 = vmatpush1.bf16.msra.mxu0 %v5232
        %7347 = vmatprep.subr.bf16.mxu0 %v5241
        %7348 = vmatpush1.bf16.msra.mxu0 %v5240
        %7349 = vmatprep.subr.bf16.mxu0 %v5249
        %7350 = vmatpush1.bf16.msra.mxu0 %v5248
        %7351 = vmatprep.subr.bf16.mxu0 %v5257
        %7352 = vmatpush1.bf16.msra.mxu0 %v5256
        %7353 = vmatprep.subr.bf16.mxu0 %v5265
        %7354 = vmatpush1.bf16.msra.mxu0 %v5264
        %7355 = vmatprep.subr.bf16.mxu0 %v5273
        %7356 = vmatpush1.bf16.msra.mxu0 %v5272
        %7357 = vmatprep.subr.bf16.mxu0 %v5281
        %7358 = vmatpush1.bf16.msra.mxu0 %v5280
        %7359 = vmatprep.subr.bf16.mxu0 %v5289
        %7360 = vmatpush1.bf16.msra.mxu0 %v5288
        %7361 = vmatprep.subr.bf16.mxu0 %v5297
        %7362 = vmatpush1.bf16.msra.mxu0 %v5296
        %7363 = vmatprep.subr.bf16.mxu0 %v5305
        %7364 = vmatpush1.bf16.msra.mxu0 %v5304
        %7365 = vmatprep.subr.bf16.mxu0 %v5313
        %7366 = vmatpush1.bf16.msra.mxu0 %v5312
        %7367 = vmatprep.subr.bf16.mxu0 %v5321
        %7368 = vmatpush1.bf16.msra.mxu0 %v5320
        %7369 = vmatprep.subr.bf16.mxu0 %v5329
        %7370 = vmatpush1.bf16.msra.mxu0 %v5328
        %7371 = vmatprep.subr.bf16.mxu0 %v5337
        %7372 = vmatpush1.bf16.msra.mxu0 %v5336
        %7373 = vmatprep.subr.bf16.mxu0 %v5345
        %7374 = vmatpush1.bf16.msra.mxu0 %v5344
        %7375 = vmatprep.subr.bf16.mxu0 %v5353
        %7376 = vmatpush1.bf16.msra.mxu0 %v5352
        %7377 = vmatprep.mubr.bf16.mxu0 %v1749
        %7378 = vmatmul.mubr.bf16.gmra.mrb[0].mxu0 %v1748
        %v7379 = vpop.f32.mrb[0].mxu0
        %v7380 = vadd.f32 %v7339, %v7379
        %v7381 = vpop.f32.mrb[0].mxu0
        %v7382 = vadd.f32 %v7341, %v7381
        %v7383 = vpop.f32.mrb[0].mxu0
        %v7384 = vpop.f32.mrb[0].mxu0
        %7385 = vdwg.mxu0
        %7386 = vmatprep.subr.bf16.mxu0 %v5361
        %7387 = vmatpush1.bf16.msra.mxu0 %v5360
        %7388 = vmatprep.subr.bf16.mxu0 %v5369
        %7389 = vmatpush1.bf16.msra.mxu0 %v5368
        %7390 = vmatprep.subr.bf16.mxu0 %v5377
        %7391 = vmatpush1.bf16.msra.mxu0 %v5376
        %7392 = vmatprep.subr.bf16.mxu0 %v5385
        %7393 = vmatpush1.bf16.msra.mxu0 %v5384
        %7394 = vmatprep.subr.bf16.mxu0 %v5393
        %7395 = vmatpush1.bf16.msra.mxu0 %v5392
        %7396 = vmatprep.subr.bf16.mxu0 %v5401
        %7397 = vmatpush1.bf16.msra.mxu0 %v5400
        %7398 = vmatprep.subr.bf16.mxu0 %v5409
        %7399 = vmatpush1.bf16.msra.mxu0 %v5408
        %7400 = vmatprep.subr.bf16.mxu0 %v5417
        %7401 = vmatpush1.bf16.msra.mxu0 %v5416
        %7402 = vmatprep.subr.bf16.mxu0 %v5425
        %7403 = vmatpush1.bf16.msra.mxu0 %v5424
        %7404 = vmatprep.subr.bf16.mxu0 %v5433
        %7405 = vmatpush1.bf16.msra.mxu0 %v5432
        %7406 = vmatprep.subr.bf16.mxu0 %v5441
        %7407 = vmatpush1.bf16.msra.mxu0 %v5440
        %7408 = vmatprep.subr.bf16.mxu0 %v5449
        %7409 = vmatpush1.bf16.msra.mxu0 %v5448
        %7410 = vmatprep.subr.bf16.mxu0 %v5457
        %7411 = vmatpush1.bf16.msra.mxu0 %v5456
        %7412 = vmatprep.subr.bf16.mxu0 %v5465
        %7413 = vmatpush1.bf16.msra.mxu0 %v5464
        %7414 = vmatprep.subr.bf16.mxu0 %v5473
        %7415 = vmatpush1.bf16.msra.mxu0 %v5472
        %7416 = vmatprep.subr.bf16.mxu0 %v5481
        %7417 = vmatpush1.bf16.msra.mxu0 %v5480
        %7418 = vmatprep.mubr.bf16.mxu0 %v1751
        %7419 = vmatmul.mubr.bf16.gmra.mrb[0].mxu0 %v1750
        %v7420 = vpop.f32.mrb[0].mxu0
        %v7421 = vadd.f32 %v7380, %v7420
        %v7422 = vpop.f32.mrb[0].mxu0
        %v7423 = vadd.f32 %v7382, %v7422
        %v7424 = vpop.f32.mrb[0].mxu0
        %v7425 = vpop.f32.mrb[0].mxu0
        %7426 = vdwg.mxu0
        %7427 = vmatprep.subr.bf16.mxu0 %v5489
        %7428 = vmatpush1.bf16.msra.mxu0 %v5488
        %7429 = vmatprep.subr.bf16.mxu0 %v5497
        %7430 = vmatpush1.bf16.msra.mxu0 %v5496
        %7431 = vmatprep.subr.bf16.mxu0 %v5505
        %7432 = vmatpush1.bf16.msra.mxu0 %v5504
        %7433 = vmatprep.subr.bf16.mxu0 %v5513
        %7434 = vmatpush1.bf16.msra.mxu0 %v5512
        %7435 = vmatprep.subr.bf16.mxu0 %v5521
        %7436 = vmatpush1.bf16.msra.mxu0 %v5520
        %7437 = vmatprep.subr.bf16.mxu0 %v5529
        %7438 = vmatpush1.bf16.msra.mxu0 %v5528
        %7439 = vmatprep.subr.bf16.mxu0 %v5537
        %7440 = vmatpush1.bf16.msra.mxu0 %v5536
        %7441 = vmatprep.subr.bf16.mxu0 %v5545
        %7442 = vmatpush1.bf16.msra.mxu0 %v5544
        %7443 = vmatprep.subr.bf16.mxu0 %v5553
        %7444 = vmatpush1.bf16.msra.mxu0 %v5552
        %7445 = vmatprep.subr.bf16.mxu0 %v5561
        %7446 = vmatpush1.bf16.msra.mxu0 %v5560
        %7447 = vmatprep.subr.bf16.mxu0 %v5569
        %7448 = vmatpush1.bf16.msra.mxu0 %v5568
        %7449 = vmatprep.subr.bf16.mxu0 %v5577
        %7450 = vmatpush1.bf16.msra.mxu0 %v5576
        %7451 = vmatprep.subr.bf16.mxu0 %v5585
        %7452 = vmatpush1.bf16.msra.mxu0 %v5584
        %7453 = vmatprep.subr.bf16.mxu0 %v5593
        %7454 = vmatpush1.bf16.msra.mxu0 %v5592
        %7455 = vmatprep.subr.bf16.mxu0 %v5601
        %7456 = vmatpush1.bf16.msra.mxu0 %v5600
        %7457 = vmatprep.subr.bf16.mxu0 %v5609
        %7458 = vmatpush1.bf16.msra.mxu0 %v5608
        %7459 = vmatprep.mubr.bf16.mxu0 %v1753
        %7460 = vmatmul.mubr.bf16.gmra.mrb[0].mxu0 %v1752
        %v7461 = vpop.f32.mrb[0].mxu0
        %v7462 = vadd.f32 %v7421, %v7461
        %v7463 = vpop.f32.mrb[0].mxu0
        %v7464 = vadd.f32 %v7423, %v7463
        %v7465 = vpop.f32.mrb[0].mxu0
        %v7466 = vpop.f32.mrb[0].mxu0
        %7467 = vdwg.mxu0
        %7468 = vmatprep.subr.bf16.mxu0 %v5617
        %7469 = vmatpush1.bf16.msra.mxu0 %v5616
        %7470 = vmatprep.subr.bf16.mxu0 %v5625
        %7471 = vmatpush1.bf16.msra.mxu0 %v5624
        %7472 = vmatprep.subr.bf16.mxu0 %v5633
        %7473 = vmatpush1.bf16.msra.mxu0 %v5632
        %7474 = vmatprep.subr.bf16.mxu0 %v5641
        %7475 = vmatpush1.bf16.msra.mxu0 %v5640
        %7476 = vmatprep.subr.bf16.mxu0 %v5649
        %7477 = vmatpush1.bf16.msra.mxu0 %v5648
        %7478 = vmatprep.subr.bf16.mxu0 %v5657
        %7479 = vmatpush1.bf16.msra.mxu0 %v5656
        %7480 = vmatprep.subr.bf16.mxu0 %v5665
        %7481 = vmatpush1.bf16.msra.mxu0 %v5664
        %7482 = vmatprep.subr.bf16.mxu0 %v5673
        %7483 = vmatpush1.bf16.msra.mxu0 %v5672
        %7484 = vmatprep.subr.bf16.mxu0 %v5681
        %7485 = vmatpush1.bf16.msra.mxu0 %v5680
        %7486 = vmatprep.subr.bf16.mxu0 %v5689
        %7487 = vmatpush1.bf16.msra.mxu0 %v5688
        %7488 = vmatprep.subr.bf16.mxu0 %v5697
        %7489 = vmatpush1.bf16.msra.mxu0 %v5696
        %7490 = vmatprep.subr.bf16.mxu0 %v5705
        %7491 = vmatpush1.bf16.msra.mxu0 %v5704
        %7492 = vmatprep.subr.bf16.mxu0 %v5713
        %7493 = vmatpush1.bf16.msra.mxu0 %v5712
        %7494 = vmatprep.subr.bf16.mxu0 %v5721
        %7495 = vmatpush1.bf16.msra.mxu0 %v5720
        %7496 = vmatprep.subr.bf16.mxu0 %v5729
        %7497 = vmatpush1.bf16.msra.mxu0 %v5728
        %7498 = vmatprep.subr.bf16.mxu0 %v5737
        %7499 = vmatpush1.bf16.msra.mxu0 %v5736
        %7500 = vmatprep.mubr.bf16.mxu0 %v1755
        %7501 = vmatmul.mubr.bf16.gmra.mrb[0].mxu0 %v1754
        %v7502 = vpop.f32.mrb[0].mxu0
        %v7503 = vadd.f32 %v7462, %v7502
        %v7504 = vpop.f32.mrb[0].mxu0
        %v7505 = vadd.f32 %v7464, %v7504
        %v7506 = vpop.f32.mrb[0].mxu0
        %v7507 = vpop.f32.mrb[0].mxu0
        %7508 = vdwg.mxu0
        %7509 = vmatprep.subr.bf16.mxu0 %v5745
        %7510 = vmatpush1.bf16.msra.mxu0 %v5744
        %7511 = vmatprep.subr.bf16.mxu0 %v5753
        %7512 = vmatpush1.bf16.msra.mxu0 %v5752
        %7513 = vmatprep.subr.bf16.mxu0 %v5761
        %7514 = vmatpush1.bf16.msra.mxu0 %v5760
        %7515 = vmatprep.subr.bf16.mxu0 %v5769
        %7516 = vmatpush1.bf16.msra.mxu0 %v5768
        %7517 = vmatprep.subr.bf16.mxu0 %v5777
        %7518 = vmatpush1.bf16.msra.mxu0 %v5776
        %7519 = vmatprep.subr.bf16.mxu0 %v5785
        %7520 = vmatpush1.bf16.msra.mxu0 %v5784
        %7521 = vmatprep.subr.bf16.mxu0 %v5793
        %7522 = vmatpush1.bf16.msra.mxu0 %v5792
        %7523 = vmatprep.subr.bf16.mxu0 %v5801
        %7524 = vmatpush1.bf16.msra.mxu0 %v5800
        %7525 = vmatprep.subr.bf16.mxu0 %v5809
        %7526 = vmatpush1.bf16.msra.mxu0 %v5808
        %7527 = vmatprep.subr.bf16.mxu0 %v5817
        %7528 = vmatpush1.bf16.msra.mxu0 %v5816
        %7529 = vmatprep.subr.bf16.mxu0 %v5825
        %7530 = vmatpush1.bf16.msra.mxu0 %v5824
        %7531 = vmatprep.subr.bf16.mxu0 %v5833
        %7532 = vmatpush1.bf16.msra.mxu0 %v5832
        %7533 = vmatprep.subr.bf16.mxu0 %v5841
        %7534 = vmatpush1.bf16.msra.mxu0 %v5840
        %7535 = vmatprep.subr.bf16.mxu0 %v5849
        %7536 = vmatpush1.bf16.msra.mxu0 %v5848
        %7537 = vmatprep.subr.bf16.mxu0 %v5857
        %7538 = vmatpush1.bf16.msra.mxu0 %v5856
        %7539 = vmatprep.subr.bf16.mxu0 %v5865
        %7540 = vmatpush1.bf16.msra.mxu0 %v5864
        %7541 = vmatprep.mubr.bf16.mxu0 %v1757
        %7542 = vmatmul.mubr.bf16.gmra.mrb[0].mxu0 %v1756
        %v7543 = vpop.f32.mrb[0].mxu0
        %v7544 = vadd.f32 %v7503, %v7543
        %v7545 = vpop.f32.mrb[0].mxu0
        %v7546 = vadd.f32 %v7505, %v7545
        %v7547 = vpop.f32.mrb[0].mxu0
        %v7548 = vpop.f32.mrb[0].mxu0
        %7549 = vdwg.mxu0
        %7550 = vmatprep.subr.bf16.mxu0 %v4851
        %7551 = vmatpush1.bf16.msra.mxu0 %v4850
        %7552 = vmatprep.subr.bf16.mxu0 %v4859
        %7553 = vmatpush1.bf16.msra.mxu0 %v4858
        %7554 = vmatprep.subr.bf16.mxu0 %v4867
        %7555 = vmatpush1.bf16.msra.mxu0 %v4866
        %7556 = vmatprep.subr.bf16.mxu0 %v4875
        %7557 = vmatpush1.bf16.msra.mxu0 %v4874
        %7558 = vmatprep.subr.bf16.mxu0 %v4883
        %7559 = vmatpush1.bf16.msra.mxu0 %v4882
        %7560 = vmatprep.subr.bf16.mxu0 %v4891
        %7561 = vmatpush1.bf16.msra.mxu0 %v4890
        %7562 = vmatprep.subr.bf16.mxu0 %v4899
        %7563 = vmatpush1.bf16.msra.mxu0 %v4898
        %7564 = vmatprep.subr.bf16.mxu0 %v4907
        %7565 = vmatpush1.bf16.msra.mxu0 %v4906
        %7566 = vmatprep.subr.bf16.mxu0 %v4915
        %7567 = vmatpush1.bf16.msra.mxu0 %v4914
        %7568 = vmatprep.subr.bf16.mxu0 %v4923
        %7569 = vmatpush1.bf16.msra.mxu0 %v4922
        %7570 = vmatprep.subr.bf16.mxu0 %v4931
        %7571 = vmatpush1.bf16.msra.mxu0 %v4930
        %7572 = vmatprep.subr.bf16.mxu0 %v4939
        %7573 = vmatpush1.bf16.msra.mxu0 %v4938
        %7574 = vmatprep.subr.bf16.mxu0 %v4947
        %7575 = vmatpush1.bf16.msra.mxu0 %v4946
        %7576 = vmatprep.subr.bf16.mxu0 %v4955
        %7577 = vmatpush1.bf16.msra.mxu0 %v4954
        %7578 = vmatprep.subr.bf16.mxu0 %v4963
        %7579 = vmatpush1.bf16.msra.mxu0 %v4962
        %7580 = vmatprep.subr.bf16.mxu0 %v4971
        %7581 = vmatpush1.bf16.msra.mxu0 %v4970
        %7582 = vmatprep.mubr.bf16.mxu0 %v1743
        %7583 = vmatmul.mubr.bf16.gmra.mrb[0].mxu0 %v1742
        %v7584 = vpop.f32.mrb[0].mxu0
        %v7585 = vadd.f32 %v1640, %v7584
        %v7586 = vpop.f32.mrb[0].mxu0
        %v7587 = vadd.f32 %v1644, %v7586
        %v7588 = vpop.f32.mrb[0].mxu0
        %v7589 = vpop.f32.mrb[0].mxu0
        %7590 = vdwg.mxu0
        %7591 = vmatprep.subr.bf16.mxu0 %v4979
        %7592 = vmatpush1.bf16.msra.mxu0 %v4978
        %7593 = vmatprep.subr.bf16.mxu0 %v4987
        %7594 = vmatpush1.bf16.msra.mxu0 %v4986
        %7595 = vmatprep.subr.bf16.mxu0 %v4995
        %7596 = vmatpush1.bf16.msra.mxu0 %v4994
        %7597 = vmatprep.subr.bf16.mxu0 %v5003
        %7598 = vmatpush1.bf16.msra.mxu0 %v5002
        %7599 = vmatprep.subr.bf16.mxu0 %v5011
        %7600 = vmatpush1.bf16.msra.mxu0 %v5010
        %7601 = vmatprep.subr.bf16.mxu0 %v5019
        %7602 = vmatpush1.bf16.msra.mxu0 %v5018
        %7603 = vmatprep.subr.bf16.mxu0 %v5027
        %7604 = vmatpush1.bf16.msra.mxu0 %v5026
        %7605 = vmatprep.subr.bf16.mxu0 %v5035
        %7606 = vmatpush1.bf16.msra.mxu0 %v5034
        %7607 = vmatprep.subr.bf16.mxu0 %v5043
        %7608 = vmatpush1.bf16.msra.mxu0 %v5042
        %7609 = vmatprep.subr.bf16.mxu0 %v5051
        %7610 = vmatpush1.bf16.msra.mxu0 %v5050
        %7611 = vmatprep.subr.bf16.mxu0 %v5059
        %7612 = vmatpush1.bf16.msra.mxu0 %v5058
        %7613 = vmatprep.subr.bf16.mxu0 %v5067
        %7614 = vmatpush1.bf16.msra.mxu0 %v5066
        %7615 = vmatprep.subr.bf16.mxu0 %v5075
        %7616 = vmatpush1.bf16.msra.mxu0 %v5074
        %7617 = vmatprep.subr.bf16.mxu0 %v5083
        %7618 = vmatpush1.bf16.msra.mxu0 %v5082
        %7619 = vmatprep.subr.bf16.mxu0 %v5091
        %7620 = vmatpush1.bf16.msra.mxu0 %v5090
        %7621 = vmatprep.subr.bf16.mxu0 %v5099
        %7622 = vmatpush1.bf16.msra.mxu0 %v5098
        %7623 = vmatprep.mubr.bf16.mxu0 %v1745
        %7624 = vmatmul.mubr.bf16.gmra.mrb[0].mxu0 %v1744
        %v7625 = vpop.f32.mrb[0].mxu0
        %v7626 = vadd.f32 %v7585, %v7625
        %v7627 = vpop.f32.mrb[0].mxu0
        %v7628 = vadd.f32 %v7587, %v7627
        %v7629 = vpop.f32.mrb[0].mxu0
        %v7630 = vpop.f32.mrb[0].mxu0
        %7631 = vdwg.mxu0
        %7632 = vmatprep.subr.bf16.mxu0 %v5107
        %7633 = vmatpush1.bf16.msra.mxu0 %v5106
        %7634 = vmatprep.subr.bf16.mxu0 %v5115
        %7635 = vmatpush1.bf16.msra.mxu0 %v5114
        %7636 = vmatprep.subr.bf16.mxu0 %v5123
        %7637 = vmatpush1.bf16.msra.mxu0 %v5122
        %7638 = vmatprep.subr.bf16.mxu0 %v5131
        %7639 = vmatpush1.bf16.msra.mxu0 %v5130
        %7640 = vmatprep.subr.bf16.mxu0 %v5139
        %7641 = vmatpush1.bf16.msra.mxu0 %v5138
        %7642 = vmatprep.subr.bf16.mxu0 %v5147
        %7643 = vmatpush1.bf16.msra.mxu0 %v5146
        %7644 = vmatprep.subr.bf16.mxu0 %v5155
        %7645 = vmatpush1.bf16.msra.mxu0 %v5154
        %7646 = vmatprep.subr.bf16.mxu0 %v5163
        %7647 = vmatpush1.bf16.msra.mxu0 %v5162
        %7648 = vmatprep.subr.bf16.mxu0 %v5171
        %7649 = vmatpush1.bf16.msra.mxu0 %v5170
        %7650 = vmatprep.subr.bf16.mxu0 %v5179
        %7651 = vmatpush1.bf16.msra.mxu0 %v5178
        %7652 = vmatprep.subr.bf16.mxu0 %v5187
        %7653 = vmatpush1.bf16.msra.mxu0 %v5186
        %7654 = vmatprep.subr.bf16.mxu0 %v5195
        %7655 = vmatpush1.bf16.msra.mxu0 %v5194
        %7656 = vmatprep.subr.bf16.mxu0 %v5203
        %7657 = vmatpush1.bf16.msra.mxu0 %v5202
        %7658 = vmatprep.subr.bf16.mxu0 %v5211
        %7659 = vmatpush1.bf16.msra.mxu0 %v5210
        %7660 = vmatprep.subr.bf16.mxu0 %v5219
        %7661 = vmatpush1.bf16.msra.mxu0 %v5218
        %7662 = vmatprep.subr.bf16.mxu0 %v5227
        %7663 = vmatpush1.bf16.msra.mxu0 %v5226
        %7664 = vmatprep.mubr.bf16.mxu0 %v1747
        %7665 = vmatmul.mubr.bf16.gmra.mrb[0].mxu0 %v1746
        %v7666 = vpop.f32.mrb[0].mxu0
        %v7667 = vadd.f32 %v7626, %v7666
        %v7668 = vpop.f32.mrb[0].mxu0
        %v7669 = vadd.f32 %v7628, %v7668
        %v7670 = vpop.f32.mrb[0].mxu0
        %v7671 = vpop.f32.mrb[0].mxu0
        %7672 = vdwg.mxu0
        %7673 = vmatprep.subr.bf16.mxu0 %v5235
        %7674 = vmatpush1.bf16.msra.mxu0 %v5234
        %7675 = vmatprep.subr.bf16.mxu0 %v5243
        %7676 = vmatpush1.bf16.msra.mxu0 %v5242
        %7677 = vmatprep.subr.bf16.mxu0 %v5251
        %7678 = vmatpush1.bf16.msra.mxu0 %v5250
        %7679 = vmatprep.subr.bf16.mxu0 %v5259
        %7680 = vmatpush1.bf16.msra.mxu0 %v5258
        %7681 = vmatprep.subr.bf16.mxu0 %v5267
        %7682 = vmatpush1.bf16.msra.mxu0 %v5266
        %7683 = vmatprep.subr.bf16.mxu0 %v5275
        %7684 = vmatpush1.bf16.msra.mxu0 %v5274
        %7685 = vmatprep.subr.bf16.mxu0 %v5283
        %7686 = vmatpush1.bf16.msra.mxu0 %v5282
        %7687 = vmatprep.subr.bf16.mxu0 %v5291
        %7688 = vmatpush1.bf16.msra.mxu0 %v5290
        %7689 = vmatprep.subr.bf16.mxu0 %v5299
        %7690 = vmatpush1.bf16.msra.mxu0 %v5298
        %7691 = vmatprep.subr.bf16.mxu0 %v5307
        %7692 = vmatpush1.bf16.msra.mxu0 %v5306
        %7693 = vmatprep.subr.bf16.mxu0 %v5315
        %7694 = vmatpush1.bf16.msra.mxu0 %v5314
        %7695 = vmatprep.subr.bf16.mxu0 %v5323
        %7696 = vmatpush1.bf16.msra.mxu0 %v5322
        %7697 = vmatprep.subr.bf16.mxu0 %v5331
        %7698 = vmatpush1.bf16.msra.mxu0 %v5330
        %7699 = vmatprep.subr.bf16.mxu0 %v5339
        %7700 = vmatpush1.bf16.msra.mxu0 %v5338
        %7701 = vmatprep.subr.bf16.mxu0 %v5347
        %7702 = vmatpush1.bf16.msra.mxu0 %v5346
        %7703 = vmatprep.subr.bf16.mxu0 %v5355
        %7704 = vmatpush1.bf16.msra.mxu0 %v5354
        %7705 = vmatprep.mubr.bf16.mxu0 %v1749
        %7706 = vmatmul.mubr.bf16.gmra.mrb[0].mxu0 %v1748
        %v7707 = vpop.f32.mrb[0].mxu0
        %v7708 = vadd.f32 %v7667, %v7707
        %v7709 = vpop.f32.mrb[0].mxu0
        %v7710 = vadd.f32 %v7669, %v7709
        %v7711 = vpop.f32.mrb[0].mxu0
        %v7712 = vpop.f32.mrb[0].mxu0
        %7713 = vdwg.mxu0
        %7714 = vmatprep.subr.bf16.mxu0 %v5363
        %7715 = vmatpush1.bf16.msra.mxu0 %v5362
        %7716 = vmatprep.subr.bf16.mxu0 %v5371
        %7717 = vmatpush1.bf16.msra.mxu0 %v5370
        %7718 = vmatprep.subr.bf16.mxu0 %v5379
        %7719 = vmatpush1.bf16.msra.mxu0 %v5378
        %7720 = vmatprep.subr.bf16.mxu0 %v5387
        %7721 = vmatpush1.bf16.msra.mxu0 %v5386
        %7722 = vmatprep.subr.bf16.mxu0 %v5395
        %7723 = vmatpush1.bf16.msra.mxu0 %v5394
        %7724 = vmatprep.subr.bf16.mxu0 %v5403
        %7725 = vmatpush1.bf16.msra.mxu0 %v5402
        %7726 = vmatprep.subr.bf16.mxu0 %v5411
        %7727 = vmatpush1.bf16.msra.mxu0 %v5410
        %7728 = vmatprep.subr.bf16.mxu0 %v5419
        %7729 = vmatpush1.bf16.msra.mxu0 %v5418
        %7730 = vmatprep.subr.bf16.mxu0 %v5427
        %7731 = vmatpush1.bf16.msra.mxu0 %v5426
        %7732 = vmatprep.subr.bf16.mxu0 %v5435
        %7733 = vmatpush1.bf16.msra.mxu0 %v5434
        %7734 = vmatprep.subr.bf16.mxu0 %v5443
        %7735 = vmatpush1.bf16.msra.mxu0 %v5442
        %7736 = vmatprep.subr.bf16.mxu0 %v5451
        %7737 = vmatpush1.bf16.msra.mxu0 %v5450
        %7738 = vmatprep.subr.bf16.mxu0 %v5459
        %7739 = vmatpush1.bf16.msra.mxu0 %v5458
        %7740 = vmatprep.subr.bf16.mxu0 %v5467
        %7741 = vmatpush1.bf16.msra.mxu0 %v5466
        %7742 = vmatprep.subr.bf16.mxu0 %v5475
        %7743 = vmatpush1.bf16.msra.mxu0 %v5474
        %7744 = vmatprep.subr.bf16.mxu0 %v5483
        %7745 = vmatpush1.bf16.msra.mxu0 %v5482
        %7746 = vmatprep.mubr.bf16.mxu0 %v1751
        %7747 = vmatmul.mubr.bf16.gmra.mrb[0].mxu0 %v1750
        %v7748 = vpop.f32.mrb[0].mxu0
        %v7749 = vadd.f32 %v7708, %v7748
        %v7750 = vpop.f32.mrb[0].mxu0
        %v7751 = vadd.f32 %v7710, %v7750
        %v7752 = vpop.f32.mrb[0].mxu0
        %v7753 = vpop.f32.mrb[0].mxu0
        %7754 = vdwg.mxu0
        %7755 = vmatprep.subr.bf16.mxu0 %v5491
        %7756 = vmatpush1.bf16.msra.mxu0 %v5490
        %7757 = vmatprep.subr.bf16.mxu0 %v5499
        %7758 = vmatpush1.bf16.msra.mxu0 %v5498
        %7759 = vmatprep.subr.bf16.mxu0 %v5507
        %7760 = vmatpush1.bf16.msra.mxu0 %v5506
        %7761 = vmatprep.subr.bf16.mxu0 %v5515
        %7762 = vmatpush1.bf16.msra.mxu0 %v5514
        %7763 = vmatprep.subr.bf16.mxu0 %v5523
        %7764 = vmatpush1.bf16.msra.mxu0 %v5522
        %7765 = vmatprep.subr.bf16.mxu0 %v5531
        %7766 = vmatpush1.bf16.msra.mxu0 %v5530
        %7767 = vmatprep.subr.bf16.mxu0 %v5539
        %7768 = vmatpush1.bf16.msra.mxu0 %v5538
        %7769 = vmatprep.subr.bf16.mxu0 %v5547
        %7770 = vmatpush1.bf16.msra.mxu0 %v5546
        %7771 = vmatprep.subr.bf16.mxu0 %v5555
        %7772 = vmatpush1.bf16.msra.mxu0 %v5554
        %7773 = vmatprep.subr.bf16.mxu0 %v5563
        %7774 = vmatpush1.bf16.msra.mxu0 %v5562
        %7775 = vmatprep.subr.bf16.mxu0 %v5571
        %7776 = vmatpush1.bf16.msra.mxu0 %v5570
        %7777 = vmatprep.subr.bf16.mxu0 %v5579
        %7778 = vmatpush1.bf16.msra.mxu0 %v5578
        %7779 = vmatprep.subr.bf16.mxu0 %v5587
        %7780 = vmatpush1.bf16.msra.mxu0 %v5586
        %7781 = vmatprep.subr.bf16.mxu0 %v5595
        %7782 = vmatpush1.bf16.msra.mxu0 %v5594
        %7783 = vmatprep.subr.bf16.mxu0 %v5603
        %7784 = vmatpush1.bf16.msra.mxu0 %v5602
        %7785 = vmatprep.subr.bf16.mxu0 %v5611
        %7786 = vmatpush1.bf16.msra.mxu0 %v5610
        %7787 = vmatprep.mubr.bf16.mxu0 %v1753
        %7788 = vmatmul.mubr.bf16.gmra.mrb[0].mxu0 %v1752
        %v7789 = vpop.f32.mrb[0].mxu0
        %v7790 = vadd.f32 %v7749, %v7789
        %v7791 = vpop.f32.mrb[0].mxu0
        %v7792 = vadd.f32 %v7751, %v7791
        %v7793 = vpop.f32.mrb[0].mxu0
        %v7794 = vpop.f32.mrb[0].mxu0
        %7795 = vdwg.mxu0
        %7796 = vmatprep.subr.bf16.mxu0 %v5619
        %7797 = vmatpush1.bf16.msra.mxu0 %v5618
        %7798 = vmatprep.subr.bf16.mxu0 %v5627
        %7799 = vmatpush1.bf16.msra.mxu0 %v5626
        %7800 = vmatprep.subr.bf16.mxu0 %v5635
        %7801 = vmatpush1.bf16.msra.mxu0 %v5634
        %7802 = vmatprep.subr.bf16.mxu0 %v5643
        %7803 = vmatpush1.bf16.msra.mxu0 %v5642
        %7804 = vmatprep.subr.bf16.mxu0 %v5651
        %7805 = vmatpush1.bf16.msra.mxu0 %v5650
        %7806 = vmatprep.subr.bf16.mxu0 %v5659
        %7807 = vmatpush1.bf16.msra.mxu0 %v5658
        %7808 = vmatprep.subr.bf16.mxu0 %v5667
        %7809 = vmatpush1.bf16.msra.mxu0 %v5666
        %7810 = vmatprep.subr.bf16.mxu0 %v5675
        %7811 = vmatpush1.bf16.msra.mxu0 %v5674
        %7812 = vmatprep.subr.bf16.mxu0 %v5683
        %7813 = vmatpush1.bf16.msra.mxu0 %v5682
        %7814 = vmatprep.subr.bf16.mxu0 %v5691
        %7815 = vmatpush1.bf16.msra.mxu0 %v5690
        %7816 = vmatprep.subr.bf16.mxu0 %v5699
        %7817 = vmatpush1.bf16.msra.mxu0 %v5698
        %7818 = vmatprep.subr.bf16.mxu0 %v5707
        %7819 = vmatpush1.bf16.msra.mxu0 %v5706
        %7820 = vmatprep.subr.bf16.mxu0 %v5715
        %7821 = vmatpush1.bf16.msra.mxu0 %v5714
        %7822 = vmatprep.subr.bf16.mxu0 %v5723
        %7823 = vmatpush1.bf16.msra.mxu0 %v5722
        %7824 = vmatprep.subr.bf16.mxu0 %v5731
        %7825 = vmatpush1.bf16.msra.mxu0 %v5730
        %7826 = vmatprep.subr.bf16.mxu0 %v5739
        %7827 = vmatpush1.bf16.msra.mxu0 %v5738
        %7828 = vmatprep.mubr.bf16.mxu0 %v1755
        %7829 = vmatmul.mubr.bf16.gmra.mrb[0].mxu0 %v1754
        %v7830 = vpop.f32.mrb[0].mxu0
        %v7831 = vadd.f32 %v7790, %v7830
        %v7832 = vpop.f32.mrb[0].mxu0
        %v7833 = vadd.f32 %v7792, %v7832
        %v7834 = vpop.f32.mrb[0].mxu0
        %v7835 = vpop.f32.mrb[0].mxu0
        %7836 = vdwg.mxu0
        %7837 = vmatprep.subr.bf16.mxu0 %v5747
        %7838 = vmatpush1.bf16.msra.mxu0 %v5746
        %7839 = vmatprep.subr.bf16.mxu0 %v5755
        %7840 = vmatpush1.bf16.msra.mxu0 %v5754
        %7841 = vmatprep.subr.bf16.mxu0 %v5763
        %7842 = vmatpush1.bf16.msra.mxu0 %v5762
        %7843 = vmatprep.subr.bf16.mxu0 %v5771
        %7844 = vmatpush1.bf16.msra.mxu0 %v5770
        %7845 = vmatprep.subr.bf16.mxu0 %v5779
        %7846 = vmatpush1.bf16.msra.mxu0 %v5778
        %7847 = vmatprep.subr.bf16.mxu0 %v5787
        %7848 = vmatpush1.bf16.msra.mxu0 %v5786
        %7849 = vmatprep.subr.bf16.mxu0 %v5795
        %7850 = vmatpush1.bf16.msra.mxu0 %v5794
        %7851 = vmatprep.subr.bf16.mxu0 %v5803
        %7852 = vmatpush1.bf16.msra.mxu0 %v5802
        %7853 = vmatprep.subr.bf16.mxu0 %v5811
        %7854 = vmatpush1.bf16.msra.mxu0 %v5810
        %7855 = vmatprep.subr.bf16.mxu0 %v5819
        %7856 = vmatpush1.bf16.msra.mxu0 %v5818
        %7857 = vmatprep.subr.bf16.mxu0 %v5827
        %7858 = vmatpush1.bf16.msra.mxu0 %v5826
        %7859 = vmatprep.subr.bf16.mxu0 %v5835
        %7860 = vmatpush1.bf16.msra.mxu0 %v5834
        %7861 = vmatprep.subr.bf16.mxu0 %v5843
        %7862 = vmatpush1.bf16.msra.mxu0 %v5842
        %7863 = vmatprep.subr.bf16.mxu0 %v5851
        %7864 = vmatpush1.bf16.msra.mxu0 %v5850
        %7865 = vmatprep.subr.bf16.mxu0 %v5859
        %7866 = vmatpush1.bf16.msra.mxu0 %v5858
        %7867 = vmatprep.subr.bf16.mxu0 %v5867
        %7868 = vmatpush1.bf16.msra.mxu0 %v5866
        %7869 = vmatprep.mubr.bf16.mxu0 %v1757
        %7870 = vmatmul.mubr.bf16.gmra.mrb[0].mxu0 %v1756
        %v7871 = vpop.f32.mrb[0].mxu0
        %v7872 = vadd.f32 %v7831, %v7871
        %v7873 = vpop.f32.mrb[0].mxu0
        %v7874 = vadd.f32 %v7833, %v7873
        %v7875 = vpop.f32.mrb[0].mxu0
        %v7876 = vpop.f32.mrb[0].mxu0
        %7877 = vdwg.mxu0
        %7878 = vmatprep.subr.bf16.mxu0 %v4853
        %7879 = vmatpush1.bf16.msra.mxu0 %v4852
        %7880 = vmatprep.subr.bf16.mxu0 %v4861
        %7881 = vmatpush1.bf16.msra.mxu0 %v4860
        %7882 = vmatprep.subr.bf16.mxu0 %v4869
        %7883 = vmatpush1.bf16.msra.mxu0 %v4868
        %7884 = vmatprep.subr.bf16.mxu0 %v4877
        %7885 = vmatpush1.bf16.msra.mxu0 %v4876
        %7886 = vmatprep.subr.bf16.mxu0 %v4885
        %7887 = vmatpush1.bf16.msra.mxu0 %v4884
        %7888 = vmatprep.subr.bf16.mxu0 %v4893
        %7889 = vmatpush1.bf16.msra.mxu0 %v4892
        %7890 = vmatprep.subr.bf16.mxu0 %v4901
        %7891 = vmatpush1.bf16.msra.mxu0 %v4900
        %7892 = vmatprep.subr.bf16.mxu0 %v4909
        %7893 = vmatpush1.bf16.msra.mxu0 %v4908
        %7894 = vmatprep.subr.bf16.mxu0 %v4917
        %7895 = vmatpush1.bf16.msra.mxu0 %v4916
        %7896 = vmatprep.subr.bf16.mxu0 %v4925
        %7897 = vmatpush1.bf16.msra.mxu0 %v4924
        %7898 = vmatprep.subr.bf16.mxu0 %v4933
        %7899 = vmatpush1.bf16.msra.mxu0 %v4932
        %7900 = vmatprep.subr.bf16.mxu0 %v4941
        %7901 = vmatpush1.bf16.msra.mxu0 %v4940
        %7902 = vmatprep.subr.bf16.mxu0 %v4949
        %7903 = vmatpush1.bf16.msra.mxu0 %v4948
        %7904 = vmatprep.subr.bf16.mxu0 %v4957
        %7905 = vmatpush1.bf16.msra.mxu0 %v4956
        %7906 = vmatprep.subr.bf16.mxu0 %v4965
        %7907 = vmatpush1.bf16.msra.mxu0 %v4964
        %7908 = vmatprep.subr.bf16.mxu0 %v4973
        %7909 = vmatpush1.bf16.msra.mxu0 %v4972
        %7910 = vmatprep.mubr.bf16.mxu0 %v1743
        %7911 = vmatmul.mubr.bf16.gmra.mrb[0].mxu0 %v1742
        %v7912 = vpop.f32.mrb[0].mxu0
        %v7913 = vadd.f32 %v1648, %v7912
        %v7914 = vpop.f32.mrb[0].mxu0
        %v7915 = vadd.f32 %v1652, %v7914
        %v7916 = vpop.f32.mrb[0].mxu0
        %v7917 = vpop.f32.mrb[0].mxu0
        %7918 = vdwg.mxu0
        %7919 = vmatprep.subr.bf16.mxu0 %v4981
        %7920 = vmatpush1.bf16.msra.mxu0 %v4980
        %7921 = vmatprep.subr.bf16.mxu0 %v4989
        %7922 = vmatpush1.bf16.msra.mxu0 %v4988
        %7923 = vmatprep.subr.bf16.mxu0 %v4997
        %7924 = vmatpush1.bf16.msra.mxu0 %v4996
        %7925 = vmatprep.subr.bf16.mxu0 %v5005
        %7926 = vmatpush1.bf16.msra.mxu0 %v5004
        %7927 = vmatprep.subr.bf16.mxu0 %v5013
        %7928 = vmatpush1.bf16.msra.mxu0 %v5012
        %7929 = vmatprep.subr.bf16.mxu0 %v5021
        %7930 = vmatpush1.bf16.msra.mxu0 %v5020
        %7931 = vmatprep.subr.bf16.mxu0 %v5029
        %7932 = vmatpush1.bf16.msra.mxu0 %v5028
        %7933 = vmatprep.subr.bf16.mxu0 %v5037
        %7934 = vmatpush1.bf16.msra.mxu0 %v5036
        %7935 = vmatprep.subr.bf16.mxu0 %v5045
        %7936 = vmatpush1.bf16.msra.mxu0 %v5044
        %7937 = vmatprep.subr.bf16.mxu0 %v5053
        %7938 = vmatpush1.bf16.msra.mxu0 %v5052
        %7939 = vmatprep.subr.bf16.mxu0 %v5061
        %7940 = vmatpush1.bf16.msra.mxu0 %v5060
        %7941 = vmatprep.subr.bf16.mxu0 %v5069
        %7942 = vmatpush1.bf16.msra.mxu0 %v5068
        %7943 = vmatprep.subr.bf16.mxu0 %v5077
        %7944 = vmatpush1.bf16.msra.mxu0 %v5076
        %7945 = vmatprep.subr.bf16.mxu0 %v5085
        %7946 = vmatpush1.bf16.msra.mxu0 %v5084
        %7947 = vmatprep.subr.bf16.mxu0 %v5093
        %7948 = vmatpush1.bf16.msra.mxu0 %v5092
        %7949 = vmatprep.subr.bf16.mxu0 %v5101
        %7950 = vmatpush1.bf16.msra.mxu0 %v5100
        %7951 = vmatprep.mubr.bf16.mxu0 %v1745
        %7952 = vmatmul.mubr.bf16.gmra.mrb[0].mxu0 %v1744
        %v7953 = vpop.f32.mrb[0].mxu0
        %v7954 = vadd.f32 %v7913, %v7953
        %v7955 = vpop.f32.mrb[0].mxu0
        %v7956 = vadd.f32 %v7915, %v7955
        %v7957 = vpop.f32.mrb[0].mxu0
        %v7958 = vpop.f32.mrb[0].mxu0
        %7959 = vdwg.mxu0
        %7960 = vmatprep.subr.bf16.mxu0 %v5109
        %7961 = vmatpush1.bf16.msra.mxu0 %v5108
        %7962 = vmatprep.subr.bf16.mxu0 %v5117
        %7963 = vmatpush1.bf16.msra.mxu0 %v5116
        %7964 = vmatprep.subr.bf16.mxu0 %v5125
        %7965 = vmatpush1.bf16.msra.mxu0 %v5124
        %7966 = vmatprep.subr.bf16.mxu0 %v5133
        %7967 = vmatpush1.bf16.msra.mxu0 %v5132
        %7968 = vmatprep.subr.bf16.mxu0 %v5141
        %7969 = vmatpush1.bf16.msra.mxu0 %v5140
        %7970 = vmatprep.subr.bf16.mxu0 %v5149
        %7971 = vmatpush1.bf16.msra.mxu0 %v5148
        %7972 = vmatprep.subr.bf16.mxu0 %v5157
        %7973 = vmatpush1.bf16.msra.mxu0 %v5156
        %7974 = vmatprep.subr.bf16.mxu0 %v5165
        %7975 = vmatpush1.bf16.msra.mxu0 %v5164
        %7976 = vmatprep.subr.bf16.mxu0 %v5173
        %7977 = vmatpush1.bf16.msra.mxu0 %v5172
        %7978 = vmatprep.subr.bf16.mxu0 %v5181
        %7979 = vmatpush1.bf16.msra.mxu0 %v5180
        %7980 = vmatprep.subr.bf16.mxu0 %v5189
        %7981 = vmatpush1.bf16.msra.mxu0 %v5188
        %7982 = vmatprep.subr.bf16.mxu0 %v5197
        %7983 = vmatpush1.bf16.msra.mxu0 %v5196
        %7984 = vmatprep.subr.bf16.mxu0 %v5205
        %7985 = vmatpush1.bf16.msra.mxu0 %v5204
        %7986 = vmatprep.subr.bf16.mxu0 %v5213
        %7987 = vmatpush1.bf16.msra.mxu0 %v5212
        %7988 = vmatprep.subr.bf16.mxu0 %v5221
        %7989 = vmatpush1.bf16.msra.mxu0 %v5220
        %7990 = vmatprep.subr.bf16.mxu0 %v5229
        %7991 = vmatpush1.bf16.msra.mxu0 %v5228
        %7992 = vmatprep.mubr.bf16.mxu0 %v1747
        %7993 = vmatmul.mubr.bf16.gmra.mrb[0].mxu0 %v1746
        %v7994 = vpop.f32.mrb[0].mxu0
        %v7995 = vadd.f32 %v7954, %v7994
        %v7996 = vpop.f32.mrb[0].mxu0
        %v7997 = vadd.f32 %v7956, %v7996
        %v7998 = vpop.f32.mrb[0].mxu0
        %v7999 = vpop.f32.mrb[0].mxu0
        %8000 = vdwg.mxu0
        %8001 = vmatprep.subr.bf16.mxu0 %v5237
        %8002 = vmatpush1.bf16.msra.mxu0 %v5236
        %8003 = vmatprep.subr.bf16.mxu0 %v5245
        %8004 = vmatpush1.bf16.msra.mxu0 %v5244
        %8005 = vmatprep.subr.bf16.mxu0 %v5253
        %8006 = vmatpush1.bf16.msra.mxu0 %v5252
        %8007 = vmatprep.subr.bf16.mxu0 %v5261
        %8008 = vmatpush1.bf16.msra.mxu0 %v5260
        %8009 = vmatprep.subr.bf16.mxu0 %v5269
        %8010 = vmatpush1.bf16.msra.mxu0 %v5268
        %8011 = vmatprep.subr.bf16.mxu0 %v5277
        %8012 = vmatpush1.bf16.msra.mxu0 %v5276
        %8013 = vmatprep.subr.bf16.mxu0 %v5285
        %8014 = vmatpush1.bf16.msra.mxu0 %v5284
        %8015 = vmatprep.subr.bf16.mxu0 %v5293
        %8016 = vmatpush1.bf16.msra.mxu0 %v5292
        %8017 = vmatprep.subr.bf16.mxu0 %v5301
        %8018 = vmatpush1.bf16.msra.mxu0 %v5300
        %8019 = vmatprep.subr.bf16.mxu0 %v5309
        %8020 = vmatpush1.bf16.msra.mxu0 %v5308
        %8021 = vmatprep.subr.bf16.mxu0 %v5317
        %8022 = vmatpush1.bf16.msra.mxu0 %v5316
        %8023 = vmatprep.subr.bf16.mxu0 %v5325
        %8024 = vmatpush1.bf16.msra.mxu0 %v5324
        %8025 = vmatprep.subr.bf16.mxu0 %v5333
        %8026 = vmatpush1.bf16.msra.mxu0 %v5332
        %8027 = vmatprep.subr.bf16.mxu0 %v5341
        %8028 = vmatpush1.bf16.msra.mxu0 %v5340
        %8029 = vmatprep.subr.bf16.mxu0 %v5349
        %8030 = vmatpush1.bf16.msra.mxu0 %v5348
        %8031 = vmatprep.subr.bf16.mxu0 %v5357
        %8032 = vmatpush1.bf16.msra.mxu0 %v5356
        %8033 = vmatprep.mubr.bf16.mxu0 %v1749
        %8034 = vmatmul.mubr.bf16.gmra.mrb[0].mxu0 %v1748
        %v8035 = vpop.f32.mrb[0].mxu0
        %v8036 = vadd.f32 %v7995, %v8035
        %v8037 = vpop.f32.mrb[0].mxu0
        %v8038 = vadd.f32 %v7997, %v8037
        %v8039 = vpop.f32.mrb[0].mxu0
        %v8040 = vpop.f32.mrb[0].mxu0
        %8041 = vdwg.mxu0
        %8042 = vmatprep.subr.bf16.mxu0 %v5365
        %8043 = vmatpush1.bf16.msra.mxu0 %v5364
        %8044 = vmatprep.subr.bf16.mxu0 %v5373
        %8045 = vmatpush1.bf16.msra.mxu0 %v5372
        %8046 = vmatprep.subr.bf16.mxu0 %v5381
        %8047 = vmatpush1.bf16.msra.mxu0 %v5380
        %8048 = vmatprep.subr.bf16.mxu0 %v5389
        %8049 = vmatpush1.bf16.msra.mxu0 %v5388
        %8050 = vmatprep.subr.bf16.mxu0 %v5397
        %8051 = vmatpush1.bf16.msra.mxu0 %v5396
        %8052 = vmatprep.subr.bf16.mxu0 %v5405
        %8053 = vmatpush1.bf16.msra.mxu0 %v5404
        %8054 = vmatprep.subr.bf16.mxu0 %v5413
        %8055 = vmatpush1.bf16.msra.mxu0 %v5412
        %8056 = vmatprep.subr.bf16.mxu0 %v5421
        %8057 = vmatpush1.bf16.msra.mxu0 %v5420
        %8058 = vmatprep.subr.bf16.mxu0 %v5429
        %8059 = vmatpush1.bf16.msra.mxu0 %v5428
        %8060 = vmatprep.subr.bf16.mxu0 %v5437
        %8061 = vmatpush1.bf16.msra.mxu0 %v5436
        %8062 = vmatprep.subr.bf16.mxu0 %v5445
        %8063 = vmatpush1.bf16.msra.mxu0 %v5444
        %8064 = vmatprep.subr.bf16.mxu0 %v5453
        %8065 = vmatpush1.bf16.msra.mxu0 %v5452
        %8066 = vmatprep.subr.bf16.mxu0 %v5461
        %8067 = vmatpush1.bf16.msra.mxu0 %v5460
        %8068 = vmatprep.subr.bf16.mxu0 %v5469
        %8069 = vmatpush1.bf16.msra.mxu0 %v5468
        %8070 = vmatprep.subr.bf16.mxu0 %v5477
        %8071 = vmatpush1.bf16.msra.mxu0 %v5476
        %8072 = vmatprep.subr.bf16.mxu0 %v5485
        %8073 = vmatpush1.bf16.msra.mxu0 %v5484
        %8074 = vmatprep.mubr.bf16.mxu0 %v1751
        %8075 = vmatmul.mubr.bf16.gmra.mrb[0].mxu0 %v1750
        %v8076 = vpop.f32.mrb[0].mxu0
        %v8077 = vadd.f32 %v8036, %v8076
        %v8078 = vpop.f32.mrb[0].mxu0
        %v8079 = vadd.f32 %v8038, %v8078
        %v8080 = vpop.f32.mrb[0].mxu0
        %v8081 = vpop.f32.mrb[0].mxu0
        %8082 = vdwg.mxu0
        %8083 = vmatprep.subr.bf16.mxu0 %v5493
        %8084 = vmatpush1.bf16.msra.mxu0 %v5492
        %8085 = vmatprep.subr.bf16.mxu0 %v5501
        %8086 = vmatpush1.bf16.msra.mxu0 %v5500
        %8087 = vmatprep.subr.bf16.mxu0 %v5509
        %8088 = vmatpush1.bf16.msra.mxu0 %v5508
        %8089 = vmatprep.subr.bf16.mxu0 %v5517
        %8090 = vmatpush1.bf16.msra.mxu0 %v5516
        %8091 = vmatprep.subr.bf16.mxu0 %v5525
        %8092 = vmatpush1.bf16.msra.mxu0 %v5524
        %8093 = vmatprep.subr.bf16.mxu0 %v5533
        %8094 = vmatpush1.bf16.msra.mxu0 %v5532
        %8095 = vmatprep.subr.bf16.mxu0 %v5541
        %8096 = vmatpush1.bf16.msra.mxu0 %v5540
        %8097 = vmatprep.subr.bf16.mxu0 %v5549
        %8098 = vmatpush1.bf16.msra.mxu0 %v5548
        %8099 = vmatprep.subr.bf16.mxu0 %v5557
        %8100 = vmatpush1.bf16.msra.mxu0 %v5556
        %8101 = vmatprep.subr.bf16.mxu0 %v5565
        %8102 = vmatpush1.bf16.msra.mxu0 %v5564
        %8103 = vmatprep.subr.bf16.mxu0 %v5573
        %8104 = vmatpush1.bf16.msra.mxu0 %v5572
        %8105 = vmatprep.subr.bf16.mxu0 %v5581
        %8106 = vmatpush1.bf16.msra.mxu0 %v5580
        %8107 = vmatprep.subr.bf16.mxu0 %v5589
        %8108 = vmatpush1.bf16.msra.mxu0 %v5588
        %8109 = vmatprep.subr.bf16.mxu0 %v5597
        %8110 = vmatpush1.bf16.msra.mxu0 %v5596
        %8111 = vmatprep.subr.bf16.mxu0 %v5605
        %8112 = vmatpush1.bf16.msra.mxu0 %v5604
        %8113 = vmatprep.subr.bf16.mxu0 %v5613
        %8114 = vmatpush1.bf16.msra.mxu0 %v5612
        %8115 = vmatprep.mubr.bf16.mxu0 %v1753
        %8116 = vmatmul.mubr.bf16.gmra.mrb[0].mxu0 %v1752
        %v8117 = vpop.f32.mrb[0].mxu0
        %v8118 = vadd.f32 %v8077, %v8117
        %v8119 = vpop.f32.mrb[0].mxu0
        %v8120 = vadd.f32 %v8079, %v8119
        %v8121 = vpop.f32.mrb[0].mxu0
        %v8122 = vpop.f32.mrb[0].mxu0
        %8123 = vdwg.mxu0
        %8124 = vmatprep.subr.bf16.mxu0 %v5621
        %8125 = vmatpush1.bf16.msra.mxu0 %v5620
        %8126 = vmatprep.subr.bf16.mxu0 %v5629
        %8127 = vmatpush1.bf16.msra.mxu0 %v5628
        %8128 = vmatprep.subr.bf16.mxu0 %v5637
        %8129 = vmatpush1.bf16.msra.mxu0 %v5636
        %8130 = vmatprep.subr.bf16.mxu0 %v5645
        %8131 = vmatpush1.bf16.msra.mxu0 %v5644
        %8132 = vmatprep.subr.bf16.mxu0 %v5653
        %8133 = vmatpush1.bf16.msra.mxu0 %v5652
        %8134 = vmatprep.subr.bf16.mxu0 %v5661
        %8135 = vmatpush1.bf16.msra.mxu0 %v5660
        %8136 = vmatprep.subr.bf16.mxu0 %v5669
        %8137 = vmatpush1.bf16.msra.mxu0 %v5668
        %8138 = vmatprep.subr.bf16.mxu0 %v5677
        %8139 = vmatpush1.bf16.msra.mxu0 %v5676
        %8140 = vmatprep.subr.bf16.mxu0 %v5685
        %8141 = vmatpush1.bf16.msra.mxu0 %v5684
        %8142 = vmatprep.subr.bf16.mxu0 %v5693
        %8143 = vmatpush1.bf16.msra.mxu0 %v5692
        %8144 = vmatprep.subr.bf16.mxu0 %v5701
        %8145 = vmatpush1.bf16.msra.mxu0 %v5700
        %8146 = vmatprep.subr.bf16.mxu0 %v5709
        %8147 = vmatpush1.bf16.msra.mxu0 %v5708
        %8148 = vmatprep.subr.bf16.mxu0 %v5717
        %8149 = vmatpush1.bf16.msra.mxu0 %v5716
        %8150 = vmatprep.subr.bf16.mxu0 %v5725
        %8151 = vmatpush1.bf16.msra.mxu0 %v5724
        %8152 = vmatprep.subr.bf16.mxu0 %v5733
        %8153 = vmatpush1.bf16.msra.mxu0 %v5732
        %8154 = vmatprep.subr.bf16.mxu0 %v5741
        %8155 = vmatpush1.bf16.msra.mxu0 %v5740
        %8156 = vmatprep.mubr.bf16.mxu0 %v1755
        %8157 = vmatmul.mubr.bf16.gmra.mrb[0].mxu0 %v1754
        %v8158 = vpop.f32.mrb[0].mxu0
        %v8159 = vadd.f32 %v8118, %v8158
        %v8160 = vpop.f32.mrb[0].mxu0
        %v8161 = vadd.f32 %v8120, %v8160
        %v8162 = vpop.f32.mrb[0].mxu0
        %v8163 = vpop.f32.mrb[0].mxu0
        %8164 = vdwg.mxu0
        %8165 = vmatprep.subr.bf16.mxu0 %v5749
        %8166 = vmatpush1.bf16.msra.mxu0 %v5748
        %8167 = vmatprep.subr.bf16.mxu0 %v5757
        %8168 = vmatpush1.bf16.msra.mxu0 %v5756
        %8169 = vmatprep.subr.bf16.mxu0 %v5765
        %8170 = vmatpush1.bf16.msra.mxu0 %v5764
        %8171 = vmatprep.subr.bf16.mxu0 %v5773
        %8172 = vmatpush1.bf16.msra.mxu0 %v5772
        %8173 = vmatprep.subr.bf16.mxu0 %v5781
        %8174 = vmatpush1.bf16.msra.mxu0 %v5780
        %8175 = vmatprep.subr.bf16.mxu0 %v5789
        %8176 = vmatpush1.bf16.msra.mxu0 %v5788
        %8177 = vmatprep.subr.bf16.mxu0 %v5797
        %8178 = vmatpush1.bf16.msra.mxu0 %v5796
        %8179 = vmatprep.subr.bf16.mxu0 %v5805
        %8180 = vmatpush1.bf16.msra.mxu0 %v5804
        %8181 = vmatprep.subr.bf16.mxu0 %v5813
        %8182 = vmatpush1.bf16.msra.mxu0 %v5812
        %8183 = vmatprep.subr.bf16.mxu0 %v5821
        %8184 = vmatpush1.bf16.msra.mxu0 %v5820
        %8185 = vmatprep.subr.bf16.mxu0 %v5829
        %8186 = vmatpush1.bf16.msra.mxu0 %v5828
        %8187 = vmatprep.subr.bf16.mxu0 %v5837
        %8188 = vmatpush1.bf16.msra.mxu0 %v5836
        %8189 = vmatprep.subr.bf16.mxu0 %v5845
        %8190 = vmatpush1.bf16.msra.mxu0 %v5844
        %8191 = vmatprep.subr.bf16.mxu0 %v5853
        %8192 = vmatpush1.bf16.msra.mxu0 %v5852
        %8193 = vmatprep.subr.bf16.mxu0 %v5861
        %8194 = vmatpush1.bf16.msra.mxu0 %v5860
        %8195 = vmatprep.subr.bf16.mxu0 %v5869
        %8196 = vmatpush1.bf16.msra.mxu0 %v5868
        %8197 = vmatprep.mubr.bf16.mxu0 %v1757
        %8198 = vmatmul.mubr.bf16.gmra.mrb[0].mxu0 %v1756
        %v8199 = vpop.f32.mrb[0].mxu0
        %v8200 = vadd.f32 %v8159, %v8199
        %v8201 = vpop.f32.mrb[0].mxu0
        %v8202 = vadd.f32 %v8161, %v8201
        %v8203 = vpop.f32.mrb[0].mxu0
        %v8204 = vpop.f32.mrb[0].mxu0
        %8205 = vdwg.mxu0
        %vm8206 = vcmask 1041408
        %v8207 = vsel %vm8206, %v7216, 0.0
        %v8208 = vrot.slane %v8207, 4
        %v8209 = vadd.f32 %v8207, %v8208
        %v8210 = vrot.slane %v8209, 2
        %v8211 = vadd.f32 %v8209, %v8210
        %v8212 = vrot.slane %v8211, 1
        %v8213 = vadd.f32 %v8211, %v8212
        %v8214 = vsel %vm8206, %v7218, 0.0
        %v8215 = vrot.slane %v8214, 4
        %v8216 = vadd.f32 %v8214, %v8215
        %v8217 = vrot.slane %v8216, 2
        %v8218 = vadd.f32 %v8216, %v8217
        %v8219 = vrot.slane %v8218, 1
        %v8220 = vadd.f32 %v8218, %v8219
        %v8221 = vsel %vm8206, %v7544, 0.0
        %v8222 = vrot.slane %v8221, 4
        %v8223 = vadd.f32 %v8221, %v8222
        %v8224 = vrot.slane %v8223, 2
        %v8225 = vadd.f32 %v8223, %v8224
        %v8226 = vrot.slane %v8225, 1
        %v8227 = vadd.f32 %v8225, %v8226
        %v8228 = vsel %vm8206, %v7546, 0.0
        %v8229 = vrot.slane %v8228, 4
        %v8230 = vadd.f32 %v8228, %v8229
        %v8231 = vrot.slane %v8230, 2
        %v8232 = vadd.f32 %v8230, %v8231
        %v8233 = vrot.slane %v8232, 1
        %v8234 = vadd.f32 %v8232, %v8233
        %v8235 = vsel %vm8206, %v7872, 0.0
        %v8236 = vrot.slane %v8235, 4
        %v8237 = vadd.f32 %v8235, %v8236
        %v8238 = vrot.slane %v8237, 2
        %v8239 = vadd.f32 %v8237, %v8238
        %v8240 = vrot.slane %v8239, 1
        %v8241 = vadd.f32 %v8239, %v8240
        %v8242 = vsel %vm8206, %v7874, 0.0
        %v8243 = vrot.slane %v8242, 4
        %v8244 = vadd.f32 %v8242, %v8243
        %v8245 = vrot.slane %v8244, 2
        %v8246 = vadd.f32 %v8244, %v8245
        %v8247 = vrot.slane %v8246, 1
        %v8248 = vadd.f32 %v8246, %v8247
        %v8249 = vsel %vm8206, %v8200, 0.0
        %v8250 = vrot.slane %v8249, 4
        %v8251 = vadd.f32 %v8249, %v8250
        %v8252 = vrot.slane %v8251, 2
        %v8253 = vadd.f32 %v8251, %v8252
        %v8254 = vrot.slane %v8253, 1
        %v8255 = vadd.f32 %v8253, %v8254
        %v8256 = vsel %vm8206, %v8202, 0.0
        %v8257 = vrot.slane %v8256, 4
        %v8258 = vadd.f32 %v8256, %v8257
        %v8259 = vrot.slane %v8258, 2
        %v8260 = vadd.f32 %v8258, %v8259
        %v8261 = vrot.slane %v8260, 1
        %v8262 = vadd.f32 %v8260, %v8261
        %v8263 = vrcp.pop 2.0
        %v8264 = vmul.f32 %v8213, %v8263
        %v8265 = vmul.f32 %v8220, %v8263
        %v8266 = vmul.f32 %v8227, %v8263
        %v8267 = vmul.f32 %v8234, %v8263
        %v8268 = vmul.f32 %v8241, %v8263
        %v8269 = vmul.f32 %v8248, %v8263
        %v8270 = vmul.f32 %v8255, %v8263
        %v8271 = vmul.f32 %v8262, %v8263
        %v8272 = vsub.f32 %v7216, %v8264
        %v8273 = vsub.f32 %v7218, %v8265
        %v8274 = vsub.f32 %v7544, %v8266
        %v8275 = vsub.f32 %v7546, %v8267
        %v8276 = vsub.f32 %v7872, %v8268
        %v8277 = vsub.f32 %v7874, %v8269
        %v8278 = vsub.f32 %v8200, %v8270
        %v8279 = vsub.f32 %v8202, %v8271
        %v8280 = vmul.f32 %v8272, %v8272
        %v8281 = vmul.f32 %v8273, %v8273
        %v8282 = vmul.f32 %v8274, %v8274
        %v8283 = vmul.f32 %v8275, %v8275
        %v8284 = vmul.f32 %v8276, %v8276
        %v8285 = vmul.f32 %v8277, %v8277
        %v8286 = vmul.f32 %v8278, %v8278
        %v8287 = vmul.f32 %v8279, %v8279
        %v8288 = vsel %vm8206, %v8280, 0.0
        %v8289 = vrot.slane %v8288, 4
        %v8290 = vadd.f32 %v8288, %v8289
        %v8291 = vrot.slane %v8290, 2
        %v8292 = vadd.f32 %v8290, %v8291
        %v8293 = vrot.slane %v8292, 1
        %v8294 = vadd.f32 %v8292, %v8293
        %v8295 = vsel %vm8206, %v8281, 0.0
        %v8296 = vrot.slane %v8295, 4
        %v8297 = vadd.f32 %v8295, %v8296
        %v8298 = vrot.slane %v8297, 2
        %v8299 = vadd.f32 %v8297, %v8298
        %v8300 = vrot.slane %v8299, 1
        %v8301 = vadd.f32 %v8299, %v8300
        %v8302 = vsel %vm8206, %v8282, 0.0
        %v8303 = vrot.slane %v8302, 4
        %v8304 = vadd.f32 %v8302, %v8303
        %v8305 = vrot.slane %v8304, 2
        %v8306 = vadd.f32 %v8304, %v8305
        %v8307 = vrot.slane %v8306, 1
        %v8308 = vadd.f32 %v8306, %v8307
        %v8309 = vsel %vm8206, %v8283, 0.0
        %v8310 = vrot.slane %v8309, 4
        %v8311 = vadd.f32 %v8309, %v8310
        %v8312 = vrot.slane %v8311, 2
        %v8313 = vadd.f32 %v8311, %v8312
        %v8314 = vrot.slane %v8313, 1
        %v8315 = vadd.f32 %v8313, %v8314
        %v8316 = vsel %vm8206, %v8284, 0.0
        %v8317 = vrot.slane %v8316, 4
        %v8318 = vadd.f32 %v8316, %v8317
        %v8319 = vrot.slane %v8318, 2
        %v8320 = vadd.f32 %v8318, %v8319
        %v8321 = vrot.slane %v8320, 1
        %v8322 = vadd.f32 %v8320, %v8321
        %v8323 = vsel %vm8206, %v8285, 0.0
        %v8324 = vrot.slane %v8323, 4
        %v8325 = vadd.f32 %v8323, %v8324
        %v8326 = vrot.slane %v8325, 2
        %v8327 = vadd.f32 %v8325, %v8326
        %v8328 = vrot.slane %v8327, 1
        %v8329 = vadd.f32 %v8327, %v8328
        %v8330 = vsel %vm8206, %v8286, 0.0
        %v8331 = vrot.slane %v8330, 4
        %v8332 = vadd.f32 %v8330, %v8331
        %v8333 = vrot.slane %v8332, 2
        %v8334 = vadd.f32 %v8332, %v8333
        %v8335 = vrot.slane %v8334, 1
        %v8336 = vadd.f32 %v8334, %v8335
        %v8337 = vsel %vm8206, %v8287, 0.0
        %v8338 = vrot.slane %v8337, 4
        %v8339 = vadd.f32 %v8337, %v8338
        %v8340 = vrot.slane %v8339, 2
        %v8341 = vadd.f32 %v8339, %v8340
        %v8342 = vrot.slane %v8341, 1
        %v8343 = vadd.f32 %v8341, %v8342
        %v8344 = vmul.f32 %v8294, %v8263
        %v8345 = vmul.f32 %v8301, %v8263
        %v8346 = vmul.f32 %v8308, %v8263
        %v8347 = vmul.f32 %v8315, %v8263
        %v8348 = vmul.f32 %v8322, %v8263
        %v8349 = vmul.f32 %v8329, %v8263
        %v8350 = vmul.f32 %v8336, %v8263
        %v8351 = vmul.f32 %v8343, %v8263
        %v8352 = vadd.f32 %v8344, 1e-05
        %v8353 = vadd.f32 %v8345, 1e-05
        %v8354 = vadd.f32 %v8346, 1e-05
        %v8355 = vadd.f32 %v8347, 1e-05
        %v8356 = vadd.f32 %v8348, 1e-05
        %v8357 = vadd.f32 %v8349, 1e-05
        %v8358 = vadd.f32 %v8350, 1e-05
        %v8359 = vadd.f32 %v8351, 1e-05
        %v8360 = vrsqrt.pop %v8352
        %v8361 = vrsqrt.pop %v8353
        %v8362 = vrsqrt.pop %v8354
        %v8363 = vrsqrt.pop %v8355
        %v8364 = vrsqrt.pop %v8356
        %v8365 = vrsqrt.pop %v8357
        %v8366 = vrsqrt.pop %v8358
        %v8367 = vrsqrt.pop %v8359
        %v8368 = vmul.f32 %v8272, %v8360
        %v8369 = vmul.f32 %v8273, %v8361
        %v8370 = vmul.f32 %v8274, %v8362
        %v8371 = vmul.f32 %v8275, %v8363
        %v8372 = vmul.f32 %v8276, %v8364
        %v8373 = vmul.f32 %v8277, %v8365
        %v8374 = vmul.f32 %v8278, %v8366
        %v8375 = vmul.f32 %v8279, %v8367
        %s8376 = scalar_lea.vmem %s211, 1 [#allocation7]
        %v8377 = vld [vmem:[%s8376] ss:$4 sm:$0xff]
        %v8379 = vlaneseq
        %v8380 = vshrl.u32 %v8379, 7
        %v8381 = vsub.s32 0, %v8380
        %v8382 = vrot.slane %v8377, %v8381
        %v8383 = vlaneseq
        %v8384 = vshrl.u32 %v8383, 7
        %v8385 = vsub.s32 1, %v8384
        %v8386 = vrot.slane %v8377, %v8385
        %v8387 = vlaneseq
        %v8388 = vshrl.u32 %v8387, 7
        %v8389 = vsub.s32 2, %v8388
        %v8390 = vrot.slane %v8377, %v8389
        %v8391 = vlaneseq
        %v8392 = vshrl.u32 %v8391, 7
        %v8393 = vsub.s32 3, %v8392
        %v8394 = vrot.slane %v8377, %v8393
        %v8395 = vlaneseq
        %v8396 = vshrl.u32 %v8395, 7
        %v8397 = vsub.s32 4, %v8396
        %v8398 = vrot.slane %v8377, %v8397
        %v8399 = vlaneseq
        %v8400 = vshrl.u32 %v8399, 7
        %v8401 = vsub.s32 5, %v8400
        %v8402 = vrot.slane %v8377, %v8401
        %v8403 = vlaneseq
        %v8404 = vshrl.u32 %v8403, 7
        %v8405 = vsub.s32 6, %v8404
        %v8406 = vrot.slane %v8377, %v8405
        %v8407 = vlaneseq
        %v8408 = vshrl.u32 %v8407, 7
        %v8409 = vsub.s32 7, %v8408
        %v8410 = vrot.slane %v8377, %v8409
        %v8419 = vmul.f32 %v8382, %v8368
        %v8420 = vmul.f32 %v8386, %v8369
        %v8421 = vmul.f32 %v8390, %v8370
        %v8422 = vmul.f32 %v8394, %v8371
        %v8423 = vmul.f32 %v8398, %v8372
        %v8424 = vmul.f32 %v8402, %v8373
        %v8425 = vmul.f32 %v8406, %v8374
        %v8426 = vmul.f32 %v8410, %v8375
        %s8427 = scalar_lea.vmem %s211, 2 [#allocation7]
        %v8428 = vld [vmem:[%s8427] ss:$4 sm:$0xff]
        %v8430 = vlaneseq
        %v8431 = vshrl.u32 %v8430, 7
        %v8432 = vsub.s32 0, %v8431
        %v8433 = vrot.slane %v8428, %v8432
        %v8434 = vlaneseq
        %v8435 = vshrl.u32 %v8434, 7
        %v8436 = vsub.s32 1, %v8435
        %v8437 = vrot.slane %v8428, %v8436
        %v8438 = vlaneseq
        %v8439 = vshrl.u32 %v8438, 7
        %v8440 = vsub.s32 2, %v8439
        %v8441 = vrot.slane %v8428, %v8440
        %v8442 = vlaneseq
        %v8443 = vshrl.u32 %v8442, 7
        %v8444 = vsub.s32 3, %v8443
        %v8445 = vrot.slane %v8428, %v8444
        %v8446 = vlaneseq
        %v8447 = vshrl.u32 %v8446, 7
        %v8448 = vsub.s32 4, %v8447
        %v8449 = vrot.slane %v8428, %v8448
        %v8450 = vlaneseq
        %v8451 = vshrl.u32 %v8450, 7
        %v8452 = vsub.s32 5, %v8451
        %v8453 = vrot.slane %v8428, %v8452
        %v8454 = vlaneseq
        %v8455 = vshrl.u32 %v8454, 7
        %v8456 = vsub.s32 6, %v8455
        %v8457 = vrot.slane %v8428, %v8456
        %v8458 = vlaneseq
        %v8459 = vshrl.u32 %v8458, 7
        %v8460 = vsub.s32 7, %v8459
        %v8461 = vrot.slane %v8428, %v8460
        %v8470 = vadd.f32 %v8419, %v8433
        %v8471 = vadd.f32 %v8420, %v8437
        %v8472 = vadd.f32 %v8421, %v8441
        %v8473 = vadd.f32 %v8422, %v8445
        %v8474 = vadd.f32 %v8423, %v8449
        %v8475 = vadd.f32 %v8424, %v8453
        %v8476 = vadd.f32 %v8425, %v8457
        %v8477 = vadd.f32 %v8426, %v8461
        %v8478 = vmax.f32 %v8470, 0.0
        %v8479 = vmax.f32 %v8471, 0.0
        %v8480 = vmax.f32 %v8472, 0.0
        %v8481 = vmax.f32 %v8473, 0.0
        %v8482 = vmax.f32 %v8474, 0.0
        %v8483 = vmax.f32 %v8475, 0.0
        %v8484 = vmax.f32 %v8476, 0.0
        %v8485 = vmax.f32 %v8477, 0.0
        %v8494 = vcombine.low %v8478, %v8479
        %v8495 = vcombine.low %v8480, %v8481
        %v8497 = vunpack.c.l.s4 1983009808
        %v8498 = vunpack.c.0.s8 %v8497
        %v8499 = vlaneseq
        %v8500 = vshrl.u32 %v8499, 7
        %v8501 = vsub.s32 %v8498, %v8500
        %v8502 = vrot.slane %v8494, %v8501
        %v8504 = vunpack.c.l.s4 1983009808
        %v8505 = vunpack.c.0.s8 %v8504
        %v8506 = vlaneseq
        %v8507 = vshrl.u32 %v8506, 7
        %v8508 = vsub.s32 %v8505, %v8507
        %v8509 = vrot.slane %v8495, %v8508
        %v8510 = vcombine.low %v8502, %v8509
        %v8511 = vcombine.low %v8482, %v8483
        %v8512 = vcombine.low %v8484, %v8485
        %v8514 = vunpack.c.l.s4 1983009808
        %v8515 = vunpack.c.0.s8 %v8514
        %v8516 = vlaneseq
        %v8517 = vshrl.u32 %v8516, 7
        %v8518 = vsub.s32 %v8515, %v8517
        %v8519 = vrot.slane %v8511, %v8518
        %v8521 = vunpack.c.l.s4 1983009808
        %v8522 = vunpack.c.0.s8 %v8521
        %v8523 = vlaneseq
        %v8524 = vshrl.u32 %v8523, 7
        %v8525 = vsub.s32 %v8522, %v8524
        %v8526 = vrot.slane %v8512, %v8525
        %v8527 = vcombine.low %v8519, %v8526
        %8530 = vst [vmem:[%s238] sm:$0xff] %v8510
        %8531 = vst [vmem:[%s238 + $0x8] sm:$0xff] %v8527
        %s8532 = sand.u32 %s102, 1
        %s8533 = scalar_lea.sflag [#allocation4], %s8532
        %s8534 = sand.u32 %s102, 1
        %s8535 = smul.addr %s8534, 16
        %s8536 = scalar_lea.vmem [#allocation8], %s8535
        // Predicated region
        $region45: #{tpu_custom_call.1} parent=31 // pred_check
          %p8537 = pneg %p112
        $region46: #{tpu_custom_call.1} parent=31 // pred_check_branch
          %8539 = sbr.rel (%p8537) target = $region48
        $region47: #{tpu_custom_call.1} parent=31 // pred_region
          %s8540 = smul.u32 8, %s21
          %s8542 = ssub.s32 256, 256
          %8543 = vsyncadd %s8533, %s8542
          %s8544 = smul.addr %s8540, 32
          %s8545 = scalar_lea.hbm %s3, %s8544
          %s8547 = sshll.u32 %s8536, 4
          %s8548 = int_to_ptr.vmem [resolvable:$true] %s8547
          %8550 = dma.vmem_to_hbm [thread:$0]  %s8548, 256, %s8545, %s8533
        $region48: #{tpu_custom_call.1} parent=31 // pred_fallthru
          _
      $region32: #{tpu_custom_call.1} parent=5 // pred_fallthru
        _
      %p8551 = scmp.le.s32.totalorder 2, %s16
      // Predicated region
      $region49: #{tpu_custom_call.1} parent=5 // pred_check
        %p8552 = pneg %p8551
      $region50: #{tpu_custom_call.1} parent=5 // pred_check_branch
        %8554 = sbr.rel (%p8552) target = $region52
      $region51: #{tpu_custom_call.1} parent=5 // pred_region
        %s8555 = ssub.s32 %s16, 2
        // Predicated region
        $region53: #{tpu_custom_call.1} parent=51 // pred_check
          %p8556 = pneg %p118
        $region54: #{tpu_custom_call.1} parent=51 // pred_check_branch
          %8558 = sbr.rel (%p8556) target = $region56
        $region55: #{tpu_custom_call.1} parent=51 // pred_region
          %s8559 = sand.u32 %s103, 1
          %s8560 = scalar_lea.sflag [#allocation4], %s8559
          %s8561 = sand.u32 %s103, 1
          %s8562 = smul.addr %s8561, 16
          %s8563 = scalar_lea.vmem [#allocation8], %s8562
          %8564 = dma.done %s8560, 256
        $region56: #{tpu_custom_call.1} parent=51 // pred_fallthru
          _
      $region52: #{tpu_custom_call.1} parent=5 // pred_fallthru
        _
    $region6: #{tpu_custom_call.1} parent=1 // loop_footer
      %s20 = sadd.s32 1, %s16
    $region7: #{tpu_custom_call.1} parent=1 // loop_footer_branch
      %15 = sbr.rel target = $region3
    $region8: #{tpu_custom_call.1} parent=1 // loop_exit
      _
    %8565 = vsyncpa [#allocation3], 1
    %s8566 = scalar_lea.sflag [#allocation3], 1
    %8567 = vsyncpa %s8566, 1
    %8568 = vsyncpa [#allocation6], 1
    %s8569 = scalar_lea.sflag [#allocation6], 1
    %8570 = vsyncpa %s8569, 1
    %8571 = vsyncpa [#allocation4], 1
    %s8572 = scalar_lea.sflag [#allocation4], 1
    %8573 = vsyncpa %s8572, 1

</llo_original>
